<compile_context>
chip_gen: v7x
topology: tpu7x:2x2x1
jax: 0.10.0
libtpu: 0.0.40
codegen_flags: <defaults>
</compile_context>

<pallas_src>
import functools

import jax
import jax.numpy as jnp
from jax.experimental import pallas as pl
from jax.experimental.pallas import tpu as pltpu


def _round_up(x, m):
    return ((x + m - 1) // m) * m


@functools.lru_cache(maxsize=1)
def _vmem_limit_bytes():
    # ~3/4 of physical VMEM, capped at 96 MiB: 96 MiB on v5e/v6e, 48 MiB on v7x.
    try:
        cap = int(pltpu.get_tpu_info().vmem_capacity_bytes)
        return min(96 * 1024 * 1024, (cap * 3) // 4)
    except Exception:
        return 48 * 1024 * 1024


# ------------------------------------------------------------------ conv3x3 stride-2

def conv3x3_s2_kernel(x_ref, w_ref, b_ref, o_ref, *, relu):
    """Fused 3x3 / stride-2 / pad-1 conv for one image; taps folded into the reduction.

    x_ref: (1, 4, Hp2, Wp2, Cin) bf16  stride-phase decomposed padded input,
           x_ref[0, 2*pi+pj, r, c, :] == x_pad[2r+pi, 2c+pj, :]
    w_ref: (9, Cin, Cout) bf16, tap t = 3*di + dj
    b_ref: (1, Cout) f32
    o_ref: (1, Ho, Wo, Cout) bf16
    """
    _, Ho, Wo, Cout = o_ref.shape
    bias = b_ref[...]                                           # (1, Cout) f32
    for i in range(Ho):                                         # static unroll (tiny Ho)
        acc = jnp.zeros((Wo, Cout), jnp.float32)
        for di in range(3):
            for dj in range(3):
                p = 2 * (di % 2) + (dj % 2)
                r0, c0 = di // 2, dj // 2
                lhs = x_ref[0, p, r0 + i, c0:c0 + Wo, :]        # (Wo, Cin) bf16
                acc = acc + jnp.dot(lhs, w_ref[3 * di + dj],
                                    preferred_element_type=jnp.float32)
        acc = acc + bias
        if relu:
            acc = jnp.maximum(acc, 0.0)
        o_ref[0, i] = acc.astype(o_ref.dtype)


def conv3x3_s2_pallas(x_nhwc, w_oihw, bias, relu=True):
    """3x3/stride-2/pad-1 conv.  No 9x im2col: one stride-phase repack in XLA, then the
    9 taps are reduced inside the kernel (f32 accumulation, bf16 MXU inputs/outputs)."""
    N, H, W, Cin = x_nhwc.shape
    assert H % 2 == 0 and W % 2 == 0, "stride-2 phase split needs even spatial dims"
    Cout = w_oihw.shape[0]
    Ho, Wo = H // 2, W // 2
    Hp2, Wp2 = (H + 2) // 2, (W + 2) // 2

    x_pad = jnp.pad(x_nhwc.astype(jnp.bfloat16), ((0, 0), (1, 1), (1, 1), (0, 0)))
    # phases[n, 2*pi+pj, r, c, :] = x_pad[n, 2r+pi, 2c+pj, :]   (single XLA repack pass)
    phases = (x_pad.reshape(N, Hp2, 2, Wp2, 2, Cin)
                   .transpose(0, 2, 4, 1, 3, 5)
                   .reshape(N, 4, Hp2, Wp2, Cin))
    # taps laid out (9, Cin, Cout), t = 3*di + dj
    w_taps = (jnp.transpose(w_oihw, (2, 3, 1, 0))
                 .reshape(9, Cin, Cout)
                 .astype(jnp.bfloat16))
    b2d = bias.astype(jnp.float32).reshape(1, Cout)

    flops = 2 * N * Ho * Wo * 9 * Cin * Cout
    bytes_accessed = (N * 4 * Hp2 * Wp2 * Cin * 2 + 9 * Cin * Cout * 2
                      + Cout * 4 + N * Ho * Wo * Cout * 2)

    return pl.pallas_call(
        functools.partial(conv3x3_s2_kernel, relu=relu),
        out_shape=jax.ShapeDtypeStruct((N, Ho, Wo, Cout), jnp.bfloat16),
        grid=(N,),
        in_specs=[
            pl.BlockSpec((1, 4, Hp2, Wp2, Cin), lambda n: (n, 0, 0, 0, 0)),
            pl.BlockSpec((9, Cin, Cout), lambda n: (0, 0, 0)),
            pl.BlockSpec((1, Cout), lambda n: (0, 0)),
        ],
        out_specs=pl.BlockSpec((1, Ho, Wo, Cout), lambda n: (n, 0, 0, 0)),
        compiler_params=pltpu.CompilerParams(
            dimension_semantics=("parallel",),
            vmem_limit_bytes=_vmem_limit_bytes()),
        cost_estimate=pl.CostEstimate(flops=flops, transcendentals=0,
                                      bytes_accessed=bytes_accessed),
    )(phases, w_taps, b2d)


# ------------------------------------------------------------------ general matmul

def matmul_bias_kernel(a_ref, w_ref, b_ref, o_ref, acc_ref, *, activation):
    """Tiled (TM,TK)@(TK,TN) with f32 VMEM accumulator; bias(+ReLU) in k-last epilogue."""
    @pl.when(pl.program_id(2) == 0)
    def _init():
        acc_ref[...] = jnp.zeros_like(acc_ref)

    acc_ref[...] += jnp.dot(a_ref[...], w_ref[...],
                            preferred_element_type=jnp.float32)

    @pl.when(pl.program_id(2) == pl.num_programs(2) - 1)
    def _epilogue():
        acc = acc_ref[...] + b_ref[...]
        if activation == "relu":
            acc = jnp.maximum(acc, 0.0)
        o_ref[...] = acc.astype(o_ref.dtype)


def pallas_matmul_bias(a, w, b, activation=None, out_dtype=jnp.bfloat16,
                       tm=1024, tn=256, tk=512, compute_dtype=jnp.bfloat16):
    """(M,K)@(K,N) + bias (+ReLU).  bf16 MXU inputs, f32 accumulation, bf16 output.
    Padded M rows / N cols are garbage (relu(bias)) and are sliced off before return."""
    M, K = a.shape
    K2, N = w.shape
    assert K == K2

    TM = min(tm, _round_up(M, 8))
    if M >= 16 and TM == _round_up(M, 8):
        # ensure >=2 M tiles so both TensorCores of a 2-TC chip (v7x) get a block
        TM = max(8, _round_up(TM // 2, 8))
    TK = min(tk, _round_up(K, 128))
    TN = min(tn, _round_up(N, 128))        # 256 default for v6e/v7x 256-wide MXU
    Mp, Kp, Np = _round_up(M, TM), _round_up(K, TK), _round_up(N, TN)

    a_p = jnp.pad(a.astype(compute_dtype), ((0, Mp - M), (0, Kp - K)))
    w_p = jnp.pad(w.astype(compute_dtype), ((0, Kp - K), (0, Np - N)))
    b_p = jnp.pad(b.astype(jnp.float32).reshape(1, N), ((0, 0), (0, Np - N)))

    flops = 2 * Mp * Np * Kp
    bytes_accessed = Mp * Kp * 2 + Kp * Np * 2 + Np * 4 + Mp * Np * 2

    grid = (Mp // TM, Np // TN, Kp // TK)
    out = pl.pallas_call(
        functools.partial(matmul_bias_kernel, activation=activation),
        out_shape=jax.ShapeDtypeStruct((Mp, Np), out_dtype),
        grid=grid,
        in_specs=[
            pl.BlockSpec((TM, TK), lambda i, j, k: (i, k)),
            pl.BlockSpec((TK, TN), lambda i, j, k: (k, j)),
            pl.BlockSpec((1, TN), lambda i, j, k: (0, j)),
        ],
        out_specs=pl.BlockSpec((TM, TN), lambda i, j, k: (i, j)),
        scratch_shapes=[pltpu.VMEM((TM, TN), jnp.float32)],
        compiler_params=pltpu.CompilerParams(
            dimension_semantics=("parallel", "parallel", "arbitrary"),
            vmem_limit_bytes=_vmem_limit_bytes()),
        cost_estimate=pl.CostEstimate(flops=flops, transcendentals=0,
                                      bytes_accessed=bytes_accessed),
    )(a_p, w_p, b_p)
    return out[:M, :N]


# ------------------------------------------------------------------ bilinear resize

def bilinear_matrix(out_size, in_size):
    """PyTorch F.interpolate(mode='bilinear', align_corners=False) weights."""
    scale = in_size / out_size
    dst = jnp.arange(out_size, dtype=jnp.float32)
    src = (dst + 0.5) * scale - 0.5
    src = jnp.maximum(src, 0.0)
    i0 = jnp.minimum(jnp.floor(src).astype(jnp.int32), in_size - 1)
    i1 = jnp.minimum(i0 + 1, in_size - 1)
    frac = src - i0.astype(jnp.float32)
    m = jnp.zeros((out_size, in_size), jnp.float32)
    rows = jnp.arange(out_size)
    m = m.at[rows, i0].add(1.0 - frac)
    m = m.at[rows, i1].add(frac)
    return m


def bilinear_kernel(f_ref, a_ref, t_ref, o_ref):
    """Per (image, row-block) bilinear resize.

    f: (1, h, w*C) bf16   a: (TH, h) bf16   t: (w*C, W*C) bf16   o: (1, TH, W*C) f32
    height interp: (TH,h)@(h,w*C); width interp: lane-dense (TH,w*C)@(w*C,W*C).
    """
    g = jnp.dot(a_ref[...], f_ref[0], preferred_element_type=jnp.float32)
    g = g.astype(jnp.bfloat16)
    out = jnp.dot(g, t_ref[...], preferred_element_type=jnp.float32)
    o_ref[0] = out.astype(o_ref.dtype)


def pallas_bilinear_resize_nhwc(feat_nhwc, H_out, W_out, th=256):
    """feat: (N, h, w, C) (real C, not lane-padded) -> (N, H_out, W_out, C) f32."""
    n, h, w, C = feat_nhwc.shape
    A = bilinear_matrix(H_out, h)                         # (H_out, h)
    B = bilinear_matrix(W_out, w)                         # (W_out, w)
    # width-interp operator on the (w*C) lane axis: T[(jw,c),(jW,c')] = B[jW,jw]*delta(c,c')
    T = jnp.einsum("Ww,cd->wcWd", B, jnp.eye(C, dtype=jnp.float32)).reshape(w * C, W_out * C)

    TH = min(th, _round_up(H_out, 8))                     # row tiling keeps blocks in VMEM
    Hp = _round_up(H_out, TH)
    A_p = jnp.pad(A, ((0, Hp - H_out), (0, 0))).astype(jnp.bfloat16)
    T_b = T.astype(jnp.bfloat16)
    f = feat_nhwc.reshape(n, h, w * C).astype(jnp.bfloat16)

    flops = 2 * n * Hp * h * (w * C) + 2 * n * Hp * (w * C) * (W_out * C)
    bytes_accessed = (f.size * 2 + A_p.size * 2 + T_b.size * 2
                      + n * Hp * W_out * C * 4)

    out = pl.pallas_call(
        bilinear_kernel,
        out_shape=jax.ShapeDtypeStruct((n, Hp, W_out * C), jnp.float32),
        grid=(n, Hp // TH),
        in_specs=[
            pl.BlockSpec((1, h, w * C), lambda i, r: (i, 0, 0)),
            pl.BlockSpec((TH, h), lambda i, r: (r, 0)),
            pl.BlockSpec((w * C, W_out * C), lambda i, r: (0, 0)),
        ],
        out_specs=pl.BlockSpec((1, TH, W_out * C), lambda i, r: (i, r, 0)),
        compiler_params=pltpu.CompilerParams(
            dimension_semantics=("parallel", "parallel"),
            vmem_limit_bytes=_vmem_limit_bytes()),
        cost_estimate=pl.CostEstimate(flops=flops, transcendentals=0,
                                      bytes_accessed=bytes_accessed),
    )(f, A_p, T_b)
    return out[:, :H_out, :].reshape(n, H_out, W_out, C)


# ------------------------------------------------------------------ model

def init_params(key, c_in, c_mid, num_classes):
    ks = jax.random.split(key, 6)

    def conv_w(k, cout, cin, kh, kw):
        fan_in = cin * kh * kw
        return jax.random.normal(k, (cout, cin, kh, kw), jnp.float32) / jnp.sqrt(fan_in)

    return {
        "w1": conv_w(ks[0], c_mid, c_in, 3, 3),
        "b1": 0.01 * jax.random.normal(ks[1], (c_mid,), jnp.float32),
        "w2": conv_w(ks[2], c_mid, c_mid, 3, 3),
        "b2": 0.01 * jax.random.normal(ks[3], (c_mid,), jnp.float32),
        "wc": conv_w(ks[4], num_classes, c_mid, 1, 1),
        "bc": 0.01 * jax.random.normal(ks[5], (num_classes,), jnp.float32),
    }


def deeplabv3_forward(params, x_nchw):
    """Mirrors Deeplabv3.forward: backbone -> classifier -> bilinear upsample.  NCHW out."""
    N, Cin, H, W = x_nchw.shape
    x = jnp.transpose(x_nchw, (0, 2, 3, 1))                              # -> NHWC

    # backbone (bf16 activations throughout; f32 accumulation inside the kernels)
    x = conv3x3_s2_pallas(x, params["w1"], params["b1"], relu=True)       # (N,H/2,W/2,Cmid)
    x = conv3x3_s2_pallas(x, params["w2"], params["b2"], relu=True)       # (N,H/4,W/4,Cmid)

    # classifier (1x1 conv as matmul), sliced to the real class count before the resize
    n, h, w, c = x.shape
    num_classes = params["wc"].shape[0]
    wc = params["wc"].reshape(num_classes, c).T                           # (c, num_classes)
    logits = pallas_matmul_bias(x.reshape(n * h * w, c), wc, params["bc"],
                                activation=None, out_dtype=jnp.bfloat16)  # (n*h*w, ncls)
    logits = logits.reshape(n, h, w, num_classes)

    # F.interpolate(size=input_shape, mode='bilinear', align_corners=False)
    out_nhwc = pallas_bilinear_resize_nhwc(logits, H, W)                  # (n, H, W, ncls)
    return jnp.transpose(out_nhwc, (0, 3, 1, 2))                          # -> NCHW


# ------------------------------------------------------------------ reference

def im2col_nhwc(x_nhwc, kh, kw, stride, pad):
    x = jnp.pad(x_nhwc, ((0, 0), (pad, pad), (pad, pad), (0, 0)))
    N, Hp, Wp, C = x.shape
    Ho = (Hp - kh) // stride + 1
    Wo = (Wp - kw) // stride + 1
    patches = []
    for di in range(kh):
        for dj in range(kw):
            patches.append(
                x[:, di:di + Ho * stride:stride, dj:dj + Wo * stride:stride, :])
    cols = jnp.stack(patches, axis=3).reshape(N, Ho, Wo, kh * kw * C)
    return cols, Ho, Wo


def reference_forward(params, x_nchw):
    """Pure-jnp reference with the same bf16-input / f32-accumulate discipline; the
    width-interp uses B directly (not the kron-style operator) as a cross-check."""
    N, Cin, H, W = x_nchw.shape
    x = jnp.transpose(x_nchw, (0, 2, 3, 1)).astype(jnp.bfloat16)

    def mm(a, w):
        return jnp.dot(a.astype(jnp.bfloat16), w.astype(jnp.bfloat16),
                       preferred_element_type=jnp.float32)

    def conv_ref(x, w, b, stride, pad, relu):
        Cout, Cin_, kh, kw = w.shape
        cols, Ho, Wo = im2col_nhwc(x, kh, kw, stride, pad)
        wm = jnp.transpose(w, (2, 3, 1, 0)).reshape(kh * kw * Cin_, Cout)
        y = mm(cols.reshape(-1, kh * kw * Cin_), wm) + b[None].astype(jnp.float32)
        if relu:
            y = jnp.maximum(y, 0.0)
        return y.astype(jnp.bfloat16).reshape(x.shape[0], Ho, Wo, Cout)

    x = conv_ref(x, params["w1"], params["b1"], 2, 1, True)
    x = conv_ref(x, params["w2"], params["b2"], 2, 1, True)

    n, h, w, c = x.shape
    ncls = params["wc"].shape[0]
    y = mm(x.reshape(-1, c), params["wc"].reshape(ncls, c).T) + params["bc"][None]
    y = y.astype(jnp.bfloat16).reshape(n, h, w, ncls)

    A = bilinear_matrix(H, h).astype(jnp.bfloat16)
    B = bilinear_matrix(W, w).astype(jnp.bfloat16)
    g = jnp.einsum("Hh,nhwc->nHwc", A, y,
                   preferred_element_type=jnp.float32).astype(jnp.bfloat16)
    out = jnp.einsum("nHwc,Ww->nHWc", g, B, preferred_element_type=jnp.float32)
    return jnp.transpose(out, (0, 3, 1, 2))


# ------------------------------------------------------------------ main

if __name__ == "__main__":
    N, C_IN, H, W = 2, 4, 16, 16
    C_MID, NUM_CLASSES = 32, 8

    key = jax.random.PRNGKey(0)
    kx, kp = jax.random.split(key)
    x = jax.random.normal(kx, (N, C_IN, H, W), jnp.float32)
    params = init_params(kp, C_IN, C_MID, NUM_CLASSES)

    out = jax.block_until_ready(jax.jit(deeplabv3_forward)(params, x))
    assert out.shape == (N, NUM_CLASSES, H, W), out.shape

    ref = jax.block_until_ready(jax.jit(reference_forward)(params, x))
    max_err = float(jnp.max(jnp.abs(out - ref)))
    assert jnp.allclose(out, ref, atol=2e-2, rtol=2e-2), max_err

    print("KERNEL_OK")
</pallas_src>

<mosaic_0001>
module attributes {stable_mosaic.version = 11 : i64} {
  func.func private @main(%arg0: i32) attributes {dimension_semantics = [#tpu.dimension_semantics<core_parallel>], iteration_bounds = array<i64: 2>, tpu.core_type = #tpu.core_type<sc_scalar_subcore>, window_params = []} {
    return
  }
}

module attributes {stable_mosaic.version = 11 : i64} {
  func.func private @main(%arg0: i32) attributes {dimension_semantics = [#tpu.dimension_semantics<core_parallel>], iteration_bounds = array<i64: 2>, tpu.core_type = #tpu.core_type<sc_scalar_subcore>, window_params = []} {
    return
  }
}

module attributes {stable_mosaic.version = 11 : i64} {
  func.func @conv3x3_s2_kernel(%arg0: i32, %arg1: memref<1x4x9x9x4xbf16, #tpu.memory_space<vmem>>, %arg2: memref<9x4x32xbf16, #tpu.memory_space<vmem>>, %arg3: memref<1x32xf32, #tpu.memory_space<vmem>>, %arg4: memref<1x8x8x32xbf16, #tpu.memory_space<vmem>>) attributes {dimension_semantics = [#tpu.dimension_semantics<parallel>], iteration_bounds = array<i64: 2>, scalar_prefetch = 0 : i64, scratch_operands = 0 : i64, tpu.core_type = #tpu.core_type<tc>, window_params = [{transform_indices = @transform_0, window_bounds = array<i64: 1, 4, 9, 9, 4>}, {pipeline_mode = #tpu.pipeline_mode<synchronous>, transform_indices = @transform_1, window_bounds = array<i64: 9, 4, 32>}, {pipeline_mode = #tpu.pipeline_mode<synchronous>, transform_indices = @transform_2, window_bounds = array<i64: 1, 32>}, {transform_indices = @transform_3, window_bounds = array<i64: 1, 8, 8, 32>}]} {
    %c0 = arith.constant 0 : index
    %c0_0 = arith.constant 0 : index
    %0 = vector.load %arg3[%c0, %c0_0] : memref<1x32xf32, #tpu.memory_space<vmem>>, vector<1x32xf32>
    %cst = arith.constant 0.000000e+00 : f32
    %1 = vector.broadcast %cst : f32 to vector<8x32xf32>
    %c0_1 = arith.constant 0 : index
    %c0_2 = arith.constant 0 : index
    %c0_3 = arith.constant 0 : index
    %c0_4 = arith.constant 0 : index
    %c0_5 = arith.constant 0 : index
    %2 = vector.load %arg1[%c0_1, %c0_2, %c0_3, %c0_4, %c0_5] : memref<1x4x9x9x4xbf16, #tpu.memory_space<vmem>>, vector<1x1x1x8x4xbf16>
    %3 = vector.shape_cast %2 : vector<1x1x1x8x4xbf16> to vector<8x4xbf16>
    %c0_6 = arith.constant 0 : index
    %c0_7 = arith.constant 0 : index
    %c0_8 = arith.constant 0 : index
    %4 = vector.load %arg2[%c0_6, %c0_7, %c0_8] : memref<9x4x32xbf16, #tpu.memory_space<vmem>>, vector<1x4x32xbf16>
    %5 = vector.shape_cast %4 : vector<1x4x32xbf16> to vector<4x32xbf16>
    %cst_9 = arith.constant dense<0.000000e+00> : vector<8x32xf32>
    %6 = tpu.matmul %3, %5, %cst_9 {dimension_numbers = #tpu.dot_dimension_numbers<[1], [0], [0], [1], [0, 0, 1, 1], [], []>} : vector<8x4xbf16>, vector<4x32xbf16>, vector<8x32xf32> -> vector<8x32xf32>
    %7 = arith.addf %1, %6 : vector<8x32xf32>
    %c0_10 = arith.constant 0 : index
    %c1 = arith.constant 1 : index
    %c0_11 = arith.constant 0 : index
    %c0_12 = arith.constant 0 : index
    %c0_13 = arith.constant 0 : index
    %8 = vector.load %arg1[%c0_10, %c1, %c0_11, %c0_12, %c0_13] : memref<1x4x9x9x4xbf16, #tpu.memory_space<vmem>>, vector<1x1x1x8x4xbf16>
    %9 = vector.shape_cast %8 : vector<1x1x1x8x4xbf16> to vector<8x4xbf16>
    %c1_14 = arith.constant 1 : index
    %c0_15 = arith.constant 0 : index
    %c0_16 = arith.constant 0 : index
    %10 = vector.load %arg2[%c1_14, %c0_15, %c0_16] : memref<9x4x32xbf16, #tpu.memory_space<vmem>>, vector<1x4x32xbf16>
    %11 = vector.shape_cast %10 : vector<1x4x32xbf16> to vector<4x32xbf16>
    %cst_17 = arith.constant dense<0.000000e+00> : vector<8x32xf32>
    %12 = tpu.matmul %9, %11, %cst_17 {dimension_numbers = #tpu.dot_dimension_numbers<[1], [0], [0], [1], [0, 0, 1, 1], [], []>} : vector<8x4xbf16>, vector<4x32xbf16>, vector<8x32xf32> -> vector<8x32xf32>
    %13 = arith.addf %7, %12 : vector<8x32xf32>
    %c0_18 = arith.constant 0 : index
    %c0_19 = arith.constant 0 : index
    %c0_20 = arith.constant 0 : index
    %c1_21 = arith.constant 1 : index
    %c0_22 = arith.constant 0 : index
    %14 = vector.load %arg1[%c0_18, %c0_19, %c0_20, %c1_21, %c0_22] : memref<1x4x9x9x4xbf16, #tpu.memory_space<vmem>>, vector<1x1x1x8x4xbf16>
    %15 = vector.shape_cast %14 : vector<1x1x1x8x4xbf16> to vector<8x4xbf16>
    %c2 = arith.constant 2 : index
    %c0_23 = arith.constant 0 : index
    %c0_24 = arith.constant 0 : index
    %16 = vector.load %arg2[%c2, %c0_23, %c0_24] : memref<9x4x32xbf16, #tpu.memory_space<vmem>>, vector<1x4x32xbf16>
    %17 = vector.shape_cast %16 : vector<1x4x32xbf16> to vector<4x32xbf16>
    %cst_25 = arith.constant dense<0.000000e+00> : vector<8x32xf32>
    %18 = tpu.matmul %15, %17, %cst_25 {dimension_numbers = #tpu.dot_dimension_numbers<[1], [0], [0], [1], [0, 0, 1, 1], [], []>} : vector<8x4xbf16>, vector<4x32xbf16>, vector<8x32xf32> -> vector<8x32xf32>
    %19 = arith.addf %13, %18 : vector<8x32xf32>
    %c0_26 = arith.constant 0 : index
    %c2_27 = arith.constant 2 : index
    %c0_28 = arith.constant 0 : index
    %c0_29 = arith.constant 0 : index
    %c0_30 = arith.constant 0 : index
    %20 = vector.load %arg1[%c0_26, %c2_27, %c0_28, %c0_29, %c0_30] : memref<1x4x9x9x4xbf16, #tpu.memory_space<vmem>>, vector<1x1x1x8x4xbf16>
    %21 = vector.shape_cast %20 : vector<1x1x1x8x4xbf16> to vector<8x4xbf16>
    %c3 = arith.constant 3 : index
    %c0_31 = arith.constant 0 : index
    %c0_32 = arith.constant 0 : index
    %22 = vector.load %arg2[%c3, %c0_31, %c0_32] : memref<9x4x32xbf16, #tpu.memory_space<vmem>>, vector<1x4x32xbf16>
    %23 = vector.shape_cast %22 : vector<1x4x32xbf16> to vector<4x32xbf16>
    %cst_33 = arith.constant dense<0.000000e+00> : vector<8x32xf32>
    %24 = tpu.matmul %21, %23, %cst_33 {dimension_numbers = #tpu.dot_dimension_numbers<[1], [0], [0], [1], [0, 0, 1, 1], [], []>} : vector<8x4xbf16>, vector<4x32xbf16>, vector<8x32xf32> -> vector<8x32xf32>
    %25 = arith.addf %19, %24 : vector<8x32xf32>
    %c0_34 = arith.constant 0 : index
    %c3_35 = arith.constant 3 : index
    %c0_36 = arith.constant 0 : index
    %c0_37 = arith.constant 0 : index
    %c0_38 = arith.constant 0 : index
    %26 = vector.load %arg1[%c0_34, %c3_35, %c0_36, %c0_37, %c0_38] : memref<1x4x9x9x4xbf16, #tpu.memory_space<vmem>>, vector<1x1x1x8x4xbf16>
    %27 = vector.shape_cast %26 : vector<1x1x1x8x4xbf16> to vector<8x4xbf16>
    %c4 = arith.constant 4 : index
    %c0_39 = arith.constant 0 : index
    %c0_40 = arith.constant 0 : index
    %28 = vector.load %arg2[%c4, %c0_39, %c0_40] : memref<9x4x32xbf16, #tpu.memory_space<vmem>>, vector<1x4x32xbf16>
    %29 = vector.shape_cast %28 : vector<1x4x32xbf16> to vector<4x32xbf16>
    %cst_41 = arith.constant dense<0.000000e+00> : vector<8x32xf32>
    %30 = tpu.matmul %27, %29, %cst_41 {dimension_numbers = #tpu.dot_dimension_numbers<[1], [0], [0], [1], [0, 0, 1, 1], [], []>} : vector<8x4xbf16>, vector<4x32xbf16>, vector<8x32xf32> -> vector<8x32xf32>
    %31 = arith.addf %25, %30 : vector<8x32xf32>
    %c0_42 = arith.constant 0 : index
    %c2_43 = arith.constant 2 : index
    %c0_44 = arith.constant 0 : index
    %c1_45 = arith.constant 1 : index
    %c0_46 = arith.constant 0 : index
    %32 = vector.load %arg1[%c0_42, %c2_43, %c0_44, %c1_45, %c0_46] : memref<1x4x9x9x4xbf16, #tpu.memory_space<vmem>>, vector<1x1x1x8x4xbf16>
    %33 = vector.shape_cast %32 : vector<1x1x1x8x4xbf16> to vector<8x4xbf16>
    %c5 = arith.constant 5 : index
    %c0_47 = arith.constant 0 : index
    %c0_48 = arith.constant 0 : index
    %34 = vector.load %arg2[%c5, %c0_47, %c0_48] : memref<9x4x32xbf16, #tpu.memory_space<vmem>>, vector<1x4x32xbf16>
    %35 = vector.shape_cast %34 : vector<1x4x32xbf16> to vector<4x32xbf16>
    %cst_49 = arith.constant dense<0.000000e+00> : vector<8x32xf32>
    %36 = tpu.matmul %33, %35, %cst_49 {dimension_numbers = #tpu.dot_dimension_numbers<[1], [0], [0], [1], [0, 0, 1, 1], [], []>} : vector<8x4xbf16>, vector<4x32xbf16>, vector<8x32xf32> -> vector<8x32xf32>
    %37 = arith.addf %31, %36 : vector<8x32xf32>
    %c0_50 = arith.constant 0 : index
    %c0_51 = arith.constant 0 : index
    %c1_52 = arith.constant 1 : index
    %c0_53 = arith.constant 0 : index
    %c0_54 = arith.constant 0 : index
    %38 = vector.load %arg1[%c0_50, %c0_51, %c1_52, %c0_53, %c0_54] : memref<1x4x9x9x4xbf16, #tpu.memory_space<vmem>>, vector<1x1x1x8x4xbf16>
    %39 = vector.shape_cast %38 : vector<1x1x1x8x4xbf16> to vector<8x4xbf16>
    %c6 = arith.constant 6 : index
    %c0_55 = arith.constant 0 : index
    %c0_56 = arith.constant 0 : index
    %40 = vector.load %arg2[%c6, %c0_55, %c0_56] : memref<9x4x32xbf16, #tpu.memory_space<vmem>>, vector<1x4x32xbf16>
    %41 = vector.shape_cast %40 : vector<1x4x32xbf16> to vector<4x32xbf16>
    %cst_57 = arith.constant dense<0.000000e+00> : vector<8x32xf32>
    %42 = tpu.matmul %39, %41, %cst_57 {dimension_numbers = #tpu.dot_dimension_numbers<[1], [0], [0], [1], [0, 0, 1, 1], [], []>} : vector<8x4xbf16>, vector<4x32xbf16>, vector<8x32xf32> -> vector<8x32xf32>
    %43 = arith.addf %37, %42 : vector<8x32xf32>
    %c0_58 = arith.constant 0 : index
    %c1_59 = arith.constant 1 : index
    %c1_60 = arith.constant 1 : index
    %c0_61 = arith.constant 0 : index
    %c0_62 = arith.constant 0 : index
    %44 = vector.load %arg1[%c0_58, %c1_59, %c1_60, %c0_61, %c0_62] : memref<1x4x9x9x4xbf16, #tpu.memory_space<vmem>>, vector<1x1x1x8x4xbf16>
    %45 = vector.shape_cast %44 : vector<1x1x1x8x4xbf16> to vector<8x4xbf16>
    %c7 = arith.constant 7 : index
    %c0_63 = arith.constant 0 : index
    %c0_64 = arith.constant 0 : index
    %46 = vector.load %arg2[%c7, %c0_63, %c0_64] : memref<9x4x32xbf16, #tpu.memory_space<vmem>>, vector<1x4x32xbf16>
    %47 = vector.shape_cast %46 : vector<1x4x32xbf16> to vector<4x32xbf16>
    %cst_65 = arith.constant dense<0.000000e+00> : vector<8x32xf32>
    %48 = tpu.matmul %45, %47, %cst_65 {dimension_numbers = #tpu.dot_dimension_numbers<[1], [0], [0], [1], [0, 0, 1, 1], [], []>} : vector<8x4xbf16>, vector<4x32xbf16>, vector<8x32xf32> -> vector<8x32xf32>
    %49 = arith.addf %43, %48 : vector<8x32xf32>
    %c0_66 = arith.constant 0 : index
    %c0_67 = arith.constant 0 : index
    %c1_68 = arith.constant 1 : index
    %c1_69 = arith.constant 1 : index
    %c0_70 = arith.constant 0 : index
    %50 = vector.load %arg1[%c0_66, %c0_67, %c1_68, %c1_69, %c0_70] : memref<1x4x9x9x4xbf16, #tpu.memory_space<vmem>>, vector<1x1x1x8x4xbf16>
    %51 = vector.shape_cast %50 : vector<1x1x1x8x4xbf16> to vector<8x4xbf16>
    %c8 = arith.constant 8 : index
    %c0_71 = arith.constant 0 : index
    %c0_72 = arith.constant 0 : index
    %52 = vector.load %arg2[%c8, %c0_71, %c0_72] : memref<9x4x32xbf16, #tpu.memory_space<vmem>>, vector<1x4x32xbf16>
    %53 = vector.shape_cast %52 : vector<1x4x32xbf16> to vector<4x32xbf16>
    %cst_73 = arith.constant dense<0.000000e+00> : vector<8x32xf32>
    %54 = tpu.matmul %51, %53, %cst_73 {dimension_numbers = #tpu.dot_dimension_numbers<[1], [0], [0], [1], [0, 0, 1, 1], [], []>} : vector<8x4xbf16>, vector<4x32xbf16>, vector<8x32xf32> -> vector<8x32xf32>
    %55 = arith.addf %49, %54 : vector<8x32xf32>
    %56 = vector.broadcast %0 : vector<1x32xf32> to vector<8x32xf32>
    %57 = arith.addf %55, %56 : vector<8x32xf32>
    %cst_74 = arith.constant 0.000000e+00 : f32
    %58 = vector.broadcast %cst_74 : f32 to vector<8x32xf32>
    %59 = arith.maximumf %57, %58 : vector<8x32xf32>
    %60 = arith.truncf %59 : vector<8x32xf32> to vector<8x32xbf16>
    %c0_75 = arith.constant 0 : index
    %c0_76 = arith.constant 0 : index
    %c0_77 = arith.constant 0 : index
    %c0_78 = arith.constant 0 : index
    %61 = vector.load %arg4[%c0_75, %c0_76, %c0_77, %c0_78] : memref<1x8x8x32xbf16, #tpu.memory_space<vmem>>, vector<1x1x8x32xbf16>
    %62 = vector.shape_cast %61 : vector<1x1x8x32xbf16> to vector<8x32xbf16>
    %63 = vector.shape_cast %60 : vector<8x32xbf16> to vector<1x1x8x32xbf16>
    tpu.vector_store %arg4[%c0_75, %c0_76, %c0_77, %c0_78], %63 {strides = array<i32>} : memref<1x8x8x32xbf16, #tpu.memory_space<vmem>>, vector<1x1x8x32xbf16>,
    %cst_79 = arith.constant 0.000000e+00 : f32
    %64 = vector.broadcast %cst_79 : f32 to vector<8x32xf32>
    %c0_80 = arith.constant 0 : index
    %c0_81 = arith.constant 0 : index
    %c1_82 = arith.constant 1 : index
    %c0_83 = arith.constant 0 : index
    %c0_84 = arith.constant 0 : index
    %65 = vector.load %arg1[%c0_80, %c0_81, %c1_82, %c0_83, %c0_84] : memref<1x4x9x9x4xbf16, #tpu.memory_space<vmem>>, vector<1x1x1x8x4xbf16>
    %66 = vector.shape_cast %65 : vector<1x1x1x8x4xbf16> to vector<8x4xbf16>
    %c0_85 = arith.constant 0 : index
    %c0_86 = arith.constant 0 : index
    %c0_87 = arith.constant 0 : index
    %67 = vector.load %arg2[%c0_85, %c0_86, %c0_87] : memref<9x4x32xbf16, #tpu.memory_space<vmem>>, vector<1x4x32xbf16>
    %68 = vector.shape_cast %67 : vector<1x4x32xbf16> to vector<4x32xbf16>
    %cst_88 = arith.constant dense<0.000000e+00> : vector<8x32xf32>
    %69 = tpu.matmul %66, %68, %cst_88 {dimension_numbers = #tpu.dot_dimension_numbers<[1], [0], [0], [1], [0, 0, 1, 1], [], []>} : vector<8x4xbf16>, vector<4x32xbf16>, vector<8x32xf32> -> vector<8x32xf32>
    %70 = arith.addf %64, %69 : vector<8x32xf32>
    %c0_89 = arith.constant 0 : index
    %c1_90 = arith.constant 1 : index
    %c1_91 = arith.constant 1 : index
    %c0_92 = arith.constant 0 : index
    %c0_93 = arith.constant 0 : index
    %71 = vector.load %arg1[%c0_89, %c1_90, %c1_91, %c0_92, %c0_93] : memref<1x4x9x9x4xbf16, #tpu.memory_space<vmem>>, vector<1x1x1x8x4xbf16>
    %72 = vector.shape_cast %71 : vector<1x1x1x8x4xbf16> to vector<8x4xbf16>
    %c1_94 = arith.constant 1 : index
    %c0_95 = arith.constant 0 : index
    %c0_96 = arith.constant 0 : index
    %73 = vector.load %arg2[%c1_94, %c0_95, %c0_96] : memref<9x4x32xbf16, #tpu.memory_space<vmem>>, vector<1x4x32xbf16>
    %74 = vector.shape_cast %73 : vector<1x4x32xbf16> to vector<4x32xbf16>
    %cst_97 = arith.constant dense<0.000000e+00> : vector<8x32xf32>
    %75 = tpu.matmul %72, %74, %cst_97 {dimension_numbers = #tpu.dot_dimension_numbers<[1], [0], [0], [1], [0, 0, 1, 1], [], []>} : vector<8x4xbf16>, vector<4x32xbf16>, vector<8x32xf32> -> vector<8x32xf32>
    %76 = arith.addf %70, %75 : vector<8x32xf32>
    %c0_98 = arith.constant 0 : index
    %c0_99 = arith.constant 0 : index
    %c1_100 = arith.constant 1 : index
    %c1_101 = arith.constant 1 : index
    %c0_102 = arith.constant 0 : index
    %77 = vector.load %arg1[%c0_98, %c0_99, %c1_100, %c1_101, %c0_102] : memref<1x4x9x9x4xbf16, #tpu.memory_space<vmem>>, vector<1x1x1x8x4xbf16>
    %78 = vector.shape_cast %77 : vector<1x1x1x8x4xbf16> to vector<8x4xbf16>
    %c2_103 = arith.constant 2 : index
    %c0_104 = arith.constant 0 : index
    %c0_105 = arith.constant 0 : index
    %79 = vector.load %arg2[%c2_103, %c0_104, %c0_105] : memref<9x4x32xbf16, #tpu.memory_space<vmem>>, vector<1x4x32xbf16>
    %80 = vector.shape_cast %79 : vector<1x4x32xbf16> to vector<4x32xbf16>
    %cst_106 = arith.constant dense<0.000000e+00> : vector<8x32xf32>
    %81 = tpu.matmul %78, %80, %cst_106 {dimension_numbers = #tpu.dot_dimension_numbers<[1], [0], [0], [1], [0, 0, 1, 1], [], []>} : vector<8x4xbf16>, vector<4x32xbf16>, vector<8x32xf32> -> vector<8x32xf32>
    %82 = arith.addf %76, %81 : vector<8x32xf32>
    %c0_107 = arith.constant 0 : index
    %c2_108 = arith.constant 2 : index
    %c1_109 = arith.constant 1 : index
    %c0_110 = arith.constant 0 : index
    %c0_111 = arith.constant 0 : index
    %83 = vector.load %arg1[%c0_107, %c2_108, %c1_109, %c0_110, %c0_111] : memref<1x4x9x9x4xbf16, #tpu.memory_space<vmem>>, vector<1x1x1x8x4xbf16>
    %84 = vector.shape_cast %83 : vector<1x1x1x8x4xbf16> to vector<8x4xbf16>
    %c3_112 = arith.constant 3 : index
    %c0_113 = arith.constant 0 : index
    %c0_114 = arith.constant 0 : index
    %85 = vector.load %arg2[%c3_112, %c0_113, %c0_114] : memref<9x4x32xbf16, #tpu.memory_space<vmem>>, vector<1x4x32xbf16>
    %86 = vector.shape_cast %85 : vector<1x4x32xbf16> to vector<4x32xbf16>
    %cst_115 = arith.constant dense<0.000000e+00> : vector<8x32xf32>
    %87 = tpu.matmul %84, %86, %cst_115 {dimension_numbers = #tpu.dot_dimension_numbers<[1], [0], [0], [1], [0, 0, 1, 1], [], []>} : vector<8x4xbf16>, vector<4x32xbf16>, vector<8x32xf32> -> vector<8x32xf32>
    %88 = arith.addf %82, %87 : vector<8x32xf32>
    %c0_116 = arith.constant 0 : index
    %c3_117 = arith.constant 3 : index
    %c1_118 = arith.constant 1 : index
    %c0_119 = arith.constant 0 : index
    %c0_120 = arith.constant 0 : index
    %89 = vector.load %arg1[%c0_116, %c3_117, %c1_118, %c0_119, %c0_120] : memref<1x4x9x9x4xbf16, #tpu.memory_space<vmem>>, vector<1x1x1x8x4xbf16>
    %90 = vector.shape_cast %89 : vector<1x1x1x8x4xbf16> to vector<8x4xbf16>
    %c4_121 = arith.constant 4 : index
    %c0_122 = arith.constant 0 : index
    %c0_123 = arith.constant 0 : index
    %91 = vector.load %arg2[%c4_121, %c0_122, %c0_123] : memref<9x4x32xbf16, #tpu.memory_space<vmem>>, vector<1x4x32xbf16>
    %92 = vector.shape_cast %91 : vector<1x4x32xbf16> to vector<4x32xbf16>
    %cst_124 = arith.constant dense<0.000000e+00> : vector<8x32xf32>
    %93 = tpu.matmul %90, %92, %cst_124 {dimension_numbers = #tpu.dot_dimension_numbers<[1], [0], [0], [1], [0, 0, 1, 1], [], []>} : vector<8x4xbf16>, vector<4x32xbf16>, vector<8x32xf32> -> vector<8x32xf32>
    %94 = arith.addf %88, %93 : vector<8x32xf32>
    %c0_125 = arith.constant 0 : index
    %c2_126 = arith.constant 2 : index
    %c1_127 = arith.constant 1 : index
    %c1_128 = arith.constant 1 : index
    %c0_129 = arith.constant 0 : index
    %95 = vector.load %arg1[%c0_125, %c2_126, %c1_127, %c1_128, %c0_129] : memref<1x4x9x9x4xbf16, #tpu.memory_space<vmem>>, vector<1x1x1x8x4xbf16>
    %96 = vector.shape_cast %95 : vector<1x1x1x8x4xbf16> to vector<8x4xbf16>
    %c5_130 = arith.constant 5 : index
    %c0_131 = arith.constant 0 : index
    %c0_132 = arith.constant 0 : index
    %97 = vector.load %arg2[%c5_130, %c0_131, %c0_132] : memref<9x4x32xbf16, #tpu.memory_space<vmem>>, vector<1x4x32xbf16>
    %98 = vector.shape_cast %97 : vector<1x4x32xbf16> to vector<4x32xbf16>
    %cst_133 = arith.constant dense<0.000000e+00> : vector<8x32xf32>
    %99 = tpu.matmul %96, %98, %cst_133 {dimension_numbers = #tpu.dot_dimension_numbers<[1], [0], [0], [1], [0, 0, 1, 1], [], []>} : vector<8x4xbf16>, vector<4x32xbf16>, vector<8x32xf32> -> vector<8x32xf32>
    %100 = arith.addf %94, %99 : vector<8x32xf32>
    %c0_134 = arith.constant 0 : index
    %c0_135 = arith.constant 0 : index
    %c2_136 = arith.constant 2 : index
    %c0_137 = arith.constant 0 : index
    %c0_138 = arith.constant 0 : index
    %101 = vector.load %arg1[%c0_134, %c0_135, %c2_136, %c0_137, %c0_138] : memref<1x4x9x9x4xbf16, #tpu.memory_space<vmem>>, vector<1x1x1x8x4xbf16>
    %102 = vector.shape_cast %101 : vector<1x1x1x8x4xbf16> to vector<8x4xbf16>
    %c6_139 = arith.constant 6 : index
    %c0_140 = arith.constant 0 : index
    %c0_141 = arith.constant 0 : index
    %103 = vector.load %arg2[%c6_139, %c0_140, %c0_141] : memref<9x4x32xbf16, #tpu.memory_space<vmem>>, vector<1x4x32xbf16>
    %104 = vector.shape_cast %103 : vector<1x4x32xbf16> to vector<4x32xbf16>
    %cst_142 = arith.constant dense<0.000000e+00> : vector<8x32xf32>
    %105 = tpu.matmul %102, %104, %cst_142 {dimension_numbers = #tpu.dot_dimension_numbers<[1], [0], [0], [1], [0, 0, 1, 1], [], []>} : vector<8x4xbf16>, vector<4x32xbf16>, vector<8x32xf32> -> vector<8x32xf32>
    %106 = arith.addf %100, %105 : vector<8x32xf32>
    %c0_143 = arith.constant 0 : index
    %c1_144 = arith.constant 1 : index
    %c2_145 = arith.constant 2 : index
    %c0_146 = arith.constant 0 : index
    %c0_147 = arith.constant 0 : index
    %107 = vector.load %arg1[%c0_143, %c1_144, %c2_145, %c0_146, %c0_147] : memref<1x4x9x9x4xbf16, #tpu.memory_space<vmem>>, vector<1x1x1x8x4xbf16>
    %108 = vector.shape_cast %107 : vector<1x1x1x8x4xbf16> to vector<8x4xbf16>
    %c7_148 = arith.constant 7 : index
    %c0_149 = arith.constant 0 : index
    %c0_150 = arith.constant 0 : index
    %109 = vector.load %arg2[%c7_148, %c0_149, %c0_150] : memref<9x4x32xbf16, #tpu.memory_space<vmem>>, vector<1x4x32xbf16>
    %110 = vector.shape_cast %109 : vector<1x4x32xbf16> to vector<4x32xbf16>
    %cst_151 = arith.constant dense<0.000000e+00> : vector<8x32xf32>
    %111 = tpu.matmul %108, %110, %cst_151 {dimension_numbers = #tpu.dot_dimension_numbers<[1], [0], [0], [1], [0, 0, 1, 1], [], []>} : vector<8x4xbf16>, vector<4x32xbf16>, vector<8x32xf32> -> vector<8x32xf32>
    %112 = arith.addf %106, %111 : vector<8x32xf32>
    %c0_152 = arith.constant 0 : index
    %c0_153 = arith.constant 0 : index
    %c2_154 = arith.constant 2 : index
    %c1_155 = arith.constant 1 : index
    %c0_156 = arith.constant 0 : index
    %113 = vector.load %arg1[%c0_152, %c0_153, %c2_154, %c1_155, %c0_156] : memref<1x4x9x9x4xbf16, #tpu.memory_space<vmem>>, vector<1x1x1x8x4xbf16>
    %114 = vector.shape_cast %113 : vector<1x1x1x8x4xbf16> to vector<8x4xbf16>
    %c8_157 = arith.constant 8 : index
    %c0_158 = arith.constant 0 : index
    %c0_159 = arith.constant 0 : index
    %115 = vector.load %arg2[%c8_157, %c0_158, %c0_159] : memref<9x4x32xbf16, #tpu.memory_space<vmem>>, vector<1x4x32xbf16>
    %116 = vector.shape_cast %115 : vector<1x4x32xbf16> to vector<4x32xbf16>
    %cst_160 = arith.constant dense<0.000000e+00> : vector<8x32xf32>
    %117 = tpu.matmul %114, %116, %cst_160 {dimension_numbers = #tpu.dot_dimension_numbers<[1], [0], [0], [1], [0, 0, 1, 1], [], []>} : vector<8x4xbf16>, vector<4x32xbf16>, vector<8x32xf32> -> vector<8x32xf32>
    %118 = arith.addf %112, %117 : vector<8x32xf32>
    %119 = vector.broadcast %0 : vector<1x32xf32> to vector<8x32xf32>
    %120 = arith.addf %118, %119 : vector<8x32xf32>
    %cst_161 = arith.constant 0.000000e+00 : f32
    %121 = vector.broadcast %cst_161 : f32 to vector<8x32xf32>
    %122 = arith.maximumf %120, %121 : vector<8x32xf32>
    %123 = arith.truncf %122 : vector<8x32xf32> to vector<8x32xbf16>
    %c0_162 = arith.constant 0 : index
    %c1_163 = arith.constant 1 : index
    %c0_164 = arith.constant 0 : index
    %c0_165 = arith.constant 0 : index
    %124 = vector.load %arg4[%c0_162, %c1_163, %c0_164, %c0_165] : memref<1x8x8x32xbf16, #tpu.memory_space<vmem>>, vector<1x1x8x32xbf16>
    %125 = vector.shape_cast %124 : vector<1x1x8x32xbf16> to vector<8x32xbf16>
    %126 = vector.shape_cast %123 : vector<8x32xbf16> to vector<1x1x8x32xbf16>
    tpu.vector_store %arg4[%c0_162, %c1_163, %c0_164, %c0_165], %126 {strides = array<i32>} : memref<1x8x8x32xbf16, #tpu.memory_space<vmem>>, vector<1x1x8x32xbf16>,
    %cst_166 = arith.constant 0.000000e+00 : f32
    %127 = vector.broadcast %cst_166 : f32 to vector<8x32xf32>
    %c0_167 = arith.constant 0 : index
    %c0_168 = arith.constant 0 : index
    %c2_169 = arith.constant 2 : index
    %c0_170 = arith.constant 0 : index
    %c0_171 = arith.constant 0 : index
    %128 = vector.load %arg1[%c0_167, %c0_168, %c2_169, %c0_170, %c0_171] : memref<1x4x9x9x4xbf16, #tpu.memory_space<vmem>>, vector<1x1x1x8x4xbf16>
    %129 = vector.shape_cast %128 : vector<1x1x1x8x4xbf16> to vector<8x4xbf16>
    %c0_172 = arith.constant 0 : index
    %c0_173 = arith.constant 0 : index
    %c0_174 = arith.constant 0 : index
    %130 = vector.load %arg2[%c0_172, %c0_173, %c0_174] : memref<9x4x32xbf16, #tpu.memory_space<vmem>>, vector<1x4x32xbf16>
    %131 = vector.shape_cast %130 : vector<1x4x32xbf16> to vector<4x32xbf16>
    %cst_175 = arith.constant dense<0.000000e+00> : vector<8x32xf32>
    %132 = tpu.matmul %129, %131, %cst_175 {dimension_numbers = #tpu.dot_dimension_numbers<[1], [0], [0], [1], [0, 0, 1, 1], [], []>} : vector<8x4xbf16>, vector<4x32xbf16>, vector<8x32xf32> -> vector<8x32xf32>
    %133 = arith.addf %127, %132 : vector<8x32xf32>
    %c0_176 = arith.constant 0 : index
    %c1_177 = arith.constant 1 : index
    %c2_178 = arith.constant 2 : index
    %c0_179 = arith.constant 0 : index
    %c0_180 = arith.constant 0 : index
    %134 = vector.load %arg1[%c0_176, %c1_177, %c2_178, %c0_179, %c0_180] : memref<1x4x9x9x4xbf16, #tpu.memory_space<vmem>>, vector<1x1x1x8x4xbf16>
    %135 = vector.shape_cast %134 : vector<1x1x1x8x4xbf16> to vector<8x4xbf16>
    %c1_181 = arith.constant 1 : index
    %c0_182 = arith.constant 0 : index
    %c0_183 = arith.constant 0 : index
    %136 = vector.load %arg2[%c1_181, %c0_182, %c0_183] : memref<9x4x32xbf16, #tpu.memory_space<vmem>>, vector<1x4x32xbf16>
    %137 = vector.shape_cast %136 : vector<1x4x32xbf16> to vector<4x32xbf16>
    %cst_184 = arith.constant dense<0.000000e+00> : vector<8x32xf32>
    %138 = tpu.matmul %135, %137, %cst_184 {dimension_numbers = #tpu.dot_dimension_numbers<[1], [0], [0], [1], [0, 0, 1, 1], [], []>} : vector<8x4xbf16>, vector<4x32xbf16>, vector<8x32xf32> -> vector<8x32xf32>
    %139 = arith.addf %133, %138 : vector<8x32xf32>
    %c0_185 = arith.constant 0 : index
    %c0_186 = arith.constant 0 : index
    %c2_187 = arith.constant 2 : index
    %c1_188 = arith.constant 1 : index
    %c0_189 = arith.constant 0 : index
    %140 = vector.load %arg1[%c0_185, %c0_186, %c2_187, %c1_188, %c0_189] : memref<1x4x9x9x4xbf16, #tpu.memory_space<vmem>>, vector<1x1x1x8x4xbf16>
    %141 = vector.shape_cast %140 : vector<1x1x1x8x4xbf16> to vector<8x4xbf16>
    %c2_190 = arith.constant 2 : index
    %c0_191 = arith.constant 0 : index
    %c0_192 = arith.constant 0 : index
    %142 = vector.load %arg2[%c2_190, %c0_191, %c0_192] : memref<9x4x32xbf16, #tpu.memory_space<vmem>>, vector<1x4x32xbf16>
    %143 = vector.shape_cast %142 : vector<1x4x32xbf16> to vector<4x32xbf16>
    %cst_193 = arith.constant dense<0.000000e+00> : vector<8x32xf32>
    %144 = tpu.matmul %141, %143, %cst_193 {dimension_numbers = #tpu.dot_dimension_numbers<[1], [0], [0], [1], [0, 0, 1, 1], [], []>} : vector<8x4xbf16>, vector<4x32xbf16>, vector<8x32xf32> -> vector<8x32xf32>
    %145 = arith.addf %139, %144 : vector<8x32xf32>
    %c0_194 = arith.constant 0 : index
    %c2_195 = arith.constant 2 : index
    %c2_196 = arith.constant 2 : index
    %c0_197 = arith.constant 0 : index
    %c0_198 = arith.constant 0 : index
    %146 = vector.load %arg1[%c0_194, %c2_195, %c2_196, %c0_197, %c0_198] : memref<1x4x9x9x4xbf16, #tpu.memory_space<vmem>>, vector<1x1x1x8x4xbf16>
    %147 = vector.shape_cast %146 : vector<1x1x1x8x4xbf16> to vector<8x4xbf16>
    %c3_199 = arith.constant 3 : index
    %c0_200 = arith.constant 0 : index
    %c0_201 = arith.constant 0 : index
    %148 = vector.load %arg2[%c3_199, %c0_200, %c0_201] : memref<9x4x32xbf16, #tpu.memory_space<vmem>>, vector<1x4x32xbf16>
    %149 = vector.shape_cast %148 : vector<1x4x32xbf16> to vector<4x32xbf16>
    %cst_202 = arith.constant dense<0.000000e+00> : vector<8x32xf32>
    %150 = tpu.matmul %147, %149, %cst_202 {dimension_numbers = #tpu.dot_dimension_numbers<[1], [0], [0], [1], [0, 0, 1, 1], [], []>} : vector<8x4xbf16>, vector<4x32xbf16>, vector<8x32xf32> -> vector<8x32xf32>
    %151 = arith.addf %145, %150 : vector<8x32xf32>
    %c0_203 = arith.constant 0 : index
    %c3_204 = arith.constant 3 : index
    %c2_205 = arith.constant 2 : index
    %c0_206 = arith.constant 0 : index
    %c0_207 = arith.constant 0 : index
    %152 = vector.load %arg1[%c0_203, %c3_204, %c2_205, %c0_206, %c0_207] : memref<1x4x9x9x4xbf16, #tpu.memory_space<vmem>>, vector<1x1x1x8x4xbf16>
    %153 = vector.shape_cast %152 : vector<1x1x1x8x4xbf16> to vector<8x4xbf16>
    %c4_208 = arith.constant 4 : index
    %c0_209 = arith.constant 0 : index
    %c0_210 = arith.constant 0 : index
    %154 = vector.load %arg2[%c4_208, %c0_209, %c0_210] : memref<9x4x32xbf16, #tpu.memory_space<vmem>>, vector<1x4x32xbf16>
    %155 = vector.shape_cast %154 : vector<1x4x32xbf16> to vector<4x32xbf16>
    %cst_211 = arith.constant dense<0.000000e+00> : vector<8x32xf32>
    %156 = tpu.matmul %153, %155, %cst_211 {dimension_numbers = #tpu.dot_dimension_numbers<[1], [0], [0], [1], [0, 0, 1, 1], [], []>} : vector<8x4xbf16>, vector<4x32xbf16>, vector<8x32xf32> -> vector<8x32xf32>
    %157 = arith.addf %151, %156 : vector<8x32xf32>
    %c0_212 = arith.constant 0 : index
    %c2_213 = arith.constant 2 : index
    %c2_214 = arith.constant 2 : index
    %c1_215 = arith.constant 1 : index
    %c0_216 = arith.constant 0 : index
    %158 = vector.load %arg1[%c0_212, %c2_213, %c2_214, %c1_215, %c0_216] : memref<1x4x9x9x4xbf16, #tpu.memory_space<vmem>>, vector<1x1x1x8x4xbf16>
    %159 = vector.shape_cast %158 : vector<1x1x1x8x4xbf16> to vector<8x4xbf16>
    %c5_217 = arith.constant 5 : index
    %c0_218 = arith.constant 0 : index
    %c0_219 = arith.constant 0 : index
    %160 = vector.load %arg2[%c5_217, %c0_218, %c0_219] : memref<9x4x32xbf16, #tpu.memory_space<vmem>>, vector<1x4x32xbf16>
    %161 = vector.shape_cast %160 : vector<1x4x32xbf16> to vector<4x32xbf16>
    %cst_220 = arith.constant dense<0.000000e+00> : vector<8x32xf32>
    %162 = tpu.matmul %159, %161, %cst_220 {dimension_numbers = #tpu.dot_dimension_numbers<[1], [0], [0], [1], [0, 0, 1, 1], [], []>} : vector<8x4xbf16>, vector<4x32xbf16>, vector<8x32xf32> -> vector<8x32xf32>
    %163 = arith.addf %157, %162 : vector<8x32xf32>
    %c0_221 = arith.constant 0 : index
    %c0_222 = arith.constant 0 : index
    %c3_223 = arith.constant 3 : index
    %c0_224 = arith.constant 0 : index
    %c0_225 = arith.constant 0 : index
    %164 = vector.load %arg1[%c0_221, %c0_222, %c3_223, %c0_224, %c0_225] : memref<1x4x9x9x4xbf16, #tpu.memory_space<vmem>>, vector<1x1x1x8x4xbf16>
    %165 = vector.shape_cast %164 : vector<1x1x1x8x4xbf16> to vector<8x4xbf16>
    %c6_226 = arith.constant 6 : index
    %c0_227 = arith.constant 0 : index
    %c0_228 = arith.constant 0 : index
    %166 = vector.load %arg2[%c6_226, %c0_227, %c0_228] : memref<9x4x32xbf16, #tpu.memory_space<vmem>>, vector<1x4x32xbf16>
    %167 = vector.shape_cast %166 : vector<1x4x32xbf16> to vector<4x32xbf16>
    %cst_229 = arith.constant dense<0.000000e+00> : vector<8x32xf32>
    %168 = tpu.matmul %165, %167, %cst_229 {dimension_numbers = #tpu.dot_dimension_numbers<[1], [0], [0], [1], [0, 0, 1, 1], [], []>} : vector<8x4xbf16>, vector<4x32xbf16>, vector<8x32xf32> -> vector<8x32xf32>
    %169 = arith.addf %163, %168 : vector<8x32xf32>
    %c0_230 = arith.constant 0 : index
    %c1_231 = arith.constant 1 : index
    %c3_232 = arith.constant 3 : index
    %c0_233 = arith.constant 0 : index
    %c0_234 = arith.constant 0 : index
    %170 = vector.load %arg1[%c0_230, %c1_231, %c3_232, %c0_233, %c0_234] : memref<1x4x9x9x4xbf16, #tpu.memory_space<vmem>>, vector<1x1x1x8x4xbf16>
    %171 = vector.shape_cast %170 : vector<1x1x1x8x4xbf16> to vector<8x4xbf16>
    %c7_235 = arith.constant 7 : index
    %c0_236 = arith.constant 0 : index
    %c0_237 = arith.constant 0 : index
    %172 = vector.load %arg2[%c7_235, %c0_236, %c0_237] : memref<9x4x32xbf16, #tpu.memory_space<vmem>>, vector<1x4x32xbf16>
    %173 = vector.shape_cast %172 : vector<1x4x32xbf16> to vector<4x32xbf16>
    %cst_238 = arith.constant dense<0.000000e+00> : vector<8x32xf32>
    %174 = tpu.matmul %171, %173, %cst_238 {dimension_numbers = #tpu.dot_dimension_numbers<[1], [0], [0], [1], [0, 0, 1, 1], [], []>} : vector<8x4xbf16>, vector<4x32xbf16>, vector<8x32xf32> -> vector<8x32xf32>
    %175 = arith.addf %169, %174 : vector<8x32xf32>
    %c0_239 = arith.constant 0 : index
    %c0_240 = arith.constant 0 : index
    %c3_241 = arith.constant 3 : index
    %c1_242 = arith.constant 1 : index
    %c0_243 = arith.constant 0 : index
    %176 = vector.load %arg1[%c0_239, %c0_240, %c3_241, %c1_242, %c0_243] : memref<1x4x9x9x4xbf16, #tpu.memory_space<vmem>>, vector<1x1x1x8x4xbf16>
    %177 = vector.shape_cast %176 : vector<1x1x1x8x4xbf16> to vector<8x4xbf16>
    %c8_244 = arith.constant 8 : index
    %c0_245 = arith.constant 0 : index
    %c0_246 = arith.constant 0 : index
    %178 = vector.load %arg2[%c8_244, %c0_245, %c0_246] : memref<9x4x32xbf16, #tpu.memory_space<vmem>>, vector<1x4x32xbf16>
    %179 = vector.shape_cast %178 : vector<1x4x32xbf16> to vector<4x32xbf16>
    %cst_247 = arith.constant dense<0.000000e+00> : vector<8x32xf32>
    %180 = tpu.matmul %177, %179, %cst_247 {dimension_numbers = #tpu.dot_dimension_numbers<[1], [0], [0], [1], [0, 0, 1, 1], [], []>} : vector<8x4xbf16>, vector<4x32xbf16>, vector<8x32xf32> -> vector<8x32xf32>
    %181 = arith.addf %175, %180 : vector<8x32xf32>
    %182 = vector.broadcast %0 : vector<1x32xf32> to vector<8x32xf32>
    %183 = arith.addf %181, %182 : vector<8x32xf32>
    %cst_248 = arith.constant 0.000000e+00 : f32
    %184 = vector.broadcast %cst_248 : f32 to vector<8x32xf32>
    %185 = arith.maximumf %183, %184 : vector<8x32xf32>
    %186 = arith.truncf %185 : vector<8x32xf32> to vector<8x32xbf16>
    %c0_249 = arith.constant 0 : index
    %c2_250 = arith.constant 2 : index
    %c0_251 = arith.constant 0 : index
    %c0_252 = arith.constant 0 : index
    %187 = vector.load %arg4[%c0_249, %c2_250, %c0_251, %c0_252] : memref<1x8x8x32xbf16, #tpu.memory_space<vmem>>, vector<1x1x8x32xbf16>
    %188 = vector.shape_cast %187 : vector<1x1x8x32xbf16> to vector<8x32xbf16>
    %189 = vector.shape_cast %186 : vector<8x32xbf16> to vector<1x1x8x32xbf16>
    tpu.vector_store %arg4[%c0_249, %c2_250, %c0_251, %c0_252], %189 {strides = array<i32>} : memref<1x8x8x32xbf16, #tpu.memory_space<vmem>>, vector<1x1x8x32xbf16>,
    %cst_253 = arith.constant 0.000000e+00 : f32
    %190 = vector.broadcast %cst_253 : f32 to vector<8x32xf32>
    %c0_254 = arith.constant 0 : index
    %c0_255 = arith.constant 0 : index
    %c3_256 = arith.constant 3 : index
    %c0_257 = arith.constant 0 : index
    %c0_258 = arith.constant 0 : index
    %191 = vector.load %arg1[%c0_254, %c0_255, %c3_256, %c0_257, %c0_258] : memref<1x4x9x9x4xbf16, #tpu.memory_space<vmem>>, vector<1x1x1x8x4xbf16>
    %192 = vector.shape_cast %191 : vector<1x1x1x8x4xbf16> to vector<8x4xbf16>
    %c0_259 = arith.constant 0 : index
    %c0_260 = arith.constant 0 : index
    %c0_261 = arith.constant 0 : index
    %193 = vector.load %arg2[%c0_259, %c0_260, %c0_261] : memref<9x4x32xbf16, #tpu.memory_space<vmem>>, vector<1x4x32xbf16>
    %194 = vector.shape_cast %193 : vector<1x4x32xbf16> to vector<4x32xbf16>
    %cst_262 = arith.constant dense<0.000000e+00> : vector<8x32xf32>
    %195 = tpu.matmul %192, %194, %cst_262 {dimension_numbers = #tpu.dot_dimension_numbers<[1], [0], [0], [1], [0, 0, 1, 1], [], []>} : vector<8x4xbf16>, vector<4x32xbf16>, vector<8x32xf32> -> vector<8x32xf32>
    %196 = arith.addf %190, %195 : vector<8x32xf32>
    %c0_263 = arith.constant 0 : index
    %c1_264 = arith.constant 1 : index
    %c3_265 = arith.constant 3 : index
    %c0_266 = arith.constant 0 : index
    %c0_267 = arith.constant 0 : index
    %197 = vector.load %arg1[%c0_263, %c1_264, %c3_265, %c0_266, %c0_267] : memref<1x4x9x9x4xbf16, #tpu.memory_space<vmem>>, vector<1x1x1x8x4xbf16>
    %198 = vector.shape_cast %197 : vector<1x1x1x8x4xbf16> to vector<8x4xbf16>
    %c1_268 = arith.constant 1 : index
    %c0_269 = arith.constant 0 : index
    %c0_270 = arith.constant 0 : index
    %199 = vector.load %arg2[%c1_268, %c0_269, %c0_270] : memref<9x4x32xbf16, #tpu.memory_space<vmem>>, vector<1x4x32xbf16>
    %200 = vector.shape_cast %199 : vector<1x4x32xbf16> to vector<4x32xbf16>
    %cst_271 = arith.constant dense<0.000000e+00> : vector<8x32xf32>
    %201 = tpu.matmul %198, %200, %cst_271 {dimension_numbers = #tpu.dot_dimension_numbers<[1], [0], [0], [1], [0, 0, 1, 1], [], []>} : vector<8x4xbf16>, vector<4x32xbf16>, vector<8x32xf32> -> vector<8x32xf32>
    %202 = arith.addf %196, %201 : vector<8x32xf32>
    %c0_272 = arith.constant 0 : index
    %c0_273 = arith.constant 0 : index
    %c3_274 = arith.constant 3 : index
    %c1_275 = arith.constant 1 : index
    %c0_276 = arith.constant 0 : index
    %203 = vector.load %arg1[%c0_272, %c0_273, %c3_274, %c1_275, %c0_276] : memref<1x4x9x9x4xbf16, #tpu.memory_space<vmem>>, vector<1x1x1x8x4xbf16>
    %204 = vector.shape_cast %203 : vector<1x1x1x8x4xbf16> to vector<8x4xbf16>
    %c2_277 = arith.constant 2 : index
    %c0_278 = arith.constant 0 : index
    %c0_279 = arith.constant 0 : index
    %205 = vector.load %arg2[%c2_277, %c0_278, %c0_279] : memref<9x4x32xbf16, #tpu.memory_space<vmem>>, vector<1x4x32xbf16>
    %206 = vector.shape_cast %205 : vector<1x4x32xbf16> to vector<4x32xbf16>
    %cst_280 = arith.constant dense<0.000000e+00> : vector<8x32xf32>
    %207 = tpu.matmul %204, %206, %cst_280 {dimension_numbers = #tpu.dot_dimension_numbers<[1], [0], [0], [1], [0, 0, 1, 1], [], []>} : vector<8x4xbf16>, vector<4x32xbf16>, vector<8x32xf32> -> vector<8x32xf32>
    %208 = arith.addf %202, %207 : vector<8x32xf32>
    %c0_281 = arith.constant 0 : index
    %c2_282 = arith.constant 2 : index
    %c3_283 = arith.constant 3 : index
    %c0_284 = arith.constant 0 : index
    %c0_285 = arith.constant 0 : index
    %209 = vector.load %arg1[%c0_281, %c2_282, %c3_283, %c0_284, %c0_285] : memref<1x4x9x9x4xbf16, #tpu.memory_space<vmem>>, vector<1x1x1x8x4xbf16>
    %210 = vector.shape_cast %209 : vector<1x1x1x8x4xbf16> to vector<8x4xbf16>
    %c3_286 = arith.constant 3 : index
    %c0_287 = arith.constant 0 : index
    %c0_288 = arith.constant 0 : index
    %211 = vector.load %arg2[%c3_286, %c0_287, %c0_288] : memref<9x4x32xbf16, #tpu.memory_space<vmem>>, vector<1x4x32xbf16>
    %212 = vector.shape_cast %211 : vector<1x4x32xbf16> to vector<4x32xbf16>
    %cst_289 = arith.constant dense<0.000000e+00> : vector<8x32xf32>
    %213 = tpu.matmul %210, %212, %cst_289 {dimension_numbers = #tpu.dot_dimension_numbers<[1], [0], [0], [1], [0, 0, 1, 1], [], []>} : vector<8x4xbf16>, vector<4x32xbf16>, vector<8x32xf32> -> vector<8x32xf32>
    %214 = arith.addf %208, %213 : vector<8x32xf32>
    %c0_290 = arith.constant 0 : index
    %c3_291 = arith.constant 3 : index
    %c3_292 = arith.constant 3 : index
    %c0_293 = arith.constant 0 : index
    %c0_294 = arith.constant 0 : index
    %215 = vector.load %arg1[%c0_290, %c3_291, %c3_292, %c0_293, %c0_294] : memref<1x4x9x9x4xbf16, #tpu.memory_space<vmem>>, vector<1x1x1x8x4xbf16>
    %216 = vector.shape_cast %215 : vector<1x1x1x8x4xbf16> to vector<8x4xbf16>
    %c4_295 = arith.constant 4 : index
    %c0_296 = arith.constant 0 : index
    %c0_297 = arith.constant 0 : index
    %217 = vector.load %arg2[%c4_295, %c0_296, %c0_297] : memref<9x4x32xbf16, #tpu.memory_space<vmem>>, vector<1x4x32xbf16>
    %218 = vector.shape_cast %217 : vector<1x4x32xbf16> to vector<4x32xbf16>
    %cst_298 = arith.constant dense<0.000000e+00> : vector<8x32xf32>
    %219 = tpu.matmul %216, %218, %cst_298 {dimension_numbers = #tpu.dot_dimension_numbers<[1], [0], [0], [1], [0, 0, 1, 1], [], []>} : vector<8x4xbf16>, vector<4x32xbf16>, vector<8x32xf32> -> vector<8x32xf32>
    %220 = arith.addf %214, %219 : vector<8x32xf32>
    %c0_299 = arith.constant 0 : index
    %c2_300 = arith.constant 2 : index
    %c3_301 = arith.constant 3 : index
    %c1_302 = arith.constant 1 : index
    %c0_303 = arith.constant 0 : index
    %221 = vector.load %arg1[%c0_299, %c2_300, %c3_301, %c1_302, %c0_303] : memref<1x4x9x9x4xbf16, #tpu.memory_space<vmem>>, vector<1x1x1x8x4xbf16>
    %222 = vector.shape_cast %221 : vector<1x1x1x8x4xbf16> to vector<8x4xbf16>
    %c5_304 = arith.constant 5 : index
    %c0_305 = arith.constant 0 : index
    %c0_306 = arith.constant 0 : index
    %223 = vector.load %arg2[%c5_304, %c0_305, %c0_306] : memref<9x4x32xbf16, #tpu.memory_space<vmem>>, vector<1x4x32xbf16>
    %224 = vector.shape_cast %223 : vector<1x4x32xbf16> to vector<4x32xbf16>
    %cst_307 = arith.constant dense<0.000000e+00> : vector<8x32xf32>
    %225 = tpu.matmul %222, %224, %cst_307 {dimension_numbers = #tpu.dot_dimension_numbers<[1], [0], [0], [1], [0, 0, 1, 1], [], []>} : vector<8x4xbf16>, vector<4x32xbf16>, vector<8x32xf32> -> vector<8x32xf32>
    %226 = arith.addf %220, %225 : vector<8x32xf32>
    %c0_308 = arith.constant 0 : index
    %c0_309 = arith.constant 0 : index
    %c4_310 = arith.constant 4 : index
    %c0_311 = arith.constant 0 : index
    %c0_312 = arith.constant 0 : index
    %227 = vector.load %arg1[%c0_308, %c0_309, %c4_310, %c0_311, %c0_312] : memref<1x4x9x9x4xbf16, #tpu.memory_space<vmem>>, vector<1x1x1x8x4xbf16>
    %228 = vector.shape_cast %227 : vector<1x1x1x8x4xbf16> to vector<8x4xbf16>
    %c6_313 = arith.constant 6 : index
    %c0_314 = arith.constant 0 : index
    %c0_315 = arith.constant 0 : index
    %229 = vector.load %arg2[%c6_313, %c0_314, %c0_315] : memref<9x4x32xbf16, #tpu.memory_space<vmem>>, vector<1x4x32xbf16>
    %230 = vector.shape_cast %229 : vector<1x4x32xbf16> to vector<4x32xbf16>
    %cst_316 = arith.constant dense<0.000000e+00> : vector<8x32xf32>
    %231 = tpu.matmul %228, %230, %cst_316 {dimension_numbers = #tpu.dot_dimension_numbers<[1], [0], [0], [1], [0, 0, 1, 1], [], []>} : vector<8x4xbf16>, vector<4x32xbf16>, vector<8x32xf32> -> vector<8x32xf32>
    %232 = arith.addf %226, %231 : vector<8x32xf32>
    %c0_317 = arith.constant 0 : index
    %c1_318 = arith.constant 1 : index
    %c4_319 = arith.constant 4 : index
    %c0_320 = arith.constant 0 : index
    %c0_321 = arith.constant 0 : index
    %233 = vector.load %arg1[%c0_317, %c1_318, %c4_319, %c0_320, %c0_321] : memref<1x4x9x9x4xbf16, #tpu.memory_space<vmem>>, vector<1x1x1x8x4xbf16>
    %234 = vector.shape_cast %233 : vector<1x1x1x8x4xbf16> to vector<8x4xbf16>
    %c7_322 = arith.constant 7 : index
    %c0_323 = arith.constant 0 : index
    %c0_324 = arith.constant 0 : index
    %235 = vector.load %arg2[%c7_322, %c0_323, %c0_324] : memref<9x4x32xbf16, #tpu.memory_space<vmem>>, vector<1x4x32xbf16>
    %236 = vector.shape_cast %235 : vector<1x4x32xbf16> to vector<4x32xbf16>
    %cst_325 = arith.constant dense<0.000000e+00> : vector<8x32xf32>
    %237 = tpu.matmul %234, %236, %cst_325 {dimension_numbers = #tpu.dot_dimension_numbers<[1], [0], [0], [1], [0, 0, 1, 1], [], []>} : vector<8x4xbf16>, vector<4x32xbf16>, vector<8x32xf32> -> vector<8x32xf32>
    %238 = arith.addf %232, %237 : vector<8x32xf32>
    %c0_326 = arith.constant 0 : index
    %c0_327 = arith.constant 0 : index
    %c4_328 = arith.constant 4 : index
    %c1_329 = arith.constant 1 : index
    %c0_330 = arith.constant 0 : index
    %239 = vector.load %arg1[%c0_326, %c0_327, %c4_328, %c1_329, %c0_330] : memref<1x4x9x9x4xbf16, #tpu.memory_space<vmem>>, vector<1x1x1x8x4xbf16>
    %240 = vector.shape_cast %239 : vector<1x1x1x8x4xbf16> to vector<8x4xbf16>
    %c8_331 = arith.constant 8 : index
    %c0_332 = arith.constant 0 : index
    %c0_333 = arith.constant 0 : index
    %241 = vector.load %arg2[%c8_331, %c0_332, %c0_333] : memref<9x4x32xbf16, #tpu.memory_space<vmem>>, vector<1x4x32xbf16>
    %242 = vector.shape_cast %241 : vector<1x4x32xbf16> to vector<4x32xbf16>
    %cst_334 = arith.constant dense<0.000000e+00> : vector<8x32xf32>
    %243 = tpu.matmul %240, %242, %cst_334 {dimension_numbers = #tpu.dot_dimension_numbers<[1], [0], [0], [1], [0, 0, 1, 1], [], []>} : vector<8x4xbf16>, vector<4x32xbf16>, vector<8x32xf32> -> vector<8x32xf32>
    %244 = arith.addf %238, %243 : vector<8x32xf32>
    %245 = vector.broadcast %0 : vector<1x32xf32> to vector<8x32xf32>
    %246 = arith.addf %244, %245 : vector<8x32xf32>
    %cst_335 = arith.constant 0.000000e+00 : f32
    %247 = vector.broadcast %cst_335 : f32 to vector<8x32xf32>
    %248 = arith.maximumf %246, %247 : vector<8x32xf32>
    %249 = arith.truncf %248 : vector<8x32xf32> to vector<8x32xbf16>
    %c0_336 = arith.constant 0 : index
    %c3_337 = arith.constant 3 : index
    %c0_338 = arith.constant 0 : index
    %c0_339 = arith.constant 0 : index
    %250 = vector.load %arg4[%c0_336, %c3_337, %c0_338, %c0_339] : memref<1x8x8x32xbf16, #tpu.memory_space<vmem>>, vector<1x1x8x32xbf16>
    %251 = vector.shape_cast %250 : vector<1x1x8x32xbf16> to vector<8x32xbf16>
    %252 = vector.shape_cast %249 : vector<8x32xbf16> to vector<1x1x8x32xbf16>
    tpu.vector_store %arg4[%c0_336, %c3_337, %c0_338, %c0_339], %252 {strides = array<i32>} : memref<1x8x8x32xbf16, #tpu.memory_space<vmem>>, vector<1x1x8x32xbf16>,
    %cst_340 = arith.constant 0.000000e+00 : f32
    %253 = vector.broadcast %cst_340 : f32 to vector<8x32xf32>
    %c0_341 = arith.constant 0 : index
    %c0_342 = arith.constant 0 : index
    %c4_343 = arith.constant 4 : index
    %c0_344 = arith.constant 0 : index
    %c0_345 = arith.constant 0 : index
    %254 = vector.load %arg1[%c0_341, %c0_342, %c4_343, %c0_344, %c0_345] : memref<1x4x9x9x4xbf16, #tpu.memory_space<vmem>>, vector<1x1x1x8x4xbf16>
    %255 = vector.shape_cast %254 : vector<1x1x1x8x4xbf16> to vector<8x4xbf16>
    %c0_346 = arith.constant 0 : index
    %c0_347 = arith.constant 0 : index
    %c0_348 = arith.constant 0 : index
    %256 = vector.load %arg2[%c0_346, %c0_347, %c0_348] : memref<9x4x32xbf16, #tpu.memory_space<vmem>>, vector<1x4x32xbf16>
    %257 = vector.shape_cast %256 : vector<1x4x32xbf16> to vector<4x32xbf16>
    %cst_349 = arith.constant dense<0.000000e+00> : vector<8x32xf32>
    %258 = tpu.matmul %255, %257, %cst_349 {dimension_numbers = #tpu.dot_dimension_numbers<[1], [0], [0], [1], [0, 0, 1, 1], [], []>} : vector<8x4xbf16>, vector<4x32xbf16>, vector<8x32xf32> -> vector<8x32xf32>
    %259 = arith.addf %253, %258 : vector<8x32xf32>
    %c0_350 = arith.constant 0 : index
    %c1_351 = arith.constant 1 : index
    %c4_352 = arith.constant 4 : index
    %c0_353 = arith.constant 0 : index
    %c0_354 = arith.constant 0 : index
    %260 = vector.load %arg1[%c0_350, %c1_351, %c4_352, %c0_353, %c0_354] : memref<1x4x9x9x4xbf16, #tpu.memory_space<vmem>>, vector<1x1x1x8x4xbf16>
    %261 = vector.shape_cast %260 : vector<1x1x1x8x4xbf16> to vector<8x4xbf16>
    %c1_355 = arith.constant 1 : index
    %c0_356 = arith.constant 0 : index
    %c0_357 = arith.constant 0 : index
    %262 = vector.load %arg2[%c1_355, %c0_356, %c0_357] : memref<9x4x32xbf16, #tpu.memory_space<vmem>>, vector<1x4x32xbf16>
    %263 = vector.shape_cast %262 : vector<1x4x32xbf16> to vector<4x32xbf16>
    %cst_358 = arith.constant dense<0.000000e+00> : vector<8x32xf32>
    %264 = tpu.matmul %261, %263, %cst_358 {dimension_numbers = #tpu.dot_dimension_numbers<[1], [0], [0], [1], [0, 0, 1, 1], [], []>} : vector<8x4xbf16>, vector<4x32xbf16>, vector<8x32xf32> -> vector<8x32xf32>
    %265 = arith.addf %259, %264 : vector<8x32xf32>
    %c0_359 = arith.constant 0 : index
    %c0_360 = arith.constant 0 : index
    %c4_361 = arith.constant 4 : index
    %c1_362 = arith.constant 1 : index
    %c0_363 = arith.constant 0 : index
    %266 = vector.load %arg1[%c0_359, %c0_360, %c4_361, %c1_362, %c0_363] : memref<1x4x9x9x4xbf16, #tpu.memory_space<vmem>>, vector<1x1x1x8x4xbf16>
    %267 = vector.shape_cast %266 : vector<1x1x1x8x4xbf16> to vector<8x4xbf16>
    %c2_364 = arith.constant 2 : index
    %c0_365 = arith.constant 0 : index
    %c0_366 = arith.constant 0 : index
    %268 = vector.load %arg2[%c2_364, %c0_365, %c0_366] : memref<9x4x32xbf16, #tpu.memory_space<vmem>>, vector<1x4x32xbf16>
    %269 = vector.shape_cast %268 : vector<1x4x32xbf16> to vector<4x32xbf16>
    %cst_367 = arith.constant dense<0.000000e+00> : vector<8x32xf32>
    %270 = tpu.matmul %267, %269, %cst_367 {dimension_numbers = #tpu.dot_dimension_numbers<[1], [0], [0], [1], [0, 0, 1, 1], [], []>} : vector<8x4xbf16>, vector<4x32xbf16>, vector<8x32xf32> -> vector<8x32xf32>
    %271 = arith.addf %265, %270 : vector<8x32xf32>
    %c0_368 = arith.constant 0 : index
    %c2_369 = arith.constant 2 : index
    %c4_370 = arith.constant 4 : index
    %c0_371 = arith.constant 0 : index
    %c0_372 = arith.constant 0 : index
    %272 = vector.load %arg1[%c0_368, %c2_369, %c4_370, %c0_371, %c0_372] : memref<1x4x9x9x4xbf16, #tpu.memory_space<vmem>>, vector<1x1x1x8x4xbf16>
    %273 = vector.shape_cast %272 : vector<1x1x1x8x4xbf16> to vector<8x4xbf16>
    %c3_373 = arith.constant 3 : index
    %c0_374 = arith.constant 0 : index
    %c0_375 = arith.constant 0 : index
    %274 = vector.load %arg2[%c3_373, %c0_374, %c0_375] : memref<9x4x32xbf16, #tpu.memory_space<vmem>>, vector<1x4x32xbf16>
    %275 = vector.shape_cast %274 : vector<1x4x32xbf16> to vector<4x32xbf16>
    %cst_376 = arith.constant dense<0.000000e+00> : vector<8x32xf32>
    %276 = tpu.matmul %273, %275, %cst_376 {dimension_numbers = #tpu.dot_dimension_numbers<[1], [0], [0], [1], [0, 0, 1, 1], [], []>} : vector<8x4xbf16>, vector<4x32xbf16>, vector<8x32xf32> -> vector<8x32xf32>
    %277 = arith.addf %271, %276 : vector<8x32xf32>
    %c0_377 = arith.constant 0 : index
    %c3_378 = arith.constant 3 : index
    %c4_379 = arith.constant 4 : index
    %c0_380 = arith.constant 0 : index
    %c0_381 = arith.constant 0 : index
    %278 = vector.load %arg1[%c0_377, %c3_378, %c4_379, %c0_380, %c0_381] : memref<1x4x9x9x4xbf16, #tpu.memory_space<vmem>>, vector<1x1x1x8x4xbf16>
    %279 = vector.shape_cast %278 : vector<1x1x1x8x4xbf16> to vector<8x4xbf16>
    %c4_382 = arith.constant 4 : index
    %c0_383 = arith.constant 0 : index
    %c0_384 = arith.constant 0 : index
    %280 = vector.load %arg2[%c4_382, %c0_383, %c0_384] : memref<9x4x32xbf16, #tpu.memory_space<vmem>>, vector<1x4x32xbf16>
    %281 = vector.shape_cast %280 : vector<1x4x32xbf16> to vector<4x32xbf16>
    %cst_385 = arith.constant dense<0.000000e+00> : vector<8x32xf32>
    %282 = tpu.matmul %279, %281, %cst_385 {dimension_numbers = #tpu.dot_dimension_numbers<[1], [0], [0], [1], [0, 0, 1, 1], [], []>} : vector<8x4xbf16>, vector<4x32xbf16>, vector<8x32xf32> -> vector<8x32xf32>
    %283 = arith.addf %277, %282 : vector<8x32xf32>
    %c0_386 = arith.constant 0 : index
    %c2_387 = arith.constant 2 : index
    %c4_388 = arith.constant 4 : index
    %c1_389 = arith.constant 1 : index
    %c0_390 = arith.constant 0 : index
    %284 = vector.load %arg1[%c0_386, %c2_387, %c4_388, %c1_389, %c0_390] : memref<1x4x9x9x4xbf16, #tpu.memory_space<vmem>>, vector<1x1x1x8x4xbf16>
    %285 = vector.shape_cast %284 : vector<1x1x1x8x4xbf16> to vector<8x4xbf16>
    %c5_391 = arith.constant 5 : index
    %c0_392 = arith.constant 0 : index
    %c0_393 = arith.constant 0 : index
    %286 = vector.load %arg2[%c5_391, %c0_392, %c0_393] : memref<9x4x32xbf16, #tpu.memory_space<vmem>>, vector<1x4x32xbf16>
    %287 = vector.shape_cast %286 : vector<1x4x32xbf16> to vector<4x32xbf16>
    %cst_394 = arith.constant dense<0.000000e+00> : vector<8x32xf32>
    %288 = tpu.matmul %285, %287, %cst_394 {dimension_numbers = #tpu.dot_dimension_numbers<[1], [0], [0], [1], [0, 0, 1, 1], [], []>} : vector<8x4xbf16>, vector<4x32xbf16>, vector<8x32xf32> -> vector<8x32xf32>
    %289 = arith.addf %283, %288 : vector<8x32xf32>
    %c0_395 = arith.constant 0 : index
    %c0_396 = arith.constant 0 : index
    %c5_397 = arith.constant 5 : index
    %c0_398 = arith.constant 0 : index
    %c0_399 = arith.constant 0 : index
    %290 = vector.load %arg1[%c0_395, %c0_396, %c5_397, %c0_398, %c0_399] : memref<1x4x9x9x4xbf16, #tpu.memory_space<vmem>>, vector<1x1x1x8x4xbf16>
    %291 = vector.shape_cast %290 : vector<1x1x1x8x4xbf16> to vector<8x4xbf16>
    %c6_400 = arith.constant 6 : index
    %c0_401 = arith.constant 0 : index
    %c0_402 = arith.constant 0 : index
    %292 = vector.load %arg2[%c6_400, %c0_401, %c0_402] : memref<9x4x32xbf16, #tpu.memory_space<vmem>>, vector<1x4x32xbf16>
    %293 = vector.shape_cast %292 : vector<1x4x32xbf16> to vector<4x32xbf16>
    %cst_403 = arith.constant dense<0.000000e+00> : vector<8x32xf32>
    %294 = tpu.matmul %291, %293, %cst_403 {dimension_numbers = #tpu.dot_dimension_numbers<[1], [0], [0], [1], [0, 0, 1, 1], [], []>} : vector<8x4xbf16>, vector<4x32xbf16>, vector<8x32xf32> -> vector<8x32xf32>
    %295 = arith.addf %289, %294 : vector<8x32xf32>
    %c0_404 = arith.constant 0 : index
    %c1_405 = arith.constant 1 : index
    %c5_406 = arith.constant 5 : index
    %c0_407 = arith.constant 0 : index
    %c0_408 = arith.constant 0 : index
    %296 = vector.load %arg1[%c0_404, %c1_405, %c5_406, %c0_407, %c0_408] : memref<1x4x9x9x4xbf16, #tpu.memory_space<vmem>>, vector<1x1x1x8x4xbf16>
    %297 = vector.shape_cast %296 : vector<1x1x1x8x4xbf16> to vector<8x4xbf16>
    %c7_409 = arith.constant 7 : index
    %c0_410 = arith.constant 0 : index
    %c0_411 = arith.constant 0 : index
    %298 = vector.load %arg2[%c7_409, %c0_410, %c0_411] : memref<9x4x32xbf16, #tpu.memory_space<vmem>>, vector<1x4x32xbf16>
    %299 = vector.shape_cast %298 : vector<1x4x32xbf16> to vector<4x32xbf16>
    %cst_412 = arith.constant dense<0.000000e+00> : vector<8x32xf32>
    %300 = tpu.matmul %297, %299, %cst_412 {dimension_numbers = #tpu.dot_dimension_numbers<[1], [0], [0], [1], [0, 0, 1, 1], [], []>} : vector<8x4xbf16>, vector<4x32xbf16>, vector<8x32xf32> -> vector<8x32xf32>
    %301 = arith.addf %295, %300 : vector<8x32xf32>
    %c0_413 = arith.constant 0 : index
    %c0_414 = arith.constant 0 : index
    %c5_415 = arith.constant 5 : index
    %c1_416 = arith.constant 1 : index
    %c0_417 = arith.constant 0 : index
    %302 = vector.load %arg1[%c0_413, %c0_414, %c5_415, %c1_416, %c0_417] : memref<1x4x9x9x4xbf16, #tpu.memory_space<vmem>>, vector<1x1x1x8x4xbf16>
    %303 = vector.shape_cast %302 : vector<1x1x1x8x4xbf16> to vector<8x4xbf16>
    %c8_418 = arith.constant 8 : index
    %c0_419 = arith.constant 0 : index
    %c0_420 = arith.constant 0 : index
    %304 = vector.load %arg2[%c8_418, %c0_419, %c0_420] : memref<9x4x32xbf16, #tpu.memory_space<vmem>>, vector<1x4x32xbf16>
    %305 = vector.shape_cast %304 : vector<1x4x32xbf16> to vector<4x32xbf16>
    %cst_421 = arith.constant dense<0.000000e+00> : vector<8x32xf32>
    %306 = tpu.matmul %303, %305, %cst_421 {dimension_numbers = #tpu.dot_dimension_numbers<[1], [0], [0], [1], [0, 0, 1, 1], [], []>} : vector<8x4xbf16>, vector<4x32xbf16>, vector<8x32xf32> -> vector<8x32xf32>
    %307 = arith.addf %301, %306 : vector<8x32xf32>
    %308 = vector.broadcast %0 : vector<1x32xf32> to vector<8x32xf32>
    %309 = arith.addf %307, %308 : vector<8x32xf32>
    %cst_422 = arith.constant 0.000000e+00 : f32
    %310 = vector.broadcast %cst_422 : f32 to vector<8x32xf32>
    %311 = arith.maximumf %309, %310 : vector<8x32xf32>
    %312 = arith.truncf %311 : vector<8x32xf32> to vector<8x32xbf16>
    %c0_423 = arith.constant 0 : index
    %c4_424 = arith.constant 4 : index
    %c0_425 = arith.constant 0 : index
    %c0_426 = arith.constant 0 : index
    %313 = vector.load %arg4[%c0_423, %c4_424, %c0_425, %c0_426] : memref<1x8x8x32xbf16, #tpu.memory_space<vmem>>, vector<1x1x8x32xbf16>
    %314 = vector.shape_cast %313 : vector<1x1x8x32xbf16> to vector<8x32xbf16>
    %315 = vector.shape_cast %312 : vector<8x32xbf16> to vector<1x1x8x32xbf16>
    tpu.vector_store %arg4[%c0_423, %c4_424, %c0_425, %c0_426], %315 {strides = array<i32>} : memref<1x8x8x32xbf16, #tpu.memory_space<vmem>>, vector<1x1x8x32xbf16>,
    %cst_427 = arith.constant 0.000000e+00 : f32
    %316 = vector.broadcast %cst_427 : f32 to vector<8x32xf32>
    %c0_428 = arith.constant 0 : index
    %c0_429 = arith.constant 0 : index
    %c5_430 = arith.constant 5 : index
    %c0_431 = arith.constant 0 : index
    %c0_432 = arith.constant 0 : index
    %317 = vector.load %arg1[%c0_428, %c0_429, %c5_430, %c0_431, %c0_432] : memref<1x4x9x9x4xbf16, #tpu.memory_space<vmem>>, vector<1x1x1x8x4xbf16>
    %318 = vector.shape_cast %317 : vector<1x1x1x8x4xbf16> to vector<8x4xbf16>
    %c0_433 = arith.constant 0 : index
    %c0_434 = arith.constant 0 : index
    %c0_435 = arith.constant 0 : index
    %319 = vector.load %arg2[%c0_433, %c0_434, %c0_435] : memref<9x4x32xbf16, #tpu.memory_space<vmem>>, vector<1x4x32xbf16>
    %320 = vector.shape_cast %319 : vector<1x4x32xbf16> to vector<4x32xbf16>
    %cst_436 = arith.constant dense<0.000000e+00> : vector<8x32xf32>
    %321 = tpu.matmul %318, %320, %cst_436 {dimension_numbers = #tpu.dot_dimension_numbers<[1], [0], [0], [1], [0, 0, 1, 1], [], []>} : vector<8x4xbf16>, vector<4x32xbf16>, vector<8x32xf32> -> vector<8x32xf32>
    %322 = arith.addf %316, %321 : vector<8x32xf32>
    %c0_437 = arith.constant 0 : index
    %c1_438 = arith.constant 1 : index
    %c5_439 = arith.constant 5 : index
    %c0_440 = arith.constant 0 : index
    %c0_441 = arith.constant 0 : index
    %323 = vector.load %arg1[%c0_437, %c1_438, %c5_439, %c0_440, %c0_441] : memref<1x4x9x9x4xbf16, #tpu.memory_space<vmem>>, vector<1x1x1x8x4xbf16>
    %324 = vector.shape_cast %323 : vector<1x1x1x8x4xbf16> to vector<8x4xbf16>
    %c1_442 = arith.constant 1 : index
    %c0_443 = arith.constant 0 : index
    %c0_444 = arith.constant 0 : index
    %325 = vector.load %arg2[%c1_442, %c0_443, %c0_444] : memref<9x4x32xbf16, #tpu.memory_space<vmem>>, vector<1x4x32xbf16>
    %326 = vector.shape_cast %325 : vector<1x4x32xbf16> to vector<4x32xbf16>
    %cst_445 = arith.constant dense<0.000000e+00> : vector<8x32xf32>
    %327 = tpu.matmul %324, %326, %cst_445 {dimension_numbers = #tpu.dot_dimension_numbers<[1], [0], [0], [1], [0, 0, 1, 1], [], []>} : vector<8x4xbf16>, vector<4x32xbf16>, vector<8x32xf32> -> vector<8x32xf32>
    %328 = arith.addf %322, %327 : vector<8x32xf32>
    %c0_446 = arith.constant 0 : index
    %c0_447 = arith.constant 0 : index
    %c5_448 = arith.constant 5 : index
    %c1_449 = arith.constant 1 : index
    %c0_450 = arith.constant 0 : index
    %329 = vector.load %arg1[%c0_446, %c0_447, %c5_448, %c1_449, %c0_450] : memref<1x4x9x9x4xbf16, #tpu.memory_space<vmem>>, vector<1x1x1x8x4xbf16>
    %330 = vector.shape_cast %329 : vector<1x1x1x8x4xbf16> to vector<8x4xbf16>
    %c2_451 = arith.constant 2 : index
    %c0_452 = arith.constant 0 : index
    %c0_453 = arith.constant 0 : index
    %331 = vector.load %arg2[%c2_451, %c0_452, %c0_453] : memref<9x4x32xbf16, #tpu.memory_space<vmem>>, vector<1x4x32xbf16>
    %332 = vector.shape_cast %331 : vector<1x4x32xbf16> to vector<4x32xbf16>
    %cst_454 = arith.constant dense<0.000000e+00> : vector<8x32xf32>
    %333 = tpu.matmul %330, %332, %cst_454 {dimension_numbers = #tpu.dot_dimension_numbers<[1], [0], [0], [1], [0, 0, 1, 1], [], []>} : vector<8x4xbf16>, vector<4x32xbf16>, vector<8x32xf32> -> vector<8x32xf32>
    %334 = arith.addf %328, %333 : vector<8x32xf32>
    %c0_455 = arith.constant 0 : index
    %c2_456 = arith.constant 2 : index
    %c5_457 = arith.constant 5 : index
    %c0_458 = arith.constant 0 : index
    %c0_459 = arith.constant 0 : index
    %335 = vector.load %arg1[%c0_455, %c2_456, %c5_457, %c0_458, %c0_459] : memref<1x4x9x9x4xbf16, #tpu.memory_space<vmem>>, vector<1x1x1x8x4xbf16>
    %336 = vector.shape_cast %335 : vector<1x1x1x8x4xbf16> to vector<8x4xbf16>
    %c3_460 = arith.constant 3 : index
    %c0_461 = arith.constant 0 : index
    %c0_462 = arith.constant 0 : index
    %337 = vector.load %arg2[%c3_460, %c0_461, %c0_462] : memref<9x4x32xbf16, #tpu.memory_space<vmem>>, vector<1x4x32xbf16>
    %338 = vector.shape_cast %337 : vector<1x4x32xbf16> to vector<4x32xbf16>
    %cst_463 = arith.constant dense<0.000000e+00> : vector<8x32xf32>
    %339 = tpu.matmul %336, %338, %cst_463 {dimension_numbers = #tpu.dot_dimension_numbers<[1], [0], [0], [1], [0, 0, 1, 1], [], []>} : vector<8x4xbf16>, vector<4x32xbf16>, vector<8x32xf32> -> vector<8x32xf32>
    %340 = arith.addf %334, %339 : vector<8x32xf32>
    %c0_464 = arith.constant 0 : index
    %c3_465 = arith.constant 3 : index
    %c5_466 = arith.constant 5 : index
    %c0_467 = arith.constant 0 : index
    %c0_468 = arith.constant 0 : index
    %341 = vector.load %arg1[%c0_464, %c3_465, %c5_466, %c0_467, %c0_468] : memref<1x4x9x9x4xbf16, #tpu.memory_space<vmem>>, vector<1x1x1x8x4xbf16>
    %342 = vector.shape_cast %341 : vector<1x1x1x8x4xbf16> to vector<8x4xbf16>
    %c4_469 = arith.constant 4 : index
    %c0_470 = arith.constant 0 : index
    %c0_471 = arith.constant 0 : index
    %343 = vector.load %arg2[%c4_469, %c0_470, %c0_471] : memref<9x4x32xbf16, #tpu.memory_space<vmem>>, vector<1x4x32xbf16>
    %344 = vector.shape_cast %343 : vector<1x4x32xbf16> to vector<4x32xbf16>
    %cst_472 = arith.constant dense<0.000000e+00> : vector<8x32xf32>
    %345 = tpu.matmul %342, %344, %cst_472 {dimension_numbers = #tpu.dot_dimension_numbers<[1], [0], [0], [1], [0, 0, 1, 1], [], []>} : vector<8x4xbf16>, vector<4x32xbf16>, vector<8x32xf32> -> vector<8x32xf32>
    %346 = arith.addf %340, %345 : vector<8x32xf32>
    %c0_473 = arith.constant 0 : index
    %c2_474 = arith.constant 2 : index
    %c5_475 = arith.constant 5 : index
    %c1_476 = arith.constant 1 : index
    %c0_477 = arith.constant 0 : index
    %347 = vector.load %arg1[%c0_473, %c2_474, %c5_475, %c1_476, %c0_477] : memref<1x4x9x9x4xbf16, #tpu.memory_space<vmem>>, vector<1x1x1x8x4xbf16>
    %348 = vector.shape_cast %347 : vector<1x1x1x8x4xbf16> to vector<8x4xbf16>
    %c5_478 = arith.constant 5 : index
    %c0_479 = arith.constant 0 : index
    %c0_480 = arith.constant 0 : index
    %349 = vector.load %arg2[%c5_478, %c0_479, %c0_480] : memref<9x4x32xbf16, #tpu.memory_space<vmem>>, vector<1x4x32xbf16>
    %350 = vector.shape_cast %349 : vector<1x4x32xbf16> to vector<4x32xbf16>
    %cst_481 = arith.constant dense<0.000000e+00> : vector<8x32xf32>
    %351 = tpu.matmul %348, %350, %cst_481 {dimension_numbers = #tpu.dot_dimension_numbers<[1], [0], [0], [1], [0, 0, 1, 1], [], []>} : vector<8x4xbf16>, vector<4x32xbf16>, vector<8x32xf32> -> vector<8x32xf32>
    %352 = arith.addf %346, %351 : vector<8x32xf32>
    %c0_482 = arith.constant 0 : index
    %c0_483 = arith.constant 0 : index
    %c6_484 = arith.constant 6 : index
    %c0_485 = arith.constant 0 : index
    %c0_486 = arith.constant 0 : index
    %353 = vector.load %arg1[%c0_482, %c0_483, %c6_484, %c0_485, %c0_486] : memref<1x4x9x9x4xbf16, #tpu.memory_space<vmem>>, vector<1x1x1x8x4xbf16>
    %354 = vector.shape_cast %353 : vector<1x1x1x8x4xbf16> to vector<8x4xbf16>
    %c6_487 = arith.constant 6 : index
    %c0_488 = arith.constant 0 : index
    %c0_489 = arith.constant 0 : index
    %355 = vector.load %arg2[%c6_487, %c0_488, %c0_489] : memref<9x4x32xbf16, #tpu.memory_space<vmem>>, vector<1x4x32xbf16>
    %356 = vector.shape_cast %355 : vector<1x4x32xbf16> to vector<4x32xbf16>
    %cst_490 = arith.constant dense<0.000000e+00> : vector<8x32xf32>
    %357 = tpu.matmul %354, %356, %cst_490 {dimension_numbers = #tpu.dot_dimension_numbers<[1], [0], [0], [1], [0, 0, 1, 1], [], []>} : vector<8x4xbf16>, vector<4x32xbf16>, vector<8x32xf32> -> vector<8x32xf32>
    %358 = arith.addf %352, %357 : vector<8x32xf32>
    %c0_491 = arith.constant 0 : index
    %c1_492 = arith.constant 1 : index
    %c6_493 = arith.constant 6 : index
    %c0_494 = arith.constant 0 : index
    %c0_495 = arith.constant 0 : index
    %359 = vector.load %arg1[%c0_491, %c1_492, %c6_493, %c0_494, %c0_495] : memref<1x4x9x9x4xbf16, #tpu.memory_space<vmem>>, vector<1x1x1x8x4xbf16>
    %360 = vector.shape_cast %359 : vector<1x1x1x8x4xbf16> to vector<8x4xbf16>
    %c7_496 = arith.constant 7 : index
    %c0_497 = arith.constant 0 : index
    %c0_498 = arith.constant 0 : index
    %361 = vector.load %arg2[%c7_496, %c0_497, %c0_498] : memref<9x4x32xbf16, #tpu.memory_space<vmem>>, vector<1x4x32xbf16>
    %362 = vector.shape_cast %361 : vector<1x4x32xbf16> to vector<4x32xbf16>
    %cst_499 = arith.constant dense<0.000000e+00> : vector<8x32xf32>
    %363 = tpu.matmul %360, %362, %cst_499 {dimension_numbers = #tpu.dot_dimension_numbers<[1], [0], [0], [1], [0, 0, 1, 1], [], []>} : vector<8x4xbf16>, vector<4x32xbf16>, vector<8x32xf32> -> vector<8x32xf32>
    %364 = arith.addf %358, %363 : vector<8x32xf32>
    %c0_500 = arith.constant 0 : index
    %c0_501 = arith.constant 0 : index
    %c6_502 = arith.constant 6 : index
    %c1_503 = arith.constant 1 : index
    %c0_504 = arith.constant 0 : index
    %365 = vector.load %arg1[%c0_500, %c0_501, %c6_502, %c1_503, %c0_504] : memref<1x4x9x9x4xbf16, #tpu.memory_space<vmem>>, vector<1x1x1x8x4xbf16>
    %366 = vector.shape_cast %365 : vector<1x1x1x8x4xbf16> to vector<8x4xbf16>
    %c8_505 = arith.constant 8 : index
    %c0_506 = arith.constant 0 : index
    %c0_507 = arith.constant 0 : index
    %367 = vector.load %arg2[%c8_505, %c0_506, %c0_507] : memref<9x4x32xbf16, #tpu.memory_space<vmem>>, vector<1x4x32xbf16>
    %368 = vector.shape_cast %367 : vector<1x4x32xbf16> to vector<4x32xbf16>
    %cst_508 = arith.constant dense<0.000000e+00> : vector<8x32xf32>
    %369 = tpu.matmul %366, %368, %cst_508 {dimension_numbers = #tpu.dot_dimension_numbers<[1], [0], [0], [1], [0, 0, 1, 1], [], []>} : vector<8x4xbf16>, vector<4x32xbf16>, vector<8x32xf32> -> vector<8x32xf32>
    %370 = arith.addf %364, %369 : vector<8x32xf32>
    %371 = vector.broadcast %0 : vector<1x32xf32> to vector<8x32xf32>
    %372 = arith.addf %370, %371 : vector<8x32xf32>
    %cst_509 = arith.constant 0.000000e+00 : f32
    %373 = vector.broadcast %cst_509 : f32 to vector<8x32xf32>
    %374 = arith.maximumf %372, %373 : vector<8x32xf32>
    %375 = arith.truncf %374 : vector<8x32xf32> to vector<8x32xbf16>
    %c0_510 = arith.constant 0 : index
    %c5_511 = arith.constant 5 : index
    %c0_512 = arith.constant 0 : index
    %c0_513 = arith.constant 0 : index
    %376 = vector.load %arg4[%c0_510, %c5_511, %c0_512, %c0_513] : memref<1x8x8x32xbf16, #tpu.memory_space<vmem>>, vector<1x1x8x32xbf16>
    %377 = vector.shape_cast %376 : vector<1x1x8x32xbf16> to vector<8x32xbf16>
    %378 = vector.shape_cast %375 : vector<8x32xbf16> to vector<1x1x8x32xbf16>
    tpu.vector_store %arg4[%c0_510, %c5_511, %c0_512, %c0_513], %378 {strides = array<i32>} : memref<1x8x8x32xbf16, #tpu.memory_space<vmem>>, vector<1x1x8x32xbf16>,
    %cst_514 = arith.constant 0.000000e+00 : f32
    %379 = vector.broadcast %cst_514 : f32 to vector<8x32xf32>
    %c0_515 = arith.constant 0 : index
    %c0_516 = arith.constant 0 : index
    %c6_517 = arith.constant 6 : index
    %c0_518 = arith.constant 0 : index
    %c0_519 = arith.constant 0 : index
    %380 = vector.load %arg1[%c0_515, %c0_516, %c6_517, %c0_518, %c0_519] : memref<1x4x9x9x4xbf16, #tpu.memory_space<vmem>>, vector<1x1x1x8x4xbf16>
    %381 = vector.shape_cast %380 : vector<1x1x1x8x4xbf16> to vector<8x4xbf16>
    %c0_520 = arith.constant 0 : index
    %c0_521 = arith.constant 0 : index
    %c0_522 = arith.constant 0 : index
    %382 = vector.load %arg2[%c0_520, %c0_521, %c0_522] : memref<9x4x32xbf16, #tpu.memory_space<vmem>>, vector<1x4x32xbf16>
    %383 = vector.shape_cast %382 : vector<1x4x32xbf16> to vector<4x32xbf16>
    %cst_523 = arith.constant dense<0.000000e+00> : vector<8x32xf32>
    %384 = tpu.matmul %381, %383, %cst_523 {dimension_numbers = #tpu.dot_dimension_numbers<[1], [0], [0], [1], [0, 0, 1, 1], [], []>} : vector<8x4xbf16>, vector<4x32xbf16>, vector<8x32xf32> -> vector<8x32xf32>
    %385 = arith.addf %379, %384 : vector<8x32xf32>
    %c0_524 = arith.constant 0 : index
    %c1_525 = arith.constant 1 : index
    %c6_526 = arith.constant 6 : index
    %c0_527 = arith.constant 0 : index
    %c0_528 = arith.constant 0 : index
    %386 = vector.load %arg1[%c0_524, %c1_525, %c6_526, %c0_527, %c0_528] : memref<1x4x9x9x4xbf16, #tpu.memory_space<vmem>>, vector<1x1x1x8x4xbf16>
    %387 = vector.shape_cast %386 : vector<1x1x1x8x4xbf16> to vector<8x4xbf16>
    %c1_529 = arith.constant 1 : index
    %c0_530 = arith.constant 0 : index
    %c0_531 = arith.constant 0 : index
    %388 = vector.load %arg2[%c1_529, %c0_530, %c0_531] : memref<9x4x32xbf16, #tpu.memory_space<vmem>>, vector<1x4x32xbf16>
    %389 = vector.shape_cast %388 : vector<1x4x32xbf16> to vector<4x32xbf16>
    %cst_532 = arith.constant dense<0.000000e+00> : vector<8x32xf32>
    %390 = tpu.matmul %387, %389, %cst_532 {dimension_numbers = #tpu.dot_dimension_numbers<[1], [0], [0], [1], [0, 0, 1, 1], [], []>} : vector<8x4xbf16>, vector<4x32xbf16>, vector<8x32xf32> -> vector<8x32xf32>
    %391 = arith.addf %385, %390 : vector<8x32xf32>
    %c0_533 = arith.constant 0 : index
    %c0_534 = arith.constant 0 : index
    %c6_535 = arith.constant 6 : index
    %c1_536 = arith.constant 1 : index
    %c0_537 = arith.constant 0 : index
    %392 = vector.load %arg1[%c0_533, %c0_534, %c6_535, %c1_536, %c0_537] : memref<1x4x9x9x4xbf16, #tpu.memory_space<vmem>>, vector<1x1x1x8x4xbf16>
    %393 = vector.shape_cast %392 : vector<1x1x1x8x4xbf16> to vector<8x4xbf16>
    %c2_538 = arith.constant 2 : index
    %c0_539 = arith.constant 0 : index
    %c0_540 = arith.constant 0 : index
    %394 = vector.load %arg2[%c2_538, %c0_539, %c0_540] : memref<9x4x32xbf16, #tpu.memory_space<vmem>>, vector<1x4x32xbf16>
    %395 = vector.shape_cast %394 : vector<1x4x32xbf16> to vector<4x32xbf16>
    %cst_541 = arith.constant dense<0.000000e+00> : vector<8x32xf32>
    %396 = tpu.matmul %393, %395, %cst_541 {dimension_numbers = #tpu.dot_dimension_numbers<[1], [0], [0], [1], [0, 0, 1, 1], [], []>} : vector<8x4xbf16>, vector<4x32xbf16>, vector<8x32xf32> -> vector<8x32xf32>
    %397 = arith.addf %391, %396 : vector<8x32xf32>
    %c0_542 = arith.constant 0 : index
    %c2_543 = arith.constant 2 : index
    %c6_544 = arith.constant 6 : index
    %c0_545 = arith.constant 0 : index
    %c0_546 = arith.constant 0 : index
    %398 = vector.load %arg1[%c0_542, %c2_543, %c6_544, %c0_545, %c0_546] : memref<1x4x9x9x4xbf16, #tpu.memory_space<vmem>>, vector<1x1x1x8x4xbf16>
    %399 = vector.shape_cast %398 : vector<1x1x1x8x4xbf16> to vector<8x4xbf16>
    %c3_547 = arith.constant 3 : index
    %c0_548 = arith.constant 0 : index
    %c0_549 = arith.constant 0 : index
    %400 = vector.load %arg2[%c3_547, %c0_548, %c0_549] : memref<9x4x32xbf16, #tpu.memory_space<vmem>>, vector<1x4x32xbf16>
    %401 = vector.shape_cast %400 : vector<1x4x32xbf16> to vector<4x32xbf16>
    %cst_550 = arith.constant dense<0.000000e+00> : vector<8x32xf32>
    %402 = tpu.matmul %399, %401, %cst_550 {dimension_numbers = #tpu.dot_dimension_numbers<[1], [0], [0], [1], [0, 0, 1, 1], [], []>} : vector<8x4xbf16>, vector<4x32xbf16>, vector<8x32xf32> -> vector<8x32xf32>
    %403 = arith.addf %397, %402 : vector<8x32xf32>
    %c0_551 = arith.constant 0 : index
    %c3_552 = arith.constant 3 : index
    %c6_553 = arith.constant 6 : index
    %c0_554 = arith.constant 0 : index
    %c0_555 = arith.constant 0 : index
    %404 = vector.load %arg1[%c0_551, %c3_552, %c6_553, %c0_554, %c0_555] : memref<1x4x9x9x4xbf16, #tpu.memory_space<vmem>>, vector<1x1x1x8x4xbf16>
    %405 = vector.shape_cast %404 : vector<1x1x1x8x4xbf16> to vector<8x4xbf16>
    %c4_556 = arith.constant 4 : index
    %c0_557 = arith.constant 0 : index
    %c0_558 = arith.constant 0 : index
    %406 = vector.load %arg2[%c4_556, %c0_557, %c0_558] : memref<9x4x32xbf16, #tpu.memory_space<vmem>>, vector<1x4x32xbf16>
    %407 = vector.shape_cast %406 : vector<1x4x32xbf16> to vector<4x32xbf16>
    %cst_559 = arith.constant dense<0.000000e+00> : vector<8x32xf32>
    %408 = tpu.matmul %405, %407, %cst_559 {dimension_numbers = #tpu.dot_dimension_numbers<[1], [0], [0], [1], [0, 0, 1, 1], [], []>} : vector<8x4xbf16>, vector<4x32xbf16>, vector<8x32xf32> -> vector<8x32xf32>
    %409 = arith.addf %403, %408 : vector<8x32xf32>
    %c0_560 = arith.constant 0 : index
    %c2_561 = arith.constant 2 : index
    %c6_562 = arith.constant 6 : index
    %c1_563 = arith.constant 1 : index
    %c0_564 = arith.constant 0 : index
    %410 = vector.load %arg1[%c0_560, %c2_561, %c6_562, %c1_563, %c0_564] : memref<1x4x9x9x4xbf16, #tpu.memory_space<vmem>>, vector<1x1x1x8x4xbf16>
    %411 = vector.shape_cast %410 : vector<1x1x1x8x4xbf16> to vector<8x4xbf16>
    %c5_565 = arith.constant 5 : index
    %c0_566 = arith.constant 0 : index
    %c0_567 = arith.constant 0 : index
    %412 = vector.load %arg2[%c5_565, %c0_566, %c0_567] : memref<9x4x32xbf16, #tpu.memory_space<vmem>>, vector<1x4x32xbf16>
    %413 = vector.shape_cast %412 : vector<1x4x32xbf16> to vector<4x32xbf16>
    %cst_568 = arith.constant dense<0.000000e+00> : vector<8x32xf32>
    %414 = tpu.matmul %411, %413, %cst_568 {dimension_numbers = #tpu.dot_dimension_numbers<[1], [0], [0], [1], [0, 0, 1, 1], [], []>} : vector<8x4xbf16>, vector<4x32xbf16>, vector<8x32xf32> -> vector<8x32xf32>
    %415 = arith.addf %409, %414 : vector<8x32xf32>
    %c0_569 = arith.constant 0 : index
    %c0_570 = arith.constant 0 : index
    %c7_571 = arith.constant 7 : index
    %c0_572 = arith.constant 0 : index
    %c0_573 = arith.constant 0 : index
    %416 = vector.load %arg1[%c0_569, %c0_570, %c7_571, %c0_572, %c0_573] : memref<1x4x9x9x4xbf16, #tpu.memory_space<vmem>>, vector<1x1x1x8x4xbf16>
    %417 = vector.shape_cast %416 : vector<1x1x1x8x4xbf16> to vector<8x4xbf16>
    %c6_574 = arith.constant 6 : index
    %c0_575 = arith.constant 0 : index
    %c0_576 = arith.constant 0 : index
    %418 = vector.load %arg2[%c6_574, %c0_575, %c0_576] : memref<9x4x32xbf16, #tpu.memory_space<vmem>>, vector<1x4x32xbf16>
    %419 = vector.shape_cast %418 : vector<1x4x32xbf16> to vector<4x32xbf16>
    %cst_577 = arith.constant dense<0.000000e+00> : vector<8x32xf32>
    %420 = tpu.matmul %417, %419, %cst_577 {dimension_numbers = #tpu.dot_dimension_numbers<[1], [0], [0], [1], [0, 0, 1, 1], [], []>} : vector<8x4xbf16>, vector<4x32xbf16>, vector<8x32xf32> -> vector<8x32xf32>
    %421 = arith.addf %415, %420 : vector<8x32xf32>
    %c0_578 = arith.constant 0 : index
    %c1_579 = arith.constant 1 : index
    %c7_580 = arith.constant 7 : index
    %c0_581 = arith.constant 0 : index
    %c0_582 = arith.constant 0 : index
    %422 = vector.load %arg1[%c0_578, %c1_579, %c7_580, %c0_581, %c0_582] : memref<1x4x9x9x4xbf16, #tpu.memory_space<vmem>>, vector<1x1x1x8x4xbf16>
    %423 = vector.shape_cast %422 : vector<1x1x1x8x4xbf16> to vector<8x4xbf16>
    %c7_583 = arith.constant 7 : index
    %c0_584 = arith.constant 0 : index
    %c0_585 = arith.constant 0 : index
    %424 = vector.load %arg2[%c7_583, %c0_584, %c0_585] : memref<9x4x32xbf16, #tpu.memory_space<vmem>>, vector<1x4x32xbf16>
    %425 = vector.shape_cast %424 : vector<1x4x32xbf16> to vector<4x32xbf16>
    %cst_586 = arith.constant dense<0.000000e+00> : vector<8x32xf32>
    %426 = tpu.matmul %423, %425, %cst_586 {dimension_numbers = #tpu.dot_dimension_numbers<[1], [0], [0], [1], [0, 0, 1, 1], [], []>} : vector<8x4xbf16>, vector<4x32xbf16>, vector<8x32xf32> -> vector<8x32xf32>
    %427 = arith.addf %421, %426 : vector<8x32xf32>
    %c0_587 = arith.constant 0 : index
    %c0_588 = arith.constant 0 : index
    %c7_589 = arith.constant 7 : index
    %c1_590 = arith.constant 1 : index
    %c0_591 = arith.constant 0 : index
    %428 = vector.load %arg1[%c0_587, %c0_588, %c7_589, %c1_590, %c0_591] : memref<1x4x9x9x4xbf16, #tpu.memory_space<vmem>>, vector<1x1x1x8x4xbf16>
    %429 = vector.shape_cast %428 : vector<1x1x1x8x4xbf16> to vector<8x4xbf16>
    %c8_592 = arith.constant 8 : index
    %c0_593 = arith.constant 0 : index
    %c0_594 = arith.constant 0 : index
    %430 = vector.load %arg2[%c8_592, %c0_593, %c0_594] : memref<9x4x32xbf16, #tpu.memory_space<vmem>>, vector<1x4x32xbf16>
    %431 = vector.shape_cast %430 : vector<1x4x32xbf16> to vector<4x32xbf16>
    %cst_595 = arith.constant dense<0.000000e+00> : vector<8x32xf32>
    %432 = tpu.matmul %429, %431, %cst_595 {dimension_numbers = #tpu.dot_dimension_numbers<[1], [0], [0], [1], [0, 0, 1, 1], [], []>} : vector<8x4xbf16>, vector<4x32xbf16>, vector<8x32xf32> -> vector<8x32xf32>
    %433 = arith.addf %427, %432 : vector<8x32xf32>
    %434 = vector.broadcast %0 : vector<1x32xf32> to vector<8x32xf32>
    %435 = arith.addf %433, %434 : vector<8x32xf32>
    %cst_596 = arith.constant 0.000000e+00 : f32
    %436 = vector.broadcast %cst_596 : f32 to vector<8x32xf32>
    %437 = arith.maximumf %435, %436 : vector<8x32xf32>
    %438 = arith.truncf %437 : vector<8x32xf32> to vector<8x32xbf16>
    %c0_597 = arith.constant 0 : index
    %c6_598 = arith.constant 6 : index
    %c0_599 = arith.constant 0 : index
    %c0_600 = arith.constant 0 : index
    %439 = vector.load %arg4[%c0_597, %c6_598, %c0_599, %c0_600] : memref<1x8x8x32xbf16, #tpu.memory_space<vmem>>, vector<1x1x8x32xbf16>
    %440 = vector.shape_cast %439 : vector<1x1x8x32xbf16> to vector<8x32xbf16>
    %441 = vector.shape_cast %438 : vector<8x32xbf16> to vector<1x1x8x32xbf16>
    tpu.vector_store %arg4[%c0_597, %c6_598, %c0_599, %c0_600], %441 {strides = array<i32>} : memref<1x8x8x32xbf16, #tpu.memory_space<vmem>>, vector<1x1x8x32xbf16>,
    %cst_601 = arith.constant 0.000000e+00 : f32
    %442 = vector.broadcast %cst_601 : f32 to vector<8x32xf32>
    %c0_602 = arith.constant 0 : index
    %c0_603 = arith.constant 0 : index
    %c7_604 = arith.constant 7 : index
    %c0_605 = arith.constant 0 : index
    %c0_606 = arith.constant 0 : index
    %443 = vector.load %arg1[%c0_602, %c0_603, %c7_604, %c0_605, %c0_606] : memref<1x4x9x9x4xbf16, #tpu.memory_space<vmem>>, vector<1x1x1x8x4xbf16>
    %444 = vector.shape_cast %443 : vector<1x1x1x8x4xbf16> to vector<8x4xbf16>
    %c0_607 = arith.constant 0 : index
    %c0_608 = arith.constant 0 : index
    %c0_609 = arith.constant 0 : index
    %445 = vector.load %arg2[%c0_607, %c0_608, %c0_609] : memref<9x4x32xbf16, #tpu.memory_space<vmem>>, vector<1x4x32xbf16>
    %446 = vector.shape_cast %445 : vector<1x4x32xbf16> to vector<4x32xbf16>
    %cst_610 = arith.constant dense<0.000000e+00> : vector<8x32xf32>
    %447 = tpu.matmul %444, %446, %cst_610 {dimension_numbers = #tpu.dot_dimension_numbers<[1], [0], [0], [1], [0, 0, 1, 1], [], []>} : vector<8x4xbf16>, vector<4x32xbf16>, vector<8x32xf32> -> vector<8x32xf32>
    %448 = arith.addf %442, %447 : vector<8x32xf32>
    %c0_611 = arith.constant 0 : index
    %c1_612 = arith.constant 1 : index
    %c7_613 = arith.constant 7 : index
    %c0_614 = arith.constant 0 : index
    %c0_615 = arith.constant 0 : index
    %449 = vector.load %arg1[%c0_611, %c1_612, %c7_613, %c0_614, %c0_615] : memref<1x4x9x9x4xbf16, #tpu.memory_space<vmem>>, vector<1x1x1x8x4xbf16>
    %450 = vector.shape_cast %449 : vector<1x1x1x8x4xbf16> to vector<8x4xbf16>
    %c1_616 = arith.constant 1 : index
    %c0_617 = arith.constant 0 : index
    %c0_618 = arith.constant 0 : index
    %451 = vector.load %arg2[%c1_616, %c0_617, %c0_618] : memref<9x4x32xbf16, #tpu.memory_space<vmem>>, vector<1x4x32xbf16>
    %452 = vector.shape_cast %451 : vector<1x4x32xbf16> to vector<4x32xbf16>
    %cst_619 = arith.constant dense<0.000000e+00> : vector<8x32xf32>
    %453 = tpu.matmul %450, %452, %cst_619 {dimension_numbers = #tpu.dot_dimension_numbers<[1], [0], [0], [1], [0, 0, 1, 1], [], []>} : vector<8x4xbf16>, vector<4x32xbf16>, vector<8x32xf32> -> vector<8x32xf32>
    %454 = arith.addf %448, %453 : vector<8x32xf32>
    %c0_620 = arith.constant 0 : index
    %c0_621 = arith.constant 0 : index
    %c7_622 = arith.constant 7 : index
    %c1_623 = arith.constant 1 : index
    %c0_624 = arith.constant 0 : index
    %455 = vector.load %arg1[%c0_620, %c0_621, %c7_622, %c1_623, %c0_624] : memref<1x4x9x9x4xbf16, #tpu.memory_space<vmem>>, vector<1x1x1x8x4xbf16>
    %456 = vector.shape_cast %455 : vector<1x1x1x8x4xbf16> to vector<8x4xbf16>
    %c2_625 = arith.constant 2 : index
    %c0_626 = arith.constant 0 : index
    %c0_627 = arith.constant 0 : index
    %457 = vector.load %arg2[%c2_625, %c0_626, %c0_627] : memref<9x4x32xbf16, #tpu.memory_space<vmem>>, vector<1x4x32xbf16>
    %458 = vector.shape_cast %457 : vector<1x4x32xbf16> to vector<4x32xbf16>
    %cst_628 = arith.constant dense<0.000000e+00> : vector<8x32xf32>
    %459 = tpu.matmul %456, %458, %cst_628 {dimension_numbers = #tpu.dot_dimension_numbers<[1], [0], [0], [1], [0, 0, 1, 1], [], []>} : vector<8x4xbf16>, vector<4x32xbf16>, vector<8x32xf32> -> vector<8x32xf32>
    %460 = arith.addf %454, %459 : vector<8x32xf32>
    %c0_629 = arith.constant 0 : index
    %c2_630 = arith.constant 2 : index
    %c7_631 = arith.constant 7 : index
    %c0_632 = arith.constant 0 : index
    %c0_633 = arith.constant 0 : index
    %461 = vector.load %arg1[%c0_629, %c2_630, %c7_631, %c0_632, %c0_633] : memref<1x4x9x9x4xbf16, #tpu.memory_space<vmem>>, vector<1x1x1x8x4xbf16>
    %462 = vector.shape_cast %461 : vector<1x1x1x8x4xbf16> to vector<8x4xbf16>
    %c3_634 = arith.constant 3 : index
    %c0_635 = arith.constant 0 : index
    %c0_636 = arith.constant 0 : index
    %463 = vector.load %arg2[%c3_634, %c0_635, %c0_636] : memref<9x4x32xbf16, #tpu.memory_space<vmem>>, vector<1x4x32xbf16>
    %464 = vector.shape_cast %463 : vector<1x4x32xbf16> to vector<4x32xbf16>
    %cst_637 = arith.constant dense<0.000000e+00> : vector<8x32xf32>
    %465 = tpu.matmul %462, %464, %cst_637 {dimension_numbers = #tpu.dot_dimension_numbers<[1], [0], [0], [1], [0, 0, 1, 1], [], []>} : vector<8x4xbf16>, vector<4x32xbf16>, vector<8x32xf32> -> vector<8x32xf32>
    %466 = arith.addf %460, %465 : vector<8x32xf32>
    %c0_638 = arith.constant 0 : index
    %c3_639 = arith.constant 3 : index
    %c7_640 = arith.constant 7 : index
    %c0_641 = arith.constant 0 : index
    %c0_642 = arith.constant 0 : index
    %467 = vector.load %arg1[%c0_638, %c3_639, %c7_640, %c0_641, %c0_642] : memref<1x4x9x9x4xbf16, #tpu.memory_space<vmem>>, vector<1x1x1x8x4xbf16>
    %468 = vector.shape_cast %467 : vector<1x1x1x8x4xbf16> to vector<8x4xbf16>
    %c4_643 = arith.constant 4 : index
    %c0_644 = arith.constant 0 : index
    %c0_645 = arith.constant 0 : index
    %469 = vector.load %arg2[%c4_643, %c0_644, %c0_645] : memref<9x4x32xbf16, #tpu.memory_space<vmem>>, vector<1x4x32xbf16>
    %470 = vector.shape_cast %469 : vector<1x4x32xbf16> to vector<4x32xbf16>
    %cst_646 = arith.constant dense<0.000000e+00> : vector<8x32xf32>
    %471 = tpu.matmul %468, %470, %cst_646 {dimension_numbers = #tpu.dot_dimension_numbers<[1], [0], [0], [1], [0, 0, 1, 1], [], []>} : vector<8x4xbf16>, vector<4x32xbf16>, vector<8x32xf32> -> vector<8x32xf32>
    %472 = arith.addf %466, %471 : vector<8x32xf32>
    %c0_647 = arith.constant 0 : index
    %c2_648 = arith.constant 2 : index
    %c7_649 = arith.constant 7 : index
    %c1_650 = arith.constant 1 : index
    %c0_651 = arith.constant 0 : index
    %473 = vector.load %arg1[%c0_647, %c2_648, %c7_649, %c1_650, %c0_651] : memref<1x4x9x9x4xbf16, #tpu.memory_space<vmem>>, vector<1x1x1x8x4xbf16>
    %474 = vector.shape_cast %473 : vector<1x1x1x8x4xbf16> to vector<8x4xbf16>
    %c5_652 = arith.constant 5 : index
    %c0_653 = arith.constant 0 : index
    %c0_654 = arith.constant 0 : index
    %475 = vector.load %arg2[%c5_652, %c0_653, %c0_654] : memref<9x4x32xbf16, #tpu.memory_space<vmem>>, vector<1x4x32xbf16>
    %476 = vector.shape_cast %475 : vector<1x4x32xbf16> to vector<4x32xbf16>
    %cst_655 = arith.constant dense<0.000000e+00> : vector<8x32xf32>
    %477 = tpu.matmul %474, %476, %cst_655 {dimension_numbers = #tpu.dot_dimension_numbers<[1], [0], [0], [1], [0, 0, 1, 1], [], []>} : vector<8x4xbf16>, vector<4x32xbf16>, vector<8x32xf32> -> vector<8x32xf32>
    %478 = arith.addf %472, %477 : vector<8x32xf32>
    %c0_656 = arith.constant 0 : index
    %c0_657 = arith.constant 0 : index
    %c8_658 = arith.constant 8 : index
    %c0_659 = arith.constant 0 : index
    %c0_660 = arith.constant 0 : index
    %479 = vector.load %arg1[%c0_656, %c0_657, %c8_658, %c0_659, %c0_660] : memref<1x4x9x9x4xbf16, #tpu.memory_space<vmem>>, vector<1x1x1x8x4xbf16>
    %480 = vector.shape_cast %479 : vector<1x1x1x8x4xbf16> to vector<8x4xbf16>
    %c6_661 = arith.constant 6 : index
    %c0_662 = arith.constant 0 : index
    %c0_663 = arith.constant 0 : index
    %481 = vector.load %arg2[%c6_661, %c0_662, %c0_663] : memref<9x4x32xbf16, #tpu.memory_space<vmem>>, vector<1x4x32xbf16>
    %482 = vector.shape_cast %481 : vector<1x4x32xbf16> to vector<4x32xbf16>
    %cst_664 = arith.constant dense<0.000000e+00> : vector<8x32xf32>
    %483 = tpu.matmul %480, %482, %cst_664 {dimension_numbers = #tpu.dot_dimension_numbers<[1], [0], [0], [1], [0, 0, 1, 1], [], []>} : vector<8x4xbf16>, vector<4x32xbf16>, vector<8x32xf32> -> vector<8x32xf32>
    %484 = arith.addf %478, %483 : vector<8x32xf32>
    %c0_665 = arith.constant 0 : index
    %c1_666 = arith.constant 1 : index
    %c8_667 = arith.constant 8 : index
    %c0_668 = arith.constant 0 : index
    %c0_669 = arith.constant 0 : index
    %485 = vector.load %arg1[%c0_665, %c1_666, %c8_667, %c0_668, %c0_669] : memref<1x4x9x9x4xbf16, #tpu.memory_space<vmem>>, vector<1x1x1x8x4xbf16>
    %486 = vector.shape_cast %485 : vector<1x1x1x8x4xbf16> to vector<8x4xbf16>
    %c7_670 = arith.constant 7 : index
    %c0_671 = arith.constant 0 : index
    %c0_672 = arith.constant 0 : index
    %487 = vector.load %arg2[%c7_670, %c0_671, %c0_672] : memref<9x4x32xbf16, #tpu.memory_space<vmem>>, vector<1x4x32xbf16>
    %488 = vector.shape_cast %487 : vector<1x4x32xbf16> to vector<4x32xbf16>
    %cst_673 = arith.constant dense<0.000000e+00> : vector<8x32xf32>
    %489 = tpu.matmul %486, %488, %cst_673 {dimension_numbers = #tpu.dot_dimension_numbers<[1], [0], [0], [1], [0, 0, 1, 1], [], []>} : vector<8x4xbf16>, vector<4x32xbf16>, vector<8x32xf32> -> vector<8x32xf32>
    %490 = arith.addf %484, %489 : vector<8x32xf32>
    %c0_674 = arith.constant 0 : index
    %c0_675 = arith.constant 0 : index
    %c8_676 = arith.constant 8 : index
    %c1_677 = arith.constant 1 : index
    %c0_678 = arith.constant 0 : index
    %491 = vector.load %arg1[%c0_674, %c0_675, %c8_676, %c1_677, %c0_678] : memref<1x4x9x9x4xbf16, #tpu.memory_space<vmem>>, vector<1x1x1x8x4xbf16>
    %492 = vector.shape_cast %491 : vector<1x1x1x8x4xbf16> to vector<8x4xbf16>
    %c8_679 = arith.constant 8 : index
    %c0_680 = arith.constant 0 : index
    %c0_681 = arith.constant 0 : index
    %493 = vector.load %arg2[%c8_679, %c0_680, %c0_681] : memref<9x4x32xbf16, #tpu.memory_space<vmem>>, vector<1x4x32xbf16>
    %494 = vector.shape_cast %493 : vector<1x4x32xbf16> to vector<4x32xbf16>
    %cst_682 = arith.constant dense<0.000000e+00> : vector<8x32xf32>
    %495 = tpu.matmul %492, %494, %cst_682 {dimension_numbers = #tpu.dot_dimension_numbers<[1], [0], [0], [1], [0, 0, 1, 1], [], []>} : vector<8x4xbf16>, vector<4x32xbf16>, vector<8x32xf32> -> vector<8x32xf32>
    %496 = arith.addf %490, %495 : vector<8x32xf32>
    %497 = vector.broadcast %0 : vector<1x32xf32> to vector<8x32xf32>
    %498 = arith.addf %496, %497 : vector<8x32xf32>
    %cst_683 = arith.constant 0.000000e+00 : f32
    %499 = vector.broadcast %cst_683 : f32 to vector<8x32xf32>
    %500 = arith.maximumf %498, %499 : vector<8x32xf32>
    %501 = arith.truncf %500 : vector<8x32xf32> to vector<8x32xbf16>
    %c0_684 = arith.constant 0 : index
    %c7_685 = arith.constant 7 : index
    %c0_686 = arith.constant 0 : index
    %c0_687 = arith.constant 0 : index
    %502 = vector.load %arg4[%c0_684, %c7_685, %c0_686, %c0_687] : memref<1x8x8x32xbf16, #tpu.memory_space<vmem>>, vector<1x1x8x32xbf16>
    %503 = vector.shape_cast %502 : vector<1x1x8x32xbf16> to vector<8x32xbf16>
    %504 = vector.shape_cast %501 : vector<8x32xbf16> to vector<1x1x8x32xbf16>
    tpu.vector_store %arg4[%c0_684, %c7_685, %c0_686, %c0_687], %504 {strides = array<i32>} : memref<1x8x8x32xbf16, #tpu.memory_space<vmem>>, vector<1x1x8x32xbf16>,
    return
  }
  func.func @transform_0(%arg0: i32) -> (i32, i32, i32, i32, i32) {
    %c0_i32 = arith.constant 0 : i32
    %c0_i32_0 = arith.constant 0 : i32
    %c0_i32_1 = arith.constant 0 : i32
    %c0_i32_2 = arith.constant 0 : i32
    %c0_i32_3 = arith.constant 0 : i32
    return %arg0, %c0_i32, %c0_i32_0, %c0_i32_1, %c0_i32_2 : i32, i32, i32, i32, i32
  }
  func.func @transform_1(%arg0: i32) -> (i32, i32, i32) {
    %c0_i32 = arith.constant 0 : i32
    %c0_i32_0 = arith.constant 0 : i32
    %c0_i32_1 = arith.constant 0 : i32
    %c0_i32_2 = arith.constant 0 : i32
    return %c0_i32, %c0_i32_0, %c0_i32_1 : i32, i32, i32
  }
  func.func @transform_2(%arg0: i32) -> (i32, i32) {
    %c0_i32 = arith.constant 0 : i32
    %c0_i32_0 = arith.constant 0 : i32
    %c0_i32_1 = arith.constant 0 : i32
    return %c0_i32, %c0_i32_0 : i32, i32
  }
  func.func @transform_3(%arg0: i32) -> (i32, i32, i32, i32) {
    %c0_i32 = arith.constant 0 : i32
    %c0_i32_0 = arith.constant 0 : i32
    %c0_i32_1 = arith.constant 0 : i32
    %c0_i32_2 = arith.constant 0 : i32
    return %arg0, %c0_i32, %c0_i32_0, %c0_i32_1 : i32, i32, i32, i32
  }
}

module attributes {stable_mosaic.version = 11 : i64} {
  func.func @matmul_bias_kernel(%arg0: i32, %arg1: i32, %arg2: i32, %arg3: memref<16x128xbf16, #tpu.memory_space<vmem>>, %arg4: memref<128x128xbf16, #tpu.memory_space<vmem>>, %arg5: memref<1x128xf32, #tpu.memory_space<vmem>>, %arg6: memref<16x128xbf16, #tpu.memory_space<vmem>>, %arg7: memref<16x128xf32, #tpu.memory_space<vmem>>) attributes {dimension_semantics = [#tpu.dimension_semantics<parallel>, #tpu.dimension_semantics<parallel>, #tpu.dimension_semantics<arbitrary>], iteration_bounds = array<i64: 2, 1, 1>, scalar_prefetch = 0 : i64, scratch_operands = 1 : i64, tpu.core_type = #tpu.core_type<tc>, window_params = [{transform_indices = @transform_0, window_bounds = array<i64: 16, 128>}, {transform_indices = @transform_1, window_bounds = array<i64: 128, 128>}, {transform_indices = @transform_2, window_bounds = array<i64: 1, 128>}, {transform_indices = @transform_3, window_bounds = array<i64: 16, 128>}]} {
    %c0_i32 = arith.constant 0 : i32
    %0 = arith.cmpi eq, %arg2, %c0_i32 : i32
    %1 = arith.extui %0 : i1 to i32
    %c0_i32_0 = arith.constant 0 : i32
    %2 = arith.cmpi ne, %1, %c0_i32_0 : i32
    scf.if %2 {
      %cst_10 = arith.constant 0.000000e+00 : f32
      %12 = vector.broadcast %cst_10 : f32 to vector<16x128xf32>
      %c0_11 = arith.constant 0 : index
      %c0_12 = arith.constant 0 : index
      %13 = vector.load %arg7[%c0_11, %c0_12] : memref<16x128xf32, #tpu.memory_space<vmem>>, vector<16x128xf32>
      tpu.vector_store %arg7[%c0_11, %c0_12], %12 {strides = array<i32>} : memref<16x128xf32, #tpu.memory_space<vmem>>, vector<16x128xf32>,
    } else {
    }
    %c0 = arith.constant 0 : index
    %c0_1 = arith.constant 0 : index
    %3 = vector.load %arg7[%c0, %c0_1] : memref<16x128xf32, #tpu.memory_space<vmem>>, vector<16x128xf32>
    %c0_2 = arith.constant 0 : index
    %c0_3 = arith.constant 0 : index
    %4 = vector.load %arg3[%c0_2, %c0_3] : memref<16x128xbf16, #tpu.memory_space<vmem>>, vector<16x128xbf16>
    %c0_4 = arith.constant 0 : index
    %c0_5 = arith.constant 0 : index
    %5 = vector.load %arg4[%c0_4, %c0_5] : memref<128x128xbf16, #tpu.memory_space<vmem>>, vector<128x128xbf16>
    %cst = arith.constant dense<0.000000e+00> : vector<16x128xf32>
    %6 = tpu.matmul %4, %5, %cst {dimension_numbers = #tpu.dot_dimension_numbers<[1], [0], [0], [1], [0, 0, 1, 1], [], []>} : vector<16x128xbf16>, vector<128x128xbf16>, vector<16x128xf32> -> vector<16x128xf32>
    %7 = arith.addf %3, %6 : vector<16x128xf32>
    %c0_6 = arith.constant 0 : index
    %c0_7 = arith.constant 0 : index
    %8 = vector.load %arg7[%c0_6, %c0_7] : memref<16x128xf32, #tpu.memory_space<vmem>>, vector<16x128xf32>
    tpu.vector_store %arg7[%c0_6, %c0_7], %7 {strides = array<i32>} : memref<16x128xf32, #tpu.memory_space<vmem>>, vector<16x128xf32>,
    %c0_i32_8 = arith.constant 0 : i32
    %9 = arith.cmpi eq, %arg2, %c0_i32_8 : i32
    %10 = arith.extui %9 : i1 to i32
    %c0_i32_9 = arith.constant 0 : i32
    %11 = arith.cmpi ne, %10, %c0_i32_9 : i32
    scf.if %11 {
      %c0_10 = arith.constant 0 : index
      %c0_11 = arith.constant 0 : index
      %12 = vector.load %arg7[%c0_10, %c0_11] : memref<16x128xf32, #tpu.memory_space<vmem>>, vector<16x128xf32>
      %c0_12 = arith.constant 0 : index
      %c0_13 = arith.constant 0 : index
      %13 = vector.load %arg5[%c0_12, %c0_13] : memref<1x128xf32, #tpu.memory_space<vmem>>, vector<1x128xf32>
      %14 = vector.broadcast %13 : vector<1x128xf32> to vector<16x128xf32>
      %15 = arith.addf %12, %14 : vector<16x128xf32>
      %16 = arith.truncf %15 : vector<16x128xf32> to vector<16x128xbf16>
      %c0_14 = arith.constant 0 : index
      %c0_15 = arith.constant 0 : index
      %17 = vector.load %arg6[%c0_14, %c0_15] : memref<16x128xbf16, #tpu.memory_space<vmem>>, vector<16x128xbf16>
      tpu.vector_store %arg6[%c0_14, %c0_15], %16 {strides = array<i32>} : memref<16x128xbf16, #tpu.memory_space<vmem>>, vector<16x128xbf16>,
    } else {
    }
    return
  }
  func.func @transform_0(%arg0: i32, %arg1: i32, %arg2: i32) -> (i32, i32) {
    %c0_i32 = arith.constant 0 : i32
    return %arg0, %arg2 : i32, i32
  }
  func.func @transform_1(%arg0: i32, %arg1: i32, %arg2: i32) -> (i32, i32) {
    %c0_i32 = arith.constant 0 : i32
    return %arg2, %arg1 : i32, i32
  }
  func.func @transform_2(%arg0: i32, %arg1: i32, %arg2: i32) -> (i32, i32) {
    %c0_i32 = arith.constant 0 : i32
    %c0_i32_0 = arith.constant 0 : i32
    return %c0_i32, %arg1 : i32, i32
  }
  func.func @transform_3(%arg0: i32, %arg1: i32, %arg2: i32) -> (i32, i32) {
    %c0_i32 = arith.constant 0 : i32
    return %arg0, %arg1 : i32, i32
  }
}

module attributes {stable_mosaic.version = 11 : i64} {
  func.func @conv3x3_s2_kernel(%arg0: i32, %arg1: memref<1x4x5x5x32xbf16, #tpu.memory_space<vmem>>, %arg2: memref<9x32x32xbf16, #tpu.memory_space<vmem>>, %arg3: memref<1x32xf32, #tpu.memory_space<vmem>>, %arg4: memref<1x4x4x32xbf16, #tpu.memory_space<vmem>>) attributes {dimension_semantics = [#tpu.dimension_semantics<parallel>], iteration_bounds = array<i64: 2>, scalar_prefetch = 0 : i64, scratch_operands = 0 : i64, tpu.core_type = #tpu.core_type<tc>, window_params = [{transform_indices = @transform_0, window_bounds = array<i64: 1, 4, 5, 5, 32>}, {pipeline_mode = #tpu.pipeline_mode<synchronous>, transform_indices = @transform_1, window_bounds = array<i64: 9, 32, 32>}, {pipeline_mode = #tpu.pipeline_mode<synchronous>, transform_indices = @transform_2, window_bounds = array<i64: 1, 32>}, {transform_indices = @transform_3, window_bounds = array<i64: 1, 4, 4, 32>}]} {
    %c0 = arith.constant 0 : index
    %c0_0 = arith.constant 0 : index
    %0 = vector.load %arg3[%c0, %c0_0] : memref<1x32xf32, #tpu.memory_space<vmem>>, vector<1x32xf32>
    %cst = arith.constant 0.000000e+00 : f32
    %1 = vector.broadcast %cst : f32 to vector<4x32xf32>
    %c0_1 = arith.constant 0 : index
    %c0_2 = arith.constant 0 : index
    %c0_3 = arith.constant 0 : index
    %c0_4 = arith.constant 0 : index
    %c0_5 = arith.constant 0 : index
    %2 = vector.load %arg1[%c0_1, %c0_2, %c0_3, %c0_4, %c0_5] : memref<1x4x5x5x32xbf16, #tpu.memory_space<vmem>>, vector<1x1x1x4x32xbf16>
    %3 = vector.shape_cast %2 : vector<1x1x1x4x32xbf16> to vector<4x32xbf16>
    %c0_6 = arith.constant 0 : index
    %c0_7 = arith.constant 0 : index
    %c0_8 = arith.constant 0 : index
    %4 = vector.load %arg2[%c0_6, %c0_7, %c0_8] : memref<9x32x32xbf16, #tpu.memory_space<vmem>>, vector<1x32x32xbf16>
    %5 = vector.shape_cast %4 : vector<1x32x32xbf16> to vector<32x32xbf16>
    %cst_9 = arith.constant dense<0.000000e+00> : vector<4x32xf32>
    %6 = tpu.matmul %3, %5, %cst_9 {dimension_numbers = #tpu.dot_dimension_numbers<[1], [0], [0], [1], [0, 0, 1, 1], [], []>} : vector<4x32xbf16>, vector<32x32xbf16>, vector<4x32xf32> -> vector<4x32xf32>
    %7 = arith.addf %1, %6 : vector<4x32xf32>
    %c0_10 = arith.constant 0 : index
    %c1 = arith.constant 1 : index
    %c0_11 = arith.constant 0 : index
    %c0_12 = arith.constant 0 : index
    %c0_13 = arith.constant 0 : index
    %8 = vector.load %arg1[%c0_10, %c1, %c0_11, %c0_12, %c0_13] : memref<1x4x5x5x32xbf16, #tpu.memory_space<vmem>>, vector<1x1x1x4x32xbf16>
    %9 = vector.shape_cast %8 : vector<1x1x1x4x32xbf16> to vector<4x32xbf16>
    %c1_14 = arith.constant 1 : index
    %c0_15 = arith.constant 0 : index
    %c0_16 = arith.constant 0 : index
    %10 = vector.load %arg2[%c1_14, %c0_15, %c0_16] : memref<9x32x32xbf16, #tpu.memory_space<vmem>>, vector<1x32x32xbf16>
    %11 = vector.shape_cast %10 : vector<1x32x32xbf16> to vector<32x32xbf16>
    %cst_17 = arith.constant dense<0.000000e+00> : vector<4x32xf32>
    %12 = tpu.matmul %9, %11, %cst_17 {dimension_numbers = #tpu.dot_dimension_numbers<[1], [0], [0], [1], [0, 0, 1, 1], [], []>} : vector<4x32xbf16>, vector<32x32xbf16>, vector<4x32xf32> -> vector<4x32xf32>
    %13 = arith.addf %7, %12 : vector<4x32xf32>
    %c0_18 = arith.constant 0 : index
    %c0_19 = arith.constant 0 : index
    %c0_20 = arith.constant 0 : index
    %c1_21 = arith.constant 1 : index
    %c0_22 = arith.constant 0 : index
    %14 = vector.load %arg1[%c0_18, %c0_19, %c0_20, %c1_21, %c0_22] : memref<1x4x5x5x32xbf16, #tpu.memory_space<vmem>>, vector<1x1x1x4x32xbf16>
    %15 = vector.shape_cast %14 : vector<1x1x1x4x32xbf16> to vector<4x32xbf16>
    %c2 = arith.constant 2 : index
    %c0_23 = arith.constant 0 : index
    %c0_24 = arith.constant 0 : index
    %16 = vector.load %arg2[%c2, %c0_23, %c0_24] : memref<9x32x32xbf16, #tpu.memory_space<vmem>>, vector<1x32x32xbf16>
    %17 = vector.shape_cast %16 : vector<1x32x32xbf16> to vector<32x32xbf16>
    %cst_25 = arith.constant dense<0.000000e+00> : vector<4x32xf32>
    %18 = tpu.matmul %15, %17, %cst_25 {dimension_numbers = #tpu.dot_dimension_numbers<[1], [0], [0], [1], [0, 0, 1, 1], [], []>} : vector<4x32xbf16>, vector<32x32xbf16>, vector<4x32xf32> -> vector<4x32xf32>
    %19 = arith.addf %13, %18 : vector<4x32xf32>
    %c0_26 = arith.constant 0 : index
    %c2_27 = arith.constant 2 : index
    %c0_28 = arith.constant 0 : index
    %c0_29 = arith.constant 0 : index
    %c0_30 = arith.constant 0 : index
    %20 = vector.load %arg1[%c0_26, %c2_27, %c0_28, %c0_29, %c0_30] : memref<1x4x5x5x32xbf16, #tpu.memory_space<vmem>>, vector<1x1x1x4x32xbf16>
    %21 = vector.shape_cast %20 : vector<1x1x1x4x32xbf16> to vector<4x32xbf16>
    %c3 = arith.constant 3 : index
    %c0_31 = arith.constant 0 : index
    %c0_32 = arith.constant 0 : index
    %22 = vector.load %arg2[%c3, %c0_31, %c0_32] : memref<9x32x32xbf16, #tpu.memory_space<vmem>>, vector<1x32x32xbf16>
    %23 = vector.shape_cast %22 : vector<1x32x32xbf16> to vector<32x32xbf16>
    %cst_33 = arith.constant dense<0.000000e+00> : vector<4x32xf32>
    %24 = tpu.matmul %21, %23, %cst_33 {dimension_numbers = #tpu.dot_dimension_numbers<[1], [0], [0], [1], [0, 0, 1, 1], [], []>} : vector<4x32xbf16>, vector<32x32xbf16>, vector<4x32xf32> -> vector<4x32xf32>
    %25 = arith.addf %19, %24 : vector<4x32xf32>
    %c0_34 = arith.constant 0 : index
    %c3_35 = arith.constant 3 : index
    %c0_36 = arith.constant 0 : index
    %c0_37 = arith.constant 0 : index
    %c0_38 = arith.constant 0 : index
    %26 = vector.load %arg1[%c0_34, %c3_35, %c0_36, %c0_37, %c0_38] : memref<1x4x5x5x32xbf16, #tpu.memory_space<vmem>>, vector<1x1x1x4x32xbf16>
    %27 = vector.shape_cast %26 : vector<1x1x1x4x32xbf16> to vector<4x32xbf16>
    %c4 = arith.constant 4 : index
    %c0_39 = arith.constant 0 : index
    %c0_40 = arith.constant 0 : index
    %28 = vector.load %arg2[%c4, %c0_39, %c0_40] : memref<9x32x32xbf16, #tpu.memory_space<vmem>>, vector<1x32x32xbf16>
    %29 = vector.shape_cast %28 : vector<1x32x32xbf16> to vector<32x32xbf16>
    %cst_41 = arith.constant dense<0.000000e+00> : vector<4x32xf32>
    %30 = tpu.matmul %27, %29, %cst_41 {dimension_numbers = #tpu.dot_dimension_numbers<[1], [0], [0], [1], [0, 0, 1, 1], [], []>} : vector<4x32xbf16>, vector<32x32xbf16>, vector<4x32xf32> -> vector<4x32xf32>
    %31 = arith.addf %25, %30 : vector<4x32xf32>
    %c0_42 = arith.constant 0 : index
    %c2_43 = arith.constant 2 : index
    %c0_44 = arith.constant 0 : index
    %c1_45 = arith.constant 1 : index
    %c0_46 = arith.constant 0 : index
    %32 = vector.load %arg1[%c0_42, %c2_43, %c0_44, %c1_45, %c0_46] : memref<1x4x5x5x32xbf16, #tpu.memory_space<vmem>>, vector<1x1x1x4x32xbf16>
    %33 = vector.shape_cast %32 : vector<1x1x1x4x32xbf16> to vector<4x32xbf16>
    %c5 = arith.constant 5 : index
    %c0_47 = arith.constant 0 : index
    %c0_48 = arith.constant 0 : index
    %34 = vector.load %arg2[%c5, %c0_47, %c0_48] : memref<9x32x32xbf16, #tpu.memory_space<vmem>>, vector<1x32x32xbf16>
    %35 = vector.shape_cast %34 : vector<1x32x32xbf16> to vector<32x32xbf16>
    %cst_49 = arith.constant dense<0.000000e+00> : vector<4x32xf32>
    %36 = tpu.matmul %33, %35, %cst_49 {dimension_numbers = #tpu.dot_dimension_numbers<[1], [0], [0], [1], [0, 0, 1, 1], [], []>} : vector<4x32xbf16>, vector<32x32xbf16>, vector<4x32xf32> -> vector<4x32xf32>
    %37 = arith.addf %31, %36 : vector<4x32xf32>
    %c0_50 = arith.constant 0 : index
    %c0_51 = arith.constant 0 : index
    %c1_52 = arith.constant 1 : index
    %c0_53 = arith.constant 0 : index
    %c0_54 = arith.constant 0 : index
    %38 = vector.load %arg1[%c0_50, %c0_51, %c1_52, %c0_53, %c0_54] : memref<1x4x5x5x32xbf16, #tpu.memory_space<vmem>>, vector<1x1x1x4x32xbf16>
    %39 = vector.shape_cast %38 : vector<1x1x1x4x32xbf16> to vector<4x32xbf16>
    %c6 = arith.constant 6 : index
    %c0_55 = arith.constant 0 : index
    %c0_56 = arith.constant 0 : index
    %40 = vector.load %arg2[%c6, %c0_55, %c0_56] : memref<9x32x32xbf16, #tpu.memory_space<vmem>>, vector<1x32x32xbf16>
    %41 = vector.shape_cast %40 : vector<1x32x32xbf16> to vector<32x32xbf16>
    %cst_57 = arith.constant dense<0.000000e+00> : vector<4x32xf32>
    %42 = tpu.matmul %39, %41, %cst_57 {dimension_numbers = #tpu.dot_dimension_numbers<[1], [0], [0], [1], [0, 0, 1, 1], [], []>} : vector<4x32xbf16>, vector<32x32xbf16>, vector<4x32xf32> -> vector<4x32xf32>
    %43 = arith.addf %37, %42 : vector<4x32xf32>
    %c0_58 = arith.constant 0 : index
    %c1_59 = arith.constant 1 : index
    %c1_60 = arith.constant 1 : index
    %c0_61 = arith.constant 0 : index
    %c0_62 = arith.constant 0 : index
    %44 = vector.load %arg1[%c0_58, %c1_59, %c1_60, %c0_61, %c0_62] : memref<1x4x5x5x32xbf16, #tpu.memory_space<vmem>>, vector<1x1x1x4x32xbf16>
    %45 = vector.shape_cast %44 : vector<1x1x1x4x32xbf16> to vector<4x32xbf16>
    %c7 = arith.constant 7 : index
    %c0_63 = arith.constant 0 : index
    %c0_64 = arith.constant 0 : index
    %46 = vector.load %arg2[%c7, %c0_63, %c0_64] : memref<9x32x32xbf16, #tpu.memory_space<vmem>>, vector<1x32x32xbf16>
    %47 = vector.shape_cast %46 : vector<1x32x32xbf16> to vector<32x32xbf16>
    %cst_65 = arith.constant dense<0.000000e+00> : vector<4x32xf32>
    %48 = tpu.matmul %45, %47, %cst_65 {dimension_numbers = #tpu.dot_dimension_numbers<[1], [0], [0], [1], [0, 0, 1, 1], [], []>} : vector<4x32xbf16>, vector<32x32xbf16>, vector<4x32xf32> -> vector<4x32xf32>
    %49 = arith.addf %43, %48 : vector<4x32xf32>
    %c0_66 = arith.constant 0 : index
    %c0_67 = arith.constant 0 : index
    %c1_68 = arith.constant 1 : index
    %c1_69 = arith.constant 1 : index
    %c0_70 = arith.constant 0 : index
    %50 = vector.load %arg1[%c0_66, %c0_67, %c1_68, %c1_69, %c0_70] : memref<1x4x5x5x32xbf16, #tpu.memory_space<vmem>>, vector<1x1x1x4x32xbf16>
    %51 = vector.shape_cast %50 : vector<1x1x1x4x32xbf16> to vector<4x32xbf16>
    %c8 = arith.constant 8 : index
    %c0_71 = arith.constant 0 : index
    %c0_72 = arith.constant 0 : index
    %52 = vector.load %arg2[%c8, %c0_71, %c0_72] : memref<9x32x32xbf16, #tpu.memory_space<vmem>>, vector<1x32x32xbf16>
    %53 = vector.shape_cast %52 : vector<1x32x32xbf16> to vector<32x32xbf16>
    %cst_73 = arith.constant dense<0.000000e+00> : vector<4x32xf32>
    %54 = tpu.matmul %51, %53, %cst_73 {dimension_numbers = #tpu.dot_dimension_numbers<[1], [0], [0], [1], [0, 0, 1, 1], [], []>} : vector<4x32xbf16>, vector<32x32xbf16>, vector<4x32xf32> -> vector<4x32xf32>
    %55 = arith.addf %49, %54 : vector<4x32xf32>
    %56 = vector.broadcast %0 : vector<1x32xf32> to vector<4x32xf32>
    %57 = arith.addf %55, %56 : vector<4x32xf32>
    %cst_74 = arith.constant 0.000000e+00 : f32
    %58 = vector.broadcast %cst_74 : f32 to vector<4x32xf32>
    %59 = arith.maximumf %57, %58 : vector<4x32xf32>
    %60 = arith.truncf %59 : vector<4x32xf32> to vector<4x32xbf16>
    %c0_75 = arith.constant 0 : index
    %c0_76 = arith.constant 0 : index
    %c0_77 = arith.constant 0 : index
    %c0_78 = arith.constant 0 : index
    %61 = vector.load %arg4[%c0_75, %c0_76, %c0_77, %c0_78] : memref<1x4x4x32xbf16, #tpu.memory_space<vmem>>, vector<1x1x4x32xbf16>
    %62 = vector.shape_cast %61 : vector<1x1x4x32xbf16> to vector<4x32xbf16>
    %63 = vector.shape_cast %60 : vector<4x32xbf16> to vector<1x1x4x32xbf16>
    tpu.vector_store %arg4[%c0_75, %c0_76, %c0_77, %c0_78], %63 {strides = array<i32>} : memref<1x4x4x32xbf16, #tpu.memory_space<vmem>>, vector<1x1x4x32xbf16>,
    %cst_79 = arith.constant 0.000000e+00 : f32
    %64 = vector.broadcast %cst_79 : f32 to vector<4x32xf32>
    %c0_80 = arith.constant 0 : index
    %c0_81 = arith.constant 0 : index
    %c1_82 = arith.constant 1 : index
    %c0_83 = arith.constant 0 : index
    %c0_84 = arith.constant 0 : index
    %65 = vector.load %arg1[%c0_80, %c0_81, %c1_82, %c0_83, %c0_84] : memref<1x4x5x5x32xbf16, #tpu.memory_space<vmem>>, vector<1x1x1x4x32xbf16>
    %66 = vector.shape_cast %65 : vector<1x1x1x4x32xbf16> to vector<4x32xbf16>
    %c0_85 = arith.constant 0 : index
    %c0_86 = arith.constant 0 : index
    %c0_87 = arith.constant 0 : index
    %67 = vector.load %arg2[%c0_85, %c0_86, %c0_87] : memref<9x32x32xbf16, #tpu.memory_space<vmem>>, vector<1x32x32xbf16>
    %68 = vector.shape_cast %67 : vector<1x32x32xbf16> to vector<32x32xbf16>
    %cst_88 = arith.constant dense<0.000000e+00> : vector<4x32xf32>
    %69 = tpu.matmul %66, %68, %cst_88 {dimension_numbers = #tpu.dot_dimension_numbers<[1], [0], [0], [1], [0, 0, 1, 1], [], []>} : vector<4x32xbf16>, vector<32x32xbf16>, vector<4x32xf32> -> vector<4x32xf32>
    %70 = arith.addf %64, %69 : vector<4x32xf32>
    %c0_89 = arith.constant 0 : index
    %c1_90 = arith.constant 1 : index
    %c1_91 = arith.constant 1 : index
    %c0_92 = arith.constant 0 : index
    %c0_93 = arith.constant 0 : index
    %71 = vector.load %arg1[%c0_89, %c1_90, %c1_91, %c0_92, %c0_93] : memref<1x4x5x5x32xbf16, #tpu.memory_space<vmem>>, vector<1x1x1x4x32xbf16>
    %72 = vector.shape_cast %71 : vector<1x1x1x4x32xbf16> to vector<4x32xbf16>
    %c1_94 = arith.constant 1 : index
    %c0_95 = arith.constant 0 : index
    %c0_96 = arith.constant 0 : index
    %73 = vector.load %arg2[%c1_94, %c0_95, %c0_96] : memref<9x32x32xbf16, #tpu.memory_space<vmem>>, vector<1x32x32xbf16>
    %74 = vector.shape_cast %73 : vector<1x32x32xbf16> to vector<32x32xbf16>
    %cst_97 = arith.constant dense<0.000000e+00> : vector<4x32xf32>
    %75 = tpu.matmul %72, %74, %cst_97 {dimension_numbers = #tpu.dot_dimension_numbers<[1], [0], [0], [1], [0, 0, 1, 1], [], []>} : vector<4x32xbf16>, vector<32x32xbf16>, vector<4x32xf32> -> vector<4x32xf32>
    %76 = arith.addf %70, %75 : vector<4x32xf32>
    %c0_98 = arith.constant 0 : index
    %c0_99 = arith.constant 0 : index
    %c1_100 = arith.constant 1 : index
    %c1_101 = arith.constant 1 : index
    %c0_102 = arith.constant 0 : index
    %77 = vector.load %arg1[%c0_98, %c0_99, %c1_100, %c1_101, %c0_102] : memref<1x4x5x5x32xbf16, #tpu.memory_space<vmem>>, vector<1x1x1x4x32xbf16>
    %78 = vector.shape_cast %77 : vector<1x1x1x4x32xbf16> to vector<4x32xbf16>
    %c2_103 = arith.constant 2 : index
    %c0_104 = arith.constant 0 : index
    %c0_105 = arith.constant 0 : index
    %79 = vector.load %arg2[%c2_103, %c0_104, %c0_105] : memref<9x32x32xbf16, #tpu.memory_space<vmem>>, vector<1x32x32xbf16>
    %80 = vector.shape_cast %79 : vector<1x32x32xbf16> to vector<32x32xbf16>
    %cst_106 = arith.constant dense<0.000000e+00> : vector<4x32xf32>
    %81 = tpu.matmul %78, %80, %cst_106 {dimension_numbers = #tpu.dot_dimension_numbers<[1], [0], [0], [1], [0, 0, 1, 1], [], []>} : vector<4x32xbf16>, vector<32x32xbf16>, vector<4x32xf32> -> vector<4x32xf32>
    %82 = arith.addf %76, %81 : vector<4x32xf32>
    %c0_107 = arith.constant 0 : index
    %c2_108 = arith.constant 2 : index
    %c1_109 = arith.constant 1 : index
    %c0_110 = arith.constant 0 : index
    %c0_111 = arith.constant 0 : index
    %83 = vector.load %arg1[%c0_107, %c2_108, %c1_109, %c0_110, %c0_111] : memref<1x4x5x5x32xbf16, #tpu.memory_space<vmem>>, vector<1x1x1x4x32xbf16>
    %84 = vector.shape_cast %83 : vector<1x1x1x4x32xbf16> to vector<4x32xbf16>
    %c3_112 = arith.constant 3 : index
    %c0_113 = arith.constant 0 : index
    %c0_114 = arith.constant 0 : index
    %85 = vector.load %arg2[%c3_112, %c0_113, %c0_114] : memref<9x32x32xbf16, #tpu.memory_space<vmem>>, vector<1x32x32xbf16>
    %86 = vector.shape_cast %85 : vector<1x32x32xbf16> to vector<32x32xbf16>
    %cst_115 = arith.constant dense<0.000000e+00> : vector<4x32xf32>
    %87 = tpu.matmul %84, %86, %cst_115 {dimension_numbers = #tpu.dot_dimension_numbers<[1], [0], [0], [1], [0, 0, 1, 1], [], []>} : vector<4x32xbf16>, vector<32x32xbf16>, vector<4x32xf32> -> vector<4x32xf32>
    %88 = arith.addf %82, %87 : vector<4x32xf32>
    %c0_116 = arith.constant 0 : index
    %c3_117 = arith.constant 3 : index
    %c1_118 = arith.constant 1 : index
    %c0_119 = arith.constant 0 : index
    %c0_120 = arith.constant 0 : index
    %89 = vector.load %arg1[%c0_116, %c3_117, %c1_118, %c0_119, %c0_120] : memref<1x4x5x5x32xbf16, #tpu.memory_space<vmem>>, vector<1x1x1x4x32xbf16>
    %90 = vector.shape_cast %89 : vector<1x1x1x4x32xbf16> to vector<4x32xbf16>
    %c4_121 = arith.constant 4 : index
    %c0_122 = arith.constant 0 : index
    %c0_123 = arith.constant 0 : index
    %91 = vector.load %arg2[%c4_121, %c0_122, %c0_123] : memref<9x32x32xbf16, #tpu.memory_space<vmem>>, vector<1x32x32xbf16>
    %92 = vector.shape_cast %91 : vector<1x32x32xbf16> to vector<32x32xbf16>
    %cst_124 = arith.constant dense<0.000000e+00> : vector<4x32xf32>
    %93 = tpu.matmul %90, %92, %cst_124 {dimension_numbers = #tpu.dot_dimension_numbers<[1], [0], [0], [1], [0, 0, 1, 1], [], []>} : vector<4x32xbf16>, vector<32x32xbf16>, vector<4x32xf32> -> vector<4x32xf32>
    %94 = arith.addf %88, %93 : vector<4x32xf32>
    %c0_125 = arith.constant 0 : index
    %c2_126 = arith.constant 2 : index
    %c1_127 = arith.constant 1 : index
    %c1_128 = arith.constant 1 : index
    %c0_129 = arith.constant 0 : index
    %95 = vector.load %arg1[%c0_125, %c2_126, %c1_127, %c1_128, %c0_129] : memref<1x4x5x5x32xbf16, #tpu.memory_space<vmem>>, vector<1x1x1x4x32xbf16>
    %96 = vector.shape_cast %95 : vector<1x1x1x4x32xbf16> to vector<4x32xbf16>
    %c5_130 = arith.constant 5 : index
    %c0_131 = arith.constant 0 : index
    %c0_132 = arith.constant 0 : index
    %97 = vector.load %arg2[%c5_130, %c0_131, %c0_132] : memref<9x32x32xbf16, #tpu.memory_space<vmem>>, vector<1x32x32xbf16>
    %98 = vector.shape_cast %97 : vector<1x32x32xbf16> to vector<32x32xbf16>
    %cst_133 = arith.constant dense<0.000000e+00> : vector<4x32xf32>
    %99 = tpu.matmul %96, %98, %cst_133 {dimension_numbers = #tpu.dot_dimension_numbers<[1], [0], [0], [1], [0, 0, 1, 1], [], []>} : vector<4x32xbf16>, vector<32x32xbf16>, vector<4x32xf32> -> vector<4x32xf32>
    %100 = arith.addf %94, %99 : vector<4x32xf32>
    %c0_134 = arith.constant 0 : index
    %c0_135 = arith.constant 0 : index
    %c2_136 = arith.constant 2 : index
    %c0_137 = arith.constant 0 : index
    %c0_138 = arith.constant 0 : index
    %101 = vector.load %arg1[%c0_134, %c0_135, %c2_136, %c0_137, %c0_138] : memref<1x4x5x5x32xbf16, #tpu.memory_space<vmem>>, vector<1x1x1x4x32xbf16>
    %102 = vector.shape_cast %101 : vector<1x1x1x4x32xbf16> to vector<4x32xbf16>
    %c6_139 = arith.constant 6 : index
    %c0_140 = arith.constant 0 : index
    %c0_141 = arith.constant 0 : index
    %103 = vector.load %arg2[%c6_139, %c0_140, %c0_141] : memref<9x32x32xbf16, #tpu.memory_space<vmem>>, vector<1x32x32xbf16>
    %104 = vector.shape_cast %103 : vector<1x32x32xbf16> to vector<32x32xbf16>
    %cst_142 = arith.constant dense<0.000000e+00> : vector<4x32xf32>
    %105 = tpu.matmul %102, %104, %cst_142 {dimension_numbers = #tpu.dot_dimension_numbers<[1], [0], [0], [1], [0, 0, 1, 1], [], []>} : vector<4x32xbf16>, vector<32x32xbf16>, vector<4x32xf32> -> vector<4x32xf32>
    %106 = arith.addf %100, %105 : vector<4x32xf32>
    %c0_143 = arith.constant 0 : index
    %c1_144 = arith.constant 1 : index
    %c2_145 = arith.constant 2 : index
    %c0_146 = arith.constant 0 : index
    %c0_147 = arith.constant 0 : index
    %107 = vector.load %arg1[%c0_143, %c1_144, %c2_145, %c0_146, %c0_147] : memref<1x4x5x5x32xbf16, #tpu.memory_space<vmem>>, vector<1x1x1x4x32xbf16>
    %108 = vector.shape_cast %107 : vector<1x1x1x4x32xbf16> to vector<4x32xbf16>
    %c7_148 = arith.constant 7 : index
    %c0_149 = arith.constant 0 : index
    %c0_150 = arith.constant 0 : index
    %109 = vector.load %arg2[%c7_148, %c0_149, %c0_150] : memref<9x32x32xbf16, #tpu.memory_space<vmem>>, vector<1x32x32xbf16>
    %110 = vector.shape_cast %109 : vector<1x32x32xbf16> to vector<32x32xbf16>
    %cst_151 = arith.constant dense<0.000000e+00> : vector<4x32xf32>
    %111 = tpu.matmul %108, %110, %cst_151 {dimension_numbers = #tpu.dot_dimension_numbers<[1], [0], [0], [1], [0, 0, 1, 1], [], []>} : vector<4x32xbf16>, vector<32x32xbf16>, vector<4x32xf32> -> vector<4x32xf32>
    %112 = arith.addf %106, %111 : vector<4x32xf32>
    %c0_152 = arith.constant 0 : index
    %c0_153 = arith.constant 0 : index
    %c2_154 = arith.constant 2 : index
    %c1_155 = arith.constant 1 : index
    %c0_156 = arith.constant 0 : index
    %113 = vector.load %arg1[%c0_152, %c0_153, %c2_154, %c1_155, %c0_156] : memref<1x4x5x5x32xbf16, #tpu.memory_space<vmem>>, vector<1x1x1x4x32xbf16>
    %114 = vector.shape_cast %113 : vector<1x1x1x4x32xbf16> to vector<4x32xbf16>
    %c8_157 = arith.constant 8 : index
    %c0_158 = arith.constant 0 : index
    %c0_159 = arith.constant 0 : index
    %115 = vector.load %arg2[%c8_157, %c0_158, %c0_159] : memref<9x32x32xbf16, #tpu.memory_space<vmem>>, vector<1x32x32xbf16>
    %116 = vector.shape_cast %115 : vector<1x32x32xbf16> to vector<32x32xbf16>
    %cst_160 = arith.constant dense<0.000000e+00> : vector<4x32xf32>
    %117 = tpu.matmul %114, %116, %cst_160 {dimension_numbers = #tpu.dot_dimension_numbers<[1], [0], [0], [1], [0, 0, 1, 1], [], []>} : vector<4x32xbf16>, vector<32x32xbf16>, vector<4x32xf32> -> vector<4x32xf32>
    %118 = arith.addf %112, %117 : vector<4x32xf32>
    %119 = vector.broadcast %0 : vector<1x32xf32> to vector<4x32xf32>
    %120 = arith.addf %118, %119 : vector<4x32xf32>
    %cst_161 = arith.constant 0.000000e+00 : f32
    %121 = vector.broadcast %cst_161 : f32 to vector<4x32xf32>
    %122 = arith.maximumf %120, %121 : vector<4x32xf32>
    %123 = arith.truncf %122 : vector<4x32xf32> to vector<4x32xbf16>
    %c0_162 = arith.constant 0 : index
    %c1_163 = arith.constant 1 : index
    %c0_164 = arith.constant 0 : index
    %c0_165 = arith.constant 0 : index
    %124 = vector.load %arg4[%c0_162, %c1_163, %c0_164, %c0_165] : memref<1x4x4x32xbf16, #tpu.memory_space<vmem>>, vector<1x1x4x32xbf16>
    %125 = vector.shape_cast %124 : vector<1x1x4x32xbf16> to vector<4x32xbf16>
    %126 = vector.shape_cast %123 : vector<4x32xbf16> to vector<1x1x4x32xbf16>
    tpu.vector_store %arg4[%c0_162, %c1_163, %c0_164, %c0_165], %126 {strides = array<i32>} : memref<1x4x4x32xbf16, #tpu.memory_space<vmem>>, vector<1x1x4x32xbf16>,
    %cst_166 = arith.constant 0.000000e+00 : f32
    %127 = vector.broadcast %cst_166 : f32 to vector<4x32xf32>
    %c0_167 = arith.constant 0 : index
    %c0_168 = arith.constant 0 : index
    %c2_169 = arith.constant 2 : index
    %c0_170 = arith.constant 0 : index
    %c0_171 = arith.constant 0 : index
    %128 = vector.load %arg1[%c0_167, %c0_168, %c2_169, %c0_170, %c0_171] : memref<1x4x5x5x32xbf16, #tpu.memory_space<vmem>>, vector<1x1x1x4x32xbf16>
    %129 = vector.shape_cast %128 : vector<1x1x1x4x32xbf16> to vector<4x32xbf16>
    %c0_172 = arith.constant 0 : index
    %c0_173 = arith.constant 0 : index
    %c0_174 = arith.constant 0 : index
    %130 = vector.load %arg2[%c0_172, %c0_173, %c0_174] : memref<9x32x32xbf16, #tpu.memory_space<vmem>>, vector<1x32x32xbf16>
    %131 = vector.shape_cast %130 : vector<1x32x32xbf16> to vector<32x32xbf16>
    %cst_175 = arith.constant dense<0.000000e+00> : vector<4x32xf32>
    %132 = tpu.matmul %129, %131, %cst_175 {dimension_numbers = #tpu.dot_dimension_numbers<[1], [0], [0], [1], [0, 0, 1, 1], [], []>} : vector<4x32xbf16>, vector<32x32xbf16>, vector<4x32xf32> -> vector<4x32xf32>
    %133 = arith.addf %127, %132 : vector<4x32xf32>
    %c0_176 = arith.constant 0 : index
    %c1_177 = arith.constant 1 : index
    %c2_178 = arith.constant 2 : index
    %c0_179 = arith.constant 0 : index
    %c0_180 = arith.constant 0 : index
    %134 = vector.load %arg1[%c0_176, %c1_177, %c2_178, %c0_179, %c0_180] : memref<1x4x5x5x32xbf16, #tpu.memory_space<vmem>>, vector<1x1x1x4x32xbf16>
    %135 = vector.shape_cast %134 : vector<1x1x1x4x32xbf16> to vector<4x32xbf16>
    %c1_181 = arith.constant 1 : index
    %c0_182 = arith.constant 0 : index
    %c0_183 = arith.constant 0 : index
    %136 = vector.load %arg2[%c1_181, %c0_182, %c0_183] : memref<9x32x32xbf16, #tpu.memory_space<vmem>>, vector<1x32x32xbf16>
    %137 = vector.shape_cast %136 : vector<1x32x32xbf16> to vector<32x32xbf16>
    %cst_184 = arith.constant dense<0.000000e+00> : vector<4x32xf32>
    %138 = tpu.matmul %135, %137, %cst_184 {dimension_numbers = #tpu.dot_dimension_numbers<[1], [0], [0], [1], [0, 0, 1, 1], [], []>} : vector<4x32xbf16>, vector<32x32xbf16>, vector<4x32xf32> -> vector<4x32xf32>
    %139 = arith.addf %133, %138 : vector<4x32xf32>
    %c0_185 = arith.constant 0 : index
    %c0_186 = arith.constant 0 : index
    %c2_187 = arith.constant 2 : index
    %c1_188 = arith.constant 1 : index
    %c0_189 = arith.constant 0 : index
    %140 = vector.load %arg1[%c0_185, %c0_186, %c2_187, %c1_188, %c0_189] : memref<1x4x5x5x32xbf16, #tpu.memory_space<vmem>>, vector<1x1x1x4x32xbf16>
    %141 = vector.shape_cast %140 : vector<1x1x1x4x32xbf16> to vector<4x32xbf16>
    %c2_190 = arith.constant 2 : index
    %c0_191 = arith.constant 0 : index
    %c0_192 = arith.constant 0 : index
    %142 = vector.load %arg2[%c2_190, %c0_191, %c0_192] : memref<9x32x32xbf16, #tpu.memory_space<vmem>>, vector<1x32x32xbf16>
    %143 = vector.shape_cast %142 : vector<1x32x32xbf16> to vector<32x32xbf16>
    %cst_193 = arith.constant dense<0.000000e+00> : vector<4x32xf32>
    %144 = tpu.matmul %141, %143, %cst_193 {dimension_numbers = #tpu.dot_dimension_numbers<[1], [0], [0], [1], [0, 0, 1, 1], [], []>} : vector<4x32xbf16>, vector<32x32xbf16>, vector<4x32xf32> -> vector<4x32xf32>
    %145 = arith.addf %139, %144 : vector<4x32xf32>
    %c0_194 = arith.constant 0 : index
    %c2_195 = arith.constant 2 : index
    %c2_196 = arith.constant 2 : index
    %c0_197 = arith.constant 0 : index
    %c0_198 = arith.constant 0 : index
    %146 = vector.load %arg1[%c0_194, %c2_195, %c2_196, %c0_197, %c0_198] : memref<1x4x5x5x32xbf16, #tpu.memory_space<vmem>>, vector<1x1x1x4x32xbf16>
    %147 = vector.shape_cast %146 : vector<1x1x1x4x32xbf16> to vector<4x32xbf16>
    %c3_199 = arith.constant 3 : index
    %c0_200 = arith.constant 0 : index
    %c0_201 = arith.constant 0 : index
    %148 = vector.load %arg2[%c3_199, %c0_200, %c0_201] : memref<9x32x32xbf16, #tpu.memory_space<vmem>>, vector<1x32x32xbf16>
    %149 = vector.shape_cast %148 : vector<1x32x32xbf16> to vector<32x32xbf16>
    %cst_202 = arith.constant dense<0.000000e+00> : vector<4x32xf32>
    %150 = tpu.matmul %147, %149, %cst_202 {dimension_numbers = #tpu.dot_dimension_numbers<[1], [0], [0], [1], [0, 0, 1, 1], [], []>} : vector<4x32xbf16>, vector<32x32xbf16>, vector<4x32xf32> -> vector<4x32xf32>
    %151 = arith.addf %145, %150 : vector<4x32xf32>
    %c0_203 = arith.constant 0 : index
    %c3_204 = arith.constant 3 : index
    %c2_205 = arith.constant 2 : index
    %c0_206 = arith.constant 0 : index
    %c0_207 = arith.constant 0 : index
    %152 = vector.load %arg1[%c0_203, %c3_204, %c2_205, %c0_206, %c0_207] : memref<1x4x5x5x32xbf16, #tpu.memory_space<vmem>>, vector<1x1x1x4x32xbf16>
    %153 = vector.shape_cast %152 : vector<1x1x1x4x32xbf16> to vector<4x32xbf16>
    %c4_208 = arith.constant 4 : index
    %c0_209 = arith.constant 0 : index
    %c0_210 = arith.constant 0 : index
    %154 = vector.load %arg2[%c4_208, %c0_209, %c0_210] : memref<9x32x32xbf16, #tpu.memory_space<vmem>>, vector<1x32x32xbf16>
    %155 = vector.shape_cast %154 : vector<1x32x32xbf16> to vector<32x32xbf16>
    %cst_211 = arith.constant dense<0.000000e+00> : vector<4x32xf32>
    %156 = tpu.matmul %153, %155, %cst_211 {dimension_numbers = #tpu.dot_dimension_numbers<[1], [0], [0], [1], [0, 0, 1, 1], [], []>} : vector<4x32xbf16>, vector<32x32xbf16>, vector<4x32xf32> -> vector<4x32xf32>
    %157 = arith.addf %151, %156 : vector<4x32xf32>
    %c0_212 = arith.constant 0 : index
    %c2_213 = arith.constant 2 : index
    %c2_214 = arith.constant 2 : index
    %c1_215 = arith.constant 1 : index
    %c0_216 = arith.constant 0 : index
    %158 = vector.load %arg1[%c0_212, %c2_213, %c2_214, %c1_215, %c0_216] : memref<1x4x5x5x32xbf16, #tpu.memory_space<vmem>>, vector<1x1x1x4x32xbf16>
    %159 = vector.shape_cast %158 : vector<1x1x1x4x32xbf16> to vector<4x32xbf16>
    %c5_217 = arith.constant 5 : index
    %c0_218 = arith.constant 0 : index
    %c0_219 = arith.constant 0 : index
    %160 = vector.load %arg2[%c5_217, %c0_218, %c0_219] : memref<9x32x32xbf16, #tpu.memory_space<vmem>>, vector<1x32x32xbf16>
    %161 = vector.shape_cast %160 : vector<1x32x32xbf16> to vector<32x32xbf16>
    %cst_220 = arith.constant dense<0.000000e+00> : vector<4x32xf32>
    %162 = tpu.matmul %159, %161, %cst_220 {dimension_numbers = #tpu.dot_dimension_numbers<[1], [0], [0], [1], [0, 0, 1, 1], [], []>} : vector<4x32xbf16>, vector<32x32xbf16>, vector<4x32xf32> -> vector<4x32xf32>
    %163 = arith.addf %157, %162 : vector<4x32xf32>
    %c0_221 = arith.constant 0 : index
    %c0_222 = arith.constant 0 : index
    %c3_223 = arith.constant 3 : index
    %c0_224 = arith.constant 0 : index
    %c0_225 = arith.constant 0 : index
    %164 = vector.load %arg1[%c0_221, %c0_222, %c3_223, %c0_224, %c0_225] : memref<1x4x5x5x32xbf16, #tpu.memory_space<vmem>>, vector<1x1x1x4x32xbf16>
    %165 = vector.shape_cast %164 : vector<1x1x1x4x32xbf16> to vector<4x32xbf16>
    %c6_226 = arith.constant 6 : index
    %c0_227 = arith.constant 0 : index
    %c0_228 = arith.constant 0 : index
    %166 = vector.load %arg2[%c6_226, %c0_227, %c0_228] : memref<9x32x32xbf16, #tpu.memory_space<vmem>>, vector<1x32x32xbf16>
    %167 = vector.shape_cast %166 : vector<1x32x32xbf16> to vector<32x32xbf16>
    %cst_229 = arith.constant dense<0.000000e+00> : vector<4x32xf32>
    %168 = tpu.matmul %165, %167, %cst_229 {dimension_numbers = #tpu.dot_dimension_numbers<[1], [0], [0], [1], [0, 0, 1, 1], [], []>} : vector<4x32xbf16>, vector<32x32xbf16>, vector<4x32xf32> -> vector<4x32xf32>
    %169 = arith.addf %163, %168 : vector<4x32xf32>
    %c0_230 = arith.constant 0 : index
    %c1_231 = arith.constant 1 : index
    %c3_232 = arith.constant 3 : index
    %c0_233 = arith.constant 0 : index
    %c0_234 = arith.constant 0 : index
    %170 = vector.load %arg1[%c0_230, %c1_231, %c3_232, %c0_233, %c0_234] : memref<1x4x5x5x32xbf16, #tpu.memory_space<vmem>>, vector<1x1x1x4x32xbf16>
    %171 = vector.shape_cast %170 : vector<1x1x1x4x32xbf16> to vector<4x32xbf16>
    %c7_235 = arith.constant 7 : index
    %c0_236 = arith.constant 0 : index
    %c0_237 = arith.constant 0 : index
    %172 = vector.load %arg2[%c7_235, %c0_236, %c0_237] : memref<9x32x32xbf16, #tpu.memory_space<vmem>>, vector<1x32x32xbf16>
    %173 = vector.shape_cast %172 : vector<1x32x32xbf16> to vector<32x32xbf16>
    %cst_238 = arith.constant dense<0.000000e+00> : vector<4x32xf32>
    %174 = tpu.matmul %171, %173, %cst_238 {dimension_numbers = #tpu.dot_dimension_numbers<[1], [0], [0], [1], [0, 0, 1, 1], [], []>} : vector<4x32xbf16>, vector<32x32xbf16>, vector<4x32xf32> -> vector<4x32xf32>
    %175 = arith.addf %169, %174 : vector<4x32xf32>
    %c0_239 = arith.constant 0 : index
    %c0_240 = arith.constant 0 : index
    %c3_241 = arith.constant 3 : index
    %c1_242 = arith.constant 1 : index
    %c0_243 = arith.constant 0 : index
    %176 = vector.load %arg1[%c0_239, %c0_240, %c3_241, %c1_242, %c0_243] : memref<1x4x5x5x32xbf16, #tpu.memory_space<vmem>>, vector<1x1x1x4x32xbf16>
    %177 = vector.shape_cast %176 : vector<1x1x1x4x32xbf16> to vector<4x32xbf16>
    %c8_244 = arith.constant 8 : index
    %c0_245 = arith.constant 0 : index
    %c0_246 = arith.constant 0 : index
    %178 = vector.load %arg2[%c8_244, %c0_245, %c0_246] : memref<9x32x32xbf16, #tpu.memory_space<vmem>>, vector<1x32x32xbf16>
    %179 = vector.shape_cast %178 : vector<1x32x32xbf16> to vector<32x32xbf16>
    %cst_247 = arith.constant dense<0.000000e+00> : vector<4x32xf32>
    %180 = tpu.matmul %177, %179, %cst_247 {dimension_numbers = #tpu.dot_dimension_numbers<[1], [0], [0], [1], [0, 0, 1, 1], [], []>} : vector<4x32xbf16>, vector<32x32xbf16>, vector<4x32xf32> -> vector<4x32xf32>
    %181 = arith.addf %175, %180 : vector<4x32xf32>
    %182 = vector.broadcast %0 : vector<1x32xf32> to vector<4x32xf32>
    %183 = arith.addf %181, %182 : vector<4x32xf32>
    %cst_248 = arith.constant 0.000000e+00 : f32
    %184 = vector.broadcast %cst_248 : f32 to vector<4x32xf32>
    %185 = arith.maximumf %183, %184 : vector<4x32xf32>
    %186 = arith.truncf %185 : vector<4x32xf32> to vector<4x32xbf16>
    %c0_249 = arith.constant 0 : index
    %c2_250 = arith.constant 2 : index
    %c0_251 = arith.constant 0 : index
    %c0_252 = arith.constant 0 : index
    %187 = vector.load %arg4[%c0_249, %c2_250, %c0_251, %c0_252] : memref<1x4x4x32xbf16, #tpu.memory_space<vmem>>, vector<1x1x4x32xbf16>
    %188 = vector.shape_cast %187 : vector<1x1x4x32xbf16> to vector<4x32xbf16>
    %189 = vector.shape_cast %186 : vector<4x32xbf16> to vector<1x1x4x32xbf16>
    tpu.vector_store %arg4[%c0_249, %c2_250, %c0_251, %c0_252], %189 {strides = array<i32>} : memref<1x4x4x32xbf16, #tpu.memory_space<vmem>>, vector<1x1x4x32xbf16>,
    %cst_253 = arith.constant 0.000000e+00 : f32
    %190 = vector.broadcast %cst_253 : f32 to vector<4x32xf32>
    %c0_254 = arith.constant 0 : index
    %c0_255 = arith.constant 0 : index
    %c3_256 = arith.constant 3 : index
    %c0_257 = arith.constant 0 : index
    %c0_258 = arith.constant 0 : index
    %191 = vector.load %arg1[%c0_254, %c0_255, %c3_256, %c0_257, %c0_258] : memref<1x4x5x5x32xbf16, #tpu.memory_space<vmem>>, vector<1x1x1x4x32xbf16>
    %192 = vector.shape_cast %191 : vector<1x1x1x4x32xbf16> to vector<4x32xbf16>
    %c0_259 = arith.constant 0 : index
    %c0_260 = arith.constant 0 : index
    %c0_261 = arith.constant 0 : index
    %193 = vector.load %arg2[%c0_259, %c0_260, %c0_261] : memref<9x32x32xbf16, #tpu.memory_space<vmem>>, vector<1x32x32xbf16>
    %194 = vector.shape_cast %193 : vector<1x32x32xbf16> to vector<32x32xbf16>
    %cst_262 = arith.constant dense<0.000000e+00> : vector<4x32xf32>
    %195 = tpu.matmul %192, %194, %cst_262 {dimension_numbers = #tpu.dot_dimension_numbers<[1], [0], [0], [1], [0, 0, 1, 1], [], []>} : vector<4x32xbf16>, vector<32x32xbf16>, vector<4x32xf32> -> vector<4x32xf32>
    %196 = arith.addf %190, %195 : vector<4x32xf32>
    %c0_263 = arith.constant 0 : index
    %c1_264 = arith.constant 1 : index
    %c3_265 = arith.constant 3 : index
    %c0_266 = arith.constant 0 : index
    %c0_267 = arith.constant 0 : index
    %197 = vector.load %arg1[%c0_263, %c1_264, %c3_265, %c0_266, %c0_267] : memref<1x4x5x5x32xbf16, #tpu.memory_space<vmem>>, vector<1x1x1x4x32xbf16>
    %198 = vector.shape_cast %197 : vector<1x1x1x4x32xbf16> to vector<4x32xbf16>
    %c1_268 = arith.constant 1 : index
    %c0_269 = arith.constant 0 : index
    %c0_270 = arith.constant 0 : index
    %199 = vector.load %arg2[%c1_268, %c0_269, %c0_270] : memref<9x32x32xbf16, #tpu.memory_space<vmem>>, vector<1x32x32xbf16>
    %200 = vector.shape_cast %199 : vector<1x32x32xbf16> to vector<32x32xbf16>
    %cst_271 = arith.constant dense<0.000000e+00> : vector<4x32xf32>
    %201 = tpu.matmul %198, %200, %cst_271 {dimension_numbers = #tpu.dot_dimension_numbers<[1], [0], [0], [1], [0, 0, 1, 1], [], []>} : vector<4x32xbf16>, vector<32x32xbf16>, vector<4x32xf32> -> vector<4x32xf32>
    %202 = arith.addf %196, %201 : vector<4x32xf32>
    %c0_272 = arith.constant 0 : index
    %c0_273 = arith.constant 0 : index
    %c3_274 = arith.constant 3 : index
    %c1_275 = arith.constant 1 : index
    %c0_276 = arith.constant 0 : index
    %203 = vector.load %arg1[%c0_272, %c0_273, %c3_274, %c1_275, %c0_276] : memref<1x4x5x5x32xbf16, #tpu.memory_space<vmem>>, vector<1x1x1x4x32xbf16>
    %204 = vector.shape_cast %203 : vector<1x1x1x4x32xbf16> to vector<4x32xbf16>
    %c2_277 = arith.constant 2 : index
    %c0_278 = arith.constant 0 : index
    %c0_279 = arith.constant 0 : index
    %205 = vector.load %arg2[%c2_277, %c0_278, %c0_279] : memref<9x32x32xbf16, #tpu.memory_space<vmem>>, vector<1x32x32xbf16>
    %206 = vector.shape_cast %205 : vector<1x32x32xbf16> to vector<32x32xbf16>
    %cst_280 = arith.constant dense<0.000000e+00> : vector<4x32xf32>
    %207 = tpu.matmul %204, %206, %cst_280 {dimension_numbers = #tpu.dot_dimension_numbers<[1], [0], [0], [1], [0, 0, 1, 1], [], []>} : vector<4x32xbf16>, vector<32x32xbf16>, vector<4x32xf32> -> vector<4x32xf32>
    %208 = arith.addf %202, %207 : vector<4x32xf32>
    %c0_281 = arith.constant 0 : index
    %c2_282 = arith.constant 2 : index
    %c3_283 = arith.constant 3 : index
    %c0_284 = arith.constant 0 : index
    %c0_285 = arith.constant 0 : index
    %209 = vector.load %arg1[%c0_281, %c2_282, %c3_283, %c0_284, %c0_285] : memref<1x4x5x5x32xbf16, #tpu.memory_space<vmem>>, vector<1x1x1x4x32xbf16>
    %210 = vector.shape_cast %209 : vector<1x1x1x4x32xbf16> to vector<4x32xbf16>
    %c3_286 = arith.constant 3 : index
    %c0_287 = arith.constant 0 : index
    %c0_288 = arith.constant 0 : index
    %211 = vector.load %arg2[%c3_286, %c0_287, %c0_288] : memref<9x32x32xbf16, #tpu.memory_space<vmem>>, vector<1x32x32xbf16>
    %212 = vector.shape_cast %211 : vector<1x32x32xbf16> to vector<32x32xbf16>
    %cst_289 = arith.constant dense<0.000000e+00> : vector<4x32xf32>
    %213 = tpu.matmul %210, %212, %cst_289 {dimension_numbers = #tpu.dot_dimension_numbers<[1], [0], [0], [1], [0, 0, 1, 1], [], []>} : vector<4x32xbf16>, vector<32x32xbf16>, vector<4x32xf32> -> vector<4x32xf32>
    %214 = arith.addf %208, %213 : vector<4x32xf32>
    %c0_290 = arith.constant 0 : index
    %c3_291 = arith.constant 3 : index
    %c3_292 = arith.constant 3 : index
    %c0_293 = arith.constant 0 : index
    %c0_294 = arith.constant 0 : index
    %215 = vector.load %arg1[%c0_290, %c3_291, %c3_292, %c0_293, %c0_294] : memref<1x4x5x5x32xbf16, #tpu.memory_space<vmem>>, vector<1x1x1x4x32xbf16>
    %216 = vector.shape_cast %215 : vector<1x1x1x4x32xbf16> to vector<4x32xbf16>
    %c4_295 = arith.constant 4 : index
    %c0_296 = arith.constant 0 : index
    %c0_297 = arith.constant 0 : index
    %217 = vector.load %arg2[%c4_295, %c0_296, %c0_297] : memref<9x32x32xbf16, #tpu.memory_space<vmem>>, vector<1x32x32xbf16>
    %218 = vector.shape_cast %217 : vector<1x32x32xbf16> to vector<32x32xbf16>
    %cst_298 = arith.constant dense<0.000000e+00> : vector<4x32xf32>
    %219 = tpu.matmul %216, %218, %cst_298 {dimension_numbers = #tpu.dot_dimension_numbers<[1], [0], [0], [1], [0, 0, 1, 1], [], []>} : vector<4x32xbf16>, vector<32x32xbf16>, vector<4x32xf32> -> vector<4x32xf32>
    %220 = arith.addf %214, %219 : vector<4x32xf32>
    %c0_299 = arith.constant 0 : index
    %c2_300 = arith.constant 2 : index
    %c3_301 = arith.constant 3 : index
    %c1_302 = arith.constant 1 : index
    %c0_303 = arith.constant 0 : index
    %221 = vector.load %arg1[%c0_299, %c2_300, %c3_301, %c1_302, %c0_303] : memref<1x4x5x5x32xbf16, #tpu.memory_space<vmem>>, vector<1x1x1x4x32xbf16>
    %222 = vector.shape_cast %221 : vector<1x1x1x4x32xbf16> to vector<4x32xbf16>
    %c5_304 = arith.constant 5 : index
    %c0_305 = arith.constant 0 : index
    %c0_306 = arith.constant 0 : index
    %223 = vector.load %arg2[%c5_304, %c0_305, %c0_306] : memref<9x32x32xbf16, #tpu.memory_space<vmem>>, vector<1x32x32xbf16>
    %224 = vector.shape_cast %223 : vector<1x32x32xbf16> to vector<32x32xbf16>
    %cst_307 = arith.constant dense<0.000000e+00> : vector<4x32xf32>
    %225 = tpu.matmul %222, %224, %cst_307 {dimension_numbers = #tpu.dot_dimension_numbers<[1], [0], [0], [1], [0, 0, 1, 1], [], []>} : vector<4x32xbf16>, vector<32x32xbf16>, vector<4x32xf32> -> vector<4x32xf32>
    %226 = arith.addf %220, %225 : vector<4x32xf32>
    %c0_308 = arith.constant 0 : index
    %c0_309 = arith.constant 0 : index
    %c4_310 = arith.constant 4 : index
    %c0_311 = arith.constant 0 : index
    %c0_312 = arith.constant 0 : index
    %227 = vector.load %arg1[%c0_308, %c0_309, %c4_310, %c0_311, %c0_312] : memref<1x4x5x5x32xbf16, #tpu.memory_space<vmem>>, vector<1x1x1x4x32xbf16>
    %228 = vector.shape_cast %227 : vector<1x1x1x4x32xbf16> to vector<4x32xbf16>
    %c6_313 = arith.constant 6 : index
    %c0_314 = arith.constant 0 : index
    %c0_315 = arith.constant 0 : index
    %229 = vector.load %arg2[%c6_313, %c0_314, %c0_315] : memref<9x32x32xbf16, #tpu.memory_space<vmem>>, vector<1x32x32xbf16>
    %230 = vector.shape_cast %229 : vector<1x32x32xbf16> to vector<32x32xbf16>
    %cst_316 = arith.constant dense<0.000000e+00> : vector<4x32xf32>
    %231 = tpu.matmul %228, %230, %cst_316 {dimension_numbers = #tpu.dot_dimension_numbers<[1], [0], [0], [1], [0, 0, 1, 1], [], []>} : vector<4x32xbf16>, vector<32x32xbf16>, vector<4x32xf32> -> vector<4x32xf32>
    %232 = arith.addf %226, %231 : vector<4x32xf32>
    %c0_317 = arith.constant 0 : index
    %c1_318 = arith.constant 1 : index
    %c4_319 = arith.constant 4 : index
    %c0_320 = arith.constant 0 : index
    %c0_321 = arith.constant 0 : index
    %233 = vector.load %arg1[%c0_317, %c1_318, %c4_319, %c0_320, %c0_321] : memref<1x4x5x5x32xbf16, #tpu.memory_space<vmem>>, vector<1x1x1x4x32xbf16>
    %234 = vector.shape_cast %233 : vector<1x1x1x4x32xbf16> to vector<4x32xbf16>
    %c7_322 = arith.constant 7 : index
    %c0_323 = arith.constant 0 : index
    %c0_324 = arith.constant 0 : index
    %235 = vector.load %arg2[%c7_322, %c0_323, %c0_324] : memref<9x32x32xbf16, #tpu.memory_space<vmem>>, vector<1x32x32xbf16>
    %236 = vector.shape_cast %235 : vector<1x32x32xbf16> to vector<32x32xbf16>
    %cst_325 = arith.constant dense<0.000000e+00> : vector<4x32xf32>
    %237 = tpu.matmul %234, %236, %cst_325 {dimension_numbers = #tpu.dot_dimension_numbers<[1], [0], [0], [1], [0, 0, 1, 1], [], []>} : vector<4x32xbf16>, vector<32x32xbf16>, vector<4x32xf32> -> vector<4x32xf32>
    %238 = arith.addf %232, %237 : vector<4x32xf32>
    %c0_326 = arith.constant 0 : index
    %c0_327 = arith.constant 0 : index
    %c4_328 = arith.constant 4 : index
    %c1_329 = arith.constant 1 : index
    %c0_330 = arith.constant 0 : index
    %239 = vector.load %arg1[%c0_326, %c0_327, %c4_328, %c1_329, %c0_330] : memref<1x4x5x5x32xbf16, #tpu.memory_space<vmem>>, vector<1x1x1x4x32xbf16>
    %240 = vector.shape_cast %239 : vector<1x1x1x4x32xbf16> to vector<4x32xbf16>
    %c8_331 = arith.constant 8 : index
    %c0_332 = arith.constant 0 : index
    %c0_333 = arith.constant 0 : index
    %241 = vector.load %arg2[%c8_331, %c0_332, %c0_333] : memref<9x32x32xbf16, #tpu.memory_space<vmem>>, vector<1x32x32xbf16>
    %242 = vector.shape_cast %241 : vector<1x32x32xbf16> to vector<32x32xbf16>
    %cst_334 = arith.constant dense<0.000000e+00> : vector<4x32xf32>
    %243 = tpu.matmul %240, %242, %cst_334 {dimension_numbers = #tpu.dot_dimension_numbers<[1], [0], [0], [1], [0, 0, 1, 1], [], []>} : vector<4x32xbf16>, vector<32x32xbf16>, vector<4x32xf32> -> vector<4x32xf32>
    %244 = arith.addf %238, %243 : vector<4x32xf32>
    %245 = vector.broadcast %0 : vector<1x32xf32> to vector<4x32xf32>
    %246 = arith.addf %244, %245 : vector<4x32xf32>
    %cst_335 = arith.constant 0.000000e+00 : f32
    %247 = vector.broadcast %cst_335 : f32 to vector<4x32xf32>
    %248 = arith.maximumf %246, %247 : vector<4x32xf32>
    %249 = arith.truncf %248 : vector<4x32xf32> to vector<4x32xbf16>
    %c0_336 = arith.constant 0 : index
    %c3_337 = arith.constant 3 : index
    %c0_338 = arith.constant 0 : index
    %c0_339 = arith.constant 0 : index
    %250 = vector.load %arg4[%c0_336, %c3_337, %c0_338, %c0_339] : memref<1x4x4x32xbf16, #tpu.memory_space<vmem>>, vector<1x1x4x32xbf16>
    %251 = vector.shape_cast %250 : vector<1x1x4x32xbf16> to vector<4x32xbf16>
    %252 = vector.shape_cast %249 : vector<4x32xbf16> to vector<1x1x4x32xbf16>
    tpu.vector_store %arg4[%c0_336, %c3_337, %c0_338, %c0_339], %252 {strides = array<i32>} : memref<1x4x4x32xbf16, #tpu.memory_space<vmem>>, vector<1x1x4x32xbf16>,
    return
  }
  func.func @transform_0(%arg0: i32) -> (i32, i32, i32, i32, i32) {
    %c0_i32 = arith.constant 0 : i32
    %c0_i32_0 = arith.constant 0 : i32
    %c0_i32_1 = arith.constant 0 : i32
    %c0_i32_2 = arith.constant 0 : i32
    %c0_i32_3 = arith.constant 0 : i32
    return %arg0, %c0_i32, %c0_i32_0, %c0_i32_1, %c0_i32_2 : i32, i32, i32, i32, i32
  }
  func.func @transform_1(%arg0: i32) -> (i32, i32, i32) {
    %c0_i32 = arith.constant 0 : i32
    %c0_i32_0 = arith.constant 0 : i32
    %c0_i32_1 = arith.constant 0 : i32
    %c0_i32_2 = arith.constant 0 : i32
    return %c0_i32, %c0_i32_0, %c0_i32_1 : i32, i32, i32
  }
  func.func @transform_2(%arg0: i32) -> (i32, i32) {
    %c0_i32 = arith.constant 0 : i32
    %c0_i32_0 = arith.constant 0 : i32
    %c0_i32_1 = arith.constant 0 : i32
    return %c0_i32, %c0_i32_0 : i32, i32
  }
  func.func @transform_3(%arg0: i32) -> (i32, i32, i32, i32) {
    %c0_i32 = arith.constant 0 : i32
    %c0_i32_0 = arith.constant 0 : i32
    %c0_i32_1 = arith.constant 0 : i32
    %c0_i32_2 = arith.constant 0 : i32
    return %arg0, %c0_i32, %c0_i32_0, %c0_i32_1 : i32, i32, i32, i32
  }
}

module attributes {stable_mosaic.version = 11 : i64} {
  func.func @bilinear_kernel(%arg0: i32, %arg1: i32, %arg2: memref<1x4x32xbf16, #tpu.memory_space<vmem>>, %arg3: memref<16x4xbf16, #tpu.memory_space<vmem>>, %arg4: memref<32x128xbf16, #tpu.memory_space<vmem>>, %arg5: memref<1x16x128xf32, #tpu.memory_space<vmem>>) attributes {dimension_semantics = [#tpu.dimension_semantics<parallel>, #tpu.dimension_semantics<parallel>], iteration_bounds = array<i64: 2, 1>, scalar_prefetch = 0 : i64, scratch_operands = 0 : i64, tpu.core_type = #tpu.core_type<tc>, window_params = [{transform_indices = @transform_0, window_bounds = array<i64: 1, 4, 32>}, {transform_indices = @transform_1, window_bounds = array<i64: 16, 4>}, {pipeline_mode = #tpu.pipeline_mode<synchronous>, transform_indices = @transform_2, window_bounds = array<i64: 32, 128>}, {transform_indices = @transform_3, window_bounds = array<i64: 1, 16, 128>}]} {
    %c0 = arith.constant 0 : index
    %c0_0 = arith.constant 0 : index
    %0 = vector.load %arg3[%c0, %c0_0] : memref<16x4xbf16, #tpu.memory_space<vmem>>, vector<16x4xbf16>
    %c0_1 = arith.constant 0 : index
    %c0_2 = arith.constant 0 : index
    %c0_3 = arith.constant 0 : index
    %1 = vector.load %arg2[%c0_1, %c0_2, %c0_3] : memref<1x4x32xbf16, #tpu.memory_space<vmem>>, vector<1x4x32xbf16>
    %2 = vector.shape_cast %1 : vector<1x4x32xbf16> to vector<4x32xbf16>
    %cst = arith.constant dense<0.000000e+00> : vector<16x32xf32>
    %3 = tpu.matmul %0, %2, %cst {dimension_numbers = #tpu.dot_dimension_numbers<[1], [0], [0], [1], [0, 0, 1, 1], [], []>} : vector<16x4xbf16>, vector<4x32xbf16>, vector<16x32xf32> -> vector<16x32xf32>
    %4 = arith.truncf %3 : vector<16x32xf32> to vector<16x32xbf16>
    %c0_4 = arith.constant 0 : index
    %c0_5 = arith.constant 0 : index
    %5 = vector.load %arg4[%c0_4, %c0_5] : memref<32x128xbf16, #tpu.memory_space<vmem>>, vector<32x128xbf16>
    %cst_6 = arith.constant dense<0.000000e+00> : vector<16x128xf32>
    %6 = tpu.matmul %4, %5, %cst_6 {dimension_numbers = #tpu.dot_dimension_numbers<[1], [0], [0], [1], [0, 0, 1, 1], [], []>} : vector<16x32xbf16>, vector<32x128xbf16>, vector<16x128xf32> -> vector<16x128xf32>
    %c0_7 = arith.constant 0 : index
    %c0_8 = arith.constant 0 : index
    %c0_9 = arith.constant 0 : index
    %7 = vector.load %arg5[%c0_7, %c0_8, %c0_9] : memref<1x16x128xf32, #tpu.memory_space<vmem>>, vector<1x16x128xf32>
    %8 = vector.shape_cast %7 : vector<1x16x128xf32> to vector<16x128xf32>
    %9 = vector.shape_cast %6 : vector<16x128xf32> to vector<1x16x128xf32>
    tpu.vector_store %arg5[%c0_7, %c0_8, %c0_9], %9 {strides = array<i32>} : memref<1x16x128xf32, #tpu.memory_space<vmem>>, vector<1x16x128xf32>,
    return
  }
  func.func @transform_0(%arg0: i32, %arg1: i32) -> (i32, i32, i32) {
    %c0_i32 = arith.constant 0 : i32
    %c0_i32_0 = arith.constant 0 : i32
    %c0_i32_1 = arith.constant 0 : i32
    return %arg0, %c0_i32, %c0_i32_0 : i32, i32, i32
  }
  func.func @transform_1(%arg0: i32, %arg1: i32) -> (i32, i32) {
    %c0_i32 = arith.constant 0 : i32
    %c0_i32_0 = arith.constant 0 : i32
    return %arg1, %c0_i32 : i32, i32
  }
  func.func @transform_2(%arg0: i32, %arg1: i32) -> (i32, i32) {
    %c0_i32 = arith.constant 0 : i32
    %c0_i32_0 = arith.constant 0 : i32
    %c0_i32_1 = arith.constant 0 : i32
    return %c0_i32, %c0_i32_0 : i32, i32
  }
  func.func @transform_3(%arg0: i32, %arg1: i32) -> (i32, i32, i32) {
    %c0_i32 = arith.constant 0 : i32
    %c0_i32_0 = arith.constant 0 : i32
    return %arg0, %arg1, %c0_i32 : i32, i32, i32
  }
}

</mosaic_0001>

<llo_original>
// kernel: deeplabv3_forward.6
$region0: #{deeplabv3_forward.6}
  #allocation0 [shape = 'u32[]', space=smem, size = 0x4, offset = 0x4, fixed_abs, tag = 'smem constant byte address 0x4 - core index']
  #allocation1 [shape = 'u32[144,128]{1,0:T(1,128)}', space=vmem, size = 0x12000, scoped, tag = 'internal scratch']
  #allocation2 [shape = 'f32[16,128]{1,0:T(8,128)}', space=vmem, size = 0x2000, scoped, tag = 'scratch operand']
  %s0 = inlined_call_operand.vmem [shape: bf16[32,128], index: 0, kind: input, shape index: {}]
  %s1 = inlined_call_operand.vmem [shape: bf16[128,128], index: 1, kind: input, shape index: {}]
  %s2 = inlined_call_operand.vmem [shape: f32[1,128], index: 2, kind: input, shape index: {}]
  %s3 = inlined_call_operand.vmem [shape: bf16[32,128], index: 3, kind: output, shape index: {}]
  %s4 = sld [smem:[#allocation0]]
  $region53: #{deeplabv3_forward.6} parent=0
    _
  %s6 = ssub.s32 1, %s4
  %s7 = scalar_select 0, %s6, %s4
  loop: start=0, step=1, limit=4
  $region2: #{deeplabv3_forward.6} parent=0 // loop_pre_header
    _
  $region3: #{deeplabv3_forward.6} parent=0 // loop_header
    %s9 = sphi 0, %s13
    %p10 = scmp.ge.s32.totalorder %s9, 4
    %s16 = sphi 0, %s35
    %s17 = sphi 0, %s31
    %s18 = sphi 0, %s27
    %s19 = sphi 0, %s16
    %s20 = sphi 0, %s17
    %s21 = sphi 0, %s18
    %s22 = sphi 0, %s19
    %s23 = sphi 0, %s20
    %s24 = sphi 0, %s21
    %s40 = sphi 0, %s42
    %s43 = sphi 0, %s40
    %s44 = sphi 0, %s43
    %s60 = sphi 0, %s44
    %s68 = sphi 0, %s70
    %s71 = sphi 0, %s68
    %s72 = sphi 0, %s71
    %s88 = sphi 0, %s72
    %s94 = sphi 0, %s96
    %s97 = sphi 0, %s94
    %s98 = sphi 0, %s97
    %s114 = sphi 0, %s98
    %s122 = sphi 0, %s124
    %s125 = sphi 0, %s122
    %s126 = sphi 0, %s125
    %s142 = sphi 0, %s126
  $region4: #{deeplabv3_forward.6} parent=0 // loop_header_branch
    %12 = sbr.rel (%p10) target = $region8
  $region5: #{deeplabv3_forward.6} parent=0 // loop_body
    %s14 = ssub.s32 %s9, 1
    %s15 = ssub.s32 %s9, 2
    %s25 = sadd.s32 1, %s18
    %p26 = scmp.ge.s32.totalorder %s25, 1
    %s27 = scalar_select %p26, 0, %s25
    %s28 = sadd.s32 1, %s17
    %s29 = scalar_select %p26, %s28, %s17
    %p30 = scmp.ge.s32.totalorder %s29, 1
    %s31 = scalar_select %p30, 0, %s29
    %s32 = sadd.s32 1, %s16
    %s33 = scalar_select %p30, %s32, %s16
    %p34 = scmp.ge.s32.totalorder %s33, 2
    %s35 = scalar_select %p34, 0, %s33
    %s36 = ssub.s32 %s16, %s35
    %s37 = ssub.s32 %s18, %s27
    %s38 = sor.u32 %s36, %s37
    %p39 = scmp.eq.s32.totalorder %s38, 0
    %s41 = sadd.s32 %s40, 1
    %s42 = scalar_select %p39, %s40, %s41
    %p45 = pneg %p39
    %p46 = scmp.eq.s32.totalorder %s9, 1
    %p47 = por %p45, %p46
    %p48 = scmp.ne.s32.totalorder %s40, %s43
    %p49 = scmp.eq.s32.totalorder %s9, 0
    %p50 = por %p48, %p49
    %p51 = scmp.ne.s32.totalorder %s40, %s43
    %p52 = scmp.eq.s32.totalorder %s14, 1
    %p53 = por %p51, %p52
    %p54 = scmp.ne.s32.totalorder %s43, %s44
    %p55 = scmp.eq.s32.totalorder %s14, 0
    %p56 = por %p54, %p55
    %p57 = scmp.ne.s32.totalorder %s43, %s44
    %p58 = scmp.eq.s32.totalorder %s15, 1
    %p59 = por %p57, %p58
    %p61 = scmp.ne.s32.totalorder %s44, %s60
    %p62 = scmp.eq.s32.totalorder %s15, 0
    %p63 = por %p61, %p62
    %s64 = ssub.s32 %s18, %s27
    %s65 = ssub.s32 %s17, %s31
    %s66 = sor.u32 %s64, %s65
    %p67 = scmp.eq.s32.totalorder %s66, 0
    %s69 = sadd.s32 %s68, 1
    %s70 = scalar_select %p67, %s68, %s69
    %p73 = pneg %p67
    %p74 = scmp.eq.s32.totalorder %s9, 1
    %p75 = por %p73, %p74
    %p76 = scmp.ne.s32.totalorder %s68, %s71
    %p77 = scmp.eq.s32.totalorder %s9, 0
    %p78 = por %p76, %p77
    %p79 = scmp.ne.s32.totalorder %s68, %s71
    %p80 = scmp.eq.s32.totalorder %s14, 1
    %p81 = por %p79, %p80
    %p82 = scmp.ne.s32.totalorder %s71, %s72
    %p83 = scmp.eq.s32.totalorder %s14, 0
    %p84 = por %p82, %p83
    %p85 = scmp.ne.s32.totalorder %s71, %s72
    %p86 = scmp.eq.s32.totalorder %s15, 1
    %p87 = por %p85, %p86
    %p89 = scmp.ne.s32.totalorder %s72, %s88
    %p90 = scmp.eq.s32.totalorder %s15, 0
    %p91 = por %p89, %p90
    %s92 = ssub.s32 %s17, %s31
    %p93 = scmp.eq.s32.totalorder %s92, 0
    %s95 = sadd.s32 %s94, 1
    %s96 = scalar_select %p93, %s94, %s95
    %p99 = pneg %p93
    %p100 = scmp.eq.s32.totalorder %s9, 1
    %p101 = por %p99, %p100
    %p102 = scmp.ne.s32.totalorder %s94, %s97
    %p103 = scmp.eq.s32.totalorder %s9, 0
    %p104 = por %p102, %p103
    %p105 = scmp.ne.s32.totalorder %s94, %s97
    %p106 = scmp.eq.s32.totalorder %s14, 1
    %p107 = por %p105, %p106
    %p108 = scmp.ne.s32.totalorder %s97, %s98
    %p109 = scmp.eq.s32.totalorder %s14, 0
    %p110 = por %p108, %p109
    %p111 = scmp.ne.s32.totalorder %s97, %s98
    %p112 = scmp.eq.s32.totalorder %s15, 1
    %p113 = por %p111, %p112
    %p115 = scmp.ne.s32.totalorder %s98, %s114
    %p116 = scmp.eq.s32.totalorder %s15, 0
    %p117 = por %p115, %p116
    %s118 = ssub.s32 %s16, %s35
    %s119 = ssub.s32 %s17, %s31
    %s120 = sor.u32 %s118, %s119
    %p121 = scmp.eq.s32.totalorder %s120, 0
    %s123 = sadd.s32 %s122, 1
    %s124 = scalar_select %p121, %s122, %s123
    %p127 = pneg %p121
    %p128 = scmp.eq.s32.totalorder %s9, 1
    %p129 = por %p127, %p128
    %p130 = scmp.ne.s32.totalorder %s122, %s125
    %p131 = scmp.eq.s32.totalorder %s9, 0
    %p132 = por %p130, %p131
    %p133 = scmp.ne.s32.totalorder %s122, %s125
    %p134 = scmp.eq.s32.totalorder %s14, 1
    %p135 = por %p133, %p134
    %p136 = scmp.ne.s32.totalorder %s125, %s126
    %p137 = scmp.eq.s32.totalorder %s14, 0
    %p138 = por %p136, %p137
    %p139 = scmp.ne.s32.totalorder %s125, %s126
    %p140 = scmp.eq.s32.totalorder %s15, 1
    %p141 = por %p139, %p140
    %p143 = scmp.ne.s32.totalorder %s126, %s142
    %p144 = scmp.eq.s32.totalorder %s15, 0
    %p145 = por %p143, %p144
    %p146 = scmp.le.s32.totalorder 1, %s9
    %p147 = scmp.lt.s32.totalorder %s9, 3
    %p148 = pnand %p146, %p147
    %p149 = pneg %p148
    // Predicated region
    $region9: #{deeplabv3_forward.6} parent=5 // pred_check
      _
    $region10: #{deeplabv3_forward.6} parent=5 // pred_check_branch
      %151 = sbr.rel (%p148) target = $region12
    $region11: #{deeplabv3_forward.6} parent=5 // pred_region
      %s152 = ssub.s32 %s9, 1
      // Predicated region
      $region13: #{deeplabv3_forward.6} parent=11 // pred_check
        %p153 = pneg %p84
      $region14: #{deeplabv3_forward.6} parent=11 // pred_check_branch
        %155 = sbr.rel (%p153) target = $region16
      $region15: #{deeplabv3_forward.6} parent=11 // pred_region
        %s156 = smul.u32 16, %s21
        %p157 = scmp.lt.s32.totalorder %s156, 15
        %s158 = scalar_select %p157, %s156, 15
        %p159 = scmp.lt.s32.totalorder %s20, 0
        %s160 = scalar_select %p159, %s20, 0
        %s161 = sadd.s32 %s160, %s158
        %s162 = smul.addr %s161, 4
        %s163 = scalar_lea.vmem %s1, %s162
        %s164 = smul.u32 16, %s21
      $region16: #{deeplabv3_forward.6} parent=11 // pred_fallthru
        _
      // Predicated region
      $region17: #{deeplabv3_forward.6} parent=11 // pred_check
        %p165 = pneg %p110
      $region18: #{deeplabv3_forward.6} parent=11 // pred_check_branch
        %167 = sbr.rel (%p165) target = $region20
      $region19: #{deeplabv3_forward.6} parent=11 // pred_region
        %p168 = scmp.lt.s32.totalorder %s20, 0
        %s169 = scalar_select %p168, %s20, 0
        %s170 = scalar_lea.vmem %s2, %s169
      $region20: #{deeplabv3_forward.6} parent=11 // pred_fallthru
        _
    $region12: #{deeplabv3_forward.6} parent=5 // pred_fallthru
      _
    %p171 = scmp.lt.s32.totalorder %s9, 2
    // Predicated region
    $region21: #{deeplabv3_forward.6} parent=5 // pred_check
      %p172 = pneg %p171
    $region22: #{deeplabv3_forward.6} parent=5 // pred_check_branch
      %174 = sbr.rel (%p172) target = $region24
    $region23: #{deeplabv3_forward.6} parent=5 // pred_region
      // Predicated region
      $region25: #{deeplabv3_forward.6} parent=23 // pred_check
        %p175 = pneg %p50
      $region26: #{deeplabv3_forward.6} parent=23 // pred_check_branch
        %177 = sbr.rel (%p175) target = $region28
      $region27: #{deeplabv3_forward.6} parent=23 // pred_region
        %s178 = smul.u32 2, %s16
        %p179 = scmp.lt.s32.totalorder %s178, 3
        %s180 = scalar_select %p179, %s178, 3
        %p181 = scmp.lt.s32.totalorder %s18, 0
        %s182 = scalar_select %p181, %s18, 0
        %s183 = sadd.s32 %s182, %s180
        %s184 = smul.addr %s183, 4
        %s185 = scalar_lea.vmem %s0, %s184
        %s186 = smul.u32 2, %s16
      $region28: #{deeplabv3_forward.6} parent=23 // pred_fallthru
        _
    $region24: #{deeplabv3_forward.6} parent=5 // pred_fallthru
      _
    %p187 = scmp.le.s32.totalorder 1, %s9
    %p188 = scmp.lt.s32.totalorder %s9, 3
    %p189 = pnand %p187, %p188
    %p190 = pneg %p189
    // Predicated region
    $region29: #{deeplabv3_forward.6} parent=5 // pred_check
      _
    $region30: #{deeplabv3_forward.6} parent=5 // pred_check_branch
      %192 = sbr.rel (%p189) target = $region32
    $region31: #{deeplabv3_forward.6} parent=5 // pred_region
      %s193 = ssub.s32 %s9, 1
      %s194 = smul.u32 2, %s19
      %p195 = scmp.lt.s32.totalorder %s194, 3
      %s196 = scalar_select %p195, %s194, 3
      %p197 = scmp.lt.s32.totalorder %s21, 0
      %s198 = scalar_select %p197, %s21, 0
      %s199 = sadd.s32 %s198, %s196
      %s200 = smul.addr %s199, 4
      %s201 = scalar_lea.vmem %s0, %s200
      %p202 = pneg %p56
      %p203 = pneg %p53
      %s204 = smul.u32 16, %s21
      %p205 = scmp.lt.s32.totalorder %s204, 15
      %s206 = scalar_select %p205, %s204, 15
      %p207 = scmp.lt.s32.totalorder %s20, 0
      %s208 = scalar_select %p207, %s20, 0
      %s209 = sadd.s32 %s208, %s206
      %s210 = smul.addr %s209, 4
      %s211 = scalar_lea.vmem %s1, %s210
      %p212 = pneg %p84
      %p213 = pneg %p81
      %p214 = scmp.lt.s32.totalorder %s20, 0
      %s215 = scalar_select %p214, %s20, 0
      %s216 = scalar_lea.vmem %s2, %s215
      %p217 = pneg %p110
      %p218 = pneg %p107
      %p219 = pneg %p138
      %p220 = pneg %p135
      %s221 = smul.u32 2, %s19
      %p222 = scmp.lt.s32.totalorder %s221, 3
      %s223 = scalar_select %p222, %s221, 3
      %p224 = scmp.lt.s32.totalorder %s20, 0
      %s225 = scalar_select %p224, %s20, 0
      %s226 = sadd.s32 %s225, %s223
      %s227 = smul.addr %s226, 4
      %s228 = scalar_lea.vmem %s3, %s227
      %s229 = smul.u32 2, %s19
      %p230 = scmp.lt.s32.totalorder %s229, 3
      %s231 = scalar_select %p230, %s229, 3
      %p232 = scmp.lt.s32.totalorder %s21, 0
      %s233 = scalar_select %p232, %s21, 0
      %s234 = sadd.s32 %s233, %s231
      %s235 = smul.addr %s234, 4
      %s236 = scalar_lea.vmem %s0, %s235
      %s237 = smul.u32 2, %s19
      %s238 = smul.u32 16, %s21
      %p239 = scmp.lt.s32.totalorder %s238, 15
      %s240 = scalar_select %p239, %s238, 15
      %p241 = scmp.lt.s32.totalorder %s20, 0
      %s242 = scalar_select %p241, %s20, 0
      %s243 = sadd.s32 %s242, %s240
      %s244 = smul.addr %s243, 4
      %s245 = scalar_lea.vmem %s1, %s244
      %s246 = smul.u32 16, %s21
      %p247 = scmp.lt.s32.totalorder %s20, 0
      %s248 = scalar_select %p247, %s20, 0
      %s249 = scalar_lea.vmem %s2, %s248
      %s250 = smul.u32 2, %s19
      %p251 = scmp.lt.s32.totalorder %s250, 3
      %s252 = scalar_select %p251, %s250, 3
      %p253 = scmp.lt.s32.totalorder %s20, 0
      %s254 = scalar_select %p253, %s20, 0
      %s255 = sadd.s32 %s254, %s252
      %s256 = smul.addr %s255, 4
      %s257 = scalar_lea.vmem %s3, %s256
      %s258 = smul.u32 2, %s19
      %p260 = scmp.eq.s32.totalorder %s21, 0
      // Predicated region
      $region33: #{deeplabv3_forward.6} parent=31 // pred_check
        %p261 = pneg %p260
      $region34: #{deeplabv3_forward.6} parent=31 // pred_check_branch
        %263 = sbr.rel (%p261) target = $region36
      $region35: #{deeplabv3_forward.6} parent=31 // pred_region
        %264 = vst [vmem:[#allocation2] sm:$0xff] 0.0
        %265 = vst [vmem:[#allocation2 + $0x8] sm:$0xff] 0.0
      $region36: #{deeplabv3_forward.6} parent=31 // pred_fallthru
        _
      %v266 = vld [vmem:[#allocation2] sm:$0xff]
      %v267 = vld [vmem:[#allocation2 + $0x8] sm:$0xff]
      %v268 = vld [vmem:[%s236] sm:$0xf]
      %v269 = vld [vmem:[%s236 + $0x4] sm:$0xf]
      %v270 = vld [vmem:[%s245] sm:$0xf]
      %v271 = vld [vmem:[%s245 + $0x4] sm:$0xf]
      %v272 = vld [vmem:[%s245 + $0x8] sm:$0xf]
      %v273 = vld [vmem:[%s245 + $0xc] sm:$0xf]
      %v274 = vld [vmem:[%s245 + $0x10] sm:$0xf]
      %v275 = vld [vmem:[%s245 + $0x14] sm:$0xf]
      %v276 = vld [vmem:[%s245 + $0x18] sm:$0xf]
      %v277 = vld [vmem:[%s245 + $0x1c] sm:$0xf]
      %v278 = vld [vmem:[%s245 + $0x20] sm:$0xf]
      %v279 = vld [vmem:[%s245 + $0x24] sm:$0xf]
      %v280 = vld [vmem:[%s245 + $0x28] sm:$0xf]
      %v281 = vld [vmem:[%s245 + $0x2c] sm:$0xf]
      %v282 = vld [vmem:[%s245 + $0x30] sm:$0xf]
      %v283 = vld [vmem:[%s245 + $0x34] sm:$0xf]
      %v284 = vld [vmem:[%s245 + $0x38] sm:$0xf]
      %v285 = vld [vmem:[%s245 + $0x3c] sm:$0xf]
      %v288 = vunpack.c.l.b16 %v268
      %v289 = vunpack.c.l.b16 %v269
      %v290 = vpack.c.b16 %v289, %v288
      %v308 = vunpack.c.l.b16 %v270
      %v309 = vunpack.c.l.b16 %v271
      %v310 = vunpack.c.l.b16 %v272
      %v311 = vunpack.c.l.b16 %v273
      %v312 = vunpack.c.l.b16 %v274
      %v313 = vunpack.c.l.b16 %v275
      %v314 = vunpack.c.l.b16 %v276
      %v315 = vunpack.c.l.b16 %v277
      %v316 = vunpack.c.l.b16 %v278
      %v317 = vunpack.c.l.b16 %v279
      %v318 = vunpack.c.l.b16 %v280
      %v319 = vunpack.c.l.b16 %v281
      %v320 = vunpack.c.l.b16 %v282
      %v321 = vunpack.c.l.b16 %v283
      %v322 = vunpack.c.l.b16 %v284
      %v323 = vunpack.c.l.b16 %v285
      %v324 = vpack.c.b16 %v309, %v308
      %v325 = vpack.c.b16 %v311, %v310
      %v326 = vpack.c.b16 %v313, %v312
      %v327 = vpack.c.b16 %v315, %v314
      %v328 = vpack.c.b16 %v317, %v316
      %v329 = vpack.c.b16 %v319, %v318
      %v330 = vpack.c.b16 %v321, %v320
      %v331 = vpack.c.b16 %v323, %v322
      %340 = vmatprep.subr.bf16.mxu0 0
      %341 = vmatpush1.bf16.msra.mxu0 %v324
      %342 = vmatprep.subr.bf16.mxu0 0
      %343 = vmatpush1.bf16.msra.mxu0 %v325
      %344 = vmatprep.subr.bf16.mxu0 0
      %345 = vmatpush1.bf16.msra.mxu0 %v326
      %346 = vmatprep.subr.bf16.mxu0 0
      %347 = vmatpush1.bf16.msra.mxu0 %v327
      %348 = vmatprep.subr.bf16.mxu0 0
      %349 = vmatpush1.bf16.msra.mxu0 %v328
      %350 = vmatprep.subr.bf16.mxu0 0
      %351 = vmatpush1.bf16.msra.mxu0 %v329
      %352 = vmatprep.subr.bf16.mxu0 0
      %353 = vmatpush1.bf16.msra.mxu0 %v330
      %354 = vmatprep.subr.bf16.mxu0 0
      %355 = vmatpush1.bf16.msra.mxu0 %v331
      %356 = vmatprep.subr.bf16.mxu0 0
      %357 = vmatpush1.bf16.msra.mxu0 0
      %358 = vmatprep.subr.bf16.mxu0 0
      %359 = vmatpush1.bf16.msra.mxu0 0
      %360 = vmatprep.subr.bf16.mxu0 0
      %361 = vmatpush1.bf16.msra.mxu0 0
      %362 = vmatprep.subr.bf16.mxu0 0
      %363 = vmatpush1.bf16.msra.mxu0 0
      %364 = vmatprep.subr.bf16.mxu0 0
      %365 = vmatpush1.bf16.msra.mxu0 0
      %366 = vmatprep.subr.bf16.mxu0 0
      %367 = vmatpush1.bf16.msra.mxu0 0
      %368 = vmatprep.subr.bf16.mxu0 0
      %369 = vmatpush1.bf16.msra.mxu0 0
      %370 = vmatprep.subr.bf16.mxu0 0
      %371 = vmatpush1.bf16.msra.mxu0 0
      %372 = vmatprep.mubr.bf16.mxu0 0
      %373 = vmatmul.mubr.bf16.gmra.mrb[0].mxu0 %v290
      %v374 = vpop.f32.mrb[0].mxu0
      %v375 = vadd.f32 0.0, %v374
      %v376 = vpop.f32.mrb[0].mxu0
      %v377 = vpop.f32.mrb[0].mxu0
      %v378 = vadd.f32 0.0, %v377
      %v379 = vpop.f32.mrb[0].mxu0
      %380 = vdwg.mxu0
      %v381 = vadd.f32 %v266, %v375
      %v382 = vadd.f32 %v267, %v378
      %383 = vst [vmem:[#allocation2] sm:$0xff] %v381
      %384 = vst [vmem:[#allocation2 + $0x8] sm:$0xff] %v382
      // Predicated region
      $region37: #{deeplabv3_forward.6} parent=31 // pred_check
        %p385 = pneg %p260
      $region38: #{deeplabv3_forward.6} parent=31 // pred_check_branch
        %387 = sbr.rel (%p385) target = $region40
      $region39: #{deeplabv3_forward.6} parent=31 // pred_region
        %v388 = vld [vmem:[#allocation2] sm:$0xff]
        %v389 = vld [vmem:[#allocation2 + $0x8] sm:$0xff]
        %v390 = vld [vmem:[%s249] sm:$0x1]
        %v392 = vlaneseq
        %v393 = vshrl.u32 %v392, 7
        %v394 = vsub.s32 0, %v393
        %v395 = vrot.slane %v390, %v394
        %v397 = vadd.f32 %v388, %v395
        %v398 = vadd.f32 %v389, %v395
        %v399 = vpack.c.bf16 %v398, %v397
        %v401 = vunpack.c.l.b16 %v399
        %v402 = vunpack.c.h.b16 %v399
        %v403 = vpack.c.b16 %v401, %v401
        %v404 = vpack.c.b16 %v402, %v402
        %407 = vst [vmem:[%s257] sm:$0xf] %v403
        %408 = vst [vmem:[%s257 + $0x4] sm:$0xf] %v404
      $region40: #{deeplabv3_forward.6} parent=31 // pred_fallthru
        _
      %s409 = smul.u32 2, %s19
      %p410 = scmp.lt.s32.totalorder %s409, 3
      %s411 = scalar_select %p410, %s409, 3
      %p412 = scmp.lt.s32.totalorder %s20, 0
      %s413 = scalar_select %p412, %s20, 0
      %s414 = sadd.s32 %s413, %s411
      %s415 = smul.addr %s414, 4
      %s416 = scalar_lea.vmem %s3, %s415
      // Predicated region
      $region41: #{deeplabv3_forward.6} parent=31 // pred_check
        %p417 = pneg %p135
      $region42: #{deeplabv3_forward.6} parent=31 // pred_check_branch
        %419 = sbr.rel (%p417) target = $region44
      $region43: #{deeplabv3_forward.6} parent=31 // pred_region
        %s420 = smul.u32 2, %s19
      $region44: #{deeplabv3_forward.6} parent=31 // pred_fallthru
        _
    $region32: #{deeplabv3_forward.6} parent=5 // pred_fallthru
      _
    %p421 = scmp.le.s32.totalorder 2, %s9
    // Predicated region
    $region45: #{deeplabv3_forward.6} parent=5 // pred_check
      %p422 = pneg %p421
    $region46: #{deeplabv3_forward.6} parent=5 // pred_check_branch
      %424 = sbr.rel (%p422) target = $region48
    $region47: #{deeplabv3_forward.6} parent=5 // pred_region
      %s425 = ssub.s32 %s9, 2
      // Predicated region
      $region49: #{deeplabv3_forward.6} parent=47 // pred_check
        %p426 = pneg %p141
      $region50: #{deeplabv3_forward.6} parent=47 // pred_check_branch
        %428 = sbr.rel (%p426) target = $region52
      $region51: #{deeplabv3_forward.6} parent=47 // pred_region
        %s429 = smul.u32 2, %s22
        %p430 = scmp.lt.s32.totalorder %s429, 3
        %s431 = scalar_select %p430, %s429, 3
        %p432 = scmp.lt.s32.totalorder %s23, 0
        %s433 = scalar_select %p432, %s23, 0
        %s434 = sadd.s32 %s433, %s431
        %s435 = smul.addr %s434, 4
        %s436 = scalar_lea.vmem %s3, %s435
      $region52: #{deeplabv3_forward.6} parent=47 // pred_fallthru
        _
    $region48: #{deeplabv3_forward.6} parent=5 // pred_fallthru
      _
  $region6: #{deeplabv3_forward.6} parent=0 // loop_footer
    %s13 = sadd.s32 1, %s9
  $region7: #{deeplabv3_forward.6} parent=0 // loop_footer_branch
    %8 = sbr.rel target = $region3
  $region8: #{deeplabv3_forward.6} parent=0 // loop_exit
    _

// kernel: deeplabv3_forward.7
$region0: #{deeplabv3_forward.7}
  #allocation0 [shape = 'u32[]', space=smem, size = 0x4, offset = 0x4, fixed_abs, tag = 'smem constant byte address 0x4 - core index']
  #allocation1 [shape = 'u32[144,128]{1,0:T(1,128)}', space=vmem, size = 0x12000, scoped, tag = 'internal scratch']
  %s0 = inlined_call_operand.vmem [shape: bf16[2,4,32], index: 0, kind: input, shape index: {}]
  %s1 = inlined_call_operand.vmem [shape: bf16[16,4], index: 1, kind: input, shape index: {}]
  %s2 = inlined_call_operand.vmem [shape: bf16[32,128], index: 2, kind: input, shape index: {}]
  %s3 = inlined_call_operand.vmem [shape: f32[2,16,128], index: 3, kind: output, shape index: {}]
  %s4 = sld [smem:[#allocation0]]
  $region45: #{deeplabv3_forward.7} parent=0
    _
  %s6 = ssub.s32 1, %s4
  %s7 = scalar_select 0, %s6, %s4
  loop: start=0, step=1, limit=4
  $region2: #{deeplabv3_forward.7} parent=0 // loop_pre_header
    _
  $region3: #{deeplabv3_forward.7} parent=0 // loop_header
    %s9 = sphi 0, %s13
    %p10 = scmp.ge.s32.totalorder %s9, 4
    %s16 = sphi 0, %s28
    %s17 = sphi 0, %s24
    %s18 = sphi 0, %s16
    %s19 = sphi 0, %s17
    %s20 = sphi 0, %s18
    %s21 = sphi 0, %s19
    %s31 = sphi 0, %s33
    %s34 = sphi 0, %s31
    %s35 = sphi 0, %s34
    %s51 = sphi 0, %s35
    %s57 = sphi 0, %s59
    %s60 = sphi 0, %s57
    %s61 = sphi 0, %s60
    %s77 = sphi 0, %s61
    %s81 = sphi 0, %s81
    %s83 = sphi 0, %s81
    %s84 = sphi 0, %s83
    %s98 = sphi 0, %s84
    %s106 = sphi 0, %s108
    %s109 = sphi 0, %s106
    %s110 = sphi 0, %s109
    %s126 = sphi 0, %s110
  $region4: #{deeplabv3_forward.7} parent=0 // loop_header_branch
    %12 = sbr.rel (%p10) target = $region8
  $region5: #{deeplabv3_forward.7} parent=0 // loop_body
    %s14 = ssub.s32 %s9, 1
    %s15 = ssub.s32 %s9, 2
    %s22 = sadd.s32 1, %s17
    %p23 = scmp.ge.s32.totalorder %s22, 1
    %s24 = scalar_select %p23, 0, %s22
    %s25 = sadd.s32 1, %s16
    %s26 = scalar_select %p23, %s25, %s16
    %p27 = scmp.ge.s32.totalorder %s26, 2
    %s28 = scalar_select %p27, 0, %s26
    %s29 = ssub.s32 %s16, %s28
    %p30 = scmp.eq.s32.totalorder %s29, 0
    %s32 = sadd.s32 %s31, 1
    %s33 = scalar_select %p30, %s31, %s32
    %p36 = pneg %p30
    %p37 = scmp.eq.s32.totalorder %s9, 1
    %p38 = por %p36, %p37
    %p39 = scmp.ne.s32.totalorder %s31, %s34
    %p40 = scmp.eq.s32.totalorder %s9, 0
    %p41 = por %p39, %p40
    %p42 = scmp.ne.s32.totalorder %s31, %s34
    %p43 = scmp.eq.s32.totalorder %s14, 1
    %p44 = por %p42, %p43
    %p45 = scmp.ne.s32.totalorder %s34, %s35
    %p46 = scmp.eq.s32.totalorder %s14, 0
    %p47 = por %p45, %p46
    %p48 = scmp.ne.s32.totalorder %s34, %s35
    %p49 = scmp.eq.s32.totalorder %s15, 1
    %p50 = por %p48, %p49
    %p52 = scmp.ne.s32.totalorder %s35, %s51
    %p53 = scmp.eq.s32.totalorder %s15, 0
    %p54 = por %p52, %p53
    %s55 = ssub.s32 %s17, %s24
    %p56 = scmp.eq.s32.totalorder %s55, 0
    %s58 = sadd.s32 %s57, 1
    %s59 = scalar_select %p56, %s57, %s58
    %p62 = pneg %p56
    %p63 = scmp.eq.s32.totalorder %s9, 1
    %p64 = por %p62, %p63
    %p65 = scmp.ne.s32.totalorder %s57, %s60
    %p66 = scmp.eq.s32.totalorder %s9, 0
    %p67 = por %p65, %p66
    %p68 = scmp.ne.s32.totalorder %s57, %s60
    %p69 = scmp.eq.s32.totalorder %s14, 1
    %p70 = por %p68, %p69
    %p71 = scmp.ne.s32.totalorder %s60, %s61
    %p72 = scmp.eq.s32.totalorder %s14, 0
    %p73 = por %p71, %p72
    %p74 = scmp.ne.s32.totalorder %s60, %s61
    %p75 = scmp.eq.s32.totalorder %s15, 1
    %p76 = por %p74, %p75
    %p78 = scmp.ne.s32.totalorder %s61, %s77
    %p79 = scmp.eq.s32.totalorder %s15, 0
    %p80 = por %p78, %p79
    %s82 = sadd.s32 %s81, 1
    %p85 = scmp.eq.s32.totalorder %s9, 1
    %p86 = scmp.ne.s32.totalorder %s81, %s83
    %p87 = scmp.eq.s32.totalorder %s9, 0
    %p88 = por %p86, %p87
    %p89 = scmp.ne.s32.totalorder %s81, %s83
    %p90 = scmp.eq.s32.totalorder %s14, 1
    %p91 = por %p89, %p90
    %p92 = scmp.ne.s32.totalorder %s83, %s84
    %p93 = scmp.eq.s32.totalorder %s14, 0
    %p94 = por %p92, %p93
    %p95 = scmp.ne.s32.totalorder %s83, %s84
    %p96 = scmp.eq.s32.totalorder %s15, 1
    %p97 = por %p95, %p96
    %p99 = scmp.ne.s32.totalorder %s84, %s98
    %p100 = scmp.eq.s32.totalorder %s15, 0
    %p101 = por %p99, %p100
    %s102 = ssub.s32 %s16, %s28
    %s103 = ssub.s32 %s17, %s24
    %s104 = sor.u32 %s102, %s103
    %p105 = scmp.eq.s32.totalorder %s104, 0
    %s107 = sadd.s32 %s106, 1
    %s108 = scalar_select %p105, %s106, %s107
    %p111 = pneg %p105
    %p112 = scmp.eq.s32.totalorder %s9, 1
    %p113 = por %p111, %p112
    %p114 = scmp.ne.s32.totalorder %s106, %s109
    %p115 = scmp.eq.s32.totalorder %s9, 0
    %p116 = por %p114, %p115
    %p117 = scmp.ne.s32.totalorder %s106, %s109
    %p118 = scmp.eq.s32.totalorder %s14, 1
    %p119 = por %p117, %p118
    %p120 = scmp.ne.s32.totalorder %s109, %s110
    %p121 = scmp.eq.s32.totalorder %s14, 0
    %p122 = por %p120, %p121
    %p123 = scmp.ne.s32.totalorder %s109, %s110
    %p124 = scmp.eq.s32.totalorder %s15, 1
    %p125 = por %p123, %p124
    %p127 = scmp.ne.s32.totalorder %s110, %s126
    %p128 = scmp.eq.s32.totalorder %s15, 0
    %p129 = por %p127, %p128
    %p130 = scmp.le.s32.totalorder 1, %s9
    %p131 = scmp.lt.s32.totalorder %s9, 3
    %p132 = pnand %p130, %p131
    %p133 = pneg %p132
    // Predicated region
    $region9: #{deeplabv3_forward.7} parent=5 // pred_check
      _
    $region10: #{deeplabv3_forward.7} parent=5 // pred_check_branch
      %135 = sbr.rel (%p132) target = $region12
    $region11: #{deeplabv3_forward.7} parent=5 // pred_region
      %s136 = ssub.s32 %s9, 1
      // Predicated region
      $region13: #{deeplabv3_forward.7} parent=11 // pred_check
        %p137 = pneg %p73
      $region14: #{deeplabv3_forward.7} parent=11 // pred_check_branch
        %139 = sbr.rel (%p137) target = $region16
      $region15: #{deeplabv3_forward.7} parent=11 // pred_region
        %s140 = smul.u32 2, %s19
        %p141 = scmp.lt.s32.totalorder %s140, 1
        %s142 = scalar_select %p141, %s140, 1
        %s143 = smul.addr %s142, 4
        %s144 = scalar_lea.vmem %s1, %s143
        %s145 = smul.u32 2, %s19
      $region16: #{deeplabv3_forward.7} parent=11 // pred_fallthru
        _
      // Predicated region
      $region17: #{deeplabv3_forward.7} parent=11 // pred_check
        %p146 = pneg %p94
      $region18: #{deeplabv3_forward.7} parent=11 // pred_check_branch
        %148 = sbr.rel (%p146) target = $region20
      $region19: #{deeplabv3_forward.7} parent=11 // pred_region
        _
      $region20: #{deeplabv3_forward.7} parent=11 // pred_fallthru
        _
    $region12: #{deeplabv3_forward.7} parent=5 // pred_fallthru
      _
    %p149 = scmp.lt.s32.totalorder %s9, 2
    // Predicated region
    $region21: #{deeplabv3_forward.7} parent=5 // pred_check
      %p150 = pneg %p149
    $region22: #{deeplabv3_forward.7} parent=5 // pred_check_branch
      %152 = sbr.rel (%p150) target = $region24
    $region23: #{deeplabv3_forward.7} parent=5 // pred_region
      // Predicated region
      $region25: #{deeplabv3_forward.7} parent=23 // pred_check
        %p153 = pneg %p41
      $region26: #{deeplabv3_forward.7} parent=23 // pred_check_branch
        %155 = sbr.rel (%p153) target = $region28
      $region27: #{deeplabv3_forward.7} parent=23 // pred_region
        %p156 = scmp.lt.s32.totalorder %s16, 1
        %s157 = scalar_select %p156, %s16, 1
        %s158 = smul.addr %s157, 2
        %s159 = scalar_lea.vmem %s0, %s158
      $region28: #{deeplabv3_forward.7} parent=23 // pred_fallthru
        _
    $region24: #{deeplabv3_forward.7} parent=5 // pred_fallthru
      _
    %p160 = scmp.le.s32.totalorder 1, %s9
    %p161 = scmp.lt.s32.totalorder %s9, 3
    %p162 = pnand %p160, %p161
    %p163 = pneg %p162
    // Predicated region
    $region29: #{deeplabv3_forward.7} parent=5 // pred_check
      _
    $region30: #{deeplabv3_forward.7} parent=5 // pred_check_branch
      %165 = sbr.rel (%p162) target = $region32
    $region31: #{deeplabv3_forward.7} parent=5 // pred_region
      %s166 = ssub.s32 %s9, 1
      %p167 = scmp.lt.s32.totalorder %s18, 1
      %s168 = scalar_select %p167, %s18, 1
      %s169 = smul.addr %s168, 2
      %s170 = scalar_lea.vmem %s0, %s169
      %p171 = pneg %p47
      %p172 = pneg %p44
      %s173 = smul.u32 2, %s19
      %p174 = scmp.lt.s32.totalorder %s173, 1
      %s175 = scalar_select %p174, %s173, 1
      %s176 = smul.addr %s175, 4
      %s177 = scalar_lea.vmem %s1, %s176
      %p178 = pneg %p73
      %p179 = pneg %p70
      %p180 = pneg %p94
      %p181 = pneg %p91
      %p182 = pneg %p122
      %p183 = pneg %p119
      %s184 = smul.u32 2, %s19
      %p185 = scmp.lt.s32.totalorder %s18, 1
      %s186 = scalar_select %p185, %s18, 1
      %p187 = scmp.lt.s32.totalorder %s184, 1
      %s188 = scalar_select %p187, %s184, 1
      %s189 = smul.addr %s186, 2
      %s190 = sadd.s32 %s188, %s189
      %s191 = smul.addr %s190, 8
      %s192 = scalar_lea.vmem %s3, %s191
      %p193 = scmp.lt.s32.totalorder %s18, 1
      %s194 = scalar_select %p193, %s18, 1
      %s195 = smul.addr %s194, 2
      %s196 = scalar_lea.vmem %s0, %s195
      %s197 = smul.u32 2, %s19
      %p198 = scmp.lt.s32.totalorder %s197, 1
      %s199 = scalar_select %p198, %s197, 1
      %s200 = smul.addr %s199, 4
      %s201 = scalar_lea.vmem %s1, %s200
      %s202 = smul.u32 2, %s19
      %s203 = smul.u32 2, %s19
      %p204 = scmp.lt.s32.totalorder %s18, 1
      %s205 = scalar_select %p204, %s18, 1
      %p206 = scmp.lt.s32.totalorder %s203, 1
      %s207 = scalar_select %p206, %s203, 1
      %s208 = smul.addr %s205, 2
      %s209 = sadd.s32 %s207, %s208
      %s210 = smul.addr %s209, 8
      %s211 = scalar_lea.vmem %s3, %s210
      %s212 = smul.u32 2, %s19
      %v214 = vld [vmem:[%s201] sm:$0xf]
      %v215 = vld [vmem:[%s201 + $0x4] sm:$0xf]
      %v216 = vld [vmem:[%s196] sm:$0x3]
      %v219 = vunpack.c.l.b16 %v214
      %v220 = vunpack.c.l.b16 %v215
      %v221 = vpack.c.b16 %v220, %v219
      %vm222 = vcmask 31744
      %v224 = vsel %vm222, %v221, 0
      %vm226 = vcmask 1041408
      %v228 = vsel %vm226, %v216, 0
      %230 = vmatprep.subr.bf16.mxu0 0
      %231 = vmatpush1.bf16.msra.mxu0 %v228
      %232 = vmatprep.subr.bf16.mxu0 0
      %233 = vmatpush1.bf16.msra.mxu0 0
      %234 = vmatprep.subr.bf16.mxu0 0
      %235 = vmatpush1.bf16.msra.mxu0 0
      %236 = vmatprep.subr.bf16.mxu0 0
      %237 = vmatpush1.bf16.msra.mxu0 0
      %238 = vmatprep.subr.bf16.mxu0 0
      %239 = vmatpush1.bf16.msra.mxu0 0
      %240 = vmatprep.subr.bf16.mxu0 0
      %241 = vmatpush1.bf16.msra.mxu0 0
      %242 = vmatprep.subr.bf16.mxu0 0
      %243 = vmatpush1.bf16.msra.mxu0 0
      %244 = vmatprep.subr.bf16.mxu0 0
      %245 = vmatpush1.bf16.msra.mxu0 0
      %246 = vmatprep.subr.bf16.mxu0 0
      %247 = vmatpush1.bf16.msra.mxu0 0
      %248 = vmatprep.subr.bf16.mxu0 0
      %249 = vmatpush1.bf16.msra.mxu0 0
      %250 = vmatprep.subr.bf16.mxu0 0
      %251 = vmatpush1.bf16.msra.mxu0 0
      %252 = vmatprep.subr.bf16.mxu0 0
      %253 = vmatpush1.bf16.msra.mxu0 0
      %254 = vmatprep.subr.bf16.mxu0 0
      %255 = vmatpush1.bf16.msra.mxu0 0
      %256 = vmatprep.subr.bf16.mxu0 0
      %257 = vmatpush1.bf16.msra.mxu0 0
      %258 = vmatprep.subr.bf16.mxu0 0
      %259 = vmatpush1.bf16.msra.mxu0 0
      %260 = vmatprep.subr.bf16.mxu0 0
      %261 = vmatpush1.bf16.msra.mxu0 0
      %262 = vmatprep.mubr.bf16.mxu0 0
      %263 = vmatmul.mubr.bf16.gmra.mrb[0].mxu0 %v224
      %v264 = vpop.f32.mrb[0].mxu0
      %v265 = vadd.f32 0.0, %v264
      %v266 = vpop.f32.mrb[0].mxu0
      %v267 = vpop.f32.mrb[0].mxu0
      %v268 = vadd.f32 0.0, %v267
      %v269 = vpop.f32.mrb[0].mxu0
      %270 = vdwg.mxu0
      %v271 = vpack.c.bf16 %v268, %v265
      %v272 = vld [vmem:[%s2] sm:$0xf]
      %v273 = vld [vmem:[%s2 + $0x4] sm:$0xf]
      %v274 = vld [vmem:[%s2 + $0x8] sm:$0xf]
      %v275 = vld [vmem:[%s2 + $0xc] sm:$0xf]
      %v280 = vunpack.c.l.b16 %v272
      %v281 = vunpack.c.l.b16 %v273
      %v282 = vunpack.c.l.b16 %v274
      %v283 = vunpack.c.l.b16 %v275
      %v284 = vpack.c.b16 %v281, %v280
      %v285 = vpack.c.b16 %v283, %v282
      %vm288 = vcmask 261120
      %v290 = vsel %vm288, %v271, 0
      %292 = vmatprep.subr.bf16.mxu0 0
      %293 = vmatpush1.bf16.msra.mxu0 %v284
      %294 = vmatprep.subr.bf16.mxu0 0
      %295 = vmatpush1.bf16.msra.mxu0 %v285
      %296 = vmatprep.subr.bf16.mxu0 0
      %297 = vmatpush1.bf16.msra.mxu0 0
      %298 = vmatprep.subr.bf16.mxu0 0
      %299 = vmatpush1.bf16.msra.mxu0 0
      %300 = vmatprep.subr.bf16.mxu0 0
      %301 = vmatpush1.bf16.msra.mxu0 0
      %302 = vmatprep.subr.bf16.mxu0 0
      %303 = vmatpush1.bf16.msra.mxu0 0
      %304 = vmatprep.subr.bf16.mxu0 0
      %305 = vmatpush1.bf16.msra.mxu0 0
      %306 = vmatprep.subr.bf16.mxu0 0
      %307 = vmatpush1.bf16.msra.mxu0 0
      %308 = vmatprep.subr.bf16.mxu0 0
      %309 = vmatpush1.bf16.msra.mxu0 0
      %310 = vmatprep.subr.bf16.mxu0 0
      %311 = vmatpush1.bf16.msra.mxu0 0
      %312 = vmatprep.subr.bf16.mxu0 0
      %313 = vmatpush1.bf16.msra.mxu0 0
      %314 = vmatprep.subr.bf16.mxu0 0
      %315 = vmatpush1.bf16.msra.mxu0 0
      %316 = vmatprep.subr.bf16.mxu0 0
      %317 = vmatpush1.bf16.msra.mxu0 0
      %318 = vmatprep.subr.bf16.mxu0 0
      %319 = vmatpush1.bf16.msra.mxu0 0
      %320 = vmatprep.subr.bf16.mxu0 0
      %321 = vmatpush1.bf16.msra.mxu0 0
      %322 = vmatprep.subr.bf16.mxu0 0
      %323 = vmatpush1.bf16.msra.mxu0 0
      %324 = vmatprep.mubr.bf16.mxu0 0
      %325 = vmatmul.mubr.bf16.gmra.mrb[0].mxu0 %v290
      %v326 = vpop.f32.mrb[0].mxu0
      %v327 = vadd.f32 0.0, %v326
      %v328 = vpop.f32.mrb[0].mxu0
      %v329 = vpop.f32.mrb[0].mxu0
      %v330 = vadd.f32 0.0, %v329
      %v331 = vpop.f32.mrb[0].mxu0
      %332 = vdwg.mxu0
      %333 = vst [vmem:[%s211] sm:$0xff] %v327
      %334 = vst [vmem:[%s211 + $0x8] sm:$0xff] %v330
      %s335 = smul.u32 2, %s19
      %p336 = scmp.lt.s32.totalorder %s18, 1
      %s337 = scalar_select %p336, %s18, 1
      %p338 = scmp.lt.s32.totalorder %s335, 1
      %s339 = scalar_select %p338, %s335, 1
      %s340 = smul.addr %s337, 2
      %s341 = sadd.s32 %s339, %s340
      %s342 = smul.addr %s341, 8
      %s343 = scalar_lea.vmem %s3, %s342
      // Predicated region
      $region33: #{deeplabv3_forward.7} parent=31 // pred_check
        %p344 = pneg %p119
      $region34: #{deeplabv3_forward.7} parent=31 // pred_check_branch
        %346 = sbr.rel (%p344) target = $region36
      $region35: #{deeplabv3_forward.7} parent=31 // pred_region
        %s347 = smul.u32 2, %s19
      $region36: #{deeplabv3_forward.7} parent=31 // pred_fallthru
        _
    $region32: #{deeplabv3_forward.7} parent=5 // pred_fallthru
      _
    %p348 = scmp.le.s32.totalorder 2, %s9
    // Predicated region
    $region37: #{deeplabv3_forward.7} parent=5 // pred_check
      %p349 = pneg %p348
    $region38: #{deeplabv3_forward.7} parent=5 // pred_check_branch
      %351 = sbr.rel (%p349) target = $region40
    $region39: #{deeplabv3_forward.7} parent=5 // pred_region
      %s352 = ssub.s32 %s9, 2
      // Predicated region
      $region41: #{deeplabv3_forward.7} parent=39 // pred_check
        %p353 = pneg %p125
      $region42: #{deeplabv3_forward.7} parent=39 // pred_check_branch
        %355 = sbr.rel (%p353) target = $region44
      $region43: #{deeplabv3_forward.7} parent=39 // pred_region
        %s356 = smul.u32 2, %s21
        %p357 = scmp.lt.s32.totalorder %s20, 1
        %s358 = scalar_select %p357, %s20, 1
        %p359 = scmp.lt.s32.totalorder %s356, 1
        %s360 = scalar_select %p359, %s356, 1
        %s361 = smul.addr %s358, 2
        %s362 = sadd.s32 %s360, %s361
        %s363 = smul.addr %s362, 8
        %s364 = scalar_lea.vmem %s3, %s363
      $region44: #{deeplabv3_forward.7} parent=39 // pred_fallthru
        _
    $region40: #{deeplabv3_forward.7} parent=5 // pred_fallthru
      _
  $region6: #{deeplabv3_forward.7} parent=0 // loop_footer
    %s13 = sadd.s32 1, %s9
  $region7: #{deeplabv3_forward.7} parent=0 // loop_footer_branch
    %8 = sbr.rel target = $region3
  $region8: #{deeplabv3_forward.7} parent=0 // loop_exit
    _

// kernel: deeplabv3_forward.5
$region0: #{deeplabv3_forward.5}
  #allocation0 [shape = 'u32[]', space=smem, size = 0x4, offset = 0x4, fixed_abs, tag = 'smem constant byte address 0x4 - core index']
  #allocation1 [shape = 'u32[144,128]{1,0:T(1,128)}', space=vmem, size = 0x12000, scoped, tag = 'internal scratch']
  %s0 = inlined_call_operand.vmem [shape: bf16[2,4,5,5,32], index: 0, kind: input, shape index: {}]
  %s1 = inlined_call_operand.vmem [shape: bf16[9,32,32], index: 1, kind: input, shape index: {}]
  %s2 = inlined_call_operand.vmem [shape: f32[1,32], index: 2, kind: input, shape index: {}]
  %s3 = inlined_call_operand.vmem [shape: bf16[2,4,4,32], index: 3, kind: output, shape index: {}]
  %s4 = sld [smem:[#allocation0]]
  $region45: #{deeplabv3_forward.5} parent=0
    _
  %s6 = ssub.s32 1, %s4
  %s7 = scalar_select 0, %s6, %s4
  loop: start=0, step=1, limit=4
  $region2: #{deeplabv3_forward.5} parent=0 // loop_pre_header
    _
  $region3: #{deeplabv3_forward.5} parent=0 // loop_header
    %s9 = sphi 0, %s13
    %p10 = scmp.ge.s32.totalorder %s9, 4
    %s19 = sphi 0, %s21
    %s22 = sphi 0, %s19
    %s23 = sphi 0, %s22
    %s39 = sphi 0, %s23
    %s43 = sphi 0, %s43
    %s45 = sphi 0, %s43
    %s46 = sphi 0, %s45
    %s60 = sphi 0, %s46
    %s64 = sphi 0, %s64
    %s66 = sphi 0, %s64
    %s67 = sphi 0, %s66
    %s81 = sphi 0, %s67
    %s87 = sphi 0, %s89
    %s90 = sphi 0, %s87
    %s91 = sphi 0, %s90
    %s107 = sphi 0, %s91
  $region4: #{deeplabv3_forward.5} parent=0 // loop_header_branch
    %12 = sbr.rel (%p10) target = $region8
  $region5: #{deeplabv3_forward.5} parent=0 // loop_body
    %s14 = ssub.s32 %s9, 1
    %s15 = ssub.s32 %s9, 2
    %s16 = sadd.s32 %s9, 1
    %s17 = ssub.s32 %s9, %s16
    %p18 = scmp.eq.s32.totalorder %s17, 0
    %s20 = sadd.s32 %s19, 1
    %s21 = scalar_select %p18, %s19, %s20
    %p24 = pneg %p18
    %p25 = scmp.eq.s32.totalorder %s9, 1
    %p26 = por %p24, %p25
    %p27 = scmp.ne.s32.totalorder %s19, %s22
    %p28 = scmp.eq.s32.totalorder %s9, 0
    %p29 = por %p27, %p28
    %p30 = scmp.ne.s32.totalorder %s19, %s22
    %p31 = scmp.eq.s32.totalorder %s14, 1
    %p32 = por %p30, %p31
    %p33 = scmp.ne.s32.totalorder %s22, %s23
    %p34 = scmp.eq.s32.totalorder %s14, 0
    %p35 = por %p33, %p34
    %p36 = scmp.ne.s32.totalorder %s22, %s23
    %p37 = scmp.eq.s32.totalorder %s15, 1
    %p38 = por %p36, %p37
    %p40 = scmp.ne.s32.totalorder %s23, %s39
    %p41 = scmp.eq.s32.totalorder %s15, 0
    %p42 = por %p40, %p41
    %s44 = sadd.s32 %s43, 1
    %p47 = scmp.eq.s32.totalorder %s9, 1
    %p48 = scmp.ne.s32.totalorder %s43, %s45
    %p49 = scmp.eq.s32.totalorder %s9, 0
    %p50 = por %p48, %p49
    %p51 = scmp.ne.s32.totalorder %s43, %s45
    %p52 = scmp.eq.s32.totalorder %s14, 1
    %p53 = por %p51, %p52
    %p54 = scmp.ne.s32.totalorder %s45, %s46
    %p55 = scmp.eq.s32.totalorder %s14, 0
    %p56 = por %p54, %p55
    %p57 = scmp.ne.s32.totalorder %s45, %s46
    %p58 = scmp.eq.s32.totalorder %s15, 1
    %p59 = por %p57, %p58
    %p61 = scmp.ne.s32.totalorder %s46, %s60
    %p62 = scmp.eq.s32.totalorder %s15, 0
    %p63 = por %p61, %p62
    %s65 = sadd.s32 %s64, 1
    %p68 = scmp.eq.s32.totalorder %s9, 1
    %p69 = scmp.ne.s32.totalorder %s64, %s66
    %p70 = scmp.eq.s32.totalorder %s9, 0
    %p71 = por %p69, %p70
    %p72 = scmp.ne.s32.totalorder %s64, %s66
    %p73 = scmp.eq.s32.totalorder %s14, 1
    %p74 = por %p72, %p73
    %p75 = scmp.ne.s32.totalorder %s66, %s67
    %p76 = scmp.eq.s32.totalorder %s14, 0
    %p77 = por %p75, %p76
    %p78 = scmp.ne.s32.totalorder %s66, %s67
    %p79 = scmp.eq.s32.totalorder %s15, 1
    %p80 = por %p78, %p79
    %p82 = scmp.ne.s32.totalorder %s67, %s81
    %p83 = scmp.eq.s32.totalorder %s15, 0
    %p84 = por %p82, %p83
    %s85 = ssub.s32 %s9, %s16
    %p86 = scmp.eq.s32.totalorder %s85, 0
    %s88 = sadd.s32 %s87, 1
    %s89 = scalar_select %p86, %s87, %s88
    %p92 = pneg %p86
    %p93 = scmp.eq.s32.totalorder %s9, 1
    %p94 = por %p92, %p93
    %p95 = scmp.ne.s32.totalorder %s87, %s90
    %p96 = scmp.eq.s32.totalorder %s9, 0
    %p97 = por %p95, %p96
    %p98 = scmp.ne.s32.totalorder %s87, %s90
    %p99 = scmp.eq.s32.totalorder %s14, 1
    %p100 = por %p98, %p99
    %p101 = scmp.ne.s32.totalorder %s90, %s91
    %p102 = scmp.eq.s32.totalorder %s14, 0
    %p103 = por %p101, %p102
    %p104 = scmp.ne.s32.totalorder %s90, %s91
    %p105 = scmp.eq.s32.totalorder %s15, 1
    %p106 = por %p104, %p105
    %p108 = scmp.ne.s32.totalorder %s91, %s107
    %p109 = scmp.eq.s32.totalorder %s15, 0
    %p110 = por %p108, %p109
    %p111 = scmp.le.s32.totalorder 1, %s9
    %p112 = scmp.lt.s32.totalorder %s9, 3
    %p113 = pnand %p111, %p112
    %p114 = pneg %p113
    // Predicated region
    $region9: #{deeplabv3_forward.5} parent=5 // pred_check
      _
    $region10: #{deeplabv3_forward.5} parent=5 // pred_check_branch
      %116 = sbr.rel (%p113) target = $region12
    $region11: #{deeplabv3_forward.5} parent=5 // pred_region
      %s117 = ssub.s32 %s9, 1
      // Predicated region
      $region13: #{deeplabv3_forward.5} parent=11 // pred_check
        %p118 = pneg %p56
      $region14: #{deeplabv3_forward.5} parent=11 // pred_check_branch
        %120 = sbr.rel (%p118) target = $region16
      $region15: #{deeplabv3_forward.5} parent=11 // pred_region
        _
      $region16: #{deeplabv3_forward.5} parent=11 // pred_fallthru
        _
      // Predicated region
      $region17: #{deeplabv3_forward.5} parent=11 // pred_check
        %p121 = pneg %p77
      $region18: #{deeplabv3_forward.5} parent=11 // pred_check_branch
        %123 = sbr.rel (%p121) target = $region20
      $region19: #{deeplabv3_forward.5} parent=11 // pred_region
        _
      $region20: #{deeplabv3_forward.5} parent=11 // pred_fallthru
        _
    $region12: #{deeplabv3_forward.5} parent=5 // pred_fallthru
      _
    %p124 = scmp.lt.s32.totalorder %s9, 2
    // Predicated region
    $region21: #{deeplabv3_forward.5} parent=5 // pred_check
      %p125 = pneg %p124
    $region22: #{deeplabv3_forward.5} parent=5 // pred_check_branch
      %127 = sbr.rel (%p125) target = $region24
    $region23: #{deeplabv3_forward.5} parent=5 // pred_region
      // Predicated region
      $region25: #{deeplabv3_forward.5} parent=23 // pred_check
        %p128 = pneg %p29
      $region26: #{deeplabv3_forward.5} parent=23 // pred_check_branch
        %130 = sbr.rel (%p128) target = $region28
      $region27: #{deeplabv3_forward.5} parent=23 // pred_region
        %p131 = scmp.lt.s32.totalorder %s9, 1
        %s132 = scalar_select %p131, %s9, 1
        %s133 = smul.addr %s132, 20
        %s134 = smul.addr %s133, 4
        %s135 = scalar_lea.vmem %s0, %s134
      $region28: #{deeplabv3_forward.5} parent=23 // pred_fallthru
        _
    $region24: #{deeplabv3_forward.5} parent=5 // pred_fallthru
      _
    %p136 = scmp.le.s32.totalorder 1, %s9
    %p137 = scmp.lt.s32.totalorder %s9, 3
    %p138 = pnand %p136, %p137
    %p139 = pneg %p138
    // Predicated region
    $region29: #{deeplabv3_forward.5} parent=5 // pred_check
      _
    $region30: #{deeplabv3_forward.5} parent=5 // pred_check_branch
      %141 = sbr.rel (%p138) target = $region32
    $region31: #{deeplabv3_forward.5} parent=5 // pred_region
      %s142 = ssub.s32 %s9, 1
      %p143 = scmp.lt.s32.totalorder %s14, 1
      %s144 = scalar_select %p143, %s14, 1
      %s145 = smul.addr %s144, 20
      %s146 = smul.addr %s145, 4
      %s147 = scalar_lea.vmem %s0, %s146
      %p148 = pneg %p35
      %p149 = pneg %p32
      %p150 = pneg %p56
      %p151 = pneg %p53
      %p152 = pneg %p77
      %p153 = pneg %p74
      %p154 = pneg %p103
      %p155 = pneg %p100
      %p156 = scmp.lt.s32.totalorder %s14, 1
      %s157 = scalar_select %p156, %s14, 1
      %s158 = smul.addr %s157, 4
      %s159 = smul.addr %s158, 2
      %s160 = scalar_lea.vmem %s3, %s159
      %p161 = scmp.lt.s32.totalorder %s14, 1
      %s162 = scalar_select %p161, %s14, 1
      %s163 = smul.addr %s162, 20
      %s164 = smul.addr %s163, 4
      %s165 = scalar_lea.vmem %s0, %s164
      %p166 = scmp.lt.s32.totalorder %s14, 1
      %s167 = scalar_select %p166, %s14, 1
      %s168 = smul.addr %s167, 4
      %s169 = smul.addr %s168, 2
      %s170 = scalar_lea.vmem %s3, %s169
      %v172 = vld [vmem:[%s2] sm:$0x1]
      %v173 = vld [vmem:[%s165] sm:$0x3]
      %v174 = vld [vmem:[%s1] sm:$0xf]
      %v175 = vld [vmem:[%s1 + $0x4] sm:$0xf]
      %v176 = vld [vmem:[%s1 + $0x8] sm:$0xf]
      %v177 = vld [vmem:[%s1 + $0xc] sm:$0xf]
      %s178 = scalar_lea.vmem %s165, 20
      %v179 = vld [vmem:[%s178] sm:$0x3]
      %s180 = scalar_lea.vmem %s1, 16
      %v181 = vld [vmem:[%s180] sm:$0xf]
      %v182 = vld [vmem:[%s180 + $0x4] sm:$0xf]
      %v183 = vld [vmem:[%s180 + $0x8] sm:$0xf]
      %v184 = vld [vmem:[%s180 + $0xc] sm:$0xf]
      %v189 = vunpack.c.l.b16 %v181
      %v190 = vunpack.c.l.b16 %v182
      %v191 = vunpack.c.l.b16 %v183
      %v192 = vunpack.c.l.b16 %v184
      %v193 = vpack.c.b16 %v190, %v189
      %v194 = vpack.c.b16 %v192, %v191
      %vm197 = vcmask 261120
      %v199 = vsel %vm197, %v179, 0
      %201 = vmatprep.subr.bf16.mxu0 0
      %202 = vmatpush1.bf16.msra.mxu0 %v193
      %203 = vmatprep.subr.bf16.mxu0 0
      %204 = vmatpush1.bf16.msra.mxu0 %v194
      %205 = vmatprep.subr.bf16.mxu0 0
      %206 = vmatpush1.bf16.msra.mxu0 0
      %207 = vmatprep.subr.bf16.mxu0 0
      %208 = vmatpush1.bf16.msra.mxu0 0
      %209 = vmatprep.subr.bf16.mxu0 0
      %210 = vmatpush1.bf16.msra.mxu0 0
      %211 = vmatprep.subr.bf16.mxu0 0
      %212 = vmatpush1.bf16.msra.mxu0 0
      %213 = vmatprep.subr.bf16.mxu0 0
      %214 = vmatpush1.bf16.msra.mxu0 0
      %215 = vmatprep.subr.bf16.mxu0 0
      %216 = vmatpush1.bf16.msra.mxu0 0
      %217 = vmatprep.subr.bf16.mxu0 0
      %218 = vmatpush1.bf16.msra.mxu0 0
      %219 = vmatprep.subr.bf16.mxu0 0
      %220 = vmatpush1.bf16.msra.mxu0 0
      %221 = vmatprep.subr.bf16.mxu0 0
      %222 = vmatpush1.bf16.msra.mxu0 0
      %223 = vmatprep.subr.bf16.mxu0 0
      %224 = vmatpush1.bf16.msra.mxu0 0
      %225 = vmatprep.subr.bf16.mxu0 0
      %226 = vmatpush1.bf16.msra.mxu0 0
      %227 = vmatprep.subr.bf16.mxu0 0
      %228 = vmatpush1.bf16.msra.mxu0 0
      %229 = vmatprep.subr.bf16.mxu0 0
      %230 = vmatpush1.bf16.msra.mxu0 0
      %231 = vmatprep.subr.bf16.mxu0 0
      %232 = vmatpush1.bf16.msra.mxu0 0
      %233 = vmatprep.mubr.bf16.mxu0 0
      %234 = vmatmul.mubr.bf16.gmra.mrb[0].mxu0 %v199
      %v235 = vpop.f32.mrb[0].mxu0
      %v236 = vadd.f32 0.0, %v235
      %v237 = vpop.f32.mrb[0].mxu0
      %v238 = vpop.f32.mrb[0].mxu0
      %v239 = vpop.f32.mrb[0].mxu0
      %240 = vdwg.mxu0
      %v245 = vunpack.c.l.b16 %v174
      %v246 = vunpack.c.l.b16 %v175
      %v247 = vunpack.c.l.b16 %v176
      %v248 = vunpack.c.l.b16 %v177
      %v249 = vpack.c.b16 %v246, %v245
      %v250 = vpack.c.b16 %v248, %v247
      %v254 = vsel %vm197, %v173, 0
      %256 = vmatprep.subr.bf16.mxu0 0
      %257 = vmatpush1.bf16.msra.mxu0 %v249
      %258 = vmatprep.subr.bf16.mxu0 0
      %259 = vmatpush1.bf16.msra.mxu0 %v250
      %260 = vmatprep.subr.bf16.mxu0 0
      %261 = vmatpush1.bf16.msra.mxu0 0
      %262 = vmatprep.subr.bf16.mxu0 0
      %263 = vmatpush1.bf16.msra.mxu0 0
      %264 = vmatprep.subr.bf16.mxu0 0
      %265 = vmatpush1.bf16.msra.mxu0 0
      %266 = vmatprep.subr.bf16.mxu0 0
      %267 = vmatpush1.bf16.msra.mxu0 0
      %268 = vmatprep.subr.bf16.mxu0 0
      %269 = vmatpush1.bf16.msra.mxu0 0
      %270 = vmatprep.subr.bf16.mxu0 0
      %271 = vmatpush1.bf16.msra.mxu0 0
      %272 = vmatprep.subr.bf16.mxu0 0
      %273 = vmatpush1.bf16.msra.mxu0 0
      %274 = vmatprep.subr.bf16.mxu0 0
      %275 = vmatpush1.bf16.msra.mxu0 0
      %276 = vmatprep.subr.bf16.mxu0 0
      %277 = vmatpush1.bf16.msra.mxu0 0
      %278 = vmatprep.subr.bf16.mxu0 0
      %279 = vmatpush1.bf16.msra.mxu0 0
      %280 = vmatprep.subr.bf16.mxu0 0
      %281 = vmatpush1.bf16.msra.mxu0 0
      %282 = vmatprep.subr.bf16.mxu0 0
      %283 = vmatpush1.bf16.msra.mxu0 0
      %284 = vmatprep.subr.bf16.mxu0 0
      %285 = vmatpush1.bf16.msra.mxu0 0
      %286 = vmatprep.subr.bf16.mxu0 0
      %287 = vmatpush1.bf16.msra.mxu0 0
      %288 = vmatprep.mubr.bf16.mxu0 0
      %289 = vmatmul.mubr.bf16.gmra.mrb[0].mxu0 %v254
      %v290 = vpop.f32.mrb[0].mxu0
      %v291 = vadd.f32 %v236, %v290
      %v292 = vpop.f32.mrb[0].mxu0
      %v293 = vpop.f32.mrb[0].mxu0
      %v294 = vpop.f32.mrb[0].mxu0
      %295 = vdwg.mxu0
      %v296 = vld [vmem:[%s165] sm:$0x7]
      %s297 = scalar_lea.vmem %s1, 32
      %v298 = vld [vmem:[%s297] sm:$0xf]
      %v299 = vld [vmem:[%s297 + $0x4] sm:$0xf]
      %v300 = vld [vmem:[%s297 + $0x8] sm:$0xf]
      %v301 = vld [vmem:[%s297 + $0xc] sm:$0xf]
      %v303 = vunpack.c.l.b16 %v296
      %v304 = vpack.c.b16 %v303, %v303
      %v306 = vshrl.u32 %v304, 16
      %v308 = vshll.u32 %v304, 16
      %v310 = vrot.slane %v308, 1
      %v311 = vor.u32 %v306, %v310
      %v316 = vunpack.c.l.b16 %v298
      %v317 = vunpack.c.l.b16 %v299
      %v318 = vunpack.c.l.b16 %v300
      %v319 = vunpack.c.l.b16 %v301
      %v320 = vpack.c.b16 %v317, %v316
      %v321 = vpack.c.b16 %v319, %v318
      %v325 = vsel %vm197, %v311, 0
      %327 = vmatprep.subr.bf16.mxu0 0
      %328 = vmatpush1.bf16.msra.mxu0 %v320
      %329 = vmatprep.subr.bf16.mxu0 0
      %330 = vmatpush1.bf16.msra.mxu0 %v321
      %331 = vmatprep.subr.bf16.mxu0 0
      %332 = vmatpush1.bf16.msra.mxu0 0
      %333 = vmatprep.subr.bf16.mxu0 0
      %334 = vmatpush1.bf16.msra.mxu0 0
      %335 = vmatprep.subr.bf16.mxu0 0
      %336 = vmatpush1.bf16.msra.mxu0 0
      %337 = vmatprep.subr.bf16.mxu0 0
      %338 = vmatpush1.bf16.msra.mxu0 0
      %339 = vmatprep.subr.bf16.mxu0 0
      %340 = vmatpush1.bf16.msra.mxu0 0
      %341 = vmatprep.subr.bf16.mxu0 0
      %342 = vmatpush1.bf16.msra.mxu0 0
      %343 = vmatprep.subr.bf16.mxu0 0
      %344 = vmatpush1.bf16.msra.mxu0 0
      %345 = vmatprep.subr.bf16.mxu0 0
      %346 = vmatpush1.bf16.msra.mxu0 0
      %347 = vmatprep.subr.bf16.mxu0 0
      %348 = vmatpush1.bf16.msra.mxu0 0
      %349 = vmatprep.subr.bf16.mxu0 0
      %350 = vmatpush1.bf16.msra.mxu0 0
      %351 = vmatprep.subr.bf16.mxu0 0
      %352 = vmatpush1.bf16.msra.mxu0 0
      %353 = vmatprep.subr.bf16.mxu0 0
      %354 = vmatpush1.bf16.msra.mxu0 0
      %355 = vmatprep.subr.bf16.mxu0 0
      %356 = vmatpush1.bf16.msra.mxu0 0
      %357 = vmatprep.subr.bf16.mxu0 0
      %358 = vmatpush1.bf16.msra.mxu0 0
      %359 = vmatprep.mubr.bf16.mxu0 0
      %360 = vmatmul.mubr.bf16.gmra.mrb[0].mxu0 %v325
      %v361 = vpop.f32.mrb[0].mxu0
      %v362 = vadd.f32 0.0, %v361
      %v363 = vpop.f32.mrb[0].mxu0
      %v364 = vpop.f32.mrb[0].mxu0
      %v365 = vpop.f32.mrb[0].mxu0
      %366 = vdwg.mxu0
      %v367 = vadd.f32 %v291, %v362
      %s368 = scalar_lea.vmem %s165, 40
      %v369 = vld [vmem:[%s368] sm:$0x3]
      %s370 = scalar_lea.vmem %s1, 48
      %v371 = vld [vmem:[%s370] sm:$0xf]
      %v372 = vld [vmem:[%s370 + $0x4] sm:$0xf]
      %v373 = vld [vmem:[%s370 + $0x8] sm:$0xf]
      %v374 = vld [vmem:[%s370 + $0xc] sm:$0xf]
      %v379 = vunpack.c.l.b16 %v371
      %v380 = vunpack.c.l.b16 %v372
      %v381 = vunpack.c.l.b16 %v373
      %v382 = vunpack.c.l.b16 %v374
      %v383 = vpack.c.b16 %v380, %v379
      %v384 = vpack.c.b16 %v382, %v381
      %v388 = vsel %vm197, %v369, 0
      %390 = vmatprep.subr.bf16.mxu0 0
      %391 = vmatpush1.bf16.msra.mxu0 %v383
      %392 = vmatprep.subr.bf16.mxu0 0
      %393 = vmatpush1.bf16.msra.mxu0 %v384
      %394 = vmatprep.subr.bf16.mxu0 0
      %395 = vmatpush1.bf16.msra.mxu0 0
      %396 = vmatprep.subr.bf16.mxu0 0
      %397 = vmatpush1.bf16.msra.mxu0 0
      %398 = vmatprep.subr.bf16.mxu0 0
      %399 = vmatpush1.bf16.msra.mxu0 0
      %400 = vmatprep.subr.bf16.mxu0 0
      %401 = vmatpush1.bf16.msra.mxu0 0
      %402 = vmatprep.subr.bf16.mxu0 0
      %403 = vmatpush1.bf16.msra.mxu0 0
      %404 = vmatprep.subr.bf16.mxu0 0
      %405 = vmatpush1.bf16.msra.mxu0 0
      %406 = vmatprep.subr.bf16.mxu0 0
      %407 = vmatpush1.bf16.msra.mxu0 0
      %408 = vmatprep.subr.bf16.mxu0 0
      %409 = vmatpush1.bf16.msra.mxu0 0
      %410 = vmatprep.subr.bf16.mxu0 0
      %411 = vmatpush1.bf16.msra.mxu0 0
      %412 = vmatprep.subr.bf16.mxu0 0
      %413 = vmatpush1.bf16.msra.mxu0 0
      %414 = vmatprep.subr.bf16.mxu0 0
      %415 = vmatpush1.bf16.msra.mxu0 0
      %416 = vmatprep.subr.bf16.mxu0 0
      %417 = vmatpush1.bf16.msra.mxu0 0
      %418 = vmatprep.subr.bf16.mxu0 0
      %419 = vmatpush1.bf16.msra.mxu0 0
      %420 = vmatprep.subr.bf16.mxu0 0
      %421 = vmatpush1.bf16.msra.mxu0 0
      %422 = vmatprep.mubr.bf16.mxu0 0
      %423 = vmatmul.mubr.bf16.gmra.mrb[0].mxu0 %v388
      %v424 = vpop.f32.mrb[0].mxu0
      %v425 = vadd.f32 0.0, %v424
      %v426 = vpop.f32.mrb[0].mxu0
      %v427 = vpop.f32.mrb[0].mxu0
      %v428 = vpop.f32.mrb[0].mxu0
      %429 = vdwg.mxu0
      %v430 = vadd.f32 %v367, %v425
      %s431 = scalar_lea.vmem %s165, 60
      %v432 = vld [vmem:[%s431] sm:$0x3]
      %s433 = scalar_lea.vmem %s1, 64
      %v434 = vld [vmem:[%s433] sm:$0xf]
      %v435 = vld [vmem:[%s433 + $0x4] sm:$0xf]
      %v436 = vld [vmem:[%s433 + $0x8] sm:$0xf]
      %v437 = vld [vmem:[%s433 + $0xc] sm:$0xf]
      %v442 = vunpack.c.l.b16 %v434
      %v443 = vunpack.c.l.b16 %v435
      %v444 = vunpack.c.l.b16 %v436
      %v445 = vunpack.c.l.b16 %v437
      %v446 = vpack.c.b16 %v443, %v442
      %v447 = vpack.c.b16 %v445, %v444
      %v451 = vsel %vm197, %v432, 0
      %453 = vmatprep.subr.bf16.mxu0 0
      %454 = vmatpush1.bf16.msra.mxu0 %v446
      %455 = vmatprep.subr.bf16.mxu0 0
      %456 = vmatpush1.bf16.msra.mxu0 %v447
      %457 = vmatprep.subr.bf16.mxu0 0
      %458 = vmatpush1.bf16.msra.mxu0 0
      %459 = vmatprep.subr.bf16.mxu0 0
      %460 = vmatpush1.bf16.msra.mxu0 0
      %461 = vmatprep.subr.bf16.mxu0 0
      %462 = vmatpush1.bf16.msra.mxu0 0
      %463 = vmatprep.subr.bf16.mxu0 0
      %464 = vmatpush1.bf16.msra.mxu0 0
      %465 = vmatprep.subr.bf16.mxu0 0
      %466 = vmatpush1.bf16.msra.mxu0 0
      %467 = vmatprep.subr.bf16.mxu0 0
      %468 = vmatpush1.bf16.msra.mxu0 0
      %469 = vmatprep.subr.bf16.mxu0 0
      %470 = vmatpush1.bf16.msra.mxu0 0
      %471 = vmatprep.subr.bf16.mxu0 0
      %472 = vmatpush1.bf16.msra.mxu0 0
      %473 = vmatprep.subr.bf16.mxu0 0
      %474 = vmatpush1.bf16.msra.mxu0 0
      %475 = vmatprep.subr.bf16.mxu0 0
      %476 = vmatpush1.bf16.msra.mxu0 0
      %477 = vmatprep.subr.bf16.mxu0 0
      %478 = vmatpush1.bf16.msra.mxu0 0
      %479 = vmatprep.subr.bf16.mxu0 0
      %480 = vmatpush1.bf16.msra.mxu0 0
      %481 = vmatprep.subr.bf16.mxu0 0
      %482 = vmatpush1.bf16.msra.mxu0 0
      %483 = vmatprep.subr.bf16.mxu0 0
      %484 = vmatpush1.bf16.msra.mxu0 0
      %485 = vmatprep.mubr.bf16.mxu0 0
      %486 = vmatmul.mubr.bf16.gmra.mrb[0].mxu0 %v451
      %v487 = vpop.f32.mrb[0].mxu0
      %v488 = vadd.f32 0.0, %v487
      %v489 = vpop.f32.mrb[0].mxu0
      %v490 = vpop.f32.mrb[0].mxu0
      %v491 = vpop.f32.mrb[0].mxu0
      %492 = vdwg.mxu0
      %v493 = vadd.f32 %v430, %v488
      %v494 = vld [vmem:[%s368] sm:$0x7]
      %s495 = scalar_lea.vmem %s1, 80
      %v496 = vld [vmem:[%s495] sm:$0xf]
      %v497 = vld [vmem:[%s495 + $0x4] sm:$0xf]
      %v498 = vld [vmem:[%s495 + $0x8] sm:$0xf]
      %v499 = vld [vmem:[%s495 + $0xc] sm:$0xf]
      %v501 = vunpack.c.l.b16 %v494
      %v502 = vpack.c.b16 %v501, %v501
      %v504 = vshrl.u32 %v502, 16
      %v506 = vshll.u32 %v502, 16
      %v508 = vrot.slane %v506, 1
      %v509 = vor.u32 %v504, %v508
      %v514 = vunpack.c.l.b16 %v496
      %v515 = vunpack.c.l.b16 %v497
      %v516 = vunpack.c.l.b16 %v498
      %v517 = vunpack.c.l.b16 %v499
      %v518 = vpack.c.b16 %v515, %v514
      %v519 = vpack.c.b16 %v517, %v516
      %v523 = vsel %vm197, %v509, 0
      %525 = vmatprep.subr.bf16.mxu0 0
      %526 = vmatpush1.bf16.msra.mxu0 %v518
      %527 = vmatprep.subr.bf16.mxu0 0
      %528 = vmatpush1.bf16.msra.mxu0 %v519
      %529 = vmatprep.subr.bf16.mxu0 0
      %530 = vmatpush1.bf16.msra.mxu0 0
      %531 = vmatprep.subr.bf16.mxu0 0
      %532 = vmatpush1.bf16.msra.mxu0 0
      %533 = vmatprep.subr.bf16.mxu0 0
      %534 = vmatpush1.bf16.msra.mxu0 0
      %535 = vmatprep.subr.bf16.mxu0 0
      %536 = vmatpush1.bf16.msra.mxu0 0
      %537 = vmatprep.subr.bf16.mxu0 0
      %538 = vmatpush1.bf16.msra.mxu0 0
      %539 = vmatprep.subr.bf16.mxu0 0
      %540 = vmatpush1.bf16.msra.mxu0 0
      %541 = vmatprep.subr.bf16.mxu0 0
      %542 = vmatpush1.bf16.msra.mxu0 0
      %543 = vmatprep.subr.bf16.mxu0 0
      %544 = vmatpush1.bf16.msra.mxu0 0
      %545 = vmatprep.subr.bf16.mxu0 0
      %546 = vmatpush1.bf16.msra.mxu0 0
      %547 = vmatprep.subr.bf16.mxu0 0
      %548 = vmatpush1.bf16.msra.mxu0 0
      %549 = vmatprep.subr.bf16.mxu0 0
      %550 = vmatpush1.bf16.msra.mxu0 0
      %551 = vmatprep.subr.bf16.mxu0 0
      %552 = vmatpush1.bf16.msra.mxu0 0
      %553 = vmatprep.subr.bf16.mxu0 0
      %554 = vmatpush1.bf16.msra.mxu0 0
      %555 = vmatprep.subr.bf16.mxu0 0
      %556 = vmatpush1.bf16.msra.mxu0 0
      %557 = vmatprep.mubr.bf16.mxu0 0
      %558 = vmatmul.mubr.bf16.gmra.mrb[0].mxu0 %v523
      %v559 = vpop.f32.mrb[0].mxu0
      %v560 = vadd.f32 0.0, %v559
      %v561 = vpop.f32.mrb[0].mxu0
      %v562 = vpop.f32.mrb[0].mxu0
      %v563 = vpop.f32.mrb[0].mxu0
      %564 = vdwg.mxu0
      %v565 = vadd.f32 %v493, %v560
      %s566 = scalar_lea.vmem %s165, 4
      %v567 = vld [vmem:[%s566] sm:$0x3]
      %s568 = scalar_lea.vmem %s1, 96
      %v569 = vld [vmem:[%s568] sm:$0xf]
      %v570 = vld [vmem:[%s568 + $0x4] sm:$0xf]
      %v571 = vld [vmem:[%s568 + $0x8] sm:$0xf]
      %v572 = vld [vmem:[%s568 + $0xc] sm:$0xf]
      %v577 = vunpack.c.l.b16 %v569
      %v578 = vunpack.c.l.b16 %v570
      %v579 = vunpack.c.l.b16 %v571
      %v580 = vunpack.c.l.b16 %v572
      %v581 = vpack.c.b16 %v578, %v577
      %v582 = vpack.c.b16 %v580, %v579
      %v586 = vsel %vm197, %v567, 0
      %588 = vmatprep.subr.bf16.mxu0 0
      %589 = vmatpush1.bf16.msra.mxu0 %v581
      %590 = vmatprep.subr.bf16.mxu0 0
      %591 = vmatpush1.bf16.msra.mxu0 %v582
      %592 = vmatprep.subr.bf16.mxu0 0
      %593 = vmatpush1.bf16.msra.mxu0 0
      %594 = vmatprep.subr.bf16.mxu0 0
      %595 = vmatpush1.bf16.msra.mxu0 0
      %596 = vmatprep.subr.bf16.mxu0 0
      %597 = vmatpush1.bf16.msra.mxu0 0
      %598 = vmatprep.subr.bf16.mxu0 0
      %599 = vmatpush1.bf16.msra.mxu0 0
      %600 = vmatprep.subr.bf16.mxu0 0
      %601 = vmatpush1.bf16.msra.mxu0 0
      %602 = vmatprep.subr.bf16.mxu0 0
      %603 = vmatpush1.bf16.msra.mxu0 0
      %604 = vmatprep.subr.bf16.mxu0 0
      %605 = vmatpush1.bf16.msra.mxu0 0
      %606 = vmatprep.subr.bf16.mxu0 0
      %607 = vmatpush1.bf16.msra.mxu0 0
      %608 = vmatprep.subr.bf16.mxu0 0
      %609 = vmatpush1.bf16.msra.mxu0 0
      %610 = vmatprep.subr.bf16.mxu0 0
      %611 = vmatpush1.bf16.msra.mxu0 0
      %612 = vmatprep.subr.bf16.mxu0 0
      %613 = vmatpush1.bf16.msra.mxu0 0
      %614 = vmatprep.subr.bf16.mxu0 0
      %615 = vmatpush1.bf16.msra.mxu0 0
      %616 = vmatprep.subr.bf16.mxu0 0
      %617 = vmatpush1.bf16.msra.mxu0 0
      %618 = vmatprep.subr.bf16.mxu0 0
      %619 = vmatpush1.bf16.msra.mxu0 0
      %620 = vmatprep.mubr.bf16.mxu0 0
      %621 = vmatmul.mubr.bf16.gmra.mrb[0].mxu0 %v586
      %v622 = vpop.f32.mrb[0].mxu0
      %v623 = vadd.f32 0.0, %v622
      %v624 = vpop.f32.mrb[0].mxu0
      %v625 = vpop.f32.mrb[0].mxu0
      %v626 = vpop.f32.mrb[0].mxu0
      %627 = vdwg.mxu0
      %v628 = vadd.f32 %v565, %v623
      %s629 = scalar_lea.vmem %s165, 24
      %v630 = vld [vmem:[%s629] sm:$0x3]
      %s631 = scalar_lea.vmem %s1, 112
      %v632 = vld [vmem:[%s631] sm:$0xf]
      %v633 = vld [vmem:[%s631 + $0x4] sm:$0xf]
      %v634 = vld [vmem:[%s631 + $0x8] sm:$0xf]
      %v635 = vld [vmem:[%s631 + $0xc] sm:$0xf]
      %v640 = vunpack.c.l.b16 %v632
      %v641 = vunpack.c.l.b16 %v633
      %v642 = vunpack.c.l.b16 %v634
      %v643 = vunpack.c.l.b16 %v635
      %v644 = vpack.c.b16 %v641, %v640
      %v645 = vpack.c.b16 %v643, %v642
      %v649 = vsel %vm197, %v630, 0
      %651 = vmatprep.subr.bf16.mxu0 0
      %652 = vmatpush1.bf16.msra.mxu0 %v644
      %653 = vmatprep.subr.bf16.mxu0 0
      %654 = vmatpush1.bf16.msra.mxu0 %v645
      %655 = vmatprep.subr.bf16.mxu0 0
      %656 = vmatpush1.bf16.msra.mxu0 0
      %657 = vmatprep.subr.bf16.mxu0 0
      %658 = vmatpush1.bf16.msra.mxu0 0
      %659 = vmatprep.subr.bf16.mxu0 0
      %660 = vmatpush1.bf16.msra.mxu0 0
      %661 = vmatprep.subr.bf16.mxu0 0
      %662 = vmatpush1.bf16.msra.mxu0 0
      %663 = vmatprep.subr.bf16.mxu0 0
      %664 = vmatpush1.bf16.msra.mxu0 0
      %665 = vmatprep.subr.bf16.mxu0 0
      %666 = vmatpush1.bf16.msra.mxu0 0
      %667 = vmatprep.subr.bf16.mxu0 0
      %668 = vmatpush1.bf16.msra.mxu0 0
      %669 = vmatprep.subr.bf16.mxu0 0
      %670 = vmatpush1.bf16.msra.mxu0 0
      %671 = vmatprep.subr.bf16.mxu0 0
      %672 = vmatpush1.bf16.msra.mxu0 0
      %673 = vmatprep.subr.bf16.mxu0 0
      %674 = vmatpush1.bf16.msra.mxu0 0
      %675 = vmatprep.subr.bf16.mxu0 0
      %676 = vmatpush1.bf16.msra.mxu0 0
      %677 = vmatprep.subr.bf16.mxu0 0
      %678 = vmatpush1.bf16.msra.mxu0 0
      %679 = vmatprep.subr.bf16.mxu0 0
      %680 = vmatpush1.bf16.msra.mxu0 0
      %681 = vmatprep.subr.bf16.mxu0 0
      %682 = vmatpush1.bf16.msra.mxu0 0
      %683 = vmatprep.mubr.bf16.mxu0 0
      %684 = vmatmul.mubr.bf16.gmra.mrb[0].mxu0 %v649
      %v685 = vpop.f32.mrb[0].mxu0
      %v686 = vadd.f32 0.0, %v685
      %v687 = vpop.f32.mrb[0].mxu0
      %v688 = vpop.f32.mrb[0].mxu0
      %v689 = vpop.f32.mrb[0].mxu0
      %690 = vdwg.mxu0
      %v691 = vadd.f32 %v628, %v686
      %v692 = vld [vmem:[%s566] sm:$0x7]
      %s693 = scalar_lea.vmem %s1, 128
      %v694 = vld [vmem:[%s693] sm:$0xf]
      %v695 = vld [vmem:[%s693 + $0x4] sm:$0xf]
      %v696 = vld [vmem:[%s693 + $0x8] sm:$0xf]
      %v697 = vld [vmem:[%s693 + $0xc] sm:$0xf]
      %v699 = vunpack.c.l.b16 %v692
      %v700 = vpack.c.b16 %v699, %v699
      %v702 = vshrl.u32 %v700, 16
      %v704 = vshll.u32 %v700, 16
      %v706 = vrot.slane %v704, 1
      %v707 = vor.u32 %v702, %v706
      %v712 = vunpack.c.l.b16 %v694
      %v713 = vunpack.c.l.b16 %v695
      %v714 = vunpack.c.l.b16 %v696
      %v715 = vunpack.c.l.b16 %v697
      %v716 = vpack.c.b16 %v713, %v712
      %v717 = vpack.c.b16 %v715, %v714
      %v721 = vsel %vm197, %v707, 0
      %723 = vmatprep.subr.bf16.mxu0 0
      %724 = vmatpush1.bf16.msra.mxu0 %v716
      %725 = vmatprep.subr.bf16.mxu0 0
      %726 = vmatpush1.bf16.msra.mxu0 %v717
      %727 = vmatprep.subr.bf16.mxu0 0
      %728 = vmatpush1.bf16.msra.mxu0 0
      %729 = vmatprep.subr.bf16.mxu0 0
      %730 = vmatpush1.bf16.msra.mxu0 0
      %731 = vmatprep.subr.bf16.mxu0 0
      %732 = vmatpush1.bf16.msra.mxu0 0
      %733 = vmatprep.subr.bf16.mxu0 0
      %734 = vmatpush1.bf16.msra.mxu0 0
      %735 = vmatprep.subr.bf16.mxu0 0
      %736 = vmatpush1.bf16.msra.mxu0 0
      %737 = vmatprep.subr.bf16.mxu0 0
      %738 = vmatpush1.bf16.msra.mxu0 0
      %739 = vmatprep.subr.bf16.mxu0 0
      %740 = vmatpush1.bf16.msra.mxu0 0
      %741 = vmatprep.subr.bf16.mxu0 0
      %742 = vmatpush1.bf16.msra.mxu0 0
      %743 = vmatprep.subr.bf16.mxu0 0
      %744 = vmatpush1.bf16.msra.mxu0 0
      %745 = vmatprep.subr.bf16.mxu0 0
      %746 = vmatpush1.bf16.msra.mxu0 0
      %747 = vmatprep.subr.bf16.mxu0 0
      %748 = vmatpush1.bf16.msra.mxu0 0
      %749 = vmatprep.subr.bf16.mxu0 0
      %750 = vmatpush1.bf16.msra.mxu0 0
      %751 = vmatprep.subr.bf16.mxu0 0
      %752 = vmatpush1.bf16.msra.mxu0 0
      %753 = vmatprep.subr.bf16.mxu0 0
      %754 = vmatpush1.bf16.msra.mxu0 0
      %755 = vmatprep.mubr.bf16.mxu0 0
      %756 = vmatmul.mubr.bf16.gmra.mrb[0].mxu0 %v721
      %v757 = vpop.f32.mrb[0].mxu0
      %v758 = vadd.f32 0.0, %v757
      %v759 = vpop.f32.mrb[0].mxu0
      %v760 = vpop.f32.mrb[0].mxu0
      %v761 = vpop.f32.mrb[0].mxu0
      %762 = vdwg.mxu0
      %v763 = vadd.f32 %v691, %v758
      %v765 = vlaneseq
      %v766 = vshrl.u32 %v765, 7
      %v767 = vsub.s32 0, %v766
      %v768 = vrot.slane %v172, %v767
      %v770 = vadd.f32 %v763, %v768
      %v771 = vmax.f32 %v770, 0.0
      %v772 = vpack.c.bf16 %v771, %v771
      %vm773 = vcmask 254976
      %774 = vst.msk [vmem:[%s170] sm:$0x3] %vm773, %v772
      %v775 = vld [vmem:[%s566] sm:$0x3]
      %v776 = vld [vmem:[%s1] sm:$0xf]
      %v777 = vld [vmem:[%s1 + $0x4] sm:$0xf]
      %v778 = vld [vmem:[%s1 + $0x8] sm:$0xf]
      %v779 = vld [vmem:[%s1 + $0xc] sm:$0xf]
      %v780 = vld [vmem:[%s629] sm:$0x3]
      %v781 = vld [vmem:[%s180] sm:$0xf]
      %v782 = vld [vmem:[%s180 + $0x4] sm:$0xf]
      %v783 = vld [vmem:[%s180 + $0x8] sm:$0xf]
      %v784 = vld [vmem:[%s180 + $0xc] sm:$0xf]
      %v789 = vunpack.c.l.b16 %v781
      %v790 = vunpack.c.l.b16 %v782
      %v791 = vunpack.c.l.b16 %v783
      %v792 = vunpack.c.l.b16 %v784
      %v793 = vpack.c.b16 %v790, %v789
      %v794 = vpack.c.b16 %v792, %v791
      %v798 = vsel %vm197, %v780, 0
      %800 = vmatprep.subr.bf16.mxu0 0
      %801 = vmatpush1.bf16.msra.mxu0 %v793
      %802 = vmatprep.subr.bf16.mxu0 0
      %803 = vmatpush1.bf16.msra.mxu0 %v794
      %804 = vmatprep.subr.bf16.mxu0 0
      %805 = vmatpush1.bf16.msra.mxu0 0
      %806 = vmatprep.subr.bf16.mxu0 0
      %807 = vmatpush1.bf16.msra.mxu0 0
      %808 = vmatprep.subr.bf16.mxu0 0
      %809 = vmatpush1.bf16.msra.mxu0 0
      %810 = vmatprep.subr.bf16.mxu0 0
      %811 = vmatpush1.bf16.msra.mxu0 0
      %812 = vmatprep.subr.bf16.mxu0 0
      %813 = vmatpush1.bf16.msra.mxu0 0
      %814 = vmatprep.subr.bf16.mxu0 0
      %815 = vmatpush1.bf16.msra.mxu0 0
      %816 = vmatprep.subr.bf16.mxu0 0
      %817 = vmatpush1.bf16.msra.mxu0 0
      %818 = vmatprep.subr.bf16.mxu0 0
      %819 = vmatpush1.bf16.msra.mxu0 0
      %820 = vmatprep.subr.bf16.mxu0 0
      %821 = vmatpush1.bf16.msra.mxu0 0
      %822 = vmatprep.subr.bf16.mxu0 0
      %823 = vmatpush1.bf16.msra.mxu0 0
      %824 = vmatprep.subr.bf16.mxu0 0
      %825 = vmatpush1.bf16.msra.mxu0 0
      %826 = vmatprep.subr.bf16.mxu0 0
      %827 = vmatpush1.bf16.msra.mxu0 0
      %828 = vmatprep.subr.bf16.mxu0 0
      %829 = vmatpush1.bf16.msra.mxu0 0
      %830 = vmatprep.subr.bf16.mxu0 0
      %831 = vmatpush1.bf16.msra.mxu0 0
      %832 = vmatprep.mubr.bf16.mxu0 0
      %833 = vmatmul.mubr.bf16.gmra.mrb[0].mxu0 %v798
      %v834 = vpop.f32.mrb[0].mxu0
      %v835 = vadd.f32 0.0, %v834
      %v836 = vpop.f32.mrb[0].mxu0
      %v837 = vpop.f32.mrb[0].mxu0
      %v838 = vpop.f32.mrb[0].mxu0
      %839 = vdwg.mxu0
      %v844 = vunpack.c.l.b16 %v776
      %v845 = vunpack.c.l.b16 %v777
      %v846 = vunpack.c.l.b16 %v778
      %v847 = vunpack.c.l.b16 %v779
      %v848 = vpack.c.b16 %v845, %v844
      %v849 = vpack.c.b16 %v847, %v846
      %v853 = vsel %vm197, %v775, 0
      %855 = vmatprep.subr.bf16.mxu0 0
      %856 = vmatpush1.bf16.msra.mxu0 %v848
      %857 = vmatprep.subr.bf16.mxu0 0
      %858 = vmatpush1.bf16.msra.mxu0 %v849
      %859 = vmatprep.subr.bf16.mxu0 0
      %860 = vmatpush1.bf16.msra.mxu0 0
      %861 = vmatprep.subr.bf16.mxu0 0
      %862 = vmatpush1.bf16.msra.mxu0 0
      %863 = vmatprep.subr.bf16.mxu0 0
      %864 = vmatpush1.bf16.msra.mxu0 0
      %865 = vmatprep.subr.bf16.mxu0 0
      %866 = vmatpush1.bf16.msra.mxu0 0
      %867 = vmatprep.subr.bf16.mxu0 0
      %868 = vmatpush1.bf16.msra.mxu0 0
      %869 = vmatprep.subr.bf16.mxu0 0
      %870 = vmatpush1.bf16.msra.mxu0 0
      %871 = vmatprep.subr.bf16.mxu0 0
      %872 = vmatpush1.bf16.msra.mxu0 0
      %873 = vmatprep.subr.bf16.mxu0 0
      %874 = vmatpush1.bf16.msra.mxu0 0
      %875 = vmatprep.subr.bf16.mxu0 0
      %876 = vmatpush1.bf16.msra.mxu0 0
      %877 = vmatprep.subr.bf16.mxu0 0
      %878 = vmatpush1.bf16.msra.mxu0 0
      %879 = vmatprep.subr.bf16.mxu0 0
      %880 = vmatpush1.bf16.msra.mxu0 0
      %881 = vmatprep.subr.bf16.mxu0 0
      %882 = vmatpush1.bf16.msra.mxu0 0
      %883 = vmatprep.subr.bf16.mxu0 0
      %884 = vmatpush1.bf16.msra.mxu0 0
      %885 = vmatprep.subr.bf16.mxu0 0
      %886 = vmatpush1.bf16.msra.mxu0 0
      %887 = vmatprep.mubr.bf16.mxu0 0
      %888 = vmatmul.mubr.bf16.gmra.mrb[0].mxu0 %v853
      %v889 = vpop.f32.mrb[0].mxu0
      %v890 = vadd.f32 %v835, %v889
      %v891 = vpop.f32.mrb[0].mxu0
      %v892 = vpop.f32.mrb[0].mxu0
      %v893 = vpop.f32.mrb[0].mxu0
      %894 = vdwg.mxu0
      %v895 = vld [vmem:[%s566] sm:$0x7]
      %v896 = vld [vmem:[%s297] sm:$0xf]
      %v897 = vld [vmem:[%s297 + $0x4] sm:$0xf]
      %v898 = vld [vmem:[%s297 + $0x8] sm:$0xf]
      %v899 = vld [vmem:[%s297 + $0xc] sm:$0xf]
      %v901 = vunpack.c.l.b16 %v895
      %v902 = vpack.c.b16 %v901, %v901
      %v904 = vshrl.u32 %v902, 16
      %v906 = vshll.u32 %v902, 16
      %v908 = vrot.slane %v906, 1
      %v909 = vor.u32 %v904, %v908
      %v914 = vunpack.c.l.b16 %v896
      %v915 = vunpack.c.l.b16 %v897
      %v916 = vunpack.c.l.b16 %v898
      %v917 = vunpack.c.l.b16 %v899
      %v918 = vpack.c.b16 %v915, %v914
      %v919 = vpack.c.b16 %v917, %v916
      %v923 = vsel %vm197, %v909, 0
      %925 = vmatprep.subr.bf16.mxu0 0
      %926 = vmatpush1.bf16.msra.mxu0 %v918
      %927 = vmatprep.subr.bf16.mxu0 0
      %928 = vmatpush1.bf16.msra.mxu0 %v919
      %929 = vmatprep.subr.bf16.mxu0 0
      %930 = vmatpush1.bf16.msra.mxu0 0
      %931 = vmatprep.subr.bf16.mxu0 0
      %932 = vmatpush1.bf16.msra.mxu0 0
      %933 = vmatprep.subr.bf16.mxu0 0
      %934 = vmatpush1.bf16.msra.mxu0 0
      %935 = vmatprep.subr.bf16.mxu0 0
      %936 = vmatpush1.bf16.msra.mxu0 0
      %937 = vmatprep.subr.bf16.mxu0 0
      %938 = vmatpush1.bf16.msra.mxu0 0
      %939 = vmatprep.subr.bf16.mxu0 0
      %940 = vmatpush1.bf16.msra.mxu0 0
      %941 = vmatprep.subr.bf16.mxu0 0
      %942 = vmatpush1.bf16.msra.mxu0 0
      %943 = vmatprep.subr.bf16.mxu0 0
      %944 = vmatpush1.bf16.msra.mxu0 0
      %945 = vmatprep.subr.bf16.mxu0 0
      %946 = vmatpush1.bf16.msra.mxu0 0
      %947 = vmatprep.subr.bf16.mxu0 0
      %948 = vmatpush1.bf16.msra.mxu0 0
      %949 = vmatprep.subr.bf16.mxu0 0
      %950 = vmatpush1.bf16.msra.mxu0 0
      %951 = vmatprep.subr.bf16.mxu0 0
      %952 = vmatpush1.bf16.msra.mxu0 0
      %953 = vmatprep.subr.bf16.mxu0 0
      %954 = vmatpush1.bf16.msra.mxu0 0
      %955 = vmatprep.subr.bf16.mxu0 0
      %956 = vmatpush1.bf16.msra.mxu0 0
      %957 = vmatprep.mubr.bf16.mxu0 0
      %958 = vmatmul.mubr.bf16.gmra.mrb[0].mxu0 %v923
      %v959 = vpop.f32.mrb[0].mxu0
      %v960 = vadd.f32 0.0, %v959
      %v961 = vpop.f32.mrb[0].mxu0
      %v962 = vpop.f32.mrb[0].mxu0
      %v963 = vpop.f32.mrb[0].mxu0
      %964 = vdwg.mxu0
      %v965 = vadd.f32 %v890, %v960
      %s966 = scalar_lea.vmem %s165, 44
      %v967 = vld [vmem:[%s966] sm:$0x3]
      %v968 = vld [vmem:[%s370] sm:$0xf]
      %v969 = vld [vmem:[%s370 + $0x4] sm:$0xf]
      %v970 = vld [vmem:[%s370 + $0x8] sm:$0xf]
      %v971 = vld [vmem:[%s370 + $0xc] sm:$0xf]
      %v976 = vunpack.c.l.b16 %v968
      %v977 = vunpack.c.l.b16 %v969
      %v978 = vunpack.c.l.b16 %v970
      %v979 = vunpack.c.l.b16 %v971
      %v980 = vpack.c.b16 %v977, %v976
      %v981 = vpack.c.b16 %v979, %v978
      %v985 = vsel %vm197, %v967, 0
      %987 = vmatprep.subr.bf16.mxu0 0
      %988 = vmatpush1.bf16.msra.mxu0 %v980
      %989 = vmatprep.subr.bf16.mxu0 0
      %990 = vmatpush1.bf16.msra.mxu0 %v981
      %991 = vmatprep.subr.bf16.mxu0 0
      %992 = vmatpush1.bf16.msra.mxu0 0
      %993 = vmatprep.subr.bf16.mxu0 0
      %994 = vmatpush1.bf16.msra.mxu0 0
      %995 = vmatprep.subr.bf16.mxu0 0
      %996 = vmatpush1.bf16.msra.mxu0 0
      %997 = vmatprep.subr.bf16.mxu0 0
      %998 = vmatpush1.bf16.msra.mxu0 0
      %999 = vmatprep.subr.bf16.mxu0 0
      %1000 = vmatpush1.bf16.msra.mxu0 0
      %1001 = vmatprep.subr.bf16.mxu0 0
      %1002 = vmatpush1.bf16.msra.mxu0 0
      %1003 = vmatprep.subr.bf16.mxu0 0
      %1004 = vmatpush1.bf16.msra.mxu0 0
      %1005 = vmatprep.subr.bf16.mxu0 0
      %1006 = vmatpush1.bf16.msra.mxu0 0
      %1007 = vmatprep.subr.bf16.mxu0 0
      %1008 = vmatpush1.bf16.msra.mxu0 0
      %1009 = vmatprep.subr.bf16.mxu0 0
      %1010 = vmatpush1.bf16.msra.mxu0 0
      %1011 = vmatprep.subr.bf16.mxu0 0
      %1012 = vmatpush1.bf16.msra.mxu0 0
      %1013 = vmatprep.subr.bf16.mxu0 0
      %1014 = vmatpush1.bf16.msra.mxu0 0
      %1015 = vmatprep.subr.bf16.mxu0 0
      %1016 = vmatpush1.bf16.msra.mxu0 0
      %1017 = vmatprep.subr.bf16.mxu0 0
      %1018 = vmatpush1.bf16.msra.mxu0 0
      %1019 = vmatprep.mubr.bf16.mxu0 0
      %1020 = vmatmul.mubr.bf16.gmra.mrb[0].mxu0 %v985
      %v1021 = vpop.f32.mrb[0].mxu0
      %v1022 = vadd.f32 0.0, %v1021
      %v1023 = vpop.f32.mrb[0].mxu0
      %v1024 = vpop.f32.mrb[0].mxu0
      %v1025 = vpop.f32.mrb[0].mxu0
      %1026 = vdwg.mxu0
      %v1027 = vadd.f32 %v965, %v1022
      %s1028 = scalar_lea.vmem %s165, 64
      %v1029 = vld [vmem:[%s1028] sm:$0x3]
      %v1030 = vld [vmem:[%s433] sm:$0xf]
      %v1031 = vld [vmem:[%s433 + $0x4] sm:$0xf]
      %v1032 = vld [vmem:[%s433 + $0x8] sm:$0xf]
      %v1033 = vld [vmem:[%s433 + $0xc] sm:$0xf]
      %v1038 = vunpack.c.l.b16 %v1030
      %v1039 = vunpack.c.l.b16 %v1031
      %v1040 = vunpack.c.l.b16 %v1032
      %v1041 = vunpack.c.l.b16 %v1033
      %v1042 = vpack.c.b16 %v1039, %v1038
      %v1043 = vpack.c.b16 %v1041, %v1040
      %v1047 = vsel %vm197, %v1029, 0
      %1049 = vmatprep.subr.bf16.mxu0 0
      %1050 = vmatpush1.bf16.msra.mxu0 %v1042
      %1051 = vmatprep.subr.bf16.mxu0 0
      %1052 = vmatpush1.bf16.msra.mxu0 %v1043
      %1053 = vmatprep.subr.bf16.mxu0 0
      %1054 = vmatpush1.bf16.msra.mxu0 0
      %1055 = vmatprep.subr.bf16.mxu0 0
      %1056 = vmatpush1.bf16.msra.mxu0 0
      %1057 = vmatprep.subr.bf16.mxu0 0
      %1058 = vmatpush1.bf16.msra.mxu0 0
      %1059 = vmatprep.subr.bf16.mxu0 0
      %1060 = vmatpush1.bf16.msra.mxu0 0
      %1061 = vmatprep.subr.bf16.mxu0 0
      %1062 = vmatpush1.bf16.msra.mxu0 0
      %1063 = vmatprep.subr.bf16.mxu0 0
      %1064 = vmatpush1.bf16.msra.mxu0 0
      %1065 = vmatprep.subr.bf16.mxu0 0
      %1066 = vmatpush1.bf16.msra.mxu0 0
      %1067 = vmatprep.subr.bf16.mxu0 0
      %1068 = vmatpush1.bf16.msra.mxu0 0
      %1069 = vmatprep.subr.bf16.mxu0 0
      %1070 = vmatpush1.bf16.msra.mxu0 0
      %1071 = vmatprep.subr.bf16.mxu0 0
      %1072 = vmatpush1.bf16.msra.mxu0 0
      %1073 = vmatprep.subr.bf16.mxu0 0
      %1074 = vmatpush1.bf16.msra.mxu0 0
      %1075 = vmatprep.subr.bf16.mxu0 0
      %1076 = vmatpush1.bf16.msra.mxu0 0
      %1077 = vmatprep.subr.bf16.mxu0 0
      %1078 = vmatpush1.bf16.msra.mxu0 0
      %1079 = vmatprep.subr.bf16.mxu0 0
      %1080 = vmatpush1.bf16.msra.mxu0 0
      %1081 = vmatprep.mubr.bf16.mxu0 0
      %1082 = vmatmul.mubr.bf16.gmra.mrb[0].mxu0 %v1047
      %v1083 = vpop.f32.mrb[0].mxu0
      %v1084 = vadd.f32 0.0, %v1083
      %v1085 = vpop.f32.mrb[0].mxu0
      %v1086 = vpop.f32.mrb[0].mxu0
      %v1087 = vpop.f32.mrb[0].mxu0
      %1088 = vdwg.mxu0
      %v1089 = vadd.f32 %v1027, %v1084
      %v1090 = vld [vmem:[%s966] sm:$0x7]
      %v1091 = vld [vmem:[%s495] sm:$0xf]
      %v1092 = vld [vmem:[%s495 + $0x4] sm:$0xf]
      %v1093 = vld [vmem:[%s495 + $0x8] sm:$0xf]
      %v1094 = vld [vmem:[%s495 + $0xc] sm:$0xf]
      %v1096 = vunpack.c.l.b16 %v1090
      %v1097 = vpack.c.b16 %v1096, %v1096
      %v1099 = vshrl.u32 %v1097, 16
      %v1101 = vshll.u32 %v1097, 16
      %v1103 = vrot.slane %v1101, 1
      %v1104 = vor.u32 %v1099, %v1103
      %v1109 = vunpack.c.l.b16 %v1091
      %v1110 = vunpack.c.l.b16 %v1092
      %v1111 = vunpack.c.l.b16 %v1093
      %v1112 = vunpack.c.l.b16 %v1094
      %v1113 = vpack.c.b16 %v1110, %v1109
      %v1114 = vpack.c.b16 %v1112, %v1111
      %v1118 = vsel %vm197, %v1104, 0
      %1120 = vmatprep.subr.bf16.mxu0 0
      %1121 = vmatpush1.bf16.msra.mxu0 %v1113
      %1122 = vmatprep.subr.bf16.mxu0 0
      %1123 = vmatpush1.bf16.msra.mxu0 %v1114
      %1124 = vmatprep.subr.bf16.mxu0 0
      %1125 = vmatpush1.bf16.msra.mxu0 0
      %1126 = vmatprep.subr.bf16.mxu0 0
      %1127 = vmatpush1.bf16.msra.mxu0 0
      %1128 = vmatprep.subr.bf16.mxu0 0
      %1129 = vmatpush1.bf16.msra.mxu0 0
      %1130 = vmatprep.subr.bf16.mxu0 0
      %1131 = vmatpush1.bf16.msra.mxu0 0
      %1132 = vmatprep.subr.bf16.mxu0 0
      %1133 = vmatpush1.bf16.msra.mxu0 0
      %1134 = vmatprep.subr.bf16.mxu0 0
      %1135 = vmatpush1.bf16.msra.mxu0 0
      %1136 = vmatprep.subr.bf16.mxu0 0
      %1137 = vmatpush1.bf16.msra.mxu0 0
      %1138 = vmatprep.subr.bf16.mxu0 0
      %1139 = vmatpush1.bf16.msra.mxu0 0
      %1140 = vmatprep.subr.bf16.mxu0 0
      %1141 = vmatpush1.bf16.msra.mxu0 0
      %1142 = vmatprep.subr.bf16.mxu0 0
      %1143 = vmatpush1.bf16.msra.mxu0 0
      %1144 = vmatprep.subr.bf16.mxu0 0
      %1145 = vmatpush1.bf16.msra.mxu0 0
      %1146 = vmatprep.subr.bf16.mxu0 0
      %1147 = vmatpush1.bf16.msra.mxu0 0
      %1148 = vmatprep.subr.bf16.mxu0 0
      %1149 = vmatpush1.bf16.msra.mxu0 0
      %1150 = vmatprep.subr.bf16.mxu0 0
      %1151 = vmatpush1.bf16.msra.mxu0 0
      %1152 = vmatprep.mubr.bf16.mxu0 0
      %1153 = vmatmul.mubr.bf16.gmra.mrb[0].mxu0 %v1118
      %v1154 = vpop.f32.mrb[0].mxu0
      %v1155 = vadd.f32 0.0, %v1154
      %v1156 = vpop.f32.mrb[0].mxu0
      %v1157 = vpop.f32.mrb[0].mxu0
      %v1158 = vpop.f32.mrb[0].mxu0
      %1159 = vdwg.mxu0
      %v1160 = vadd.f32 %v1089, %v1155
      %s1161 = scalar_lea.vmem %s165, 8
      %v1162 = vld [vmem:[%s1161] sm:$0x3]
      %v1163 = vld [vmem:[%s568] sm:$0xf]
      %v1164 = vld [vmem:[%s568 + $0x4] sm:$0xf]
      %v1165 = vld [vmem:[%s568 + $0x8] sm:$0xf]
      %v1166 = vld [vmem:[%s568 + $0xc] sm:$0xf]
      %v1171 = vunpack.c.l.b16 %v1163
      %v1172 = vunpack.c.l.b16 %v1164
      %v1173 = vunpack.c.l.b16 %v1165
      %v1174 = vunpack.c.l.b16 %v1166
      %v1175 = vpack.c.b16 %v1172, %v1171
      %v1176 = vpack.c.b16 %v1174, %v1173
      %v1180 = vsel %vm197, %v1162, 0
      %1182 = vmatprep.subr.bf16.mxu0 0
      %1183 = vmatpush1.bf16.msra.mxu0 %v1175
      %1184 = vmatprep.subr.bf16.mxu0 0
      %1185 = vmatpush1.bf16.msra.mxu0 %v1176
      %1186 = vmatprep.subr.bf16.mxu0 0
      %1187 = vmatpush1.bf16.msra.mxu0 0
      %1188 = vmatprep.subr.bf16.mxu0 0
      %1189 = vmatpush1.bf16.msra.mxu0 0
      %1190 = vmatprep.subr.bf16.mxu0 0
      %1191 = vmatpush1.bf16.msra.mxu0 0
      %1192 = vmatprep.subr.bf16.mxu0 0
      %1193 = vmatpush1.bf16.msra.mxu0 0
      %1194 = vmatprep.subr.bf16.mxu0 0
      %1195 = vmatpush1.bf16.msra.mxu0 0
      %1196 = vmatprep.subr.bf16.mxu0 0
      %1197 = vmatpush1.bf16.msra.mxu0 0
      %1198 = vmatprep.subr.bf16.mxu0 0
      %1199 = vmatpush1.bf16.msra.mxu0 0
      %1200 = vmatprep.subr.bf16.mxu0 0
      %1201 = vmatpush1.bf16.msra.mxu0 0
      %1202 = vmatprep.subr.bf16.mxu0 0
      %1203 = vmatpush1.bf16.msra.mxu0 0
      %1204 = vmatprep.subr.bf16.mxu0 0
      %1205 = vmatpush1.bf16.msra.mxu0 0
      %1206 = vmatprep.subr.bf16.mxu0 0
      %1207 = vmatpush1.bf16.msra.mxu0 0
      %1208 = vmatprep.subr.bf16.mxu0 0
      %1209 = vmatpush1.bf16.msra.mxu0 0
      %1210 = vmatprep.subr.bf16.mxu0 0
      %1211 = vmatpush1.bf16.msra.mxu0 0
      %1212 = vmatprep.subr.bf16.mxu0 0
      %1213 = vmatpush1.bf16.msra.mxu0 0
      %1214 = vmatprep.mubr.bf16.mxu0 0
      %1215 = vmatmul.mubr.bf16.gmra.mrb[0].mxu0 %v1180
      %v1216 = vpop.f32.mrb[0].mxu0
      %v1217 = vadd.f32 0.0, %v1216
      %v1218 = vpop.f32.mrb[0].mxu0
      %v1219 = vpop.f32.mrb[0].mxu0
      %v1220 = vpop.f32.mrb[0].mxu0
      %1221 = vdwg.mxu0
      %v1222 = vadd.f32 %v1160, %v1217
      %s1223 = scalar_lea.vmem %s165, 28
      %v1224 = vld [vmem:[%s1223] sm:$0x3]
      %v1225 = vld [vmem:[%s631] sm:$0xf]
      %v1226 = vld [vmem:[%s631 + $0x4] sm:$0xf]
      %v1227 = vld [vmem:[%s631 + $0x8] sm:$0xf]
      %v1228 = vld [vmem:[%s631 + $0xc] sm:$0xf]
      %v1233 = vunpack.c.l.b16 %v1225
      %v1234 = vunpack.c.l.b16 %v1226
      %v1235 = vunpack.c.l.b16 %v1227
      %v1236 = vunpack.c.l.b16 %v1228
      %v1237 = vpack.c.b16 %v1234, %v1233
      %v1238 = vpack.c.b16 %v1236, %v1235
      %v1242 = vsel %vm197, %v1224, 0
      %1244 = vmatprep.subr.bf16.mxu0 0
      %1245 = vmatpush1.bf16.msra.mxu0 %v1237
      %1246 = vmatprep.subr.bf16.mxu0 0
      %1247 = vmatpush1.bf16.msra.mxu0 %v1238
      %1248 = vmatprep.subr.bf16.mxu0 0
      %1249 = vmatpush1.bf16.msra.mxu0 0
      %1250 = vmatprep.subr.bf16.mxu0 0
      %1251 = vmatpush1.bf16.msra.mxu0 0
      %1252 = vmatprep.subr.bf16.mxu0 0
      %1253 = vmatpush1.bf16.msra.mxu0 0
      %1254 = vmatprep.subr.bf16.mxu0 0
      %1255 = vmatpush1.bf16.msra.mxu0 0
      %1256 = vmatprep.subr.bf16.mxu0 0
      %1257 = vmatpush1.bf16.msra.mxu0 0
      %1258 = vmatprep.subr.bf16.mxu0 0
      %1259 = vmatpush1.bf16.msra.mxu0 0
      %1260 = vmatprep.subr.bf16.mxu0 0
      %1261 = vmatpush1.bf16.msra.mxu0 0
      %1262 = vmatprep.subr.bf16.mxu0 0
      %1263 = vmatpush1.bf16.msra.mxu0 0
      %1264 = vmatprep.subr.bf16.mxu0 0
      %1265 = vmatpush1.bf16.msra.mxu0 0
      %1266 = vmatprep.subr.bf16.mxu0 0
      %1267 = vmatpush1.bf16.msra.mxu0 0
      %1268 = vmatprep.subr.bf16.mxu0 0
      %1269 = vmatpush1.bf16.msra.mxu0 0
      %1270 = vmatprep.subr.bf16.mxu0 0
      %1271 = vmatpush1.bf16.msra.mxu0 0
      %1272 = vmatprep.subr.bf16.mxu0 0
      %1273 = vmatpush1.bf16.msra.mxu0 0
      %1274 = vmatprep.subr.bf16.mxu0 0
      %1275 = vmatpush1.bf16.msra.mxu0 0
      %1276 = vmatprep.mubr.bf16.mxu0 0
      %1277 = vmatmul.mubr.bf16.gmra.mrb[0].mxu0 %v1242
      %v1278 = vpop.f32.mrb[0].mxu0
      %v1279 = vadd.f32 0.0, %v1278
      %v1280 = vpop.f32.mrb[0].mxu0
      %v1281 = vpop.f32.mrb[0].mxu0
      %v1282 = vpop.f32.mrb[0].mxu0
      %1283 = vdwg.mxu0
      %v1284 = vadd.f32 %v1222, %v1279
      %v1285 = vld [vmem:[%s1161] sm:$0x7]
      %v1286 = vld [vmem:[%s693] sm:$0xf]
      %v1287 = vld [vmem:[%s693 + $0x4] sm:$0xf]
      %v1288 = vld [vmem:[%s693 + $0x8] sm:$0xf]
      %v1289 = vld [vmem:[%s693 + $0xc] sm:$0xf]
      %v1291 = vunpack.c.l.b16 %v1285
      %v1292 = vpack.c.b16 %v1291, %v1291
      %v1294 = vshrl.u32 %v1292, 16
      %v1296 = vshll.u32 %v1292, 16
      %v1298 = vrot.slane %v1296, 1
      %v1299 = vor.u32 %v1294, %v1298
      %v1304 = vunpack.c.l.b16 %v1286
      %v1305 = vunpack.c.l.b16 %v1287
      %v1306 = vunpack.c.l.b16 %v1288
      %v1307 = vunpack.c.l.b16 %v1289
      %v1308 = vpack.c.b16 %v1305, %v1304
      %v1309 = vpack.c.b16 %v1307, %v1306
      %v1313 = vsel %vm197, %v1299, 0
      %1315 = vmatprep.subr.bf16.mxu0 0
      %1316 = vmatpush1.bf16.msra.mxu0 %v1308
      %1317 = vmatprep.subr.bf16.mxu0 0
      %1318 = vmatpush1.bf16.msra.mxu0 %v1309
      %1319 = vmatprep.subr.bf16.mxu0 0
      %1320 = vmatpush1.bf16.msra.mxu0 0
      %1321 = vmatprep.subr.bf16.mxu0 0
      %1322 = vmatpush1.bf16.msra.mxu0 0
      %1323 = vmatprep.subr.bf16.mxu0 0
      %1324 = vmatpush1.bf16.msra.mxu0 0
      %1325 = vmatprep.subr.bf16.mxu0 0
      %1326 = vmatpush1.bf16.msra.mxu0 0
      %1327 = vmatprep.subr.bf16.mxu0 0
      %1328 = vmatpush1.bf16.msra.mxu0 0
      %1329 = vmatprep.subr.bf16.mxu0 0
      %1330 = vmatpush1.bf16.msra.mxu0 0
      %1331 = vmatprep.subr.bf16.mxu0 0
      %1332 = vmatpush1.bf16.msra.mxu0 0
      %1333 = vmatprep.subr.bf16.mxu0 0
      %1334 = vmatpush1.bf16.msra.mxu0 0
      %1335 = vmatprep.subr.bf16.mxu0 0
      %1336 = vmatpush1.bf16.msra.mxu0 0
      %1337 = vmatprep.subr.bf16.mxu0 0
      %1338 = vmatpush1.bf16.msra.mxu0 0
      %1339 = vmatprep.subr.bf16.mxu0 0
      %1340 = vmatpush1.bf16.msra.mxu0 0
      %1341 = vmatprep.subr.bf16.mxu0 0
      %1342 = vmatpush1.bf16.msra.mxu0 0
      %1343 = vmatprep.subr.bf16.mxu0 0
      %1344 = vmatpush1.bf16.msra.mxu0 0
      %1345 = vmatprep.subr.bf16.mxu0 0
      %1346 = vmatpush1.bf16.msra.mxu0 0
      %1347 = vmatprep.mubr.bf16.mxu0 0
      %1348 = vmatmul.mubr.bf16.gmra.mrb[0].mxu0 %v1313
      %v1349 = vpop.f32.mrb[0].mxu0
      %v1350 = vadd.f32 0.0, %v1349
      %v1351 = vpop.f32.mrb[0].mxu0
      %v1352 = vpop.f32.mrb[0].mxu0
      %v1353 = vpop.f32.mrb[0].mxu0
      %1354 = vdwg.mxu0
      %v1355 = vadd.f32 %v1284, %v1350
      %v1356 = vadd.f32 %v1355, %v768
      %v1357 = vmax.f32 %v1356, 0.0
      %v1358 = vpack.c.bf16 %v1357, %v1357
      %s1359 = scalar_lea.vmem %s170, 2
      %1360 = vst.msk [vmem:[%s1359] sm:$0x3] %vm773, %v1358
      %v1361 = vld [vmem:[%s1161] sm:$0x3]
      %v1362 = vld [vmem:[%s1] sm:$0xf]
      %v1363 = vld [vmem:[%s1 + $0x4] sm:$0xf]
      %v1364 = vld [vmem:[%s1 + $0x8] sm:$0xf]
      %v1365 = vld [vmem:[%s1 + $0xc] sm:$0xf]
      %v1366 = vld [vmem:[%s1223] sm:$0x3]
      %v1367 = vld [vmem:[%s180] sm:$0xf]
      %v1368 = vld [vmem:[%s180 + $0x4] sm:$0xf]
      %v1369 = vld [vmem:[%s180 + $0x8] sm:$0xf]
      %v1370 = vld [vmem:[%s180 + $0xc] sm:$0xf]
      %v1375 = vunpack.c.l.b16 %v1367
      %v1376 = vunpack.c.l.b16 %v1368
      %v1377 = vunpack.c.l.b16 %v1369
      %v1378 = vunpack.c.l.b16 %v1370
      %v1379 = vpack.c.b16 %v1376, %v1375
      %v1380 = vpack.c.b16 %v1378, %v1377
      %v1384 = vsel %vm197, %v1366, 0
      %1386 = vmatprep.subr.bf16.mxu0 0
      %1387 = vmatpush1.bf16.msra.mxu0 %v1379
      %1388 = vmatprep.subr.bf16.mxu0 0
      %1389 = vmatpush1.bf16.msra.mxu0 %v1380
      %1390 = vmatprep.subr.bf16.mxu0 0
      %1391 = vmatpush1.bf16.msra.mxu0 0
      %1392 = vmatprep.subr.bf16.mxu0 0
      %1393 = vmatpush1.bf16.msra.mxu0 0
      %1394 = vmatprep.subr.bf16.mxu0 0
      %1395 = vmatpush1.bf16.msra.mxu0 0
      %1396 = vmatprep.subr.bf16.mxu0 0
      %1397 = vmatpush1.bf16.msra.mxu0 0
      %1398 = vmatprep.subr.bf16.mxu0 0
      %1399 = vmatpush1.bf16.msra.mxu0 0
      %1400 = vmatprep.subr.bf16.mxu0 0
      %1401 = vmatpush1.bf16.msra.mxu0 0
      %1402 = vmatprep.subr.bf16.mxu0 0
      %1403 = vmatpush1.bf16.msra.mxu0 0
      %1404 = vmatprep.subr.bf16.mxu0 0
      %1405 = vmatpush1.bf16.msra.mxu0 0
      %1406 = vmatprep.subr.bf16.mxu0 0
      %1407 = vmatpush1.bf16.msra.mxu0 0
      %1408 = vmatprep.subr.bf16.mxu0 0
      %1409 = vmatpush1.bf16.msra.mxu0 0
      %1410 = vmatprep.subr.bf16.mxu0 0
      %1411 = vmatpush1.bf16.msra.mxu0 0
      %1412 = vmatprep.subr.bf16.mxu0 0
      %1413 = vmatpush1.bf16.msra.mxu0 0
      %1414 = vmatprep.subr.bf16.mxu0 0
      %1415 = vmatpush1.bf16.msra.mxu0 0
      %1416 = vmatprep.subr.bf16.mxu0 0
      %1417 = vmatpush1.bf16.msra.mxu0 0
      %1418 = vmatprep.mubr.bf16.mxu0 0
      %1419 = vmatmul.mubr.bf16.gmra.mrb[0].mxu0 %v1384
      %v1420 = vpop.f32.mrb[0].mxu0
      %v1421 = vadd.f32 0.0, %v1420
      %v1422 = vpop.f32.mrb[0].mxu0
      %v1423 = vpop.f32.mrb[0].mxu0
      %v1424 = vpop.f32.mrb[0].mxu0
      %1425 = vdwg.mxu0
      %v1430 = vunpack.c.l.b16 %v1362
      %v1431 = vunpack.c.l.b16 %v1363
      %v1432 = vunpack.c.l.b16 %v1364
      %v1433 = vunpack.c.l.b16 %v1365
      %v1434 = vpack.c.b16 %v1431, %v1430
      %v1435 = vpack.c.b16 %v1433, %v1432
      %v1439 = vsel %vm197, %v1361, 0
      %1441 = vmatprep.subr.bf16.mxu0 0
      %1442 = vmatpush1.bf16.msra.mxu0 %v1434
      %1443 = vmatprep.subr.bf16.mxu0 0
      %1444 = vmatpush1.bf16.msra.mxu0 %v1435
      %1445 = vmatprep.subr.bf16.mxu0 0
      %1446 = vmatpush1.bf16.msra.mxu0 0
      %1447 = vmatprep.subr.bf16.mxu0 0
      %1448 = vmatpush1.bf16.msra.mxu0 0
      %1449 = vmatprep.subr.bf16.mxu0 0
      %1450 = vmatpush1.bf16.msra.mxu0 0
      %1451 = vmatprep.subr.bf16.mxu0 0
      %1452 = vmatpush1.bf16.msra.mxu0 0
      %1453 = vmatprep.subr.bf16.mxu0 0
      %1454 = vmatpush1.bf16.msra.mxu0 0
      %1455 = vmatprep.subr.bf16.mxu0 0
      %1456 = vmatpush1.bf16.msra.mxu0 0
      %1457 = vmatprep.subr.bf16.mxu0 0
      %1458 = vmatpush1.bf16.msra.mxu0 0
      %1459 = vmatprep.subr.bf16.mxu0 0
      %1460 = vmatpush1.bf16.msra.mxu0 0
      %1461 = vmatprep.subr.bf16.mxu0 0
      %1462 = vmatpush1.bf16.msra.mxu0 0
      %1463 = vmatprep.subr.bf16.mxu0 0
      %1464 = vmatpush1.bf16.msra.mxu0 0
      %1465 = vmatprep.subr.bf16.mxu0 0
      %1466 = vmatpush1.bf16.msra.mxu0 0
      %1467 = vmatprep.subr.bf16.mxu0 0
      %1468 = vmatpush1.bf16.msra.mxu0 0
      %1469 = vmatprep.subr.bf16.mxu0 0
      %1470 = vmatpush1.bf16.msra.mxu0 0
      %1471 = vmatprep.subr.bf16.mxu0 0
      %1472 = vmatpush1.bf16.msra.mxu0 0
      %1473 = vmatprep.mubr.bf16.mxu0 0
      %1474 = vmatmul.mubr.bf16.gmra.mrb[0].mxu0 %v1439
      %v1475 = vpop.f32.mrb[0].mxu0
      %v1476 = vadd.f32 %v1421, %v1475
      %v1477 = vpop.f32.mrb[0].mxu0
      %v1478 = vpop.f32.mrb[0].mxu0
      %v1479 = vpop.f32.mrb[0].mxu0
      %1480 = vdwg.mxu0
      %v1481 = vld [vmem:[%s1161] sm:$0x7]
      %v1482 = vld [vmem:[%s297] sm:$0xf]
      %v1483 = vld [vmem:[%s297 + $0x4] sm:$0xf]
      %v1484 = vld [vmem:[%s297 + $0x8] sm:$0xf]
      %v1485 = vld [vmem:[%s297 + $0xc] sm:$0xf]
      %v1487 = vunpack.c.l.b16 %v1481
      %v1488 = vpack.c.b16 %v1487, %v1487
      %v1490 = vshrl.u32 %v1488, 16
      %v1492 = vshll.u32 %v1488, 16
      %v1494 = vrot.slane %v1492, 1
      %v1495 = vor.u32 %v1490, %v1494
      %v1500 = vunpack.c.l.b16 %v1482
      %v1501 = vunpack.c.l.b16 %v1483
      %v1502 = vunpack.c.l.b16 %v1484
      %v1503 = vunpack.c.l.b16 %v1485
      %v1504 = vpack.c.b16 %v1501, %v1500
      %v1505 = vpack.c.b16 %v1503, %v1502
      %v1509 = vsel %vm197, %v1495, 0
      %1511 = vmatprep.subr.bf16.mxu0 0
      %1512 = vmatpush1.bf16.msra.mxu0 %v1504
      %1513 = vmatprep.subr.bf16.mxu0 0
      %1514 = vmatpush1.bf16.msra.mxu0 %v1505
      %1515 = vmatprep.subr.bf16.mxu0 0
      %1516 = vmatpush1.bf16.msra.mxu0 0
      %1517 = vmatprep.subr.bf16.mxu0 0
      %1518 = vmatpush1.bf16.msra.mxu0 0
      %1519 = vmatprep.subr.bf16.mxu0 0
      %1520 = vmatpush1.bf16.msra.mxu0 0
      %1521 = vmatprep.subr.bf16.mxu0 0
      %1522 = vmatpush1.bf16.msra.mxu0 0
      %1523 = vmatprep.subr.bf16.mxu0 0
      %1524 = vmatpush1.bf16.msra.mxu0 0
      %1525 = vmatprep.subr.bf16.mxu0 0
      %1526 = vmatpush1.bf16.msra.mxu0 0
      %1527 = vmatprep.subr.bf16.mxu0 0
      %1528 = vmatpush1.bf16.msra.mxu0 0
      %1529 = vmatprep.subr.bf16.mxu0 0
      %1530 = vmatpush1.bf16.msra.mxu0 0
      %1531 = vmatprep.subr.bf16.mxu0 0
      %1532 = vmatpush1.bf16.msra.mxu0 0
      %1533 = vmatprep.subr.bf16.mxu0 0
      %1534 = vmatpush1.bf16.msra.mxu0 0
      %1535 = vmatprep.subr.bf16.mxu0 0
      %1536 = vmatpush1.bf16.msra.mxu0 0
      %1537 = vmatprep.subr.bf16.mxu0 0
      %1538 = vmatpush1.bf16.msra.mxu0 0
      %1539 = vmatprep.subr.bf16.mxu0 0
      %1540 = vmatpush1.bf16.msra.mxu0 0
      %1541 = vmatprep.subr.bf16.mxu0 0
      %1542 = vmatpush1.bf16.msra.mxu0 0
      %1543 = vmatprep.mubr.bf16.mxu0 0
      %1544 = vmatmul.mubr.bf16.gmra.mrb[0].mxu0 %v1509
      %v1545 = vpop.f32.mrb[0].mxu0
      %v1546 = vadd.f32 0.0, %v1545
      %v1547 = vpop.f32.mrb[0].mxu0
      %v1548 = vpop.f32.mrb[0].mxu0
      %v1549 = vpop.f32.mrb[0].mxu0
      %1550 = vdwg.mxu0
      %v1551 = vadd.f32 %v1476, %v1546
      %s1552 = scalar_lea.vmem %s165, 48
      %v1553 = vld [vmem:[%s1552] sm:$0x3]
      %v1554 = vld [vmem:[%s370] sm:$0xf]
      %v1555 = vld [vmem:[%s370 + $0x4] sm:$0xf]
      %v1556 = vld [vmem:[%s370 + $0x8] sm:$0xf]
      %v1557 = vld [vmem:[%s370 + $0xc] sm:$0xf]
      %v1562 = vunpack.c.l.b16 %v1554
      %v1563 = vunpack.c.l.b16 %v1555
      %v1564 = vunpack.c.l.b16 %v1556
      %v1565 = vunpack.c.l.b16 %v1557
      %v1566 = vpack.c.b16 %v1563, %v1562
      %v1567 = vpack.c.b16 %v1565, %v1564
      %v1571 = vsel %vm197, %v1553, 0
      %1573 = vmatprep.subr.bf16.mxu0 0
      %1574 = vmatpush1.bf16.msra.mxu0 %v1566
      %1575 = vmatprep.subr.bf16.mxu0 0
      %1576 = vmatpush1.bf16.msra.mxu0 %v1567
      %1577 = vmatprep.subr.bf16.mxu0 0
      %1578 = vmatpush1.bf16.msra.mxu0 0
      %1579 = vmatprep.subr.bf16.mxu0 0
      %1580 = vmatpush1.bf16.msra.mxu0 0
      %1581 = vmatprep.subr.bf16.mxu0 0
      %1582 = vmatpush1.bf16.msra.mxu0 0
      %1583 = vmatprep.subr.bf16.mxu0 0
      %1584 = vmatpush1.bf16.msra.mxu0 0
      %1585 = vmatprep.subr.bf16.mxu0 0
      %1586 = vmatpush1.bf16.msra.mxu0 0
      %1587 = vmatprep.subr.bf16.mxu0 0
      %1588 = vmatpush1.bf16.msra.mxu0 0
      %1589 = vmatprep.subr.bf16.mxu0 0
      %1590 = vmatpush1.bf16.msra.mxu0 0
      %1591 = vmatprep.subr.bf16.mxu0 0
      %1592 = vmatpush1.bf16.msra.mxu0 0
      %1593 = vmatprep.subr.bf16.mxu0 0
      %1594 = vmatpush1.bf16.msra.mxu0 0
      %1595 = vmatprep.subr.bf16.mxu0 0
      %1596 = vmatpush1.bf16.msra.mxu0 0
      %1597 = vmatprep.subr.bf16.mxu0 0
      %1598 = vmatpush1.bf16.msra.mxu0 0
      %1599 = vmatprep.subr.bf16.mxu0 0
      %1600 = vmatpush1.bf16.msra.mxu0 0
      %1601 = vmatprep.subr.bf16.mxu0 0
      %1602 = vmatpush1.bf16.msra.mxu0 0
      %1603 = vmatprep.subr.bf16.mxu0 0
      %1604 = vmatpush1.bf16.msra.mxu0 0
      %1605 = vmatprep.mubr.bf16.mxu0 0
      %1606 = vmatmul.mubr.bf16.gmra.mrb[0].mxu0 %v1571
      %v1607 = vpop.f32.mrb[0].mxu0
      %v1608 = vadd.f32 0.0, %v1607
      %v1609 = vpop.f32.mrb[0].mxu0
      %v1610 = vpop.f32.mrb[0].mxu0
      %v1611 = vpop.f32.mrb[0].mxu0
      %1612 = vdwg.mxu0
      %v1613 = vadd.f32 %v1551, %v1608
      %s1614 = scalar_lea.vmem %s165, 68
      %v1615 = vld [vmem:[%s1614] sm:$0x3]
      %v1616 = vld [vmem:[%s433] sm:$0xf]
      %v1617 = vld [vmem:[%s433 + $0x4] sm:$0xf]
      %v1618 = vld [vmem:[%s433 + $0x8] sm:$0xf]
      %v1619 = vld [vmem:[%s433 + $0xc] sm:$0xf]
      %v1624 = vunpack.c.l.b16 %v1616
      %v1625 = vunpack.c.l.b16 %v1617
      %v1626 = vunpack.c.l.b16 %v1618
      %v1627 = vunpack.c.l.b16 %v1619
      %v1628 = vpack.c.b16 %v1625, %v1624
      %v1629 = vpack.c.b16 %v1627, %v1626
      %v1633 = vsel %vm197, %v1615, 0
      %1635 = vmatprep.subr.bf16.mxu0 0
      %1636 = vmatpush1.bf16.msra.mxu0 %v1628
      %1637 = vmatprep.subr.bf16.mxu0 0
      %1638 = vmatpush1.bf16.msra.mxu0 %v1629
      %1639 = vmatprep.subr.bf16.mxu0 0
      %1640 = vmatpush1.bf16.msra.mxu0 0
      %1641 = vmatprep.subr.bf16.mxu0 0
      %1642 = vmatpush1.bf16.msra.mxu0 0
      %1643 = vmatprep.subr.bf16.mxu0 0
      %1644 = vmatpush1.bf16.msra.mxu0 0
      %1645 = vmatprep.subr.bf16.mxu0 0
      %1646 = vmatpush1.bf16.msra.mxu0 0
      %1647 = vmatprep.subr.bf16.mxu0 0
      %1648 = vmatpush1.bf16.msra.mxu0 0
      %1649 = vmatprep.subr.bf16.mxu0 0
      %1650 = vmatpush1.bf16.msra.mxu0 0
      %1651 = vmatprep.subr.bf16.mxu0 0
      %1652 = vmatpush1.bf16.msra.mxu0 0
      %1653 = vmatprep.subr.bf16.mxu0 0
      %1654 = vmatpush1.bf16.msra.mxu0 0
      %1655 = vmatprep.subr.bf16.mxu0 0
      %1656 = vmatpush1.bf16.msra.mxu0 0
      %1657 = vmatprep.subr.bf16.mxu0 0
      %1658 = vmatpush1.bf16.msra.mxu0 0
      %1659 = vmatprep.subr.bf16.mxu0 0
      %1660 = vmatpush1.bf16.msra.mxu0 0
      %1661 = vmatprep.subr.bf16.mxu0 0
      %1662 = vmatpush1.bf16.msra.mxu0 0
      %1663 = vmatprep.subr.bf16.mxu0 0
      %1664 = vmatpush1.bf16.msra.mxu0 0
      %1665 = vmatprep.subr.bf16.mxu0 0
      %1666 = vmatpush1.bf16.msra.mxu0 0
      %1667 = vmatprep.mubr.bf16.mxu0 0
      %1668 = vmatmul.mubr.bf16.gmra.mrb[0].mxu0 %v1633
      %v1669 = vpop.f32.mrb[0].mxu0
      %v1670 = vadd.f32 0.0, %v1669
      %v1671 = vpop.f32.mrb[0].mxu0
      %v1672 = vpop.f32.mrb[0].mxu0
      %v1673 = vpop.f32.mrb[0].mxu0
      %1674 = vdwg.mxu0
      %v1675 = vadd.f32 %v1613, %v1670
      %v1676 = vld [vmem:[%s1552] sm:$0x7]
      %v1677 = vld [vmem:[%s495] sm:$0xf]
      %v1678 = vld [vmem:[%s495 + $0x4] sm:$0xf]
      %v1679 = vld [vmem:[%s495 + $0x8] sm:$0xf]
      %v1680 = vld [vmem:[%s495 + $0xc] sm:$0xf]
      %v1682 = vunpack.c.l.b16 %v1676
      %v1683 = vpack.c.b16 %v1682, %v1682
      %v1685 = vshrl.u32 %v1683, 16
      %v1687 = vshll.u32 %v1683, 16
      %v1689 = vrot.slane %v1687, 1
      %v1690 = vor.u32 %v1685, %v1689
      %v1695 = vunpack.c.l.b16 %v1677
      %v1696 = vunpack.c.l.b16 %v1678
      %v1697 = vunpack.c.l.b16 %v1679
      %v1698 = vunpack.c.l.b16 %v1680
      %v1699 = vpack.c.b16 %v1696, %v1695
      %v1700 = vpack.c.b16 %v1698, %v1697
      %v1704 = vsel %vm197, %v1690, 0
      %1706 = vmatprep.subr.bf16.mxu0 0
      %1707 = vmatpush1.bf16.msra.mxu0 %v1699
      %1708 = vmatprep.subr.bf16.mxu0 0
      %1709 = vmatpush1.bf16.msra.mxu0 %v1700
      %1710 = vmatprep.subr.bf16.mxu0 0
      %1711 = vmatpush1.bf16.msra.mxu0 0
      %1712 = vmatprep.subr.bf16.mxu0 0
      %1713 = vmatpush1.bf16.msra.mxu0 0
      %1714 = vmatprep.subr.bf16.mxu0 0
      %1715 = vmatpush1.bf16.msra.mxu0 0
      %1716 = vmatprep.subr.bf16.mxu0 0
      %1717 = vmatpush1.bf16.msra.mxu0 0
      %1718 = vmatprep.subr.bf16.mxu0 0
      %1719 = vmatpush1.bf16.msra.mxu0 0
      %1720 = vmatprep.subr.bf16.mxu0 0
      %1721 = vmatpush1.bf16.msra.mxu0 0
      %1722 = vmatprep.subr.bf16.mxu0 0
      %1723 = vmatpush1.bf16.msra.mxu0 0
      %1724 = vmatprep.subr.bf16.mxu0 0
      %1725 = vmatpush1.bf16.msra.mxu0 0
      %1726 = vmatprep.subr.bf16.mxu0 0
      %1727 = vmatpush1.bf16.msra.mxu0 0
      %1728 = vmatprep.subr.bf16.mxu0 0
      %1729 = vmatpush1.bf16.msra.mxu0 0
      %1730 = vmatprep.subr.bf16.mxu0 0
      %1731 = vmatpush1.bf16.msra.mxu0 0
      %1732 = vmatprep.subr.bf16.mxu0 0
      %1733 = vmatpush1.bf16.msra.mxu0 0
      %1734 = vmatprep.subr.bf16.mxu0 0
      %1735 = vmatpush1.bf16.msra.mxu0 0
      %1736 = vmatprep.subr.bf16.mxu0 0
      %1737 = vmatpush1.bf16.msra.mxu0 0
      %1738 = vmatprep.mubr.bf16.mxu0 0
      %1739 = vmatmul.mubr.bf16.gmra.mrb[0].mxu0 %v1704
      %v1740 = vpop.f32.mrb[0].mxu0
      %v1741 = vadd.f32 0.0, %v1740
      %v1742 = vpop.f32.mrb[0].mxu0
      %v1743 = vpop.f32.mrb[0].mxu0
      %v1744 = vpop.f32.mrb[0].mxu0
      %1745 = vdwg.mxu0
      %v1746 = vadd.f32 %v1675, %v1741
      %s1747 = scalar_lea.vmem %s165, 12
      %v1748 = vld [vmem:[%s1747] sm:$0x3]
      %v1749 = vld [vmem:[%s568] sm:$0xf]
      %v1750 = vld [vmem:[%s568 + $0x4] sm:$0xf]
      %v1751 = vld [vmem:[%s568 + $0x8] sm:$0xf]
      %v1752 = vld [vmem:[%s568 + $0xc] sm:$0xf]
      %v1757 = vunpack.c.l.b16 %v1749
      %v1758 = vunpack.c.l.b16 %v1750
      %v1759 = vunpack.c.l.b16 %v1751
      %v1760 = vunpack.c.l.b16 %v1752
      %v1761 = vpack.c.b16 %v1758, %v1757
      %v1762 = vpack.c.b16 %v1760, %v1759
      %v1766 = vsel %vm197, %v1748, 0
      %1768 = vmatprep.subr.bf16.mxu0 0
      %1769 = vmatpush1.bf16.msra.mxu0 %v1761
      %1770 = vmatprep.subr.bf16.mxu0 0
      %1771 = vmatpush1.bf16.msra.mxu0 %v1762
      %1772 = vmatprep.subr.bf16.mxu0 0
      %1773 = vmatpush1.bf16.msra.mxu0 0
      %1774 = vmatprep.subr.bf16.mxu0 0
      %1775 = vmatpush1.bf16.msra.mxu0 0
      %1776 = vmatprep.subr.bf16.mxu0 0
      %1777 = vmatpush1.bf16.msra.mxu0 0
      %1778 = vmatprep.subr.bf16.mxu0 0
      %1779 = vmatpush1.bf16.msra.mxu0 0
      %1780 = vmatprep.subr.bf16.mxu0 0
      %1781 = vmatpush1.bf16.msra.mxu0 0
      %1782 = vmatprep.subr.bf16.mxu0 0
      %1783 = vmatpush1.bf16.msra.mxu0 0
      %1784 = vmatprep.subr.bf16.mxu0 0
      %1785 = vmatpush1.bf16.msra.mxu0 0
      %1786 = vmatprep.subr.bf16.mxu0 0
      %1787 = vmatpush1.bf16.msra.mxu0 0
      %1788 = vmatprep.subr.bf16.mxu0 0
      %1789 = vmatpush1.bf16.msra.mxu0 0
      %1790 = vmatprep.subr.bf16.mxu0 0
      %1791 = vmatpush1.bf16.msra.mxu0 0
      %1792 = vmatprep.subr.bf16.mxu0 0
      %1793 = vmatpush1.bf16.msra.mxu0 0
      %1794 = vmatprep.subr.bf16.mxu0 0
      %1795 = vmatpush1.bf16.msra.mxu0 0
      %1796 = vmatprep.subr.bf16.mxu0 0
      %1797 = vmatpush1.bf16.msra.mxu0 0
      %1798 = vmatprep.subr.bf16.mxu0 0
      %1799 = vmatpush1.bf16.msra.mxu0 0
      %1800 = vmatprep.mubr.bf16.mxu0 0
      %1801 = vmatmul.mubr.bf16.gmra.mrb[0].mxu0 %v1766
      %v1802 = vpop.f32.mrb[0].mxu0
      %v1803 = vadd.f32 0.0, %v1802
      %v1804 = vpop.f32.mrb[0].mxu0
      %v1805 = vpop.f32.mrb[0].mxu0
      %v1806 = vpop.f32.mrb[0].mxu0
      %1807 = vdwg.mxu0
      %v1808 = vadd.f32 %v1746, %v1803
      %s1809 = scalar_lea.vmem %s165, 32
      %v1810 = vld [vmem:[%s1809] sm:$0x3]
      %v1811 = vld [vmem:[%s631] sm:$0xf]
      %v1812 = vld [vmem:[%s631 + $0x4] sm:$0xf]
      %v1813 = vld [vmem:[%s631 + $0x8] sm:$0xf]
      %v1814 = vld [vmem:[%s631 + $0xc] sm:$0xf]
      %v1819 = vunpack.c.l.b16 %v1811
      %v1820 = vunpack.c.l.b16 %v1812
      %v1821 = vunpack.c.l.b16 %v1813
      %v1822 = vunpack.c.l.b16 %v1814
      %v1823 = vpack.c.b16 %v1820, %v1819
      %v1824 = vpack.c.b16 %v1822, %v1821
      %v1828 = vsel %vm197, %v1810, 0
      %1830 = vmatprep.subr.bf16.mxu0 0
      %1831 = vmatpush1.bf16.msra.mxu0 %v1823
      %1832 = vmatprep.subr.bf16.mxu0 0
      %1833 = vmatpush1.bf16.msra.mxu0 %v1824
      %1834 = vmatprep.subr.bf16.mxu0 0
      %1835 = vmatpush1.bf16.msra.mxu0 0
      %1836 = vmatprep.subr.bf16.mxu0 0
      %1837 = vmatpush1.bf16.msra.mxu0 0
      %1838 = vmatprep.subr.bf16.mxu0 0
      %1839 = vmatpush1.bf16.msra.mxu0 0
      %1840 = vmatprep.subr.bf16.mxu0 0
      %1841 = vmatpush1.bf16.msra.mxu0 0
      %1842 = vmatprep.subr.bf16.mxu0 0
      %1843 = vmatpush1.bf16.msra.mxu0 0
      %1844 = vmatprep.subr.bf16.mxu0 0
      %1845 = vmatpush1.bf16.msra.mxu0 0
      %1846 = vmatprep.subr.bf16.mxu0 0
      %1847 = vmatpush1.bf16.msra.mxu0 0
      %1848 = vmatprep.subr.bf16.mxu0 0
      %1849 = vmatpush1.bf16.msra.mxu0 0
      %1850 = vmatprep.subr.bf16.mxu0 0
      %1851 = vmatpush1.bf16.msra.mxu0 0
      %1852 = vmatprep.subr.bf16.mxu0 0
      %1853 = vmatpush1.bf16.msra.mxu0 0
      %1854 = vmatprep.subr.bf16.mxu0 0
      %1855 = vmatpush1.bf16.msra.mxu0 0
      %1856 = vmatprep.subr.bf16.mxu0 0
      %1857 = vmatpush1.bf16.msra.mxu0 0
      %1858 = vmatprep.subr.bf16.mxu0 0
      %1859 = vmatpush1.bf16.msra.mxu0 0
      %1860 = vmatprep.subr.bf16.mxu0 0
      %1861 = vmatpush1.bf16.msra.mxu0 0
      %1862 = vmatprep.mubr.bf16.mxu0 0
      %1863 = vmatmul.mubr.bf16.gmra.mrb[0].mxu0 %v1828
      %v1864 = vpop.f32.mrb[0].mxu0
      %v1865 = vadd.f32 0.0, %v1864
      %v1866 = vpop.f32.mrb[0].mxu0
      %v1867 = vpop.f32.mrb[0].mxu0
      %v1868 = vpop.f32.mrb[0].mxu0
      %1869 = vdwg.mxu0
      %v1870 = vadd.f32 %v1808, %v1865
      %v1871 = vld [vmem:[%s1747] sm:$0x7]
      %v1872 = vld [vmem:[%s693] sm:$0xf]
      %v1873 = vld [vmem:[%s693 + $0x4] sm:$0xf]
      %v1874 = vld [vmem:[%s693 + $0x8] sm:$0xf]
      %v1875 = vld [vmem:[%s693 + $0xc] sm:$0xf]
      %v1877 = vunpack.c.l.b16 %v1871
      %v1878 = vpack.c.b16 %v1877, %v1877
      %v1880 = vshrl.u32 %v1878, 16
      %v1882 = vshll.u32 %v1878, 16
      %v1884 = vrot.slane %v1882, 1
      %v1885 = vor.u32 %v1880, %v1884
      %v1890 = vunpack.c.l.b16 %v1872
      %v1891 = vunpack.c.l.b16 %v1873
      %v1892 = vunpack.c.l.b16 %v1874
      %v1893 = vunpack.c.l.b16 %v1875
      %v1894 = vpack.c.b16 %v1891, %v1890
      %v1895 = vpack.c.b16 %v1893, %v1892
      %v1899 = vsel %vm197, %v1885, 0
      %1901 = vmatprep.subr.bf16.mxu0 0
      %1902 = vmatpush1.bf16.msra.mxu0 %v1894
      %1903 = vmatprep.subr.bf16.mxu0 0
      %1904 = vmatpush1.bf16.msra.mxu0 %v1895
      %1905 = vmatprep.subr.bf16.mxu0 0
      %1906 = vmatpush1.bf16.msra.mxu0 0
      %1907 = vmatprep.subr.bf16.mxu0 0
      %1908 = vmatpush1.bf16.msra.mxu0 0
      %1909 = vmatprep.subr.bf16.mxu0 0
      %1910 = vmatpush1.bf16.msra.mxu0 0
      %1911 = vmatprep.subr.bf16.mxu0 0
      %1912 = vmatpush1.bf16.msra.mxu0 0
      %1913 = vmatprep.subr.bf16.mxu0 0
      %1914 = vmatpush1.bf16.msra.mxu0 0
      %1915 = vmatprep.subr.bf16.mxu0 0
      %1916 = vmatpush1.bf16.msra.mxu0 0
      %1917 = vmatprep.subr.bf16.mxu0 0
      %1918 = vmatpush1.bf16.msra.mxu0 0
      %1919 = vmatprep.subr.bf16.mxu0 0
      %1920 = vmatpush1.bf16.msra.mxu0 0
      %1921 = vmatprep.subr.bf16.mxu0 0
      %1922 = vmatpush1.bf16.msra.mxu0 0
      %1923 = vmatprep.subr.bf16.mxu0 0
      %1924 = vmatpush1.bf16.msra.mxu0 0
      %1925 = vmatprep.subr.bf16.mxu0 0
      %1926 = vmatpush1.bf16.msra.mxu0 0
      %1927 = vmatprep.subr.bf16.mxu0 0
      %1928 = vmatpush1.bf16.msra.mxu0 0
      %1929 = vmatprep.subr.bf16.mxu0 0
      %1930 = vmatpush1.bf16.msra.mxu0 0
      %1931 = vmatprep.subr.bf16.mxu0 0
      %1932 = vmatpush1.bf16.msra.mxu0 0
      %1933 = vmatprep.mubr.bf16.mxu0 0
      %1934 = vmatmul.mubr.bf16.gmra.mrb[0].mxu0 %v1899
      %v1935 = vpop.f32.mrb[0].mxu0
      %v1936 = vadd.f32 0.0, %v1935
      %v1937 = vpop.f32.mrb[0].mxu0
      %v1938 = vpop.f32.mrb[0].mxu0
      %v1939 = vpop.f32.mrb[0].mxu0
      %1940 = vdwg.mxu0
      %v1941 = vadd.f32 %v1870, %v1936
      %v1942 = vadd.f32 %v1941, %v768
      %v1943 = vmax.f32 %v1942, 0.0
      %v1944 = vpack.c.bf16 %v1943, %v1943
      %s1945 = scalar_lea.vmem %s170, 4
      %1946 = vst.msk [vmem:[%s1945] sm:$0x3] %vm773, %v1944
      %v1947 = vld [vmem:[%s1747] sm:$0x3]
      %v1948 = vld [vmem:[%s1] sm:$0xf]
      %v1949 = vld [vmem:[%s1 + $0x4] sm:$0xf]
      %v1950 = vld [vmem:[%s1 + $0x8] sm:$0xf]
      %v1951 = vld [vmem:[%s1 + $0xc] sm:$0xf]
      %v1952 = vld [vmem:[%s1809] sm:$0x3]
      %v1953 = vld [vmem:[%s180] sm:$0xf]
      %v1954 = vld [vmem:[%s180 + $0x4] sm:$0xf]
      %v1955 = vld [vmem:[%s180 + $0x8] sm:$0xf]
      %v1956 = vld [vmem:[%s180 + $0xc] sm:$0xf]
      %v1961 = vunpack.c.l.b16 %v1953
      %v1962 = vunpack.c.l.b16 %v1954
      %v1963 = vunpack.c.l.b16 %v1955
      %v1964 = vunpack.c.l.b16 %v1956
      %v1965 = vpack.c.b16 %v1962, %v1961
      %v1966 = vpack.c.b16 %v1964, %v1963
      %v1970 = vsel %vm197, %v1952, 0
      %1972 = vmatprep.subr.bf16.mxu0 0
      %1973 = vmatpush1.bf16.msra.mxu0 %v1965
      %1974 = vmatprep.subr.bf16.mxu0 0
      %1975 = vmatpush1.bf16.msra.mxu0 %v1966
      %1976 = vmatprep.subr.bf16.mxu0 0
      %1977 = vmatpush1.bf16.msra.mxu0 0
      %1978 = vmatprep.subr.bf16.mxu0 0
      %1979 = vmatpush1.bf16.msra.mxu0 0
      %1980 = vmatprep.subr.bf16.mxu0 0
      %1981 = vmatpush1.bf16.msra.mxu0 0
      %1982 = vmatprep.subr.bf16.mxu0 0
      %1983 = vmatpush1.bf16.msra.mxu0 0
      %1984 = vmatprep.subr.bf16.mxu0 0
      %1985 = vmatpush1.bf16.msra.mxu0 0
      %1986 = vmatprep.subr.bf16.mxu0 0
      %1987 = vmatpush1.bf16.msra.mxu0 0
      %1988 = vmatprep.subr.bf16.mxu0 0
      %1989 = vmatpush1.bf16.msra.mxu0 0
      %1990 = vmatprep.subr.bf16.mxu0 0
      %1991 = vmatpush1.bf16.msra.mxu0 0
      %1992 = vmatprep.subr.bf16.mxu0 0
      %1993 = vmatpush1.bf16.msra.mxu0 0
      %1994 = vmatprep.subr.bf16.mxu0 0
      %1995 = vmatpush1.bf16.msra.mxu0 0
      %1996 = vmatprep.subr.bf16.mxu0 0
      %1997 = vmatpush1.bf16.msra.mxu0 0
      %1998 = vmatprep.subr.bf16.mxu0 0
      %1999 = vmatpush1.bf16.msra.mxu0 0
      %2000 = vmatprep.subr.bf16.mxu0 0
      %2001 = vmatpush1.bf16.msra.mxu0 0
      %2002 = vmatprep.subr.bf16.mxu0 0
      %2003 = vmatpush1.bf16.msra.mxu0 0
      %2004 = vmatprep.mubr.bf16.mxu0 0
      %2005 = vmatmul.mubr.bf16.gmra.mrb[0].mxu0 %v1970
      %v2006 = vpop.f32.mrb[0].mxu0
      %v2007 = vadd.f32 0.0, %v2006
      %v2008 = vpop.f32.mrb[0].mxu0
      %v2009 = vpop.f32.mrb[0].mxu0
      %v2010 = vpop.f32.mrb[0].mxu0
      %2011 = vdwg.mxu0
      %v2016 = vunpack.c.l.b16 %v1948
      %v2017 = vunpack.c.l.b16 %v1949
      %v2018 = vunpack.c.l.b16 %v1950
      %v2019 = vunpack.c.l.b16 %v1951
      %v2020 = vpack.c.b16 %v2017, %v2016
      %v2021 = vpack.c.b16 %v2019, %v2018
      %v2025 = vsel %vm197, %v1947, 0
      %2027 = vmatprep.subr.bf16.mxu0 0
      %2028 = vmatpush1.bf16.msra.mxu0 %v2020
      %2029 = vmatprep.subr.bf16.mxu0 0
      %2030 = vmatpush1.bf16.msra.mxu0 %v2021
      %2031 = vmatprep.subr.bf16.mxu0 0
      %2032 = vmatpush1.bf16.msra.mxu0 0
      %2033 = vmatprep.subr.bf16.mxu0 0
      %2034 = vmatpush1.bf16.msra.mxu0 0
      %2035 = vmatprep.subr.bf16.mxu0 0
      %2036 = vmatpush1.bf16.msra.mxu0 0
      %2037 = vmatprep.subr.bf16.mxu0 0
      %2038 = vmatpush1.bf16.msra.mxu0 0
      %2039 = vmatprep.subr.bf16.mxu0 0
      %2040 = vmatpush1.bf16.msra.mxu0 0
      %2041 = vmatprep.subr.bf16.mxu0 0
      %2042 = vmatpush1.bf16.msra.mxu0 0
      %2043 = vmatprep.subr.bf16.mxu0 0
      %2044 = vmatpush1.bf16.msra.mxu0 0
      %2045 = vmatprep.subr.bf16.mxu0 0
      %2046 = vmatpush1.bf16.msra.mxu0 0
      %2047 = vmatprep.subr.bf16.mxu0 0
      %2048 = vmatpush1.bf16.msra.mxu0 0
      %2049 = vmatprep.subr.bf16.mxu0 0
      %2050 = vmatpush1.bf16.msra.mxu0 0
      %2051 = vmatprep.subr.bf16.mxu0 0
      %2052 = vmatpush1.bf16.msra.mxu0 0
      %2053 = vmatprep.subr.bf16.mxu0 0
      %2054 = vmatpush1.bf16.msra.mxu0 0
      %2055 = vmatprep.subr.bf16.mxu0 0
      %2056 = vmatpush1.bf16.msra.mxu0 0
      %2057 = vmatprep.subr.bf16.mxu0 0
      %2058 = vmatpush1.bf16.msra.mxu0 0
      %2059 = vmatprep.mubr.bf16.mxu0 0
      %2060 = vmatmul.mubr.bf16.gmra.mrb[0].mxu0 %v2025
      %v2061 = vpop.f32.mrb[0].mxu0
      %v2062 = vadd.f32 %v2007, %v2061
      %v2063 = vpop.f32.mrb[0].mxu0
      %v2064 = vpop.f32.mrb[0].mxu0
      %v2065 = vpop.f32.mrb[0].mxu0
      %2066 = vdwg.mxu0
      %v2067 = vld [vmem:[%s1747] sm:$0x7]
      %v2068 = vld [vmem:[%s297] sm:$0xf]
      %v2069 = vld [vmem:[%s297 + $0x4] sm:$0xf]
      %v2070 = vld [vmem:[%s297 + $0x8] sm:$0xf]
      %v2071 = vld [vmem:[%s297 + $0xc] sm:$0xf]
      %v2073 = vunpack.c.l.b16 %v2067
      %v2074 = vpack.c.b16 %v2073, %v2073
      %v2076 = vshrl.u32 %v2074, 16
      %v2078 = vshll.u32 %v2074, 16
      %v2080 = vrot.slane %v2078, 1
      %v2081 = vor.u32 %v2076, %v2080
      %v2086 = vunpack.c.l.b16 %v2068
      %v2087 = vunpack.c.l.b16 %v2069
      %v2088 = vunpack.c.l.b16 %v2070
      %v2089 = vunpack.c.l.b16 %v2071
      %v2090 = vpack.c.b16 %v2087, %v2086
      %v2091 = vpack.c.b16 %v2089, %v2088
      %v2095 = vsel %vm197, %v2081, 0
      %2097 = vmatprep.subr.bf16.mxu0 0
      %2098 = vmatpush1.bf16.msra.mxu0 %v2090
      %2099 = vmatprep.subr.bf16.mxu0 0
      %2100 = vmatpush1.bf16.msra.mxu0 %v2091
      %2101 = vmatprep.subr.bf16.mxu0 0
      %2102 = vmatpush1.bf16.msra.mxu0 0
      %2103 = vmatprep.subr.bf16.mxu0 0
      %2104 = vmatpush1.bf16.msra.mxu0 0
      %2105 = vmatprep.subr.bf16.mxu0 0
      %2106 = vmatpush1.bf16.msra.mxu0 0
      %2107 = vmatprep.subr.bf16.mxu0 0
      %2108 = vmatpush1.bf16.msra.mxu0 0
      %2109 = vmatprep.subr.bf16.mxu0 0
      %2110 = vmatpush1.bf16.msra.mxu0 0
      %2111 = vmatprep.subr.bf16.mxu0 0
      %2112 = vmatpush1.bf16.msra.mxu0 0
      %2113 = vmatprep.subr.bf16.mxu0 0
      %2114 = vmatpush1.bf16.msra.mxu0 0
      %2115 = vmatprep.subr.bf16.mxu0 0
      %2116 = vmatpush1.bf16.msra.mxu0 0
      %2117 = vmatprep.subr.bf16.mxu0 0
      %2118 = vmatpush1.bf16.msra.mxu0 0
      %2119 = vmatprep.subr.bf16.mxu0 0
      %2120 = vmatpush1.bf16.msra.mxu0 0
      %2121 = vmatprep.subr.bf16.mxu0 0
      %2122 = vmatpush1.bf16.msra.mxu0 0
      %2123 = vmatprep.subr.bf16.mxu0 0
      %2124 = vmatpush1.bf16.msra.mxu0 0
      %2125 = vmatprep.subr.bf16.mxu0 0
      %2126 = vmatpush1.bf16.msra.mxu0 0
      %2127 = vmatprep.subr.bf16.mxu0 0
      %2128 = vmatpush1.bf16.msra.mxu0 0
      %2129 = vmatprep.mubr.bf16.mxu0 0
      %2130 = vmatmul.mubr.bf16.gmra.mrb[0].mxu0 %v2095
      %v2131 = vpop.f32.mrb[0].mxu0
      %v2132 = vadd.f32 0.0, %v2131
      %v2133 = vpop.f32.mrb[0].mxu0
      %v2134 = vpop.f32.mrb[0].mxu0
      %v2135 = vpop.f32.mrb[0].mxu0
      %2136 = vdwg.mxu0
      %v2137 = vadd.f32 %v2062, %v2132
      %s2138 = scalar_lea.vmem %s165, 52
      %v2139 = vld [vmem:[%s2138] sm:$0x3]
      %v2140 = vld [vmem:[%s370] sm:$0xf]
      %v2141 = vld [vmem:[%s370 + $0x4] sm:$0xf]
      %v2142 = vld [vmem:[%s370 + $0x8] sm:$0xf]
      %v2143 = vld [vmem:[%s370 + $0xc] sm:$0xf]
      %v2148 = vunpack.c.l.b16 %v2140
      %v2149 = vunpack.c.l.b16 %v2141
      %v2150 = vunpack.c.l.b16 %v2142
      %v2151 = vunpack.c.l.b16 %v2143
      %v2152 = vpack.c.b16 %v2149, %v2148
      %v2153 = vpack.c.b16 %v2151, %v2150
      %v2157 = vsel %vm197, %v2139, 0
      %2159 = vmatprep.subr.bf16.mxu0 0
      %2160 = vmatpush1.bf16.msra.mxu0 %v2152
      %2161 = vmatprep.subr.bf16.mxu0 0
      %2162 = vmatpush1.bf16.msra.mxu0 %v2153
      %2163 = vmatprep.subr.bf16.mxu0 0
      %2164 = vmatpush1.bf16.msra.mxu0 0
      %2165 = vmatprep.subr.bf16.mxu0 0
      %2166 = vmatpush1.bf16.msra.mxu0 0
      %2167 = vmatprep.subr.bf16.mxu0 0
      %2168 = vmatpush1.bf16.msra.mxu0 0
      %2169 = vmatprep.subr.bf16.mxu0 0
      %2170 = vmatpush1.bf16.msra.mxu0 0
      %2171 = vmatprep.subr.bf16.mxu0 0
      %2172 = vmatpush1.bf16.msra.mxu0 0
      %2173 = vmatprep.subr.bf16.mxu0 0
      %2174 = vmatpush1.bf16.msra.mxu0 0
      %2175 = vmatprep.subr.bf16.mxu0 0
      %2176 = vmatpush1.bf16.msra.mxu0 0
      %2177 = vmatprep.subr.bf16.mxu0 0
      %2178 = vmatpush1.bf16.msra.mxu0 0
      %2179 = vmatprep.subr.bf16.mxu0 0
      %2180 = vmatpush1.bf16.msra.mxu0 0
      %2181 = vmatprep.subr.bf16.mxu0 0
      %2182 = vmatpush1.bf16.msra.mxu0 0
      %2183 = vmatprep.subr.bf16.mxu0 0
      %2184 = vmatpush1.bf16.msra.mxu0 0
      %2185 = vmatprep.subr.bf16.mxu0 0
      %2186 = vmatpush1.bf16.msra.mxu0 0
      %2187 = vmatprep.subr.bf16.mxu0 0
      %2188 = vmatpush1.bf16.msra.mxu0 0
      %2189 = vmatprep.subr.bf16.mxu0 0
      %2190 = vmatpush1.bf16.msra.mxu0 0
      %2191 = vmatprep.mubr.bf16.mxu0 0
      %2192 = vmatmul.mubr.bf16.gmra.mrb[0].mxu0 %v2157
      %v2193 = vpop.f32.mrb[0].mxu0
      %v2194 = vadd.f32 0.0, %v2193
      %v2195 = vpop.f32.mrb[0].mxu0
      %v2196 = vpop.f32.mrb[0].mxu0
      %v2197 = vpop.f32.mrb[0].mxu0
      %2198 = vdwg.mxu0
      %v2199 = vadd.f32 %v2137, %v2194
      %s2200 = scalar_lea.vmem %s165, 72
      %v2201 = vld [vmem:[%s2200] sm:$0x3]
      %v2202 = vld [vmem:[%s433] sm:$0xf]
      %v2203 = vld [vmem:[%s433 + $0x4] sm:$0xf]
      %v2204 = vld [vmem:[%s433 + $0x8] sm:$0xf]
      %v2205 = vld [vmem:[%s433 + $0xc] sm:$0xf]
      %v2210 = vunpack.c.l.b16 %v2202
      %v2211 = vunpack.c.l.b16 %v2203
      %v2212 = vunpack.c.l.b16 %v2204
      %v2213 = vunpack.c.l.b16 %v2205
      %v2214 = vpack.c.b16 %v2211, %v2210
      %v2215 = vpack.c.b16 %v2213, %v2212
      %v2219 = vsel %vm197, %v2201, 0
      %2221 = vmatprep.subr.bf16.mxu0 0
      %2222 = vmatpush1.bf16.msra.mxu0 %v2214
      %2223 = vmatprep.subr.bf16.mxu0 0
      %2224 = vmatpush1.bf16.msra.mxu0 %v2215
      %2225 = vmatprep.subr.bf16.mxu0 0
      %2226 = vmatpush1.bf16.msra.mxu0 0
      %2227 = vmatprep.subr.bf16.mxu0 0
      %2228 = vmatpush1.bf16.msra.mxu0 0
      %2229 = vmatprep.subr.bf16.mxu0 0
      %2230 = vmatpush1.bf16.msra.mxu0 0
      %2231 = vmatprep.subr.bf16.mxu0 0
      %2232 = vmatpush1.bf16.msra.mxu0 0
      %2233 = vmatprep.subr.bf16.mxu0 0
      %2234 = vmatpush1.bf16.msra.mxu0 0
      %2235 = vmatprep.subr.bf16.mxu0 0
      %2236 = vmatpush1.bf16.msra.mxu0 0
      %2237 = vmatprep.subr.bf16.mxu0 0
      %2238 = vmatpush1.bf16.msra.mxu0 0
      %2239 = vmatprep.subr.bf16.mxu0 0
      %2240 = vmatpush1.bf16.msra.mxu0 0
      %2241 = vmatprep.subr.bf16.mxu0 0
      %2242 = vmatpush1.bf16.msra.mxu0 0
      %2243 = vmatprep.subr.bf16.mxu0 0
      %2244 = vmatpush1.bf16.msra.mxu0 0
      %2245 = vmatprep.subr.bf16.mxu0 0
      %2246 = vmatpush1.bf16.msra.mxu0 0
      %2247 = vmatprep.subr.bf16.mxu0 0
      %2248 = vmatpush1.bf16.msra.mxu0 0
      %2249 = vmatprep.subr.bf16.mxu0 0
      %2250 = vmatpush1.bf16.msra.mxu0 0
      %2251 = vmatprep.subr.bf16.mxu0 0
      %2252 = vmatpush1.bf16.msra.mxu0 0
      %2253 = vmatprep.mubr.bf16.mxu0 0
      %2254 = vmatmul.mubr.bf16.gmra.mrb[0].mxu0 %v2219
      %v2255 = vpop.f32.mrb[0].mxu0
      %v2256 = vadd.f32 0.0, %v2255
      %v2257 = vpop.f32.mrb[0].mxu0
      %v2258 = vpop.f32.mrb[0].mxu0
      %v2259 = vpop.f32.mrb[0].mxu0
      %2260 = vdwg.mxu0
      %v2261 = vadd.f32 %v2199, %v2256
      %v2262 = vld [vmem:[%s2138] sm:$0x7]
      %v2263 = vld [vmem:[%s495] sm:$0xf]
      %v2264 = vld [vmem:[%s495 + $0x4] sm:$0xf]
      %v2265 = vld [vmem:[%s495 + $0x8] sm:$0xf]
      %v2266 = vld [vmem:[%s495 + $0xc] sm:$0xf]
      %v2268 = vunpack.c.l.b16 %v2262
      %v2269 = vpack.c.b16 %v2268, %v2268
      %v2271 = vshrl.u32 %v2269, 16
      %v2273 = vshll.u32 %v2269, 16
      %v2275 = vrot.slane %v2273, 1
      %v2276 = vor.u32 %v2271, %v2275
      %v2281 = vunpack.c.l.b16 %v2263
      %v2282 = vunpack.c.l.b16 %v2264
      %v2283 = vunpack.c.l.b16 %v2265
      %v2284 = vunpack.c.l.b16 %v2266
      %v2285 = vpack.c.b16 %v2282, %v2281
      %v2286 = vpack.c.b16 %v2284, %v2283
      %v2290 = vsel %vm197, %v2276, 0
      %2292 = vmatprep.subr.bf16.mxu0 0
      %2293 = vmatpush1.bf16.msra.mxu0 %v2285
      %2294 = vmatprep.subr.bf16.mxu0 0
      %2295 = vmatpush1.bf16.msra.mxu0 %v2286
      %2296 = vmatprep.subr.bf16.mxu0 0
      %2297 = vmatpush1.bf16.msra.mxu0 0
      %2298 = vmatprep.subr.bf16.mxu0 0
      %2299 = vmatpush1.bf16.msra.mxu0 0
      %2300 = vmatprep.subr.bf16.mxu0 0
      %2301 = vmatpush1.bf16.msra.mxu0 0
      %2302 = vmatprep.subr.bf16.mxu0 0
      %2303 = vmatpush1.bf16.msra.mxu0 0
      %2304 = vmatprep.subr.bf16.mxu0 0
      %2305 = vmatpush1.bf16.msra.mxu0 0
      %2306 = vmatprep.subr.bf16.mxu0 0
      %2307 = vmatpush1.bf16.msra.mxu0 0
      %2308 = vmatprep.subr.bf16.mxu0 0
      %2309 = vmatpush1.bf16.msra.mxu0 0
      %2310 = vmatprep.subr.bf16.mxu0 0
      %2311 = vmatpush1.bf16.msra.mxu0 0
      %2312 = vmatprep.subr.bf16.mxu0 0
      %2313 = vmatpush1.bf16.msra.mxu0 0
      %2314 = vmatprep.subr.bf16.mxu0 0
      %2315 = vmatpush1.bf16.msra.mxu0 0
      %2316 = vmatprep.subr.bf16.mxu0 0
      %2317 = vmatpush1.bf16.msra.mxu0 0
      %2318 = vmatprep.subr.bf16.mxu0 0
      %2319 = vmatpush1.bf16.msra.mxu0 0
      %2320 = vmatprep.subr.bf16.mxu0 0
      %2321 = vmatpush1.bf16.msra.mxu0 0
      %2322 = vmatprep.subr.bf16.mxu0 0
      %2323 = vmatpush1.bf16.msra.mxu0 0
      %2324 = vmatprep.mubr.bf16.mxu0 0
      %2325 = vmatmul.mubr.bf16.gmra.mrb[0].mxu0 %v2290
      %v2326 = vpop.f32.mrb[0].mxu0
      %v2327 = vadd.f32 0.0, %v2326
      %v2328 = vpop.f32.mrb[0].mxu0
      %v2329 = vpop.f32.mrb[0].mxu0
      %v2330 = vpop.f32.mrb[0].mxu0
      %2331 = vdwg.mxu0
      %v2332 = vadd.f32 %v2261, %v2327
      %s2333 = scalar_lea.vmem %s165, 16
      %v2334 = vld [vmem:[%s2333] sm:$0x3]
      %v2335 = vld [vmem:[%s568] sm:$0xf]
      %v2336 = vld [vmem:[%s568 + $0x4] sm:$0xf]
      %v2337 = vld [vmem:[%s568 + $0x8] sm:$0xf]
      %v2338 = vld [vmem:[%s568 + $0xc] sm:$0xf]
      %v2343 = vunpack.c.l.b16 %v2335
      %v2344 = vunpack.c.l.b16 %v2336
      %v2345 = vunpack.c.l.b16 %v2337
      %v2346 = vunpack.c.l.b16 %v2338
      %v2347 = vpack.c.b16 %v2344, %v2343
      %v2348 = vpack.c.b16 %v2346, %v2345
      %v2352 = vsel %vm197, %v2334, 0
      %2354 = vmatprep.subr.bf16.mxu0 0
      %2355 = vmatpush1.bf16.msra.mxu0 %v2347
      %2356 = vmatprep.subr.bf16.mxu0 0
      %2357 = vmatpush1.bf16.msra.mxu0 %v2348
      %2358 = vmatprep.subr.bf16.mxu0 0
      %2359 = vmatpush1.bf16.msra.mxu0 0
      %2360 = vmatprep.subr.bf16.mxu0 0
      %2361 = vmatpush1.bf16.msra.mxu0 0
      %2362 = vmatprep.subr.bf16.mxu0 0
      %2363 = vmatpush1.bf16.msra.mxu0 0
      %2364 = vmatprep.subr.bf16.mxu0 0
      %2365 = vmatpush1.bf16.msra.mxu0 0
      %2366 = vmatprep.subr.bf16.mxu0 0
      %2367 = vmatpush1.bf16.msra.mxu0 0
      %2368 = vmatprep.subr.bf16.mxu0 0
      %2369 = vmatpush1.bf16.msra.mxu0 0
      %2370 = vmatprep.subr.bf16.mxu0 0
      %2371 = vmatpush1.bf16.msra.mxu0 0
      %2372 = vmatprep.subr.bf16.mxu0 0
      %2373 = vmatpush1.bf16.msra.mxu0 0
      %2374 = vmatprep.subr.bf16.mxu0 0
      %2375 = vmatpush1.bf16.msra.mxu0 0
      %2376 = vmatprep.subr.bf16.mxu0 0
      %2377 = vmatpush1.bf16.msra.mxu0 0
      %2378 = vmatprep.subr.bf16.mxu0 0
      %2379 = vmatpush1.bf16.msra.mxu0 0
      %2380 = vmatprep.subr.bf16.mxu0 0
      %2381 = vmatpush1.bf16.msra.mxu0 0
      %2382 = vmatprep.subr.bf16.mxu0 0
      %2383 = vmatpush1.bf16.msra.mxu0 0
      %2384 = vmatprep.subr.bf16.mxu0 0
      %2385 = vmatpush1.bf16.msra.mxu0 0
      %2386 = vmatprep.mubr.bf16.mxu0 0
      %2387 = vmatmul.mubr.bf16.gmra.mrb[0].mxu0 %v2352
      %v2388 = vpop.f32.mrb[0].mxu0
      %v2389 = vadd.f32 0.0, %v2388
      %v2390 = vpop.f32.mrb[0].mxu0
      %v2391 = vpop.f32.mrb[0].mxu0
      %v2392 = vpop.f32.mrb[0].mxu0
      %2393 = vdwg.mxu0
      %v2394 = vadd.f32 %v2332, %v2389
      %s2395 = scalar_lea.vmem %s165, 36
      %v2396 = vld [vmem:[%s2395] sm:$0x3]
      %v2397 = vld [vmem:[%s631] sm:$0xf]
      %v2398 = vld [vmem:[%s631 + $0x4] sm:$0xf]
      %v2399 = vld [vmem:[%s631 + $0x8] sm:$0xf]
      %v2400 = vld [vmem:[%s631 + $0xc] sm:$0xf]
      %v2405 = vunpack.c.l.b16 %v2397
      %v2406 = vunpack.c.l.b16 %v2398
      %v2407 = vunpack.c.l.b16 %v2399
      %v2408 = vunpack.c.l.b16 %v2400
      %v2409 = vpack.c.b16 %v2406, %v2405
      %v2410 = vpack.c.b16 %v2408, %v2407
      %v2414 = vsel %vm197, %v2396, 0
      %2416 = vmatprep.subr.bf16.mxu0 0
      %2417 = vmatpush1.bf16.msra.mxu0 %v2409
      %2418 = vmatprep.subr.bf16.mxu0 0
      %2419 = vmatpush1.bf16.msra.mxu0 %v2410
      %2420 = vmatprep.subr.bf16.mxu0 0
      %2421 = vmatpush1.bf16.msra.mxu0 0
      %2422 = vmatprep.subr.bf16.mxu0 0
      %2423 = vmatpush1.bf16.msra.mxu0 0
      %2424 = vmatprep.subr.bf16.mxu0 0
      %2425 = vmatpush1.bf16.msra.mxu0 0
      %2426 = vmatprep.subr.bf16.mxu0 0
      %2427 = vmatpush1.bf16.msra.mxu0 0
      %2428 = vmatprep.subr.bf16.mxu0 0
      %2429 = vmatpush1.bf16.msra.mxu0 0
      %2430 = vmatprep.subr.bf16.mxu0 0
      %2431 = vmatpush1.bf16.msra.mxu0 0
      %2432 = vmatprep.subr.bf16.mxu0 0
      %2433 = vmatpush1.bf16.msra.mxu0 0
      %2434 = vmatprep.subr.bf16.mxu0 0
      %2435 = vmatpush1.bf16.msra.mxu0 0
      %2436 = vmatprep.subr.bf16.mxu0 0
      %2437 = vmatpush1.bf16.msra.mxu0 0
      %2438 = vmatprep.subr.bf16.mxu0 0
      %2439 = vmatpush1.bf16.msra.mxu0 0
      %2440 = vmatprep.subr.bf16.mxu0 0
      %2441 = vmatpush1.bf16.msra.mxu0 0
      %2442 = vmatprep.subr.bf16.mxu0 0
      %2443 = vmatpush1.bf16.msra.mxu0 0
      %2444 = vmatprep.subr.bf16.mxu0 0
      %2445 = vmatpush1.bf16.msra.mxu0 0
      %2446 = vmatprep.subr.bf16.mxu0 0
      %2447 = vmatpush1.bf16.msra.mxu0 0
      %2448 = vmatprep.mubr.bf16.mxu0 0
      %2449 = vmatmul.mubr.bf16.gmra.mrb[0].mxu0 %v2414
      %v2450 = vpop.f32.mrb[0].mxu0
      %v2451 = vadd.f32 0.0, %v2450
      %v2452 = vpop.f32.mrb[0].mxu0
      %v2453 = vpop.f32.mrb[0].mxu0
      %v2454 = vpop.f32.mrb[0].mxu0
      %2455 = vdwg.mxu0
      %v2456 = vadd.f32 %v2394, %v2451
      %v2457 = vld [vmem:[%s2333] sm:$0x7]
      %v2458 = vld [vmem:[%s693] sm:$0xf]
      %v2459 = vld [vmem:[%s693 + $0x4] sm:$0xf]
      %v2460 = vld [vmem:[%s693 + $0x8] sm:$0xf]
      %v2461 = vld [vmem:[%s693 + $0xc] sm:$0xf]
      %v2463 = vunpack.c.l.b16 %v2457
      %v2464 = vpack.c.b16 %v2463, %v2463
      %v2466 = vshrl.u32 %v2464, 16
      %v2468 = vshll.u32 %v2464, 16
      %v2470 = vrot.slane %v2468, 1
      %v2471 = vor.u32 %v2466, %v2470
      %v2476 = vunpack.c.l.b16 %v2458
      %v2477 = vunpack.c.l.b16 %v2459
      %v2478 = vunpack.c.l.b16 %v2460
      %v2479 = vunpack.c.l.b16 %v2461
      %v2480 = vpack.c.b16 %v2477, %v2476
      %v2481 = vpack.c.b16 %v2479, %v2478
      %v2485 = vsel %vm197, %v2471, 0
      %2487 = vmatprep.subr.bf16.mxu0 0
      %2488 = vmatpush1.bf16.msra.mxu0 %v2480
      %2489 = vmatprep.subr.bf16.mxu0 0
      %2490 = vmatpush1.bf16.msra.mxu0 %v2481
      %2491 = vmatprep.subr.bf16.mxu0 0
      %2492 = vmatpush1.bf16.msra.mxu0 0
      %2493 = vmatprep.subr.bf16.mxu0 0
      %2494 = vmatpush1.bf16.msra.mxu0 0
      %2495 = vmatprep.subr.bf16.mxu0 0
      %2496 = vmatpush1.bf16.msra.mxu0 0
      %2497 = vmatprep.subr.bf16.mxu0 0
      %2498 = vmatpush1.bf16.msra.mxu0 0
      %2499 = vmatprep.subr.bf16.mxu0 0
      %2500 = vmatpush1.bf16.msra.mxu0 0
      %2501 = vmatprep.subr.bf16.mxu0 0
      %2502 = vmatpush1.bf16.msra.mxu0 0
      %2503 = vmatprep.subr.bf16.mxu0 0
      %2504 = vmatpush1.bf16.msra.mxu0 0
      %2505 = vmatprep.subr.bf16.mxu0 0
      %2506 = vmatpush1.bf16.msra.mxu0 0
      %2507 = vmatprep.subr.bf16.mxu0 0
      %2508 = vmatpush1.bf16.msra.mxu0 0
      %2509 = vmatprep.subr.bf16.mxu0 0
      %2510 = vmatpush1.bf16.msra.mxu0 0
      %2511 = vmatprep.subr.bf16.mxu0 0
      %2512 = vmatpush1.bf16.msra.mxu0 0
      %2513 = vmatprep.subr.bf16.mxu0 0
      %2514 = vmatpush1.bf16.msra.mxu0 0
      %2515 = vmatprep.subr.bf16.mxu0 0
      %2516 = vmatpush1.bf16.msra.mxu0 0
      %2517 = vmatprep.subr.bf16.mxu0 0
      %2518 = vmatpush1.bf16.msra.mxu0 0
      %2519 = vmatprep.mubr.bf16.mxu0 0
      %2520 = vmatmul.mubr.bf16.gmra.mrb[0].mxu0 %v2485
      %v2521 = vpop.f32.mrb[0].mxu0
      %v2522 = vadd.f32 0.0, %v2521
      %v2523 = vpop.f32.mrb[0].mxu0
      %v2524 = vpop.f32.mrb[0].mxu0
      %v2525 = vpop.f32.mrb[0].mxu0
      %2526 = vdwg.mxu0
      %v2527 = vadd.f32 %v2456, %v2522
      %v2528 = vadd.f32 %v2527, %v768
      %v2529 = vmax.f32 %v2528, 0.0
      %v2530 = vpack.c.bf16 %v2529, %v2529
      %s2531 = scalar_lea.vmem %s170, 6
      %2532 = vst.msk [vmem:[%s2531] sm:$0x3] %vm773, %v2530
      %p2533 = scmp.lt.s32.totalorder %s14, 1
      %s2534 = scalar_select %p2533, %s14, 1
      %s2535 = smul.addr %s2534, 4
      %s2536 = smul.addr %s2535, 2
      %s2537 = scalar_lea.vmem %s3, %s2536
      // Predicated region
      $region33: #{deeplabv3_forward.5} parent=31 // pred_check
        %p2538 = pneg %p100
      $region34: #{deeplabv3_forward.5} parent=31 // pred_check_branch
        %2540 = sbr.rel (%p2538) target = $region36
      $region35: #{deeplabv3_forward.5} parent=31 // pred_region
        _
      $region36: #{deeplabv3_forward.5} parent=31 // pred_fallthru
        _
    $region32: #{deeplabv3_forward.5} parent=5 // pred_fallthru
      _
    %p2541 = scmp.le.s32.totalorder 2, %s9
    // Predicated region
    $region37: #{deeplabv3_forward.5} parent=5 // pred_check
      %p2542 = pneg %p2541
    $region38: #{deeplabv3_forward.5} parent=5 // pred_check_branch
      %2544 = sbr.rel (%p2542) target = $region40
    $region39: #{deeplabv3_forward.5} parent=5 // pred_region
      %s2545 = ssub.s32 %s9, 2
      // Predicated region
      $region41: #{deeplabv3_forward.5} parent=39 // pred_check
        %p2546 = pneg %p106
      $region42: #{deeplabv3_forward.5} parent=39 // pred_check_branch
        %2548 = sbr.rel (%p2546) target = $region44
      $region43: #{deeplabv3_forward.5} parent=39 // pred_region
        %p2549 = scmp.lt.s32.totalorder %s15, 1
        %s2550 = scalar_select %p2549, %s15, 1
        %s2551 = smul.addr %s2550, 4
        %s2552 = smul.addr %s2551, 2
        %s2553 = scalar_lea.vmem %s3, %s2552
      $region44: #{deeplabv3_forward.5} parent=39 // pred_fallthru
        _
    $region40: #{deeplabv3_forward.5} parent=5 // pred_fallthru
      _
  $region6: #{deeplabv3_forward.5} parent=0 // loop_footer
    %s13 = sadd.s32 1, %s9
  $region7: #{deeplabv3_forward.5} parent=0 // loop_footer_branch
    %8 = sbr.rel target = $region3
  $region8: #{deeplabv3_forward.5} parent=0 // loop_exit
    _

// kernel: deeplabv3_forward.4
$region0: #{deeplabv3_forward.4}
  #allocation0 [shape = 'u32[]', space=smem, size = 0x4, offset = 0x4, fixed_abs, tag = 'smem constant byte address 0x4 - core index']
  #allocation1 [shape = 'u32[144,128]{1,0:T(1,128)}', space=vmem, size = 0x12000, scoped, tag = 'internal scratch']
  %s0 = inlined_call_operand.vmem [shape: bf16[2,4,9,9,4], index: 0, kind: input, shape index: {}]
  %s1 = inlined_call_operand.vmem [shape: bf16[9,4,32], index: 1, kind: input, shape index: {}]
  %s2 = inlined_call_operand.vmem [shape: f32[1,32], index: 2, kind: input, shape index: {}]
  %s3 = inlined_call_operand.vmem [shape: bf16[2,8,8,32], index: 3, kind: output, shape index: {}]
  %s4 = sld [smem:[#allocation0]]
  $region45: #{deeplabv3_forward.4} parent=0
    _
  %s6 = ssub.s32 1, %s4
  %s7 = scalar_select 0, %s6, %s4
  loop: start=0, step=1, limit=4
  $region2: #{deeplabv3_forward.4} parent=0 // loop_pre_header
    _
  $region3: #{deeplabv3_forward.4} parent=0 // loop_header
    %s9 = sphi 0, %s13
    %p10 = scmp.ge.s32.totalorder %s9, 4
    %s19 = sphi 0, %s21
    %s22 = sphi 0, %s19
    %s23 = sphi 0, %s22
    %s39 = sphi 0, %s23
    %s43 = sphi 0, %s43
    %s45 = sphi 0, %s43
    %s46 = sphi 0, %s45
    %s60 = sphi 0, %s46
    %s64 = sphi 0, %s64
    %s66 = sphi 0, %s64
    %s67 = sphi 0, %s66
    %s81 = sphi 0, %s67
    %s87 = sphi 0, %s89
    %s90 = sphi 0, %s87
    %s91 = sphi 0, %s90
    %s107 = sphi 0, %s91
  $region4: #{deeplabv3_forward.4} parent=0 // loop_header_branch
    %12 = sbr.rel (%p10) target = $region8
  $region5: #{deeplabv3_forward.4} parent=0 // loop_body
    %s14 = ssub.s32 %s9, 1
    %s15 = ssub.s32 %s9, 2
    %s16 = sadd.s32 %s9, 1
    %s17 = ssub.s32 %s9, %s16
    %p18 = scmp.eq.s32.totalorder %s17, 0
    %s20 = sadd.s32 %s19, 1
    %s21 = scalar_select %p18, %s19, %s20
    %p24 = pneg %p18
    %p25 = scmp.eq.s32.totalorder %s9, 1
    %p26 = por %p24, %p25
    %p27 = scmp.ne.s32.totalorder %s19, %s22
    %p28 = scmp.eq.s32.totalorder %s9, 0
    %p29 = por %p27, %p28
    %p30 = scmp.ne.s32.totalorder %s19, %s22
    %p31 = scmp.eq.s32.totalorder %s14, 1
    %p32 = por %p30, %p31
    %p33 = scmp.ne.s32.totalorder %s22, %s23
    %p34 = scmp.eq.s32.totalorder %s14, 0
    %p35 = por %p33, %p34
    %p36 = scmp.ne.s32.totalorder %s22, %s23
    %p37 = scmp.eq.s32.totalorder %s15, 1
    %p38 = por %p36, %p37
    %p40 = scmp.ne.s32.totalorder %s23, %s39
    %p41 = scmp.eq.s32.totalorder %s15, 0
    %p42 = por %p40, %p41
    %s44 = sadd.s32 %s43, 1
    %p47 = scmp.eq.s32.totalorder %s9, 1
    %p48 = scmp.ne.s32.totalorder %s43, %s45
    %p49 = scmp.eq.s32.totalorder %s9, 0
    %p50 = por %p48, %p49
    %p51 = scmp.ne.s32.totalorder %s43, %s45
    %p52 = scmp.eq.s32.totalorder %s14, 1
    %p53 = por %p51, %p52
    %p54 = scmp.ne.s32.totalorder %s45, %s46
    %p55 = scmp.eq.s32.totalorder %s14, 0
    %p56 = por %p54, %p55
    %p57 = scmp.ne.s32.totalorder %s45, %s46
    %p58 = scmp.eq.s32.totalorder %s15, 1
    %p59 = por %p57, %p58
    %p61 = scmp.ne.s32.totalorder %s46, %s60
    %p62 = scmp.eq.s32.totalorder %s15, 0
    %p63 = por %p61, %p62
    %s65 = sadd.s32 %s64, 1
    %p68 = scmp.eq.s32.totalorder %s9, 1
    %p69 = scmp.ne.s32.totalorder %s64, %s66
    %p70 = scmp.eq.s32.totalorder %s9, 0
    %p71 = por %p69, %p70
    %p72 = scmp.ne.s32.totalorder %s64, %s66
    %p73 = scmp.eq.s32.totalorder %s14, 1
    %p74 = por %p72, %p73
    %p75 = scmp.ne.s32.totalorder %s66, %s67
    %p76 = scmp.eq.s32.totalorder %s14, 0
    %p77 = por %p75, %p76
    %p78 = scmp.ne.s32.totalorder %s66, %s67
    %p79 = scmp.eq.s32.totalorder %s15, 1
    %p80 = por %p78, %p79
    %p82 = scmp.ne.s32.totalorder %s67, %s81
    %p83 = scmp.eq.s32.totalorder %s15, 0
    %p84 = por %p82, %p83
    %s85 = ssub.s32 %s9, %s16
    %p86 = scmp.eq.s32.totalorder %s85, 0
    %s88 = sadd.s32 %s87, 1
    %s89 = scalar_select %p86, %s87, %s88
    %p92 = pneg %p86
    %p93 = scmp.eq.s32.totalorder %s9, 1
    %p94 = por %p92, %p93
    %p95 = scmp.ne.s32.totalorder %s87, %s90
    %p96 = scmp.eq.s32.totalorder %s9, 0
    %p97 = por %p95, %p96
    %p98 = scmp.ne.s32.totalorder %s87, %s90
    %p99 = scmp.eq.s32.totalorder %s14, 1
    %p100 = por %p98, %p99
    %p101 = scmp.ne.s32.totalorder %s90, %s91
    %p102 = scmp.eq.s32.totalorder %s14, 0
    %p103 = por %p101, %p102
    %p104 = scmp.ne.s32.totalorder %s90, %s91
    %p105 = scmp.eq.s32.totalorder %s15, 1
    %p106 = por %p104, %p105
    %p108 = scmp.ne.s32.totalorder %s91, %s107
    %p109 = scmp.eq.s32.totalorder %s15, 0
    %p110 = por %p108, %p109
    %p111 = scmp.le.s32.totalorder 1, %s9
    %p112 = scmp.lt.s32.totalorder %s9, 3
    %p113 = pnand %p111, %p112
    %p114 = pneg %p113
    // Predicated region
    $region9: #{deeplabv3_forward.4} parent=5 // pred_check
      _
    $region10: #{deeplabv3_forward.4} parent=5 // pred_check_branch
      %116 = sbr.rel (%p113) target = $region12
    $region11: #{deeplabv3_forward.4} parent=5 // pred_region
      %s117 = ssub.s32 %s9, 1
      // Predicated region
      $region13: #{deeplabv3_forward.4} parent=11 // pred_check
        %p118 = pneg %p56
      $region14: #{deeplabv3_forward.4} parent=11 // pred_check_branch
        %120 = sbr.rel (%p118) target = $region16
      $region15: #{deeplabv3_forward.4} parent=11 // pred_region
        _
      $region16: #{deeplabv3_forward.4} parent=11 // pred_fallthru
        _
      // Predicated region
      $region17: #{deeplabv3_forward.4} parent=11 // pred_check
        %p121 = pneg %p77
      $region18: #{deeplabv3_forward.4} parent=11 // pred_check_branch
        %123 = sbr.rel (%p121) target = $region20
      $region19: #{deeplabv3_forward.4} parent=11 // pred_region
        _
      $region20: #{deeplabv3_forward.4} parent=11 // pred_fallthru
        _
    $region12: #{deeplabv3_forward.4} parent=5 // pred_fallthru
      _
    %p124 = scmp.lt.s32.totalorder %s9, 2
    // Predicated region
    $region21: #{deeplabv3_forward.4} parent=5 // pred_check
      %p125 = pneg %p124
    $region22: #{deeplabv3_forward.4} parent=5 // pred_check_branch
      %127 = sbr.rel (%p125) target = $region24
    $region23: #{deeplabv3_forward.4} parent=5 // pred_region
      // Predicated region
      $region25: #{deeplabv3_forward.4} parent=23 // pred_check
        %p128 = pneg %p29
      $region26: #{deeplabv3_forward.4} parent=23 // pred_check_branch
        %130 = sbr.rel (%p128) target = $region28
      $region27: #{deeplabv3_forward.4} parent=23 // pred_region
        %p131 = scmp.lt.s32.totalorder %s9, 1
        %s132 = scalar_select %p131, %s9, 1
        %s133 = smul.addr %s132, 72
        %s134 = smul.addr %s133, 4
        %s135 = scalar_lea.vmem %s0, %s134
      $region28: #{deeplabv3_forward.4} parent=23 // pred_fallthru
        _
    $region24: #{deeplabv3_forward.4} parent=5 // pred_fallthru
      _
    %p136 = scmp.le.s32.totalorder 1, %s9
    %p137 = scmp.lt.s32.totalorder %s9, 3
    %p138 = pnand %p136, %p137
    %p139 = pneg %p138
    // Predicated region
    $region29: #{deeplabv3_forward.4} parent=5 // pred_check
      _
    $region30: #{deeplabv3_forward.4} parent=5 // pred_check_branch
      %141 = sbr.rel (%p138) target = $region32
    $region31: #{deeplabv3_forward.4} parent=5 // pred_region
      %s142 = ssub.s32 %s9, 1
      %p143 = scmp.lt.s32.totalorder %s14, 1
      %s144 = scalar_select %p143, %s14, 1
      %s145 = smul.addr %s144, 72
      %s146 = smul.addr %s145, 4
      %s147 = scalar_lea.vmem %s0, %s146
      %p148 = pneg %p35
      %p149 = pneg %p32
      %p150 = pneg %p56
      %p151 = pneg %p53
      %p152 = pneg %p77
      %p153 = pneg %p74
      %p154 = pneg %p103
      %p155 = pneg %p100
      %p156 = scmp.lt.s32.totalorder %s14, 1
      %s157 = scalar_select %p156, %s14, 1
      %s158 = smul.addr %s157, 8
      %s159 = smul.addr %s158, 4
      %s160 = scalar_lea.vmem %s3, %s159
      %p161 = scmp.lt.s32.totalorder %s14, 1
      %s162 = scalar_select %p161, %s14, 1
      %s163 = smul.addr %s162, 72
      %s164 = smul.addr %s163, 4
      %s165 = scalar_lea.vmem %s0, %s164
      %p166 = scmp.lt.s32.totalorder %s14, 1
      %s167 = scalar_select %p166, %s14, 1
      %s168 = smul.addr %s167, 8
      %s169 = smul.addr %s168, 4
      %s170 = scalar_lea.vmem %s3, %s169
      %v172 = vld [vmem:[%s2] sm:$0x1]
      %v173 = vld [vmem:[%s165] sm:$0xf]
      %v174 = vld [vmem:[%s1] sm:$0x3]
      %s175 = scalar_lea.vmem %s165, 72
      %v176 = vld [vmem:[%s175] sm:$0xf]
      %s177 = scalar_lea.vmem %s1, 2
      %v178 = vld [vmem:[%s177] sm:$0x3]
      %vm179 = vcmask 31744
      %v181 = vsel %vm179, %v176, 0
      %vm183 = vcmask 1041408
      %v185 = vsel %vm183, %v178, 0
      %187 = vmatprep.subr.bf16.mxu0 0
      %188 = vmatpush1.bf16.msra.mxu0 %v185
      %189 = vmatprep.subr.bf16.mxu0 0
      %190 = vmatpush1.bf16.msra.mxu0 0
      %191 = vmatprep.subr.bf16.mxu0 0
      %192 = vmatpush1.bf16.msra.mxu0 0
      %193 = vmatprep.subr.bf16.mxu0 0
      %194 = vmatpush1.bf16.msra.mxu0 0
      %195 = vmatprep.subr.bf16.mxu0 0
      %196 = vmatpush1.bf16.msra.mxu0 0
      %197 = vmatprep.subr.bf16.mxu0 0
      %198 = vmatpush1.bf16.msra.mxu0 0
      %199 = vmatprep.subr.bf16.mxu0 0
      %200 = vmatpush1.bf16.msra.mxu0 0
      %201 = vmatprep.subr.bf16.mxu0 0
      %202 = vmatpush1.bf16.msra.mxu0 0
      %203 = vmatprep.subr.bf16.mxu0 0
      %204 = vmatpush1.bf16.msra.mxu0 0
      %205 = vmatprep.subr.bf16.mxu0 0
      %206 = vmatpush1.bf16.msra.mxu0 0
      %207 = vmatprep.subr.bf16.mxu0 0
      %208 = vmatpush1.bf16.msra.mxu0 0
      %209 = vmatprep.subr.bf16.mxu0 0
      %210 = vmatpush1.bf16.msra.mxu0 0
      %211 = vmatprep.subr.bf16.mxu0 0
      %212 = vmatpush1.bf16.msra.mxu0 0
      %213 = vmatprep.subr.bf16.mxu0 0
      %214 = vmatpush1.bf16.msra.mxu0 0
      %215 = vmatprep.subr.bf16.mxu0 0
      %216 = vmatpush1.bf16.msra.mxu0 0
      %217 = vmatprep.subr.bf16.mxu0 0
      %218 = vmatpush1.bf16.msra.mxu0 0
      %219 = vmatprep.mubr.bf16.mxu0 0
      %220 = vmatmul.mubr.bf16.gmra.mrb[0].mxu0 %v181
      %v221 = vpop.f32.mrb[0].mxu0
      %v222 = vadd.f32 0.0, %v221
      %v223 = vpop.f32.mrb[0].mxu0
      %v224 = vpop.f32.mrb[0].mxu0
      %v225 = vpop.f32.mrb[0].mxu0
      %226 = vdwg.mxu0
      %v228 = vsel %vm179, %v173, 0
      %v231 = vsel %vm183, %v174, 0
      %233 = vmatprep.subr.bf16.mxu0 0
      %234 = vmatpush1.bf16.msra.mxu0 %v231
      %235 = vmatprep.subr.bf16.mxu0 0
      %236 = vmatpush1.bf16.msra.mxu0 0
      %237 = vmatprep.subr.bf16.mxu0 0
      %238 = vmatpush1.bf16.msra.mxu0 0
      %239 = vmatprep.subr.bf16.mxu0 0
      %240 = vmatpush1.bf16.msra.mxu0 0
      %241 = vmatprep.subr.bf16.mxu0 0
      %242 = vmatpush1.bf16.msra.mxu0 0
      %243 = vmatprep.subr.bf16.mxu0 0
      %244 = vmatpush1.bf16.msra.mxu0 0
      %245 = vmatprep.subr.bf16.mxu0 0
      %246 = vmatpush1.bf16.msra.mxu0 0
      %247 = vmatprep.subr.bf16.mxu0 0
      %248 = vmatpush1.bf16.msra.mxu0 0
      %249 = vmatprep.subr.bf16.mxu0 0
      %250 = vmatpush1.bf16.msra.mxu0 0
      %251 = vmatprep.subr.bf16.mxu0 0
      %252 = vmatpush1.bf16.msra.mxu0 0
      %253 = vmatprep.subr.bf16.mxu0 0
      %254 = vmatpush1.bf16.msra.mxu0 0
      %255 = vmatprep.subr.bf16.mxu0 0
      %256 = vmatpush1.bf16.msra.mxu0 0
      %257 = vmatprep.subr.bf16.mxu0 0
      %258 = vmatpush1.bf16.msra.mxu0 0
      %259 = vmatprep.subr.bf16.mxu0 0
      %260 = vmatpush1.bf16.msra.mxu0 0
      %261 = vmatprep.subr.bf16.mxu0 0
      %262 = vmatpush1.bf16.msra.mxu0 0
      %263 = vmatprep.subr.bf16.mxu0 0
      %264 = vmatpush1.bf16.msra.mxu0 0
      %265 = vmatprep.mubr.bf16.mxu0 0
      %266 = vmatmul.mubr.bf16.gmra.mrb[0].mxu0 %v228
      %v267 = vpop.f32.mrb[0].mxu0
      %v268 = vadd.f32 %v222, %v267
      %v269 = vpop.f32.mrb[0].mxu0
      %v270 = vpop.f32.mrb[0].mxu0
      %v271 = vpop.f32.mrb[0].mxu0
      %272 = vdwg.mxu0
      %v273 = vld [vmem:[%s165] sm:$0xf]
      %v274 = vld [vmem:[%s165 + $0x4] sm:$0x1]
      %s275 = scalar_lea.vmem %s1, 4
      %v276 = vld [vmem:[%s275] sm:$0x3]
      %v279 = vunpack.c.l.b16 %v273
      %v280 = vunpack.c.l.b16 %v274
      %v281 = vpack.c.b16 %v280, %v279
      %v283 = vshrl.u32 %v281, 16
      %v285 = vshll.u32 %v281, 16
      %v287 = vrot.slane %v285, 1
      %v288 = vor.u32 %v283, %v287
      %v290 = vsel %vm179, %v288, 0
      %v293 = vsel %vm183, %v276, 0
      %295 = vmatprep.subr.bf16.mxu0 0
      %296 = vmatpush1.bf16.msra.mxu0 %v293
      %297 = vmatprep.subr.bf16.mxu0 0
      %298 = vmatpush1.bf16.msra.mxu0 0
      %299 = vmatprep.subr.bf16.mxu0 0
      %300 = vmatpush1.bf16.msra.mxu0 0
      %301 = vmatprep.subr.bf16.mxu0 0
      %302 = vmatpush1.bf16.msra.mxu0 0
      %303 = vmatprep.subr.bf16.mxu0 0
      %304 = vmatpush1.bf16.msra.mxu0 0
      %305 = vmatprep.subr.bf16.mxu0 0
      %306 = vmatpush1.bf16.msra.mxu0 0
      %307 = vmatprep.subr.bf16.mxu0 0
      %308 = vmatpush1.bf16.msra.mxu0 0
      %309 = vmatprep.subr.bf16.mxu0 0
      %310 = vmatpush1.bf16.msra.mxu0 0
      %311 = vmatprep.subr.bf16.mxu0 0
      %312 = vmatpush1.bf16.msra.mxu0 0
      %313 = vmatprep.subr.bf16.mxu0 0
      %314 = vmatpush1.bf16.msra.mxu0 0
      %315 = vmatprep.subr.bf16.mxu0 0
      %316 = vmatpush1.bf16.msra.mxu0 0
      %317 = vmatprep.subr.bf16.mxu0 0
      %318 = vmatpush1.bf16.msra.mxu0 0
      %319 = vmatprep.subr.bf16.mxu0 0
      %320 = vmatpush1.bf16.msra.mxu0 0
      %321 = vmatprep.subr.bf16.mxu0 0
      %322 = vmatpush1.bf16.msra.mxu0 0
      %323 = vmatprep.subr.bf16.mxu0 0
      %324 = vmatpush1.bf16.msra.mxu0 0
      %325 = vmatprep.subr.bf16.mxu0 0
      %326 = vmatpush1.bf16.msra.mxu0 0
      %327 = vmatprep.mubr.bf16.mxu0 0
      %328 = vmatmul.mubr.bf16.gmra.mrb[0].mxu0 %v290
      %v329 = vpop.f32.mrb[0].mxu0
      %v330 = vadd.f32 0.0, %v329
      %v331 = vpop.f32.mrb[0].mxu0
      %v332 = vpop.f32.mrb[0].mxu0
      %v333 = vpop.f32.mrb[0].mxu0
      %334 = vdwg.mxu0
      %v335 = vadd.f32 %v268, %v330
      %s336 = scalar_lea.vmem %s165, 144
      %v337 = vld [vmem:[%s336] sm:$0xf]
      %s338 = scalar_lea.vmem %s1, 6
      %v339 = vld [vmem:[%s338] sm:$0x3]
      %v341 = vsel %vm179, %v337, 0
      %v344 = vsel %vm183, %v339, 0
      %346 = vmatprep.subr.bf16.mxu0 0
      %347 = vmatpush1.bf16.msra.mxu0 %v344
      %348 = vmatprep.subr.bf16.mxu0 0
      %349 = vmatpush1.bf16.msra.mxu0 0
      %350 = vmatprep.subr.bf16.mxu0 0
      %351 = vmatpush1.bf16.msra.mxu0 0
      %352 = vmatprep.subr.bf16.mxu0 0
      %353 = vmatpush1.bf16.msra.mxu0 0
      %354 = vmatprep.subr.bf16.mxu0 0
      %355 = vmatpush1.bf16.msra.mxu0 0
      %356 = vmatprep.subr.bf16.mxu0 0
      %357 = vmatpush1.bf16.msra.mxu0 0
      %358 = vmatprep.subr.bf16.mxu0 0
      %359 = vmatpush1.bf16.msra.mxu0 0
      %360 = vmatprep.subr.bf16.mxu0 0
      %361 = vmatpush1.bf16.msra.mxu0 0
      %362 = vmatprep.subr.bf16.mxu0 0
      %363 = vmatpush1.bf16.msra.mxu0 0
      %364 = vmatprep.subr.bf16.mxu0 0
      %365 = vmatpush1.bf16.msra.mxu0 0
      %366 = vmatprep.subr.bf16.mxu0 0
      %367 = vmatpush1.bf16.msra.mxu0 0
      %368 = vmatprep.subr.bf16.mxu0 0
      %369 = vmatpush1.bf16.msra.mxu0 0
      %370 = vmatprep.subr.bf16.mxu0 0
      %371 = vmatpush1.bf16.msra.mxu0 0
      %372 = vmatprep.subr.bf16.mxu0 0
      %373 = vmatpush1.bf16.msra.mxu0 0
      %374 = vmatprep.subr.bf16.mxu0 0
      %375 = vmatpush1.bf16.msra.mxu0 0
      %376 = vmatprep.subr.bf16.mxu0 0
      %377 = vmatpush1.bf16.msra.mxu0 0
      %378 = vmatprep.mubr.bf16.mxu0 0
      %379 = vmatmul.mubr.bf16.gmra.mrb[0].mxu0 %v341
      %v380 = vpop.f32.mrb[0].mxu0
      %v381 = vadd.f32 0.0, %v380
      %v382 = vpop.f32.mrb[0].mxu0
      %v383 = vpop.f32.mrb[0].mxu0
      %v384 = vpop.f32.mrb[0].mxu0
      %385 = vdwg.mxu0
      %v386 = vadd.f32 %v335, %v381
      %s387 = scalar_lea.vmem %s165, 216
      %v388 = vld [vmem:[%s387] sm:$0xf]
      %s389 = scalar_lea.vmem %s1, 8
      %v390 = vld [vmem:[%s389] sm:$0x3]
      %v392 = vsel %vm179, %v388, 0
      %v395 = vsel %vm183, %v390, 0
      %397 = vmatprep.subr.bf16.mxu0 0
      %398 = vmatpush1.bf16.msra.mxu0 %v395
      %399 = vmatprep.subr.bf16.mxu0 0
      %400 = vmatpush1.bf16.msra.mxu0 0
      %401 = vmatprep.subr.bf16.mxu0 0
      %402 = vmatpush1.bf16.msra.mxu0 0
      %403 = vmatprep.subr.bf16.mxu0 0
      %404 = vmatpush1.bf16.msra.mxu0 0
      %405 = vmatprep.subr.bf16.mxu0 0
      %406 = vmatpush1.bf16.msra.mxu0 0
      %407 = vmatprep.subr.bf16.mxu0 0
      %408 = vmatpush1.bf16.msra.mxu0 0
      %409 = vmatprep.subr.bf16.mxu0 0
      %410 = vmatpush1.bf16.msra.mxu0 0
      %411 = vmatprep.subr.bf16.mxu0 0
      %412 = vmatpush1.bf16.msra.mxu0 0
      %413 = vmatprep.subr.bf16.mxu0 0
      %414 = vmatpush1.bf16.msra.mxu0 0
      %415 = vmatprep.subr.bf16.mxu0 0
      %416 = vmatpush1.bf16.msra.mxu0 0
      %417 = vmatprep.subr.bf16.mxu0 0
      %418 = vmatpush1.bf16.msra.mxu0 0
      %419 = vmatprep.subr.bf16.mxu0 0
      %420 = vmatpush1.bf16.msra.mxu0 0
      %421 = vmatprep.subr.bf16.mxu0 0
      %422 = vmatpush1.bf16.msra.mxu0 0
      %423 = vmatprep.subr.bf16.mxu0 0
      %424 = vmatpush1.bf16.msra.mxu0 0
      %425 = vmatprep.subr.bf16.mxu0 0
      %426 = vmatpush1.bf16.msra.mxu0 0
      %427 = vmatprep.subr.bf16.mxu0 0
      %428 = vmatpush1.bf16.msra.mxu0 0
      %429 = vmatprep.mubr.bf16.mxu0 0
      %430 = vmatmul.mubr.bf16.gmra.mrb[0].mxu0 %v392
      %v431 = vpop.f32.mrb[0].mxu0
      %v432 = vadd.f32 0.0, %v431
      %v433 = vpop.f32.mrb[0].mxu0
      %v434 = vpop.f32.mrb[0].mxu0
      %v435 = vpop.f32.mrb[0].mxu0
      %436 = vdwg.mxu0
      %v437 = vadd.f32 %v386, %v432
      %v438 = vld [vmem:[%s336] sm:$0xf]
      %v439 = vld [vmem:[%s336 + $0x4] sm:$0x1]
      %s440 = scalar_lea.vmem %s1, 10
      %v441 = vld [vmem:[%s440] sm:$0x3]
      %v444 = vunpack.c.l.b16 %v438
      %v445 = vunpack.c.l.b16 %v439
      %v446 = vpack.c.b16 %v445, %v444
      %v448 = vshrl.u32 %v446, 16
      %v450 = vshll.u32 %v446, 16
      %v452 = vrot.slane %v450, 1
      %v453 = vor.u32 %v448, %v452
      %v455 = vsel %vm179, %v453, 0
      %v458 = vsel %vm183, %v441, 0
      %460 = vmatprep.subr.bf16.mxu0 0
      %461 = vmatpush1.bf16.msra.mxu0 %v458
      %462 = vmatprep.subr.bf16.mxu0 0
      %463 = vmatpush1.bf16.msra.mxu0 0
      %464 = vmatprep.subr.bf16.mxu0 0
      %465 = vmatpush1.bf16.msra.mxu0 0
      %466 = vmatprep.subr.bf16.mxu0 0
      %467 = vmatpush1.bf16.msra.mxu0 0
      %468 = vmatprep.subr.bf16.mxu0 0
      %469 = vmatpush1.bf16.msra.mxu0 0
      %470 = vmatprep.subr.bf16.mxu0 0
      %471 = vmatpush1.bf16.msra.mxu0 0
      %472 = vmatprep.subr.bf16.mxu0 0
      %473 = vmatpush1.bf16.msra.mxu0 0
      %474 = vmatprep.subr.bf16.mxu0 0
      %475 = vmatpush1.bf16.msra.mxu0 0
      %476 = vmatprep.subr.bf16.mxu0 0
      %477 = vmatpush1.bf16.msra.mxu0 0
      %478 = vmatprep.subr.bf16.mxu0 0
      %479 = vmatpush1.bf16.msra.mxu0 0
      %480 = vmatprep.subr.bf16.mxu0 0
      %481 = vmatpush1.bf16.msra.mxu0 0
      %482 = vmatprep.subr.bf16.mxu0 0
      %483 = vmatpush1.bf16.msra.mxu0 0
      %484 = vmatprep.subr.bf16.mxu0 0
      %485 = vmatpush1.bf16.msra.mxu0 0
      %486 = vmatprep.subr.bf16.mxu0 0
      %487 = vmatpush1.bf16.msra.mxu0 0
      %488 = vmatprep.subr.bf16.mxu0 0
      %489 = vmatpush1.bf16.msra.mxu0 0
      %490 = vmatprep.subr.bf16.mxu0 0
      %491 = vmatpush1.bf16.msra.mxu0 0
      %492 = vmatprep.mubr.bf16.mxu0 0
      %493 = vmatmul.mubr.bf16.gmra.mrb[0].mxu0 %v455
      %v494 = vpop.f32.mrb[0].mxu0
      %v495 = vadd.f32 0.0, %v494
      %v496 = vpop.f32.mrb[0].mxu0
      %v497 = vpop.f32.mrb[0].mxu0
      %v498 = vpop.f32.mrb[0].mxu0
      %499 = vdwg.mxu0
      %v500 = vadd.f32 %v437, %v495
      %s501 = scalar_lea.vmem %s165, 8
      %v502 = vld [vmem:[%s501] sm:$0xf]
      %s503 = scalar_lea.vmem %s1, 12
      %v504 = vld [vmem:[%s503] sm:$0x3]
      %v506 = vsel %vm179, %v502, 0
      %v509 = vsel %vm183, %v504, 0
      %511 = vmatprep.subr.bf16.mxu0 0
      %512 = vmatpush1.bf16.msra.mxu0 %v509
      %513 = vmatprep.subr.bf16.mxu0 0
      %514 = vmatpush1.bf16.msra.mxu0 0
      %515 = vmatprep.subr.bf16.mxu0 0
      %516 = vmatpush1.bf16.msra.mxu0 0
      %517 = vmatprep.subr.bf16.mxu0 0
      %518 = vmatpush1.bf16.msra.mxu0 0
      %519 = vmatprep.subr.bf16.mxu0 0
      %520 = vmatpush1.bf16.msra.mxu0 0
      %521 = vmatprep.subr.bf16.mxu0 0
      %522 = vmatpush1.bf16.msra.mxu0 0
      %523 = vmatprep.subr.bf16.mxu0 0
      %524 = vmatpush1.bf16.msra.mxu0 0
      %525 = vmatprep.subr.bf16.mxu0 0
      %526 = vmatpush1.bf16.msra.mxu0 0
      %527 = vmatprep.subr.bf16.mxu0 0
      %528 = vmatpush1.bf16.msra.mxu0 0
      %529 = vmatprep.subr.bf16.mxu0 0
      %530 = vmatpush1.bf16.msra.mxu0 0
      %531 = vmatprep.subr.bf16.mxu0 0
      %532 = vmatpush1.bf16.msra.mxu0 0
      %533 = vmatprep.subr.bf16.mxu0 0
      %534 = vmatpush1.bf16.msra.mxu0 0
      %535 = vmatprep.subr.bf16.mxu0 0
      %536 = vmatpush1.bf16.msra.mxu0 0
      %537 = vmatprep.subr.bf16.mxu0 0
      %538 = vmatpush1.bf16.msra.mxu0 0
      %539 = vmatprep.subr.bf16.mxu0 0
      %540 = vmatpush1.bf16.msra.mxu0 0
      %541 = vmatprep.subr.bf16.mxu0 0
      %542 = vmatpush1.bf16.msra.mxu0 0
      %543 = vmatprep.mubr.bf16.mxu0 0
      %544 = vmatmul.mubr.bf16.gmra.mrb[0].mxu0 %v506
      %v545 = vpop.f32.mrb[0].mxu0
      %v546 = vadd.f32 0.0, %v545
      %v547 = vpop.f32.mrb[0].mxu0
      %v548 = vpop.f32.mrb[0].mxu0
      %v549 = vpop.f32.mrb[0].mxu0
      %550 = vdwg.mxu0
      %v551 = vadd.f32 %v500, %v546
      %s552 = scalar_lea.vmem %s165, 80
      %v553 = vld [vmem:[%s552] sm:$0xf]
      %s554 = scalar_lea.vmem %s1, 14
      %v555 = vld [vmem:[%s554] sm:$0x3]
      %v557 = vsel %vm179, %v553, 0
      %v560 = vsel %vm183, %v555, 0
      %562 = vmatprep.subr.bf16.mxu0 0
      %563 = vmatpush1.bf16.msra.mxu0 %v560
      %564 = vmatprep.subr.bf16.mxu0 0
      %565 = vmatpush1.bf16.msra.mxu0 0
      %566 = vmatprep.subr.bf16.mxu0 0
      %567 = vmatpush1.bf16.msra.mxu0 0
      %568 = vmatprep.subr.bf16.mxu0 0
      %569 = vmatpush1.bf16.msra.mxu0 0
      %570 = vmatprep.subr.bf16.mxu0 0
      %571 = vmatpush1.bf16.msra.mxu0 0
      %572 = vmatprep.subr.bf16.mxu0 0
      %573 = vmatpush1.bf16.msra.mxu0 0
      %574 = vmatprep.subr.bf16.mxu0 0
      %575 = vmatpush1.bf16.msra.mxu0 0
      %576 = vmatprep.subr.bf16.mxu0 0
      %577 = vmatpush1.bf16.msra.mxu0 0
      %578 = vmatprep.subr.bf16.mxu0 0
      %579 = vmatpush1.bf16.msra.mxu0 0
      %580 = vmatprep.subr.bf16.mxu0 0
      %581 = vmatpush1.bf16.msra.mxu0 0
      %582 = vmatprep.subr.bf16.mxu0 0
      %583 = vmatpush1.bf16.msra.mxu0 0
      %584 = vmatprep.subr.bf16.mxu0 0
      %585 = vmatpush1.bf16.msra.mxu0 0
      %586 = vmatprep.subr.bf16.mxu0 0
      %587 = vmatpush1.bf16.msra.mxu0 0
      %588 = vmatprep.subr.bf16.mxu0 0
      %589 = vmatpush1.bf16.msra.mxu0 0
      %590 = vmatprep.subr.bf16.mxu0 0
      %591 = vmatpush1.bf16.msra.mxu0 0
      %592 = vmatprep.subr.bf16.mxu0 0
      %593 = vmatpush1.bf16.msra.mxu0 0
      %594 = vmatprep.mubr.bf16.mxu0 0
      %595 = vmatmul.mubr.bf16.gmra.mrb[0].mxu0 %v557
      %v596 = vpop.f32.mrb[0].mxu0
      %v597 = vadd.f32 0.0, %v596
      %v598 = vpop.f32.mrb[0].mxu0
      %v599 = vpop.f32.mrb[0].mxu0
      %v600 = vpop.f32.mrb[0].mxu0
      %601 = vdwg.mxu0
      %v602 = vadd.f32 %v551, %v597
      %v603 = vld [vmem:[%s501] sm:$0xf]
      %v604 = vld [vmem:[%s501 + $0x4] sm:$0x1]
      %s605 = scalar_lea.vmem %s1, 16
      %v606 = vld [vmem:[%s605] sm:$0x3]
      %v609 = vunpack.c.l.b16 %v603
      %v610 = vunpack.c.l.b16 %v604
      %v611 = vpack.c.b16 %v610, %v609
      %v613 = vshrl.u32 %v611, 16
      %v615 = vshll.u32 %v611, 16
      %v617 = vrot.slane %v615, 1
      %v618 = vor.u32 %v613, %v617
      %v620 = vsel %vm179, %v618, 0
      %v623 = vsel %vm183, %v606, 0
      %625 = vmatprep.subr.bf16.mxu0 0
      %626 = vmatpush1.bf16.msra.mxu0 %v623
      %627 = vmatprep.subr.bf16.mxu0 0
      %628 = vmatpush1.bf16.msra.mxu0 0
      %629 = vmatprep.subr.bf16.mxu0 0
      %630 = vmatpush1.bf16.msra.mxu0 0
      %631 = vmatprep.subr.bf16.mxu0 0
      %632 = vmatpush1.bf16.msra.mxu0 0
      %633 = vmatprep.subr.bf16.mxu0 0
      %634 = vmatpush1.bf16.msra.mxu0 0
      %635 = vmatprep.subr.bf16.mxu0 0
      %636 = vmatpush1.bf16.msra.mxu0 0
      %637 = vmatprep.subr.bf16.mxu0 0
      %638 = vmatpush1.bf16.msra.mxu0 0
      %639 = vmatprep.subr.bf16.mxu0 0
      %640 = vmatpush1.bf16.msra.mxu0 0
      %641 = vmatprep.subr.bf16.mxu0 0
      %642 = vmatpush1.bf16.msra.mxu0 0
      %643 = vmatprep.subr.bf16.mxu0 0
      %644 = vmatpush1.bf16.msra.mxu0 0
      %645 = vmatprep.subr.bf16.mxu0 0
      %646 = vmatpush1.bf16.msra.mxu0 0
      %647 = vmatprep.subr.bf16.mxu0 0
      %648 = vmatpush1.bf16.msra.mxu0 0
      %649 = vmatprep.subr.bf16.mxu0 0
      %650 = vmatpush1.bf16.msra.mxu0 0
      %651 = vmatprep.subr.bf16.mxu0 0
      %652 = vmatpush1.bf16.msra.mxu0 0
      %653 = vmatprep.subr.bf16.mxu0 0
      %654 = vmatpush1.bf16.msra.mxu0 0
      %655 = vmatprep.subr.bf16.mxu0 0
      %656 = vmatpush1.bf16.msra.mxu0 0
      %657 = vmatprep.mubr.bf16.mxu0 0
      %658 = vmatmul.mubr.bf16.gmra.mrb[0].mxu0 %v620
      %v659 = vpop.f32.mrb[0].mxu0
      %v660 = vadd.f32 0.0, %v659
      %v661 = vpop.f32.mrb[0].mxu0
      %v662 = vpop.f32.mrb[0].mxu0
      %v663 = vpop.f32.mrb[0].mxu0
      %664 = vdwg.mxu0
      %v665 = vadd.f32 %v602, %v660
      %v667 = vlaneseq
      %v668 = vshrl.u32 %v667, 7
      %v669 = vsub.s32 0, %v668
      %v670 = vrot.slane %v172, %v669
      %v672 = vadd.f32 %v665, %v670
      %v673 = vmax.f32 %v672, 0.0
      %v674 = vpack.c.bf16 %v673, %v673
      %vm675 = vcmask 257024
      %676 = vst.msk [vmem:[%s170] sm:$0xf] %vm675, %v674
      %v677 = vld [vmem:[%s501] sm:$0xf]
      %v678 = vld [vmem:[%s1] sm:$0x3]
      %v679 = vld [vmem:[%s552] sm:$0xf]
      %v680 = vld [vmem:[%s177] sm:$0x3]
      %v682 = vsel %vm179, %v679, 0
      %v685 = vsel %vm183, %v680, 0
      %687 = vmatprep.subr.bf16.mxu0 0
      %688 = vmatpush1.bf16.msra.mxu0 %v685
      %689 = vmatprep.subr.bf16.mxu0 0
      %690 = vmatpush1.bf16.msra.mxu0 0
      %691 = vmatprep.subr.bf16.mxu0 0
      %692 = vmatpush1.bf16.msra.mxu0 0
      %693 = vmatprep.subr.bf16.mxu0 0
      %694 = vmatpush1.bf16.msra.mxu0 0
      %695 = vmatprep.subr.bf16.mxu0 0
      %696 = vmatpush1.bf16.msra.mxu0 0
      %697 = vmatprep.subr.bf16.mxu0 0
      %698 = vmatpush1.bf16.msra.mxu0 0
      %699 = vmatprep.subr.bf16.mxu0 0
      %700 = vmatpush1.bf16.msra.mxu0 0
      %701 = vmatprep.subr.bf16.mxu0 0
      %702 = vmatpush1.bf16.msra.mxu0 0
      %703 = vmatprep.subr.bf16.mxu0 0
      %704 = vmatpush1.bf16.msra.mxu0 0
      %705 = vmatprep.subr.bf16.mxu0 0
      %706 = vmatpush1.bf16.msra.mxu0 0
      %707 = vmatprep.subr.bf16.mxu0 0
      %708 = vmatpush1.bf16.msra.mxu0 0
      %709 = vmatprep.subr.bf16.mxu0 0
      %710 = vmatpush1.bf16.msra.mxu0 0
      %711 = vmatprep.subr.bf16.mxu0 0
      %712 = vmatpush1.bf16.msra.mxu0 0
      %713 = vmatprep.subr.bf16.mxu0 0
      %714 = vmatpush1.bf16.msra.mxu0 0
      %715 = vmatprep.subr.bf16.mxu0 0
      %716 = vmatpush1.bf16.msra.mxu0 0
      %717 = vmatprep.subr.bf16.mxu0 0
      %718 = vmatpush1.bf16.msra.mxu0 0
      %719 = vmatprep.mubr.bf16.mxu0 0
      %720 = vmatmul.mubr.bf16.gmra.mrb[0].mxu0 %v682
      %v721 = vpop.f32.mrb[0].mxu0
      %v722 = vadd.f32 0.0, %v721
      %v723 = vpop.f32.mrb[0].mxu0
      %v724 = vpop.f32.mrb[0].mxu0
      %v725 = vpop.f32.mrb[0].mxu0
      %726 = vdwg.mxu0
      %v728 = vsel %vm179, %v677, 0
      %v731 = vsel %vm183, %v678, 0
      %733 = vmatprep.subr.bf16.mxu0 0
      %734 = vmatpush1.bf16.msra.mxu0 %v731
      %735 = vmatprep.subr.bf16.mxu0 0
      %736 = vmatpush1.bf16.msra.mxu0 0
      %737 = vmatprep.subr.bf16.mxu0 0
      %738 = vmatpush1.bf16.msra.mxu0 0
      %739 = vmatprep.subr.bf16.mxu0 0
      %740 = vmatpush1.bf16.msra.mxu0 0
      %741 = vmatprep.subr.bf16.mxu0 0
      %742 = vmatpush1.bf16.msra.mxu0 0
      %743 = vmatprep.subr.bf16.mxu0 0
      %744 = vmatpush1.bf16.msra.mxu0 0
      %745 = vmatprep.subr.bf16.mxu0 0
      %746 = vmatpush1.bf16.msra.mxu0 0
      %747 = vmatprep.subr.bf16.mxu0 0
      %748 = vmatpush1.bf16.msra.mxu0 0
      %749 = vmatprep.subr.bf16.mxu0 0
      %750 = vmatpush1.bf16.msra.mxu0 0
      %751 = vmatprep.subr.bf16.mxu0 0
      %752 = vmatpush1.bf16.msra.mxu0 0
      %753 = vmatprep.subr.bf16.mxu0 0
      %754 = vmatpush1.bf16.msra.mxu0 0
      %755 = vmatprep.subr.bf16.mxu0 0
      %756 = vmatpush1.bf16.msra.mxu0 0
      %757 = vmatprep.subr.bf16.mxu0 0
      %758 = vmatpush1.bf16.msra.mxu0 0
      %759 = vmatprep.subr.bf16.mxu0 0
      %760 = vmatpush1.bf16.msra.mxu0 0
      %761 = vmatprep.subr.bf16.mxu0 0
      %762 = vmatpush1.bf16.msra.mxu0 0
      %763 = vmatprep.subr.bf16.mxu0 0
      %764 = vmatpush1.bf16.msra.mxu0 0
      %765 = vmatprep.mubr.bf16.mxu0 0
      %766 = vmatmul.mubr.bf16.gmra.mrb[0].mxu0 %v728
      %v767 = vpop.f32.mrb[0].mxu0
      %v768 = vadd.f32 %v722, %v767
      %v769 = vpop.f32.mrb[0].mxu0
      %v770 = vpop.f32.mrb[0].mxu0
      %v771 = vpop.f32.mrb[0].mxu0
      %772 = vdwg.mxu0
      %v773 = vld [vmem:[%s501] sm:$0xf]
      %v774 = vld [vmem:[%s501 + $0x4] sm:$0x1]
      %v775 = vld [vmem:[%s275] sm:$0x3]
      %v778 = vunpack.c.l.b16 %v773
      %v779 = vunpack.c.l.b16 %v774
      %v780 = vpack.c.b16 %v779, %v778
      %v782 = vshrl.u32 %v780, 16
      %v784 = vshll.u32 %v780, 16
      %v786 = vrot.slane %v784, 1
      %v787 = vor.u32 %v782, %v786
      %v789 = vsel %vm179, %v787, 0
      %v792 = vsel %vm183, %v775, 0
      %794 = vmatprep.subr.bf16.mxu0 0
      %795 = vmatpush1.bf16.msra.mxu0 %v792
      %796 = vmatprep.subr.bf16.mxu0 0
      %797 = vmatpush1.bf16.msra.mxu0 0
      %798 = vmatprep.subr.bf16.mxu0 0
      %799 = vmatpush1.bf16.msra.mxu0 0
      %800 = vmatprep.subr.bf16.mxu0 0
      %801 = vmatpush1.bf16.msra.mxu0 0
      %802 = vmatprep.subr.bf16.mxu0 0
      %803 = vmatpush1.bf16.msra.mxu0 0
      %804 = vmatprep.subr.bf16.mxu0 0
      %805 = vmatpush1.bf16.msra.mxu0 0
      %806 = vmatprep.subr.bf16.mxu0 0
      %807 = vmatpush1.bf16.msra.mxu0 0
      %808 = vmatprep.subr.bf16.mxu0 0
      %809 = vmatpush1.bf16.msra.mxu0 0
      %810 = vmatprep.subr.bf16.mxu0 0
      %811 = vmatpush1.bf16.msra.mxu0 0
      %812 = vmatprep.subr.bf16.mxu0 0
      %813 = vmatpush1.bf16.msra.mxu0 0
      %814 = vmatprep.subr.bf16.mxu0 0
      %815 = vmatpush1.bf16.msra.mxu0 0
      %816 = vmatprep.subr.bf16.mxu0 0
      %817 = vmatpush1.bf16.msra.mxu0 0
      %818 = vmatprep.subr.bf16.mxu0 0
      %819 = vmatpush1.bf16.msra.mxu0 0
      %820 = vmatprep.subr.bf16.mxu0 0
      %821 = vmatpush1.bf16.msra.mxu0 0
      %822 = vmatprep.subr.bf16.mxu0 0
      %823 = vmatpush1.bf16.msra.mxu0 0
      %824 = vmatprep.subr.bf16.mxu0 0
      %825 = vmatpush1.bf16.msra.mxu0 0
      %826 = vmatprep.mubr.bf16.mxu0 0
      %827 = vmatmul.mubr.bf16.gmra.mrb[0].mxu0 %v789
      %v828 = vpop.f32.mrb[0].mxu0
      %v829 = vadd.f32 0.0, %v828
      %v830 = vpop.f32.mrb[0].mxu0
      %v831 = vpop.f32.mrb[0].mxu0
      %v832 = vpop.f32.mrb[0].mxu0
      %833 = vdwg.mxu0
      %v834 = vadd.f32 %v768, %v829
      %s835 = scalar_lea.vmem %s165, 152
      %v836 = vld [vmem:[%s835] sm:$0xf]
      %v837 = vld [vmem:[%s338] sm:$0x3]
      %v839 = vsel %vm179, %v836, 0
      %v842 = vsel %vm183, %v837, 0
      %844 = vmatprep.subr.bf16.mxu0 0
      %845 = vmatpush1.bf16.msra.mxu0 %v842
      %846 = vmatprep.subr.bf16.mxu0 0
      %847 = vmatpush1.bf16.msra.mxu0 0
      %848 = vmatprep.subr.bf16.mxu0 0
      %849 = vmatpush1.bf16.msra.mxu0 0
      %850 = vmatprep.subr.bf16.mxu0 0
      %851 = vmatpush1.bf16.msra.mxu0 0
      %852 = vmatprep.subr.bf16.mxu0 0
      %853 = vmatpush1.bf16.msra.mxu0 0
      %854 = vmatprep.subr.bf16.mxu0 0
      %855 = vmatpush1.bf16.msra.mxu0 0
      %856 = vmatprep.subr.bf16.mxu0 0
      %857 = vmatpush1.bf16.msra.mxu0 0
      %858 = vmatprep.subr.bf16.mxu0 0
      %859 = vmatpush1.bf16.msra.mxu0 0
      %860 = vmatprep.subr.bf16.mxu0 0
      %861 = vmatpush1.bf16.msra.mxu0 0
      %862 = vmatprep.subr.bf16.mxu0 0
      %863 = vmatpush1.bf16.msra.mxu0 0
      %864 = vmatprep.subr.bf16.mxu0 0
      %865 = vmatpush1.bf16.msra.mxu0 0
      %866 = vmatprep.subr.bf16.mxu0 0
      %867 = vmatpush1.bf16.msra.mxu0 0
      %868 = vmatprep.subr.bf16.mxu0 0
      %869 = vmatpush1.bf16.msra.mxu0 0
      %870 = vmatprep.subr.bf16.mxu0 0
      %871 = vmatpush1.bf16.msra.mxu0 0
      %872 = vmatprep.subr.bf16.mxu0 0
      %873 = vmatpush1.bf16.msra.mxu0 0
      %874 = vmatprep.subr.bf16.mxu0 0
      %875 = vmatpush1.bf16.msra.mxu0 0
      %876 = vmatprep.mubr.bf16.mxu0 0
      %877 = vmatmul.mubr.bf16.gmra.mrb[0].mxu0 %v839
      %v878 = vpop.f32.mrb[0].mxu0
      %v879 = vadd.f32 0.0, %v878
      %v880 = vpop.f32.mrb[0].mxu0
      %v881 = vpop.f32.mrb[0].mxu0
      %v882 = vpop.f32.mrb[0].mxu0
      %883 = vdwg.mxu0
      %v884 = vadd.f32 %v834, %v879
      %s885 = scalar_lea.vmem %s165, 224
      %v886 = vld [vmem:[%s885] sm:$0xf]
      %v887 = vld [vmem:[%s389] sm:$0x3]
      %v889 = vsel %vm179, %v886, 0
      %v892 = vsel %vm183, %v887, 0
      %894 = vmatprep.subr.bf16.mxu0 0
      %895 = vmatpush1.bf16.msra.mxu0 %v892
      %896 = vmatprep.subr.bf16.mxu0 0
      %897 = vmatpush1.bf16.msra.mxu0 0
      %898 = vmatprep.subr.bf16.mxu0 0
      %899 = vmatpush1.bf16.msra.mxu0 0
      %900 = vmatprep.subr.bf16.mxu0 0
      %901 = vmatpush1.bf16.msra.mxu0 0
      %902 = vmatprep.subr.bf16.mxu0 0
      %903 = vmatpush1.bf16.msra.mxu0 0
      %904 = vmatprep.subr.bf16.mxu0 0
      %905 = vmatpush1.bf16.msra.mxu0 0
      %906 = vmatprep.subr.bf16.mxu0 0
      %907 = vmatpush1.bf16.msra.mxu0 0
      %908 = vmatprep.subr.bf16.mxu0 0
      %909 = vmatpush1.bf16.msra.mxu0 0
      %910 = vmatprep.subr.bf16.mxu0 0
      %911 = vmatpush1.bf16.msra.mxu0 0
      %912 = vmatprep.subr.bf16.mxu0 0
      %913 = vmatpush1.bf16.msra.mxu0 0
      %914 = vmatprep.subr.bf16.mxu0 0
      %915 = vmatpush1.bf16.msra.mxu0 0
      %916 = vmatprep.subr.bf16.mxu0 0
      %917 = vmatpush1.bf16.msra.mxu0 0
      %918 = vmatprep.subr.bf16.mxu0 0
      %919 = vmatpush1.bf16.msra.mxu0 0
      %920 = vmatprep.subr.bf16.mxu0 0
      %921 = vmatpush1.bf16.msra.mxu0 0
      %922 = vmatprep.subr.bf16.mxu0 0
      %923 = vmatpush1.bf16.msra.mxu0 0
      %924 = vmatprep.subr.bf16.mxu0 0
      %925 = vmatpush1.bf16.msra.mxu0 0
      %926 = vmatprep.mubr.bf16.mxu0 0
      %927 = vmatmul.mubr.bf16.gmra.mrb[0].mxu0 %v889
      %v928 = vpop.f32.mrb[0].mxu0
      %v929 = vadd.f32 0.0, %v928
      %v930 = vpop.f32.mrb[0].mxu0
      %v931 = vpop.f32.mrb[0].mxu0
      %v932 = vpop.f32.mrb[0].mxu0
      %933 = vdwg.mxu0
      %v934 = vadd.f32 %v884, %v929
      %v935 = vld [vmem:[%s835] sm:$0xf]
      %v936 = vld [vmem:[%s835 + $0x4] sm:$0x1]
      %v937 = vld [vmem:[%s440] sm:$0x3]
      %v940 = vunpack.c.l.b16 %v935
      %v941 = vunpack.c.l.b16 %v936
      %v942 = vpack.c.b16 %v941, %v940
      %v944 = vshrl.u32 %v942, 16
      %v946 = vshll.u32 %v942, 16
      %v948 = vrot.slane %v946, 1
      %v949 = vor.u32 %v944, %v948
      %v951 = vsel %vm179, %v949, 0
      %v954 = vsel %vm183, %v937, 0
      %956 = vmatprep.subr.bf16.mxu0 0
      %957 = vmatpush1.bf16.msra.mxu0 %v954
      %958 = vmatprep.subr.bf16.mxu0 0
      %959 = vmatpush1.bf16.msra.mxu0 0
      %960 = vmatprep.subr.bf16.mxu0 0
      %961 = vmatpush1.bf16.msra.mxu0 0
      %962 = vmatprep.subr.bf16.mxu0 0
      %963 = vmatpush1.bf16.msra.mxu0 0
      %964 = vmatprep.subr.bf16.mxu0 0
      %965 = vmatpush1.bf16.msra.mxu0 0
      %966 = vmatprep.subr.bf16.mxu0 0
      %967 = vmatpush1.bf16.msra.mxu0 0
      %968 = vmatprep.subr.bf16.mxu0 0
      %969 = vmatpush1.bf16.msra.mxu0 0
      %970 = vmatprep.subr.bf16.mxu0 0
      %971 = vmatpush1.bf16.msra.mxu0 0
      %972 = vmatprep.subr.bf16.mxu0 0
      %973 = vmatpush1.bf16.msra.mxu0 0
      %974 = vmatprep.subr.bf16.mxu0 0
      %975 = vmatpush1.bf16.msra.mxu0 0
      %976 = vmatprep.subr.bf16.mxu0 0
      %977 = vmatpush1.bf16.msra.mxu0 0
      %978 = vmatprep.subr.bf16.mxu0 0
      %979 = vmatpush1.bf16.msra.mxu0 0
      %980 = vmatprep.subr.bf16.mxu0 0
      %981 = vmatpush1.bf16.msra.mxu0 0
      %982 = vmatprep.subr.bf16.mxu0 0
      %983 = vmatpush1.bf16.msra.mxu0 0
      %984 = vmatprep.subr.bf16.mxu0 0
      %985 = vmatpush1.bf16.msra.mxu0 0
      %986 = vmatprep.subr.bf16.mxu0 0
      %987 = vmatpush1.bf16.msra.mxu0 0
      %988 = vmatprep.mubr.bf16.mxu0 0
      %989 = vmatmul.mubr.bf16.gmra.mrb[0].mxu0 %v951
      %v990 = vpop.f32.mrb[0].mxu0
      %v991 = vadd.f32 0.0, %v990
      %v992 = vpop.f32.mrb[0].mxu0
      %v993 = vpop.f32.mrb[0].mxu0
      %v994 = vpop.f32.mrb[0].mxu0
      %995 = vdwg.mxu0
      %v996 = vadd.f32 %v934, %v991
      %s997 = scalar_lea.vmem %s165, 16
      %v998 = vld [vmem:[%s997] sm:$0xf]
      %v999 = vld [vmem:[%s503] sm:$0x3]
      %v1001 = vsel %vm179, %v998, 0
      %v1004 = vsel %vm183, %v999, 0
      %1006 = vmatprep.subr.bf16.mxu0 0
      %1007 = vmatpush1.bf16.msra.mxu0 %v1004
      %1008 = vmatprep.subr.bf16.mxu0 0
      %1009 = vmatpush1.bf16.msra.mxu0 0
      %1010 = vmatprep.subr.bf16.mxu0 0
      %1011 = vmatpush1.bf16.msra.mxu0 0
      %1012 = vmatprep.subr.bf16.mxu0 0
      %1013 = vmatpush1.bf16.msra.mxu0 0
      %1014 = vmatprep.subr.bf16.mxu0 0
      %1015 = vmatpush1.bf16.msra.mxu0 0
      %1016 = vmatprep.subr.bf16.mxu0 0
      %1017 = vmatpush1.bf16.msra.mxu0 0
      %1018 = vmatprep.subr.bf16.mxu0 0
      %1019 = vmatpush1.bf16.msra.mxu0 0
      %1020 = vmatprep.subr.bf16.mxu0 0
      %1021 = vmatpush1.bf16.msra.mxu0 0
      %1022 = vmatprep.subr.bf16.mxu0 0
      %1023 = vmatpush1.bf16.msra.mxu0 0
      %1024 = vmatprep.subr.bf16.mxu0 0
      %1025 = vmatpush1.bf16.msra.mxu0 0
      %1026 = vmatprep.subr.bf16.mxu0 0
      %1027 = vmatpush1.bf16.msra.mxu0 0
      %1028 = vmatprep.subr.bf16.mxu0 0
      %1029 = vmatpush1.bf16.msra.mxu0 0
      %1030 = vmatprep.subr.bf16.mxu0 0
      %1031 = vmatpush1.bf16.msra.mxu0 0
      %1032 = vmatprep.subr.bf16.mxu0 0
      %1033 = vmatpush1.bf16.msra.mxu0 0
      %1034 = vmatprep.subr.bf16.mxu0 0
      %1035 = vmatpush1.bf16.msra.mxu0 0
      %1036 = vmatprep.subr.bf16.mxu0 0
      %1037 = vmatpush1.bf16.msra.mxu0 0
      %1038 = vmatprep.mubr.bf16.mxu0 0
      %1039 = vmatmul.mubr.bf16.gmra.mrb[0].mxu0 %v1001
      %v1040 = vpop.f32.mrb[0].mxu0
      %v1041 = vadd.f32 0.0, %v1040
      %v1042 = vpop.f32.mrb[0].mxu0
      %v1043 = vpop.f32.mrb[0].mxu0
      %v1044 = vpop.f32.mrb[0].mxu0
      %1045 = vdwg.mxu0
      %v1046 = vadd.f32 %v996, %v1041
      %s1047 = scalar_lea.vmem %s165, 88
      %v1048 = vld [vmem:[%s1047] sm:$0xf]
      %v1049 = vld [vmem:[%s554] sm:$0x3]
      %v1051 = vsel %vm179, %v1048, 0
      %v1054 = vsel %vm183, %v1049, 0
      %1056 = vmatprep.subr.bf16.mxu0 0
      %1057 = vmatpush1.bf16.msra.mxu0 %v1054
      %1058 = vmatprep.subr.bf16.mxu0 0
      %1059 = vmatpush1.bf16.msra.mxu0 0
      %1060 = vmatprep.subr.bf16.mxu0 0
      %1061 = vmatpush1.bf16.msra.mxu0 0
      %1062 = vmatprep.subr.bf16.mxu0 0
      %1063 = vmatpush1.bf16.msra.mxu0 0
      %1064 = vmatprep.subr.bf16.mxu0 0
      %1065 = vmatpush1.bf16.msra.mxu0 0
      %1066 = vmatprep.subr.bf16.mxu0 0
      %1067 = vmatpush1.bf16.msra.mxu0 0
      %1068 = vmatprep.subr.bf16.mxu0 0
      %1069 = vmatpush1.bf16.msra.mxu0 0
      %1070 = vmatprep.subr.bf16.mxu0 0
      %1071 = vmatpush1.bf16.msra.mxu0 0
      %1072 = vmatprep.subr.bf16.mxu0 0
      %1073 = vmatpush1.bf16.msra.mxu0 0
      %1074 = vmatprep.subr.bf16.mxu0 0
      %1075 = vmatpush1.bf16.msra.mxu0 0
      %1076 = vmatprep.subr.bf16.mxu0 0
      %1077 = vmatpush1.bf16.msra.mxu0 0
      %1078 = vmatprep.subr.bf16.mxu0 0
      %1079 = vmatpush1.bf16.msra.mxu0 0
      %1080 = vmatprep.subr.bf16.mxu0 0
      %1081 = vmatpush1.bf16.msra.mxu0 0
      %1082 = vmatprep.subr.bf16.mxu0 0
      %1083 = vmatpush1.bf16.msra.mxu0 0
      %1084 = vmatprep.subr.bf16.mxu0 0
      %1085 = vmatpush1.bf16.msra.mxu0 0
      %1086 = vmatprep.subr.bf16.mxu0 0
      %1087 = vmatpush1.bf16.msra.mxu0 0
      %1088 = vmatprep.mubr.bf16.mxu0 0
      %1089 = vmatmul.mubr.bf16.gmra.mrb[0].mxu0 %v1051
      %v1090 = vpop.f32.mrb[0].mxu0
      %v1091 = vadd.f32 0.0, %v1090
      %v1092 = vpop.f32.mrb[0].mxu0
      %v1093 = vpop.f32.mrb[0].mxu0
      %v1094 = vpop.f32.mrb[0].mxu0
      %1095 = vdwg.mxu0
      %v1096 = vadd.f32 %v1046, %v1091
      %v1097 = vld [vmem:[%s997] sm:$0xf]
      %v1098 = vld [vmem:[%s997 + $0x4] sm:$0x1]
      %v1099 = vld [vmem:[%s605] sm:$0x3]
      %v1102 = vunpack.c.l.b16 %v1097
      %v1103 = vunpack.c.l.b16 %v1098
      %v1104 = vpack.c.b16 %v1103, %v1102
      %v1106 = vshrl.u32 %v1104, 16
      %v1108 = vshll.u32 %v1104, 16
      %v1110 = vrot.slane %v1108, 1
      %v1111 = vor.u32 %v1106, %v1110
      %v1113 = vsel %vm179, %v1111, 0
      %v1116 = vsel %vm183, %v1099, 0
      %1118 = vmatprep.subr.bf16.mxu0 0
      %1119 = vmatpush1.bf16.msra.mxu0 %v1116
      %1120 = vmatprep.subr.bf16.mxu0 0
      %1121 = vmatpush1.bf16.msra.mxu0 0
      %1122 = vmatprep.subr.bf16.mxu0 0
      %1123 = vmatpush1.bf16.msra.mxu0 0
      %1124 = vmatprep.subr.bf16.mxu0 0
      %1125 = vmatpush1.bf16.msra.mxu0 0
      %1126 = vmatprep.subr.bf16.mxu0 0
      %1127 = vmatpush1.bf16.msra.mxu0 0
      %1128 = vmatprep.subr.bf16.mxu0 0
      %1129 = vmatpush1.bf16.msra.mxu0 0
      %1130 = vmatprep.subr.bf16.mxu0 0
      %1131 = vmatpush1.bf16.msra.mxu0 0
      %1132 = vmatprep.subr.bf16.mxu0 0
      %1133 = vmatpush1.bf16.msra.mxu0 0
      %1134 = vmatprep.subr.bf16.mxu0 0
      %1135 = vmatpush1.bf16.msra.mxu0 0
      %1136 = vmatprep.subr.bf16.mxu0 0
      %1137 = vmatpush1.bf16.msra.mxu0 0
      %1138 = vmatprep.subr.bf16.mxu0 0
      %1139 = vmatpush1.bf16.msra.mxu0 0
      %1140 = vmatprep.subr.bf16.mxu0 0
      %1141 = vmatpush1.bf16.msra.mxu0 0
      %1142 = vmatprep.subr.bf16.mxu0 0
      %1143 = vmatpush1.bf16.msra.mxu0 0
      %1144 = vmatprep.subr.bf16.mxu0 0
      %1145 = vmatpush1.bf16.msra.mxu0 0
      %1146 = vmatprep.subr.bf16.mxu0 0
      %1147 = vmatpush1.bf16.msra.mxu0 0
      %1148 = vmatprep.subr.bf16.mxu0 0
      %1149 = vmatpush1.bf16.msra.mxu0 0
      %1150 = vmatprep.mubr.bf16.mxu0 0
      %1151 = vmatmul.mubr.bf16.gmra.mrb[0].mxu0 %v1113
      %v1152 = vpop.f32.mrb[0].mxu0
      %v1153 = vadd.f32 0.0, %v1152
      %v1154 = vpop.f32.mrb[0].mxu0
      %v1155 = vpop.f32.mrb[0].mxu0
      %v1156 = vpop.f32.mrb[0].mxu0
      %1157 = vdwg.mxu0
      %v1158 = vadd.f32 %v1096, %v1153
      %v1159 = vadd.f32 %v1158, %v670
      %v1160 = vmax.f32 %v1159, 0.0
      %v1161 = vpack.c.bf16 %v1160, %v1160
      %s1162 = scalar_lea.vmem %s170, 4
      %1163 = vst.msk [vmem:[%s1162] sm:$0xf] %vm675, %v1161
      %v1164 = vld [vmem:[%s997] sm:$0xf]
      %v1165 = vld [vmem:[%s1] sm:$0x3]
      %v1166 = vld [vmem:[%s1047] sm:$0xf]
      %v1167 = vld [vmem:[%s177] sm:$0x3]
      %v1169 = vsel %vm179, %v1166, 0
      %v1172 = vsel %vm183, %v1167, 0
      %1174 = vmatprep.subr.bf16.mxu0 0
      %1175 = vmatpush1.bf16.msra.mxu0 %v1172
      %1176 = vmatprep.subr.bf16.mxu0 0
      %1177 = vmatpush1.bf16.msra.mxu0 0
      %1178 = vmatprep.subr.bf16.mxu0 0
      %1179 = vmatpush1.bf16.msra.mxu0 0
      %1180 = vmatprep.subr.bf16.mxu0 0
      %1181 = vmatpush1.bf16.msra.mxu0 0
      %1182 = vmatprep.subr.bf16.mxu0 0
      %1183 = vmatpush1.bf16.msra.mxu0 0
      %1184 = vmatprep.subr.bf16.mxu0 0
      %1185 = vmatpush1.bf16.msra.mxu0 0
      %1186 = vmatprep.subr.bf16.mxu0 0
      %1187 = vmatpush1.bf16.msra.mxu0 0
      %1188 = vmatprep.subr.bf16.mxu0 0
      %1189 = vmatpush1.bf16.msra.mxu0 0
      %1190 = vmatprep.subr.bf16.mxu0 0
      %1191 = vmatpush1.bf16.msra.mxu0 0
      %1192 = vmatprep.subr.bf16.mxu0 0
      %1193 = vmatpush1.bf16.msra.mxu0 0
      %1194 = vmatprep.subr.bf16.mxu0 0
      %1195 = vmatpush1.bf16.msra.mxu0 0
      %1196 = vmatprep.subr.bf16.mxu0 0
      %1197 = vmatpush1.bf16.msra.mxu0 0
      %1198 = vmatprep.subr.bf16.mxu0 0
      %1199 = vmatpush1.bf16.msra.mxu0 0
      %1200 = vmatprep.subr.bf16.mxu0 0
      %1201 = vmatpush1.bf16.msra.mxu0 0
      %1202 = vmatprep.subr.bf16.mxu0 0
      %1203 = vmatpush1.bf16.msra.mxu0 0
      %1204 = vmatprep.subr.bf16.mxu0 0
      %1205 = vmatpush1.bf16.msra.mxu0 0
      %1206 = vmatprep.mubr.bf16.mxu0 0
      %1207 = vmatmul.mubr.bf16.gmra.mrb[0].mxu0 %v1169
      %v1208 = vpop.f32.mrb[0].mxu0
      %v1209 = vadd.f32 0.0, %v1208
      %v1210 = vpop.f32.mrb[0].mxu0
      %v1211 = vpop.f32.mrb[0].mxu0
      %v1212 = vpop.f32.mrb[0].mxu0
      %1213 = vdwg.mxu0
      %v1215 = vsel %vm179, %v1164, 0
      %v1218 = vsel %vm183, %v1165, 0
      %1220 = vmatprep.subr.bf16.mxu0 0
      %1221 = vmatpush1.bf16.msra.mxu0 %v1218
      %1222 = vmatprep.subr.bf16.mxu0 0
      %1223 = vmatpush1.bf16.msra.mxu0 0
      %1224 = vmatprep.subr.bf16.mxu0 0
      %1225 = vmatpush1.bf16.msra.mxu0 0
      %1226 = vmatprep.subr.bf16.mxu0 0
      %1227 = vmatpush1.bf16.msra.mxu0 0
      %1228 = vmatprep.subr.bf16.mxu0 0
      %1229 = vmatpush1.bf16.msra.mxu0 0
      %1230 = vmatprep.subr.bf16.mxu0 0
      %1231 = vmatpush1.bf16.msra.mxu0 0
      %1232 = vmatprep.subr.bf16.mxu0 0
      %1233 = vmatpush1.bf16.msra.mxu0 0
      %1234 = vmatprep.subr.bf16.mxu0 0
      %1235 = vmatpush1.bf16.msra.mxu0 0
      %1236 = vmatprep.subr.bf16.mxu0 0
      %1237 = vmatpush1.bf16.msra.mxu0 0
      %1238 = vmatprep.subr.bf16.mxu0 0
      %1239 = vmatpush1.bf16.msra.mxu0 0
      %1240 = vmatprep.subr.bf16.mxu0 0
      %1241 = vmatpush1.bf16.msra.mxu0 0
      %1242 = vmatprep.subr.bf16.mxu0 0
      %1243 = vmatpush1.bf16.msra.mxu0 0
      %1244 = vmatprep.subr.bf16.mxu0 0
      %1245 = vmatpush1.bf16.msra.mxu0 0
      %1246 = vmatprep.subr.bf16.mxu0 0
      %1247 = vmatpush1.bf16.msra.mxu0 0
      %1248 = vmatprep.subr.bf16.mxu0 0
      %1249 = vmatpush1.bf16.msra.mxu0 0
      %1250 = vmatprep.subr.bf16.mxu0 0
      %1251 = vmatpush1.bf16.msra.mxu0 0
      %1252 = vmatprep.mubr.bf16.mxu0 0
      %1253 = vmatmul.mubr.bf16.gmra.mrb[0].mxu0 %v1215
      %v1254 = vpop.f32.mrb[0].mxu0
      %v1255 = vadd.f32 %v1209, %v1254
      %v1256 = vpop.f32.mrb[0].mxu0
      %v1257 = vpop.f32.mrb[0].mxu0
      %v1258 = vpop.f32.mrb[0].mxu0
      %1259 = vdwg.mxu0
      %v1260 = vld [vmem:[%s997] sm:$0xf]
      %v1261 = vld [vmem:[%s997 + $0x4] sm:$0x1]
      %v1262 = vld [vmem:[%s275] sm:$0x3]
      %v1265 = vunpack.c.l.b16 %v1260
      %v1266 = vunpack.c.l.b16 %v1261
      %v1267 = vpack.c.b16 %v1266, %v1265
      %v1269 = vshrl.u32 %v1267, 16
      %v1271 = vshll.u32 %v1267, 16
      %v1273 = vrot.slane %v1271, 1
      %v1274 = vor.u32 %v1269, %v1273
      %v1276 = vsel %vm179, %v1274, 0
      %v1279 = vsel %vm183, %v1262, 0
      %1281 = vmatprep.subr.bf16.mxu0 0
      %1282 = vmatpush1.bf16.msra.mxu0 %v1279
      %1283 = vmatprep.subr.bf16.mxu0 0
      %1284 = vmatpush1.bf16.msra.mxu0 0
      %1285 = vmatprep.subr.bf16.mxu0 0
      %1286 = vmatpush1.bf16.msra.mxu0 0
      %1287 = vmatprep.subr.bf16.mxu0 0
      %1288 = vmatpush1.bf16.msra.mxu0 0
      %1289 = vmatprep.subr.bf16.mxu0 0
      %1290 = vmatpush1.bf16.msra.mxu0 0
      %1291 = vmatprep.subr.bf16.mxu0 0
      %1292 = vmatpush1.bf16.msra.mxu0 0
      %1293 = vmatprep.subr.bf16.mxu0 0
      %1294 = vmatpush1.bf16.msra.mxu0 0
      %1295 = vmatprep.subr.bf16.mxu0 0
      %1296 = vmatpush1.bf16.msra.mxu0 0
      %1297 = vmatprep.subr.bf16.mxu0 0
      %1298 = vmatpush1.bf16.msra.mxu0 0
      %1299 = vmatprep.subr.bf16.mxu0 0
      %1300 = vmatpush1.bf16.msra.mxu0 0
      %1301 = vmatprep.subr.bf16.mxu0 0
      %1302 = vmatpush1.bf16.msra.mxu0 0
      %1303 = vmatprep.subr.bf16.mxu0 0
      %1304 = vmatpush1.bf16.msra.mxu0 0
      %1305 = vmatprep.subr.bf16.mxu0 0
      %1306 = vmatpush1.bf16.msra.mxu0 0
      %1307 = vmatprep.subr.bf16.mxu0 0
      %1308 = vmatpush1.bf16.msra.mxu0 0
      %1309 = vmatprep.subr.bf16.mxu0 0
      %1310 = vmatpush1.bf16.msra.mxu0 0
      %1311 = vmatprep.subr.bf16.mxu0 0
      %1312 = vmatpush1.bf16.msra.mxu0 0
      %1313 = vmatprep.mubr.bf16.mxu0 0
      %1314 = vmatmul.mubr.bf16.gmra.mrb[0].mxu0 %v1276
      %v1315 = vpop.f32.mrb[0].mxu0
      %v1316 = vadd.f32 0.0, %v1315
      %v1317 = vpop.f32.mrb[0].mxu0
      %v1318 = vpop.f32.mrb[0].mxu0
      %v1319 = vpop.f32.mrb[0].mxu0
      %1320 = vdwg.mxu0
      %v1321 = vadd.f32 %v1255, %v1316
      %s1322 = scalar_lea.vmem %s165, 160
      %v1323 = vld [vmem:[%s1322] sm:$0xf]
      %v1324 = vld [vmem:[%s338] sm:$0x3]
      %v1326 = vsel %vm179, %v1323, 0
      %v1329 = vsel %vm183, %v1324, 0
      %1331 = vmatprep.subr.bf16.mxu0 0
      %1332 = vmatpush1.bf16.msra.mxu0 %v1329
      %1333 = vmatprep.subr.bf16.mxu0 0
      %1334 = vmatpush1.bf16.msra.mxu0 0
      %1335 = vmatprep.subr.bf16.mxu0 0
      %1336 = vmatpush1.bf16.msra.mxu0 0
      %1337 = vmatprep.subr.bf16.mxu0 0
      %1338 = vmatpush1.bf16.msra.mxu0 0
      %1339 = vmatprep.subr.bf16.mxu0 0
      %1340 = vmatpush1.bf16.msra.mxu0 0
      %1341 = vmatprep.subr.bf16.mxu0 0
      %1342 = vmatpush1.bf16.msra.mxu0 0
      %1343 = vmatprep.subr.bf16.mxu0 0
      %1344 = vmatpush1.bf16.msra.mxu0 0
      %1345 = vmatprep.subr.bf16.mxu0 0
      %1346 = vmatpush1.bf16.msra.mxu0 0
      %1347 = vmatprep.subr.bf16.mxu0 0
      %1348 = vmatpush1.bf16.msra.mxu0 0
      %1349 = vmatprep.subr.bf16.mxu0 0
      %1350 = vmatpush1.bf16.msra.mxu0 0
      %1351 = vmatprep.subr.bf16.mxu0 0
      %1352 = vmatpush1.bf16.msra.mxu0 0
      %1353 = vmatprep.subr.bf16.mxu0 0
      %1354 = vmatpush1.bf16.msra.mxu0 0
      %1355 = vmatprep.subr.bf16.mxu0 0
      %1356 = vmatpush1.bf16.msra.mxu0 0
      %1357 = vmatprep.subr.bf16.mxu0 0
      %1358 = vmatpush1.bf16.msra.mxu0 0
      %1359 = vmatprep.subr.bf16.mxu0 0
      %1360 = vmatpush1.bf16.msra.mxu0 0
      %1361 = vmatprep.subr.bf16.mxu0 0
      %1362 = vmatpush1.bf16.msra.mxu0 0
      %1363 = vmatprep.mubr.bf16.mxu0 0
      %1364 = vmatmul.mubr.bf16.gmra.mrb[0].mxu0 %v1326
      %v1365 = vpop.f32.mrb[0].mxu0
      %v1366 = vadd.f32 0.0, %v1365
      %v1367 = vpop.f32.mrb[0].mxu0
      %v1368 = vpop.f32.mrb[0].mxu0
      %v1369 = vpop.f32.mrb[0].mxu0
      %1370 = vdwg.mxu0
      %v1371 = vadd.f32 %v1321, %v1366
      %s1372 = scalar_lea.vmem %s165, 232
      %v1373 = vld [vmem:[%s1372] sm:$0xf]
      %v1374 = vld [vmem:[%s389] sm:$0x3]
      %v1376 = vsel %vm179, %v1373, 0
      %v1379 = vsel %vm183, %v1374, 0
      %1381 = vmatprep.subr.bf16.mxu0 0
      %1382 = vmatpush1.bf16.msra.mxu0 %v1379
      %1383 = vmatprep.subr.bf16.mxu0 0
      %1384 = vmatpush1.bf16.msra.mxu0 0
      %1385 = vmatprep.subr.bf16.mxu0 0
      %1386 = vmatpush1.bf16.msra.mxu0 0
      %1387 = vmatprep.subr.bf16.mxu0 0
      %1388 = vmatpush1.bf16.msra.mxu0 0
      %1389 = vmatprep.subr.bf16.mxu0 0
      %1390 = vmatpush1.bf16.msra.mxu0 0
      %1391 = vmatprep.subr.bf16.mxu0 0
      %1392 = vmatpush1.bf16.msra.mxu0 0
      %1393 = vmatprep.subr.bf16.mxu0 0
      %1394 = vmatpush1.bf16.msra.mxu0 0
      %1395 = vmatprep.subr.bf16.mxu0 0
      %1396 = vmatpush1.bf16.msra.mxu0 0
      %1397 = vmatprep.subr.bf16.mxu0 0
      %1398 = vmatpush1.bf16.msra.mxu0 0
      %1399 = vmatprep.subr.bf16.mxu0 0
      %1400 = vmatpush1.bf16.msra.mxu0 0
      %1401 = vmatprep.subr.bf16.mxu0 0
      %1402 = vmatpush1.bf16.msra.mxu0 0
      %1403 = vmatprep.subr.bf16.mxu0 0
      %1404 = vmatpush1.bf16.msra.mxu0 0
      %1405 = vmatprep.subr.bf16.mxu0 0
      %1406 = vmatpush1.bf16.msra.mxu0 0
      %1407 = vmatprep.subr.bf16.mxu0 0
      %1408 = vmatpush1.bf16.msra.mxu0 0
      %1409 = vmatprep.subr.bf16.mxu0 0
      %1410 = vmatpush1.bf16.msra.mxu0 0
      %1411 = vmatprep.subr.bf16.mxu0 0
      %1412 = vmatpush1.bf16.msra.mxu0 0
      %1413 = vmatprep.mubr.bf16.mxu0 0
      %1414 = vmatmul.mubr.bf16.gmra.mrb[0].mxu0 %v1376
      %v1415 = vpop.f32.mrb[0].mxu0
      %v1416 = vadd.f32 0.0, %v1415
      %v1417 = vpop.f32.mrb[0].mxu0
      %v1418 = vpop.f32.mrb[0].mxu0
      %v1419 = vpop.f32.mrb[0].mxu0
      %1420 = vdwg.mxu0
      %v1421 = vadd.f32 %v1371, %v1416
      %v1422 = vld [vmem:[%s1322] sm:$0xf]
      %v1423 = vld [vmem:[%s1322 + $0x4] sm:$0x1]
      %v1424 = vld [vmem:[%s440] sm:$0x3]
      %v1427 = vunpack.c.l.b16 %v1422
      %v1428 = vunpack.c.l.b16 %v1423
      %v1429 = vpack.c.b16 %v1428, %v1427
      %v1431 = vshrl.u32 %v1429, 16
      %v1433 = vshll.u32 %v1429, 16
      %v1435 = vrot.slane %v1433, 1
      %v1436 = vor.u32 %v1431, %v1435
      %v1438 = vsel %vm179, %v1436, 0
      %v1441 = vsel %vm183, %v1424, 0
      %1443 = vmatprep.subr.bf16.mxu0 0
      %1444 = vmatpush1.bf16.msra.mxu0 %v1441
      %1445 = vmatprep.subr.bf16.mxu0 0
      %1446 = vmatpush1.bf16.msra.mxu0 0
      %1447 = vmatprep.subr.bf16.mxu0 0
      %1448 = vmatpush1.bf16.msra.mxu0 0
      %1449 = vmatprep.subr.bf16.mxu0 0
      %1450 = vmatpush1.bf16.msra.mxu0 0
      %1451 = vmatprep.subr.bf16.mxu0 0
      %1452 = vmatpush1.bf16.msra.mxu0 0
      %1453 = vmatprep.subr.bf16.mxu0 0
      %1454 = vmatpush1.bf16.msra.mxu0 0
      %1455 = vmatprep.subr.bf16.mxu0 0
      %1456 = vmatpush1.bf16.msra.mxu0 0
      %1457 = vmatprep.subr.bf16.mxu0 0
      %1458 = vmatpush1.bf16.msra.mxu0 0
      %1459 = vmatprep.subr.bf16.mxu0 0
      %1460 = vmatpush1.bf16.msra.mxu0 0
      %1461 = vmatprep.subr.bf16.mxu0 0
      %1462 = vmatpush1.bf16.msra.mxu0 0
      %1463 = vmatprep.subr.bf16.mxu0 0
      %1464 = vmatpush1.bf16.msra.mxu0 0
      %1465 = vmatprep.subr.bf16.mxu0 0
      %1466 = vmatpush1.bf16.msra.mxu0 0
      %1467 = vmatprep.subr.bf16.mxu0 0
      %1468 = vmatpush1.bf16.msra.mxu0 0
      %1469 = vmatprep.subr.bf16.mxu0 0
      %1470 = vmatpush1.bf16.msra.mxu0 0
      %1471 = vmatprep.subr.bf16.mxu0 0
      %1472 = vmatpush1.bf16.msra.mxu0 0
      %1473 = vmatprep.subr.bf16.mxu0 0
      %1474 = vmatpush1.bf16.msra.mxu0 0
      %1475 = vmatprep.mubr.bf16.mxu0 0
      %1476 = vmatmul.mubr.bf16.gmra.mrb[0].mxu0 %v1438
      %v1477 = vpop.f32.mrb[0].mxu0
      %v1478 = vadd.f32 0.0, %v1477
      %v1479 = vpop.f32.mrb[0].mxu0
      %v1480 = vpop.f32.mrb[0].mxu0
      %v1481 = vpop.f32.mrb[0].mxu0
      %1482 = vdwg.mxu0
      %v1483 = vadd.f32 %v1421, %v1478
      %s1484 = scalar_lea.vmem %s165, 24
      %v1485 = vld [vmem:[%s1484] sm:$0xf]
      %v1486 = vld [vmem:[%s503] sm:$0x3]
      %v1488 = vsel %vm179, %v1485, 0
      %v1491 = vsel %vm183, %v1486, 0
      %1493 = vmatprep.subr.bf16.mxu0 0
      %1494 = vmatpush1.bf16.msra.mxu0 %v1491
      %1495 = vmatprep.subr.bf16.mxu0 0
      %1496 = vmatpush1.bf16.msra.mxu0 0
      %1497 = vmatprep.subr.bf16.mxu0 0
      %1498 = vmatpush1.bf16.msra.mxu0 0
      %1499 = vmatprep.subr.bf16.mxu0 0
      %1500 = vmatpush1.bf16.msra.mxu0 0
      %1501 = vmatprep.subr.bf16.mxu0 0
      %1502 = vmatpush1.bf16.msra.mxu0 0
      %1503 = vmatprep.subr.bf16.mxu0 0
      %1504 = vmatpush1.bf16.msra.mxu0 0
      %1505 = vmatprep.subr.bf16.mxu0 0
      %1506 = vmatpush1.bf16.msra.mxu0 0
      %1507 = vmatprep.subr.bf16.mxu0 0
      %1508 = vmatpush1.bf16.msra.mxu0 0
      %1509 = vmatprep.subr.bf16.mxu0 0
      %1510 = vmatpush1.bf16.msra.mxu0 0
      %1511 = vmatprep.subr.bf16.mxu0 0
      %1512 = vmatpush1.bf16.msra.mxu0 0
      %1513 = vmatprep.subr.bf16.mxu0 0
      %1514 = vmatpush1.bf16.msra.mxu0 0
      %1515 = vmatprep.subr.bf16.mxu0 0
      %1516 = vmatpush1.bf16.msra.mxu0 0
      %1517 = vmatprep.subr.bf16.mxu0 0
      %1518 = vmatpush1.bf16.msra.mxu0 0
      %1519 = vmatprep.subr.bf16.mxu0 0
      %1520 = vmatpush1.bf16.msra.mxu0 0
      %1521 = vmatprep.subr.bf16.mxu0 0
      %1522 = vmatpush1.bf16.msra.mxu0 0
      %1523 = vmatprep.subr.bf16.mxu0 0
      %1524 = vmatpush1.bf16.msra.mxu0 0
      %1525 = vmatprep.mubr.bf16.mxu0 0
      %1526 = vmatmul.mubr.bf16.gmra.mrb[0].mxu0 %v1488
      %v1527 = vpop.f32.mrb[0].mxu0
      %v1528 = vadd.f32 0.0, %v1527
      %v1529 = vpop.f32.mrb[0].mxu0
      %v1530 = vpop.f32.mrb[0].mxu0
      %v1531 = vpop.f32.mrb[0].mxu0
      %1532 = vdwg.mxu0
      %v1533 = vadd.f32 %v1483, %v1528
      %s1534 = scalar_lea.vmem %s165, 96
      %v1535 = vld [vmem:[%s1534] sm:$0xf]
      %v1536 = vld [vmem:[%s554] sm:$0x3]
      %v1538 = vsel %vm179, %v1535, 0
      %v1541 = vsel %vm183, %v1536, 0
      %1543 = vmatprep.subr.bf16.mxu0 0
      %1544 = vmatpush1.bf16.msra.mxu0 %v1541
      %1545 = vmatprep.subr.bf16.mxu0 0
      %1546 = vmatpush1.bf16.msra.mxu0 0
      %1547 = vmatprep.subr.bf16.mxu0 0
      %1548 = vmatpush1.bf16.msra.mxu0 0
      %1549 = vmatprep.subr.bf16.mxu0 0
      %1550 = vmatpush1.bf16.msra.mxu0 0
      %1551 = vmatprep.subr.bf16.mxu0 0
      %1552 = vmatpush1.bf16.msra.mxu0 0
      %1553 = vmatprep.subr.bf16.mxu0 0
      %1554 = vmatpush1.bf16.msra.mxu0 0
      %1555 = vmatprep.subr.bf16.mxu0 0
      %1556 = vmatpush1.bf16.msra.mxu0 0
      %1557 = vmatprep.subr.bf16.mxu0 0
      %1558 = vmatpush1.bf16.msra.mxu0 0
      %1559 = vmatprep.subr.bf16.mxu0 0
      %1560 = vmatpush1.bf16.msra.mxu0 0
      %1561 = vmatprep.subr.bf16.mxu0 0
      %1562 = vmatpush1.bf16.msra.mxu0 0
      %1563 = vmatprep.subr.bf16.mxu0 0
      %1564 = vmatpush1.bf16.msra.mxu0 0
      %1565 = vmatprep.subr.bf16.mxu0 0
      %1566 = vmatpush1.bf16.msra.mxu0 0
      %1567 = vmatprep.subr.bf16.mxu0 0
      %1568 = vmatpush1.bf16.msra.mxu0 0
      %1569 = vmatprep.subr.bf16.mxu0 0
      %1570 = vmatpush1.bf16.msra.mxu0 0
      %1571 = vmatprep.subr.bf16.mxu0 0
      %1572 = vmatpush1.bf16.msra.mxu0 0
      %1573 = vmatprep.subr.bf16.mxu0 0
      %1574 = vmatpush1.bf16.msra.mxu0 0
      %1575 = vmatprep.mubr.bf16.mxu0 0
      %1576 = vmatmul.mubr.bf16.gmra.mrb[0].mxu0 %v1538
      %v1577 = vpop.f32.mrb[0].mxu0
      %v1578 = vadd.f32 0.0, %v1577
      %v1579 = vpop.f32.mrb[0].mxu0
      %v1580 = vpop.f32.mrb[0].mxu0
      %v1581 = vpop.f32.mrb[0].mxu0
      %1582 = vdwg.mxu0
      %v1583 = vadd.f32 %v1533, %v1578
      %v1584 = vld [vmem:[%s1484] sm:$0xf]
      %v1585 = vld [vmem:[%s1484 + $0x4] sm:$0x1]
      %v1586 = vld [vmem:[%s605] sm:$0x3]
      %v1589 = vunpack.c.l.b16 %v1584
      %v1590 = vunpack.c.l.b16 %v1585
      %v1591 = vpack.c.b16 %v1590, %v1589
      %v1593 = vshrl.u32 %v1591, 16
      %v1595 = vshll.u32 %v1591, 16
      %v1597 = vrot.slane %v1595, 1
      %v1598 = vor.u32 %v1593, %v1597
      %v1600 = vsel %vm179, %v1598, 0
      %v1603 = vsel %vm183, %v1586, 0
      %1605 = vmatprep.subr.bf16.mxu0 0
      %1606 = vmatpush1.bf16.msra.mxu0 %v1603
      %1607 = vmatprep.subr.bf16.mxu0 0
      %1608 = vmatpush1.bf16.msra.mxu0 0
      %1609 = vmatprep.subr.bf16.mxu0 0
      %1610 = vmatpush1.bf16.msra.mxu0 0
      %1611 = vmatprep.subr.bf16.mxu0 0
      %1612 = vmatpush1.bf16.msra.mxu0 0
      %1613 = vmatprep.subr.bf16.mxu0 0
      %1614 = vmatpush1.bf16.msra.mxu0 0
      %1615 = vmatprep.subr.bf16.mxu0 0
      %1616 = vmatpush1.bf16.msra.mxu0 0
      %1617 = vmatprep.subr.bf16.mxu0 0
      %1618 = vmatpush1.bf16.msra.mxu0 0
      %1619 = vmatprep.subr.bf16.mxu0 0
      %1620 = vmatpush1.bf16.msra.mxu0 0
      %1621 = vmatprep.subr.bf16.mxu0 0
      %1622 = vmatpush1.bf16.msra.mxu0 0
      %1623 = vmatprep.subr.bf16.mxu0 0
      %1624 = vmatpush1.bf16.msra.mxu0 0
      %1625 = vmatprep.subr.bf16.mxu0 0
      %1626 = vmatpush1.bf16.msra.mxu0 0
      %1627 = vmatprep.subr.bf16.mxu0 0
      %1628 = vmatpush1.bf16.msra.mxu0 0
      %1629 = vmatprep.subr.bf16.mxu0 0
      %1630 = vmatpush1.bf16.msra.mxu0 0
      %1631 = vmatprep.subr.bf16.mxu0 0
      %1632 = vmatpush1.bf16.msra.mxu0 0
      %1633 = vmatprep.subr.bf16.mxu0 0
      %1634 = vmatpush1.bf16.msra.mxu0 0
      %1635 = vmatprep.subr.bf16.mxu0 0
      %1636 = vmatpush1.bf16.msra.mxu0 0
      %1637 = vmatprep.mubr.bf16.mxu0 0
      %1638 = vmatmul.mubr.bf16.gmra.mrb[0].mxu0 %v1600
      %v1639 = vpop.f32.mrb[0].mxu0
      %v1640 = vadd.f32 0.0, %v1639
      %v1641 = vpop.f32.mrb[0].mxu0
      %v1642 = vpop.f32.mrb[0].mxu0
      %v1643 = vpop.f32.mrb[0].mxu0
      %1644 = vdwg.mxu0
      %v1645 = vadd.f32 %v1583, %v1640
      %v1646 = vadd.f32 %v1645, %v670
      %v1647 = vmax.f32 %v1646, 0.0
      %v1648 = vpack.c.bf16 %v1647, %v1647
      %s1649 = scalar_lea.vmem %s170, 8
      %1650 = vst.msk [vmem:[%s1649] sm:$0xf] %vm675, %v1648
      %v1651 = vld [vmem:[%s1484] sm:$0xf]
      %v1652 = vld [vmem:[%s1] sm:$0x3]
      %v1653 = vld [vmem:[%s1534] sm:$0xf]
      %v1654 = vld [vmem:[%s177] sm:$0x3]
      %v1656 = vsel %vm179, %v1653, 0
      %v1659 = vsel %vm183, %v1654, 0
      %1661 = vmatprep.subr.bf16.mxu0 0
      %1662 = vmatpush1.bf16.msra.mxu0 %v1659
      %1663 = vmatprep.subr.bf16.mxu0 0
      %1664 = vmatpush1.bf16.msra.mxu0 0
      %1665 = vmatprep.subr.bf16.mxu0 0
      %1666 = vmatpush1.bf16.msra.mxu0 0
      %1667 = vmatprep.subr.bf16.mxu0 0
      %1668 = vmatpush1.bf16.msra.mxu0 0
      %1669 = vmatprep.subr.bf16.mxu0 0
      %1670 = vmatpush1.bf16.msra.mxu0 0
      %1671 = vmatprep.subr.bf16.mxu0 0
      %1672 = vmatpush1.bf16.msra.mxu0 0
      %1673 = vmatprep.subr.bf16.mxu0 0
      %1674 = vmatpush1.bf16.msra.mxu0 0
      %1675 = vmatprep.subr.bf16.mxu0 0
      %1676 = vmatpush1.bf16.msra.mxu0 0
      %1677 = vmatprep.subr.bf16.mxu0 0
      %1678 = vmatpush1.bf16.msra.mxu0 0
      %1679 = vmatprep.subr.bf16.mxu0 0
      %1680 = vmatpush1.bf16.msra.mxu0 0
      %1681 = vmatprep.subr.bf16.mxu0 0
      %1682 = vmatpush1.bf16.msra.mxu0 0
      %1683 = vmatprep.subr.bf16.mxu0 0
      %1684 = vmatpush1.bf16.msra.mxu0 0
      %1685 = vmatprep.subr.bf16.mxu0 0
      %1686 = vmatpush1.bf16.msra.mxu0 0
      %1687 = vmatprep.subr.bf16.mxu0 0
      %1688 = vmatpush1.bf16.msra.mxu0 0
      %1689 = vmatprep.subr.bf16.mxu0 0
      %1690 = vmatpush1.bf16.msra.mxu0 0
      %1691 = vmatprep.subr.bf16.mxu0 0
      %1692 = vmatpush1.bf16.msra.mxu0 0
      %1693 = vmatprep.mubr.bf16.mxu0 0
      %1694 = vmatmul.mubr.bf16.gmra.mrb[0].mxu0 %v1656
      %v1695 = vpop.f32.mrb[0].mxu0
      %v1696 = vadd.f32 0.0, %v1695
      %v1697 = vpop.f32.mrb[0].mxu0
      %v1698 = vpop.f32.mrb[0].mxu0
      %v1699 = vpop.f32.mrb[0].mxu0
      %1700 = vdwg.mxu0
      %v1702 = vsel %vm179, %v1651, 0
      %v1705 = vsel %vm183, %v1652, 0
      %1707 = vmatprep.subr.bf16.mxu0 0
      %1708 = vmatpush1.bf16.msra.mxu0 %v1705
      %1709 = vmatprep.subr.bf16.mxu0 0
      %1710 = vmatpush1.bf16.msra.mxu0 0
      %1711 = vmatprep.subr.bf16.mxu0 0
      %1712 = vmatpush1.bf16.msra.mxu0 0
      %1713 = vmatprep.subr.bf16.mxu0 0
      %1714 = vmatpush1.bf16.msra.mxu0 0
      %1715 = vmatprep.subr.bf16.mxu0 0
      %1716 = vmatpush1.bf16.msra.mxu0 0
      %1717 = vmatprep.subr.bf16.mxu0 0
      %1718 = vmatpush1.bf16.msra.mxu0 0
      %1719 = vmatprep.subr.bf16.mxu0 0
      %1720 = vmatpush1.bf16.msra.mxu0 0
      %1721 = vmatprep.subr.bf16.mxu0 0
      %1722 = vmatpush1.bf16.msra.mxu0 0
      %1723 = vmatprep.subr.bf16.mxu0 0
      %1724 = vmatpush1.bf16.msra.mxu0 0
      %1725 = vmatprep.subr.bf16.mxu0 0
      %1726 = vmatpush1.bf16.msra.mxu0 0
      %1727 = vmatprep.subr.bf16.mxu0 0
      %1728 = vmatpush1.bf16.msra.mxu0 0
      %1729 = vmatprep.subr.bf16.mxu0 0
      %1730 = vmatpush1.bf16.msra.mxu0 0
      %1731 = vmatprep.subr.bf16.mxu0 0
      %1732 = vmatpush1.bf16.msra.mxu0 0
      %1733 = vmatprep.subr.bf16.mxu0 0
      %1734 = vmatpush1.bf16.msra.mxu0 0
      %1735 = vmatprep.subr.bf16.mxu0 0
      %1736 = vmatpush1.bf16.msra.mxu0 0
      %1737 = vmatprep.subr.bf16.mxu0 0
      %1738 = vmatpush1.bf16.msra.mxu0 0
      %1739 = vmatprep.mubr.bf16.mxu0 0
      %1740 = vmatmul.mubr.bf16.gmra.mrb[0].mxu0 %v1702
      %v1741 = vpop.f32.mrb[0].mxu0
      %v1742 = vadd.f32 %v1696, %v1741
      %v1743 = vpop.f32.mrb[0].mxu0
      %v1744 = vpop.f32.mrb[0].mxu0
      %v1745 = vpop.f32.mrb[0].mxu0
      %1746 = vdwg.mxu0
      %v1747 = vld [vmem:[%s1484] sm:$0xf]
      %v1748 = vld [vmem:[%s1484 + $0x4] sm:$0x1]
      %v1749 = vld [vmem:[%s275] sm:$0x3]
      %v1752 = vunpack.c.l.b16 %v1747
      %v1753 = vunpack.c.l.b16 %v1748
      %v1754 = vpack.c.b16 %v1753, %v1752
      %v1756 = vshrl.u32 %v1754, 16
      %v1758 = vshll.u32 %v1754, 16
      %v1760 = vrot.slane %v1758, 1
      %v1761 = vor.u32 %v1756, %v1760
      %v1763 = vsel %vm179, %v1761, 0
      %v1766 = vsel %vm183, %v1749, 0
      %1768 = vmatprep.subr.bf16.mxu0 0
      %1769 = vmatpush1.bf16.msra.mxu0 %v1766
      %1770 = vmatprep.subr.bf16.mxu0 0
      %1771 = vmatpush1.bf16.msra.mxu0 0
      %1772 = vmatprep.subr.bf16.mxu0 0
      %1773 = vmatpush1.bf16.msra.mxu0 0
      %1774 = vmatprep.subr.bf16.mxu0 0
      %1775 = vmatpush1.bf16.msra.mxu0 0
      %1776 = vmatprep.subr.bf16.mxu0 0
      %1777 = vmatpush1.bf16.msra.mxu0 0
      %1778 = vmatprep.subr.bf16.mxu0 0
      %1779 = vmatpush1.bf16.msra.mxu0 0
      %1780 = vmatprep.subr.bf16.mxu0 0
      %1781 = vmatpush1.bf16.msra.mxu0 0
      %1782 = vmatprep.subr.bf16.mxu0 0
      %1783 = vmatpush1.bf16.msra.mxu0 0
      %1784 = vmatprep.subr.bf16.mxu0 0
      %1785 = vmatpush1.bf16.msra.mxu0 0
      %1786 = vmatprep.subr.bf16.mxu0 0
      %1787 = vmatpush1.bf16.msra.mxu0 0
      %1788 = vmatprep.subr.bf16.mxu0 0
      %1789 = vmatpush1.bf16.msra.mxu0 0
      %1790 = vmatprep.subr.bf16.mxu0 0
      %1791 = vmatpush1.bf16.msra.mxu0 0
      %1792 = vmatprep.subr.bf16.mxu0 0
      %1793 = vmatpush1.bf16.msra.mxu0 0
      %1794 = vmatprep.subr.bf16.mxu0 0
      %1795 = vmatpush1.bf16.msra.mxu0 0
      %1796 = vmatprep.subr.bf16.mxu0 0
      %1797 = vmatpush1.bf16.msra.mxu0 0
      %1798 = vmatprep.subr.bf16.mxu0 0
      %1799 = vmatpush1.bf16.msra.mxu0 0
      %1800 = vmatprep.mubr.bf16.mxu0 0
      %1801 = vmatmul.mubr.bf16.gmra.mrb[0].mxu0 %v1763
      %v1802 = vpop.f32.mrb[0].mxu0
      %v1803 = vadd.f32 0.0, %v1802
      %v1804 = vpop.f32.mrb[0].mxu0
      %v1805 = vpop.f32.mrb[0].mxu0
      %v1806 = vpop.f32.mrb[0].mxu0
      %1807 = vdwg.mxu0
      %v1808 = vadd.f32 %v1742, %v1803
      %s1809 = scalar_lea.vmem %s165, 168
      %v1810 = vld [vmem:[%s1809] sm:$0xf]
      %v1811 = vld [vmem:[%s338] sm:$0x3]
      %v1813 = vsel %vm179, %v1810, 0
      %v1816 = vsel %vm183, %v1811, 0
      %1818 = vmatprep.subr.bf16.mxu0 0
      %1819 = vmatpush1.bf16.msra.mxu0 %v1816
      %1820 = vmatprep.subr.bf16.mxu0 0
      %1821 = vmatpush1.bf16.msra.mxu0 0
      %1822 = vmatprep.subr.bf16.mxu0 0
      %1823 = vmatpush1.bf16.msra.mxu0 0
      %1824 = vmatprep.subr.bf16.mxu0 0
      %1825 = vmatpush1.bf16.msra.mxu0 0
      %1826 = vmatprep.subr.bf16.mxu0 0
      %1827 = vmatpush1.bf16.msra.mxu0 0
      %1828 = vmatprep.subr.bf16.mxu0 0
      %1829 = vmatpush1.bf16.msra.mxu0 0
      %1830 = vmatprep.subr.bf16.mxu0 0
      %1831 = vmatpush1.bf16.msra.mxu0 0
      %1832 = vmatprep.subr.bf16.mxu0 0
      %1833 = vmatpush1.bf16.msra.mxu0 0
      %1834 = vmatprep.subr.bf16.mxu0 0
      %1835 = vmatpush1.bf16.msra.mxu0 0
      %1836 = vmatprep.subr.bf16.mxu0 0
      %1837 = vmatpush1.bf16.msra.mxu0 0
      %1838 = vmatprep.subr.bf16.mxu0 0
      %1839 = vmatpush1.bf16.msra.mxu0 0
      %1840 = vmatprep.subr.bf16.mxu0 0
      %1841 = vmatpush1.bf16.msra.mxu0 0
      %1842 = vmatprep.subr.bf16.mxu0 0
      %1843 = vmatpush1.bf16.msra.mxu0 0
      %1844 = vmatprep.subr.bf16.mxu0 0
      %1845 = vmatpush1.bf16.msra.mxu0 0
      %1846 = vmatprep.subr.bf16.mxu0 0
      %1847 = vmatpush1.bf16.msra.mxu0 0
      %1848 = vmatprep.subr.bf16.mxu0 0
      %1849 = vmatpush1.bf16.msra.mxu0 0
      %1850 = vmatprep.mubr.bf16.mxu0 0
      %1851 = vmatmul.mubr.bf16.gmra.mrb[0].mxu0 %v1813
      %v1852 = vpop.f32.mrb[0].mxu0
      %v1853 = vadd.f32 0.0, %v1852
      %v1854 = vpop.f32.mrb[0].mxu0
      %v1855 = vpop.f32.mrb[0].mxu0
      %v1856 = vpop.f32.mrb[0].mxu0
      %1857 = vdwg.mxu0
      %v1858 = vadd.f32 %v1808, %v1853
      %s1859 = scalar_lea.vmem %s165, 240
      %v1860 = vld [vmem:[%s1859] sm:$0xf]
      %v1861 = vld [vmem:[%s389] sm:$0x3]
      %v1863 = vsel %vm179, %v1860, 0
      %v1866 = vsel %vm183, %v1861, 0
      %1868 = vmatprep.subr.bf16.mxu0 0
      %1869 = vmatpush1.bf16.msra.mxu0 %v1866
      %1870 = vmatprep.subr.bf16.mxu0 0
      %1871 = vmatpush1.bf16.msra.mxu0 0
      %1872 = vmatprep.subr.bf16.mxu0 0
      %1873 = vmatpush1.bf16.msra.mxu0 0
      %1874 = vmatprep.subr.bf16.mxu0 0
      %1875 = vmatpush1.bf16.msra.mxu0 0
      %1876 = vmatprep.subr.bf16.mxu0 0
      %1877 = vmatpush1.bf16.msra.mxu0 0
      %1878 = vmatprep.subr.bf16.mxu0 0
      %1879 = vmatpush1.bf16.msra.mxu0 0
      %1880 = vmatprep.subr.bf16.mxu0 0
      %1881 = vmatpush1.bf16.msra.mxu0 0
      %1882 = vmatprep.subr.bf16.mxu0 0
      %1883 = vmatpush1.bf16.msra.mxu0 0
      %1884 = vmatprep.subr.bf16.mxu0 0
      %1885 = vmatpush1.bf16.msra.mxu0 0
      %1886 = vmatprep.subr.bf16.mxu0 0
      %1887 = vmatpush1.bf16.msra.mxu0 0
      %1888 = vmatprep.subr.bf16.mxu0 0
      %1889 = vmatpush1.bf16.msra.mxu0 0
      %1890 = vmatprep.subr.bf16.mxu0 0
      %1891 = vmatpush1.bf16.msra.mxu0 0
      %1892 = vmatprep.subr.bf16.mxu0 0
      %1893 = vmatpush1.bf16.msra.mxu0 0
      %1894 = vmatprep.subr.bf16.mxu0 0
      %1895 = vmatpush1.bf16.msra.mxu0 0
      %1896 = vmatprep.subr.bf16.mxu0 0
      %1897 = vmatpush1.bf16.msra.mxu0 0
      %1898 = vmatprep.subr.bf16.mxu0 0
      %1899 = vmatpush1.bf16.msra.mxu0 0
      %1900 = vmatprep.mubr.bf16.mxu0 0
      %1901 = vmatmul.mubr.bf16.gmra.mrb[0].mxu0 %v1863
      %v1902 = vpop.f32.mrb[0].mxu0
      %v1903 = vadd.f32 0.0, %v1902
      %v1904 = vpop.f32.mrb[0].mxu0
      %v1905 = vpop.f32.mrb[0].mxu0
      %v1906 = vpop.f32.mrb[0].mxu0
      %1907 = vdwg.mxu0
      %v1908 = vadd.f32 %v1858, %v1903
      %v1909 = vld [vmem:[%s1809] sm:$0xf]
      %v1910 = vld [vmem:[%s1809 + $0x4] sm:$0x1]
      %v1911 = vld [vmem:[%s440] sm:$0x3]
      %v1914 = vunpack.c.l.b16 %v1909
      %v1915 = vunpack.c.l.b16 %v1910
      %v1916 = vpack.c.b16 %v1915, %v1914
      %v1918 = vshrl.u32 %v1916, 16
      %v1920 = vshll.u32 %v1916, 16
      %v1922 = vrot.slane %v1920, 1
      %v1923 = vor.u32 %v1918, %v1922
      %v1925 = vsel %vm179, %v1923, 0
      %v1928 = vsel %vm183, %v1911, 0
      %1930 = vmatprep.subr.bf16.mxu0 0
      %1931 = vmatpush1.bf16.msra.mxu0 %v1928
      %1932 = vmatprep.subr.bf16.mxu0 0
      %1933 = vmatpush1.bf16.msra.mxu0 0
      %1934 = vmatprep.subr.bf16.mxu0 0
      %1935 = vmatpush1.bf16.msra.mxu0 0
      %1936 = vmatprep.subr.bf16.mxu0 0
      %1937 = vmatpush1.bf16.msra.mxu0 0
      %1938 = vmatprep.subr.bf16.mxu0 0
      %1939 = vmatpush1.bf16.msra.mxu0 0
      %1940 = vmatprep.subr.bf16.mxu0 0
      %1941 = vmatpush1.bf16.msra.mxu0 0
      %1942 = vmatprep.subr.bf16.mxu0 0
      %1943 = vmatpush1.bf16.msra.mxu0 0
      %1944 = vmatprep.subr.bf16.mxu0 0
      %1945 = vmatpush1.bf16.msra.mxu0 0
      %1946 = vmatprep.subr.bf16.mxu0 0
      %1947 = vmatpush1.bf16.msra.mxu0 0
      %1948 = vmatprep.subr.bf16.mxu0 0
      %1949 = vmatpush1.bf16.msra.mxu0 0
      %1950 = vmatprep.subr.bf16.mxu0 0
      %1951 = vmatpush1.bf16.msra.mxu0 0
      %1952 = vmatprep.subr.bf16.mxu0 0
      %1953 = vmatpush1.bf16.msra.mxu0 0
      %1954 = vmatprep.subr.bf16.mxu0 0
      %1955 = vmatpush1.bf16.msra.mxu0 0
      %1956 = vmatprep.subr.bf16.mxu0 0
      %1957 = vmatpush1.bf16.msra.mxu0 0
      %1958 = vmatprep.subr.bf16.mxu0 0
      %1959 = vmatpush1.bf16.msra.mxu0 0
      %1960 = vmatprep.subr.bf16.mxu0 0
      %1961 = vmatpush1.bf16.msra.mxu0 0
      %1962 = vmatprep.mubr.bf16.mxu0 0
      %1963 = vmatmul.mubr.bf16.gmra.mrb[0].mxu0 %v1925
      %v1964 = vpop.f32.mrb[0].mxu0
      %v1965 = vadd.f32 0.0, %v1964
      %v1966 = vpop.f32.mrb[0].mxu0
      %v1967 = vpop.f32.mrb[0].mxu0
      %v1968 = vpop.f32.mrb[0].mxu0
      %1969 = vdwg.mxu0
      %v1970 = vadd.f32 %v1908, %v1965
      %s1971 = scalar_lea.vmem %s165, 32
      %v1972 = vld [vmem:[%s1971] sm:$0xf]
      %v1973 = vld [vmem:[%s503] sm:$0x3]
      %v1975 = vsel %vm179, %v1972, 0
      %v1978 = vsel %vm183, %v1973, 0
      %1980 = vmatprep.subr.bf16.mxu0 0
      %1981 = vmatpush1.bf16.msra.mxu0 %v1978
      %1982 = vmatprep.subr.bf16.mxu0 0
      %1983 = vmatpush1.bf16.msra.mxu0 0
      %1984 = vmatprep.subr.bf16.mxu0 0
      %1985 = vmatpush1.bf16.msra.mxu0 0
      %1986 = vmatprep.subr.bf16.mxu0 0
      %1987 = vmatpush1.bf16.msra.mxu0 0
      %1988 = vmatprep.subr.bf16.mxu0 0
      %1989 = vmatpush1.bf16.msra.mxu0 0
      %1990 = vmatprep.subr.bf16.mxu0 0
      %1991 = vmatpush1.bf16.msra.mxu0 0
      %1992 = vmatprep.subr.bf16.mxu0 0
      %1993 = vmatpush1.bf16.msra.mxu0 0
      %1994 = vmatprep.subr.bf16.mxu0 0
      %1995 = vmatpush1.bf16.msra.mxu0 0
      %1996 = vmatprep.subr.bf16.mxu0 0
      %1997 = vmatpush1.bf16.msra.mxu0 0
      %1998 = vmatprep.subr.bf16.mxu0 0
      %1999 = vmatpush1.bf16.msra.mxu0 0
      %2000 = vmatprep.subr.bf16.mxu0 0
      %2001 = vmatpush1.bf16.msra.mxu0 0
      %2002 = vmatprep.subr.bf16.mxu0 0
      %2003 = vmatpush1.bf16.msra.mxu0 0
      %2004 = vmatprep.subr.bf16.mxu0 0
      %2005 = vmatpush1.bf16.msra.mxu0 0
      %2006 = vmatprep.subr.bf16.mxu0 0
      %2007 = vmatpush1.bf16.msra.mxu0 0
      %2008 = vmatprep.subr.bf16.mxu0 0
      %2009 = vmatpush1.bf16.msra.mxu0 0
      %2010 = vmatprep.subr.bf16.mxu0 0
      %2011 = vmatpush1.bf16.msra.mxu0 0
      %2012 = vmatprep.mubr.bf16.mxu0 0
      %2013 = vmatmul.mubr.bf16.gmra.mrb[0].mxu0 %v1975
      %v2014 = vpop.f32.mrb[0].mxu0
      %v2015 = vadd.f32 0.0, %v2014
      %v2016 = vpop.f32.mrb[0].mxu0
      %v2017 = vpop.f32.mrb[0].mxu0
      %v2018 = vpop.f32.mrb[0].mxu0
      %2019 = vdwg.mxu0
      %v2020 = vadd.f32 %v1970, %v2015
      %s2021 = scalar_lea.vmem %s165, 104
      %v2022 = vld [vmem:[%s2021] sm:$0xf]
      %v2023 = vld [vmem:[%s554] sm:$0x3]
      %v2025 = vsel %vm179, %v2022, 0
      %v2028 = vsel %vm183, %v2023, 0
      %2030 = vmatprep.subr.bf16.mxu0 0
      %2031 = vmatpush1.bf16.msra.mxu0 %v2028
      %2032 = vmatprep.subr.bf16.mxu0 0
      %2033 = vmatpush1.bf16.msra.mxu0 0
      %2034 = vmatprep.subr.bf16.mxu0 0
      %2035 = vmatpush1.bf16.msra.mxu0 0
      %2036 = vmatprep.subr.bf16.mxu0 0
      %2037 = vmatpush1.bf16.msra.mxu0 0
      %2038 = vmatprep.subr.bf16.mxu0 0
      %2039 = vmatpush1.bf16.msra.mxu0 0
      %2040 = vmatprep.subr.bf16.mxu0 0
      %2041 = vmatpush1.bf16.msra.mxu0 0
      %2042 = vmatprep.subr.bf16.mxu0 0
      %2043 = vmatpush1.bf16.msra.mxu0 0
      %2044 = vmatprep.subr.bf16.mxu0 0
      %2045 = vmatpush1.bf16.msra.mxu0 0
      %2046 = vmatprep.subr.bf16.mxu0 0
      %2047 = vmatpush1.bf16.msra.mxu0 0
      %2048 = vmatprep.subr.bf16.mxu0 0
      %2049 = vmatpush1.bf16.msra.mxu0 0
      %2050 = vmatprep.subr.bf16.mxu0 0
      %2051 = vmatpush1.bf16.msra.mxu0 0
      %2052 = vmatprep.subr.bf16.mxu0 0
      %2053 = vmatpush1.bf16.msra.mxu0 0
      %2054 = vmatprep.subr.bf16.mxu0 0
      %2055 = vmatpush1.bf16.msra.mxu0 0
      %2056 = vmatprep.subr.bf16.mxu0 0
      %2057 = vmatpush1.bf16.msra.mxu0 0
      %2058 = vmatprep.subr.bf16.mxu0 0
      %2059 = vmatpush1.bf16.msra.mxu0 0
      %2060 = vmatprep.subr.bf16.mxu0 0
      %2061 = vmatpush1.bf16.msra.mxu0 0
      %2062 = vmatprep.mubr.bf16.mxu0 0
      %2063 = vmatmul.mubr.bf16.gmra.mrb[0].mxu0 %v2025
      %v2064 = vpop.f32.mrb[0].mxu0
      %v2065 = vadd.f32 0.0, %v2064
      %v2066 = vpop.f32.mrb[0].mxu0
      %v2067 = vpop.f32.mrb[0].mxu0
      %v2068 = vpop.f32.mrb[0].mxu0
      %2069 = vdwg.mxu0
      %v2070 = vadd.f32 %v2020, %v2065
      %v2071 = vld [vmem:[%s1971] sm:$0xf]
      %v2072 = vld [vmem:[%s1971 + $0x4] sm:$0x1]
      %v2073 = vld [vmem:[%s605] sm:$0x3]
      %v2076 = vunpack.c.l.b16 %v2071
      %v2077 = vunpack.c.l.b16 %v2072
      %v2078 = vpack.c.b16 %v2077, %v2076
      %v2080 = vshrl.u32 %v2078, 16
      %v2082 = vshll.u32 %v2078, 16
      %v2084 = vrot.slane %v2082, 1
      %v2085 = vor.u32 %v2080, %v2084
      %v2087 = vsel %vm179, %v2085, 0
      %v2090 = vsel %vm183, %v2073, 0
      %2092 = vmatprep.subr.bf16.mxu0 0
      %2093 = vmatpush1.bf16.msra.mxu0 %v2090
      %2094 = vmatprep.subr.bf16.mxu0 0
      %2095 = vmatpush1.bf16.msra.mxu0 0
      %2096 = vmatprep.subr.bf16.mxu0 0
      %2097 = vmatpush1.bf16.msra.mxu0 0
      %2098 = vmatprep.subr.bf16.mxu0 0
      %2099 = vmatpush1.bf16.msra.mxu0 0
      %2100 = vmatprep.subr.bf16.mxu0 0
      %2101 = vmatpush1.bf16.msra.mxu0 0
      %2102 = vmatprep.subr.bf16.mxu0 0
      %2103 = vmatpush1.bf16.msra.mxu0 0
      %2104 = vmatprep.subr.bf16.mxu0 0
      %2105 = vmatpush1.bf16.msra.mxu0 0
      %2106 = vmatprep.subr.bf16.mxu0 0
      %2107 = vmatpush1.bf16.msra.mxu0 0
      %2108 = vmatprep.subr.bf16.mxu0 0
      %2109 = vmatpush1.bf16.msra.mxu0 0
      %2110 = vmatprep.subr.bf16.mxu0 0
      %2111 = vmatpush1.bf16.msra.mxu0 0
      %2112 = vmatprep.subr.bf16.mxu0 0
      %2113 = vmatpush1.bf16.msra.mxu0 0
      %2114 = vmatprep.subr.bf16.mxu0 0
      %2115 = vmatpush1.bf16.msra.mxu0 0
      %2116 = vmatprep.subr.bf16.mxu0 0
      %2117 = vmatpush1.bf16.msra.mxu0 0
      %2118 = vmatprep.subr.bf16.mxu0 0
      %2119 = vmatpush1.bf16.msra.mxu0 0
      %2120 = vmatprep.subr.bf16.mxu0 0
      %2121 = vmatpush1.bf16.msra.mxu0 0
      %2122 = vmatprep.subr.bf16.mxu0 0
      %2123 = vmatpush1.bf16.msra.mxu0 0
      %2124 = vmatprep.mubr.bf16.mxu0 0
      %2125 = vmatmul.mubr.bf16.gmra.mrb[0].mxu0 %v2087
      %v2126 = vpop.f32.mrb[0].mxu0
      %v2127 = vadd.f32 0.0, %v2126
      %v2128 = vpop.f32.mrb[0].mxu0
      %v2129 = vpop.f32.mrb[0].mxu0
      %v2130 = vpop.f32.mrb[0].mxu0
      %2131 = vdwg.mxu0
      %v2132 = vadd.f32 %v2070, %v2127
      %v2133 = vadd.f32 %v2132, %v670
      %v2134 = vmax.f32 %v2133, 0.0
      %v2135 = vpack.c.bf16 %v2134, %v2134
      %s2136 = scalar_lea.vmem %s170, 12
      %2137 = vst.msk [vmem:[%s2136] sm:$0xf] %vm675, %v2135
      %v2138 = vld [vmem:[%s1971] sm:$0xf]
      %v2139 = vld [vmem:[%s1] sm:$0x3]
      %v2140 = vld [vmem:[%s2021] sm:$0xf]
      %v2141 = vld [vmem:[%s177] sm:$0x3]
      %v2143 = vsel %vm179, %v2140, 0
      %v2146 = vsel %vm183, %v2141, 0
      %2148 = vmatprep.subr.bf16.mxu0 0
      %2149 = vmatpush1.bf16.msra.mxu0 %v2146
      %2150 = vmatprep.subr.bf16.mxu0 0
      %2151 = vmatpush1.bf16.msra.mxu0 0
      %2152 = vmatprep.subr.bf16.mxu0 0
      %2153 = vmatpush1.bf16.msra.mxu0 0
      %2154 = vmatprep.subr.bf16.mxu0 0
      %2155 = vmatpush1.bf16.msra.mxu0 0
      %2156 = vmatprep.subr.bf16.mxu0 0
      %2157 = vmatpush1.bf16.msra.mxu0 0
      %2158 = vmatprep.subr.bf16.mxu0 0
      %2159 = vmatpush1.bf16.msra.mxu0 0
      %2160 = vmatprep.subr.bf16.mxu0 0
      %2161 = vmatpush1.bf16.msra.mxu0 0
      %2162 = vmatprep.subr.bf16.mxu0 0
      %2163 = vmatpush1.bf16.msra.mxu0 0
      %2164 = vmatprep.subr.bf16.mxu0 0
      %2165 = vmatpush1.bf16.msra.mxu0 0
      %2166 = vmatprep.subr.bf16.mxu0 0
      %2167 = vmatpush1.bf16.msra.mxu0 0
      %2168 = vmatprep.subr.bf16.mxu0 0
      %2169 = vmatpush1.bf16.msra.mxu0 0
      %2170 = vmatprep.subr.bf16.mxu0 0
      %2171 = vmatpush1.bf16.msra.mxu0 0
      %2172 = vmatprep.subr.bf16.mxu0 0
      %2173 = vmatpush1.bf16.msra.mxu0 0
      %2174 = vmatprep.subr.bf16.mxu0 0
      %2175 = vmatpush1.bf16.msra.mxu0 0
      %2176 = vmatprep.subr.bf16.mxu0 0
      %2177 = vmatpush1.bf16.msra.mxu0 0
      %2178 = vmatprep.subr.bf16.mxu0 0
      %2179 = vmatpush1.bf16.msra.mxu0 0
      %2180 = vmatprep.mubr.bf16.mxu0 0
      %2181 = vmatmul.mubr.bf16.gmra.mrb[0].mxu0 %v2143
      %v2182 = vpop.f32.mrb[0].mxu0
      %v2183 = vadd.f32 0.0, %v2182
      %v2184 = vpop.f32.mrb[0].mxu0
      %v2185 = vpop.f32.mrb[0].mxu0
      %v2186 = vpop.f32.mrb[0].mxu0
      %2187 = vdwg.mxu0
      %v2189 = vsel %vm179, %v2138, 0
      %v2192 = vsel %vm183, %v2139, 0
      %2194 = vmatprep.subr.bf16.mxu0 0
      %2195 = vmatpush1.bf16.msra.mxu0 %v2192
      %2196 = vmatprep.subr.bf16.mxu0 0
      %2197 = vmatpush1.bf16.msra.mxu0 0
      %2198 = vmatprep.subr.bf16.mxu0 0
      %2199 = vmatpush1.bf16.msra.mxu0 0
      %2200 = vmatprep.subr.bf16.mxu0 0
      %2201 = vmatpush1.bf16.msra.mxu0 0
      %2202 = vmatprep.subr.bf16.mxu0 0
      %2203 = vmatpush1.bf16.msra.mxu0 0
      %2204 = vmatprep.subr.bf16.mxu0 0
      %2205 = vmatpush1.bf16.msra.mxu0 0
      %2206 = vmatprep.subr.bf16.mxu0 0
      %2207 = vmatpush1.bf16.msra.mxu0 0
      %2208 = vmatprep.subr.bf16.mxu0 0
      %2209 = vmatpush1.bf16.msra.mxu0 0
      %2210 = vmatprep.subr.bf16.mxu0 0
      %2211 = vmatpush1.bf16.msra.mxu0 0
      %2212 = vmatprep.subr.bf16.mxu0 0
      %2213 = vmatpush1.bf16.msra.mxu0 0
      %2214 = vmatprep.subr.bf16.mxu0 0
      %2215 = vmatpush1.bf16.msra.mxu0 0
      %2216 = vmatprep.subr.bf16.mxu0 0
      %2217 = vmatpush1.bf16.msra.mxu0 0
      %2218 = vmatprep.subr.bf16.mxu0 0
      %2219 = vmatpush1.bf16.msra.mxu0 0
      %2220 = vmatprep.subr.bf16.mxu0 0
      %2221 = vmatpush1.bf16.msra.mxu0 0
      %2222 = vmatprep.subr.bf16.mxu0 0
      %2223 = vmatpush1.bf16.msra.mxu0 0
      %2224 = vmatprep.subr.bf16.mxu0 0
      %2225 = vmatpush1.bf16.msra.mxu0 0
      %2226 = vmatprep.mubr.bf16.mxu0 0
      %2227 = vmatmul.mubr.bf16.gmra.mrb[0].mxu0 %v2189
      %v2228 = vpop.f32.mrb[0].mxu0
      %v2229 = vadd.f32 %v2183, %v2228
      %v2230 = vpop.f32.mrb[0].mxu0
      %v2231 = vpop.f32.mrb[0].mxu0
      %v2232 = vpop.f32.mrb[0].mxu0
      %2233 = vdwg.mxu0
      %v2234 = vld [vmem:[%s1971] sm:$0xf]
      %v2235 = vld [vmem:[%s1971 + $0x4] sm:$0x1]
      %v2236 = vld [vmem:[%s275] sm:$0x3]
      %v2239 = vunpack.c.l.b16 %v2234
      %v2240 = vunpack.c.l.b16 %v2235
      %v2241 = vpack.c.b16 %v2240, %v2239
      %v2243 = vshrl.u32 %v2241, 16
      %v2245 = vshll.u32 %v2241, 16
      %v2247 = vrot.slane %v2245, 1
      %v2248 = vor.u32 %v2243, %v2247
      %v2250 = vsel %vm179, %v2248, 0
      %v2253 = vsel %vm183, %v2236, 0
      %2255 = vmatprep.subr.bf16.mxu0 0
      %2256 = vmatpush1.bf16.msra.mxu0 %v2253
      %2257 = vmatprep.subr.bf16.mxu0 0
      %2258 = vmatpush1.bf16.msra.mxu0 0
      %2259 = vmatprep.subr.bf16.mxu0 0
      %2260 = vmatpush1.bf16.msra.mxu0 0
      %2261 = vmatprep.subr.bf16.mxu0 0
      %2262 = vmatpush1.bf16.msra.mxu0 0
      %2263 = vmatprep.subr.bf16.mxu0 0
      %2264 = vmatpush1.bf16.msra.mxu0 0
      %2265 = vmatprep.subr.bf16.mxu0 0
      %2266 = vmatpush1.bf16.msra.mxu0 0
      %2267 = vmatprep.subr.bf16.mxu0 0
      %2268 = vmatpush1.bf16.msra.mxu0 0
      %2269 = vmatprep.subr.bf16.mxu0 0
      %2270 = vmatpush1.bf16.msra.mxu0 0
      %2271 = vmatprep.subr.bf16.mxu0 0
      %2272 = vmatpush1.bf16.msra.mxu0 0
      %2273 = vmatprep.subr.bf16.mxu0 0
      %2274 = vmatpush1.bf16.msra.mxu0 0
      %2275 = vmatprep.subr.bf16.mxu0 0
      %2276 = vmatpush1.bf16.msra.mxu0 0
      %2277 = vmatprep.subr.bf16.mxu0 0
      %2278 = vmatpush1.bf16.msra.mxu0 0
      %2279 = vmatprep.subr.bf16.mxu0 0
      %2280 = vmatpush1.bf16.msra.mxu0 0
      %2281 = vmatprep.subr.bf16.mxu0 0
      %2282 = vmatpush1.bf16.msra.mxu0 0
      %2283 = vmatprep.subr.bf16.mxu0 0
      %2284 = vmatpush1.bf16.msra.mxu0 0
      %2285 = vmatprep.subr.bf16.mxu0 0
      %2286 = vmatpush1.bf16.msra.mxu0 0
      %2287 = vmatprep.mubr.bf16.mxu0 0
      %2288 = vmatmul.mubr.bf16.gmra.mrb[0].mxu0 %v2250
      %v2289 = vpop.f32.mrb[0].mxu0
      %v2290 = vadd.f32 0.0, %v2289
      %v2291 = vpop.f32.mrb[0].mxu0
      %v2292 = vpop.f32.mrb[0].mxu0
      %v2293 = vpop.f32.mrb[0].mxu0
      %2294 = vdwg.mxu0
      %v2295 = vadd.f32 %v2229, %v2290
      %s2296 = scalar_lea.vmem %s165, 176
      %v2297 = vld [vmem:[%s2296] sm:$0xf]
      %v2298 = vld [vmem:[%s338] sm:$0x3]
      %v2300 = vsel %vm179, %v2297, 0
      %v2303 = vsel %vm183, %v2298, 0
      %2305 = vmatprep.subr.bf16.mxu0 0
      %2306 = vmatpush1.bf16.msra.mxu0 %v2303
      %2307 = vmatprep.subr.bf16.mxu0 0
      %2308 = vmatpush1.bf16.msra.mxu0 0
      %2309 = vmatprep.subr.bf16.mxu0 0
      %2310 = vmatpush1.bf16.msra.mxu0 0
      %2311 = vmatprep.subr.bf16.mxu0 0
      %2312 = vmatpush1.bf16.msra.mxu0 0
      %2313 = vmatprep.subr.bf16.mxu0 0
      %2314 = vmatpush1.bf16.msra.mxu0 0
      %2315 = vmatprep.subr.bf16.mxu0 0
      %2316 = vmatpush1.bf16.msra.mxu0 0
      %2317 = vmatprep.subr.bf16.mxu0 0
      %2318 = vmatpush1.bf16.msra.mxu0 0
      %2319 = vmatprep.subr.bf16.mxu0 0
      %2320 = vmatpush1.bf16.msra.mxu0 0
      %2321 = vmatprep.subr.bf16.mxu0 0
      %2322 = vmatpush1.bf16.msra.mxu0 0
      %2323 = vmatprep.subr.bf16.mxu0 0
      %2324 = vmatpush1.bf16.msra.mxu0 0
      %2325 = vmatprep.subr.bf16.mxu0 0
      %2326 = vmatpush1.bf16.msra.mxu0 0
      %2327 = vmatprep.subr.bf16.mxu0 0
      %2328 = vmatpush1.bf16.msra.mxu0 0
      %2329 = vmatprep.subr.bf16.mxu0 0
      %2330 = vmatpush1.bf16.msra.mxu0 0
      %2331 = vmatprep.subr.bf16.mxu0 0
      %2332 = vmatpush1.bf16.msra.mxu0 0
      %2333 = vmatprep.subr.bf16.mxu0 0
      %2334 = vmatpush1.bf16.msra.mxu0 0
      %2335 = vmatprep.subr.bf16.mxu0 0
      %2336 = vmatpush1.bf16.msra.mxu0 0
      %2337 = vmatprep.mubr.bf16.mxu0 0
      %2338 = vmatmul.mubr.bf16.gmra.mrb[0].mxu0 %v2300
      %v2339 = vpop.f32.mrb[0].mxu0
      %v2340 = vadd.f32 0.0, %v2339
      %v2341 = vpop.f32.mrb[0].mxu0
      %v2342 = vpop.f32.mrb[0].mxu0
      %v2343 = vpop.f32.mrb[0].mxu0
      %2344 = vdwg.mxu0
      %v2345 = vadd.f32 %v2295, %v2340
      %s2346 = scalar_lea.vmem %s165, 248
      %v2347 = vld [vmem:[%s2346] sm:$0xf]
      %v2348 = vld [vmem:[%s389] sm:$0x3]
      %v2350 = vsel %vm179, %v2347, 0
      %v2353 = vsel %vm183, %v2348, 0
      %2355 = vmatprep.subr.bf16.mxu0 0
      %2356 = vmatpush1.bf16.msra.mxu0 %v2353
      %2357 = vmatprep.subr.bf16.mxu0 0
      %2358 = vmatpush1.bf16.msra.mxu0 0
      %2359 = vmatprep.subr.bf16.mxu0 0
      %2360 = vmatpush1.bf16.msra.mxu0 0
      %2361 = vmatprep.subr.bf16.mxu0 0
      %2362 = vmatpush1.bf16.msra.mxu0 0
      %2363 = vmatprep.subr.bf16.mxu0 0
      %2364 = vmatpush1.bf16.msra.mxu0 0
      %2365 = vmatprep.subr.bf16.mxu0 0
      %2366 = vmatpush1.bf16.msra.mxu0 0
      %2367 = vmatprep.subr.bf16.mxu0 0
      %2368 = vmatpush1.bf16.msra.mxu0 0
      %2369 = vmatprep.subr.bf16.mxu0 0
      %2370 = vmatpush1.bf16.msra.mxu0 0
      %2371 = vmatprep.subr.bf16.mxu0 0
      %2372 = vmatpush1.bf16.msra.mxu0 0
      %2373 = vmatprep.subr.bf16.mxu0 0
      %2374 = vmatpush1.bf16.msra.mxu0 0
      %2375 = vmatprep.subr.bf16.mxu0 0
      %2376 = vmatpush1.bf16.msra.mxu0 0
      %2377 = vmatprep.subr.bf16.mxu0 0
      %2378 = vmatpush1.bf16.msra.mxu0 0
      %2379 = vmatprep.subr.bf16.mxu0 0
      %2380 = vmatpush1.bf16.msra.mxu0 0
      %2381 = vmatprep.subr.bf16.mxu0 0
      %2382 = vmatpush1.bf16.msra.mxu0 0
      %2383 = vmatprep.subr.bf16.mxu0 0
      %2384 = vmatpush1.bf16.msra.mxu0 0
      %2385 = vmatprep.subr.bf16.mxu0 0
      %2386 = vmatpush1.bf16.msra.mxu0 0
      %2387 = vmatprep.mubr.bf16.mxu0 0
      %2388 = vmatmul.mubr.bf16.gmra.mrb[0].mxu0 %v2350
      %v2389 = vpop.f32.mrb[0].mxu0
      %v2390 = vadd.f32 0.0, %v2389
      %v2391 = vpop.f32.mrb[0].mxu0
      %v2392 = vpop.f32.mrb[0].mxu0
      %v2393 = vpop.f32.mrb[0].mxu0
      %2394 = vdwg.mxu0
      %v2395 = vadd.f32 %v2345, %v2390
      %v2396 = vld [vmem:[%s2296] sm:$0xf]
      %v2397 = vld [vmem:[%s2296 + $0x4] sm:$0x1]
      %v2398 = vld [vmem:[%s440] sm:$0x3]
      %v2401 = vunpack.c.l.b16 %v2396
      %v2402 = vunpack.c.l.b16 %v2397
      %v2403 = vpack.c.b16 %v2402, %v2401
      %v2405 = vshrl.u32 %v2403, 16
      %v2407 = vshll.u32 %v2403, 16
      %v2409 = vrot.slane %v2407, 1
      %v2410 = vor.u32 %v2405, %v2409
      %v2412 = vsel %vm179, %v2410, 0
      %v2415 = vsel %vm183, %v2398, 0
      %2417 = vmatprep.subr.bf16.mxu0 0
      %2418 = vmatpush1.bf16.msra.mxu0 %v2415
      %2419 = vmatprep.subr.bf16.mxu0 0
      %2420 = vmatpush1.bf16.msra.mxu0 0
      %2421 = vmatprep.subr.bf16.mxu0 0
      %2422 = vmatpush1.bf16.msra.mxu0 0
      %2423 = vmatprep.subr.bf16.mxu0 0
      %2424 = vmatpush1.bf16.msra.mxu0 0
      %2425 = vmatprep.subr.bf16.mxu0 0
      %2426 = vmatpush1.bf16.msra.mxu0 0
      %2427 = vmatprep.subr.bf16.mxu0 0
      %2428 = vmatpush1.bf16.msra.mxu0 0
      %2429 = vmatprep.subr.bf16.mxu0 0
      %2430 = vmatpush1.bf16.msra.mxu0 0
      %2431 = vmatprep.subr.bf16.mxu0 0
      %2432 = vmatpush1.bf16.msra.mxu0 0
      %2433 = vmatprep.subr.bf16.mxu0 0
      %2434 = vmatpush1.bf16.msra.mxu0 0
      %2435 = vmatprep.subr.bf16.mxu0 0
      %2436 = vmatpush1.bf16.msra.mxu0 0
      %2437 = vmatprep.subr.bf16.mxu0 0
      %2438 = vmatpush1.bf16.msra.mxu0 0
      %2439 = vmatprep.subr.bf16.mxu0 0
      %2440 = vmatpush1.bf16.msra.mxu0 0
      %2441 = vmatprep.subr.bf16.mxu0 0
      %2442 = vmatpush1.bf16.msra.mxu0 0
      %2443 = vmatprep.subr.bf16.mxu0 0
      %2444 = vmatpush1.bf16.msra.mxu0 0
      %2445 = vmatprep.subr.bf16.mxu0 0
      %2446 = vmatpush1.bf16.msra.mxu0 0
      %2447 = vmatprep.subr.bf16.mxu0 0
      %2448 = vmatpush1.bf16.msra.mxu0 0
      %2449 = vmatprep.mubr.bf16.mxu0 0
      %2450 = vmatmul.mubr.bf16.gmra.mrb[0].mxu0 %v2412
      %v2451 = vpop.f32.mrb[0].mxu0
      %v2452 = vadd.f32 0.0, %v2451
      %v2453 = vpop.f32.mrb[0].mxu0
      %v2454 = vpop.f32.mrb[0].mxu0
      %v2455 = vpop.f32.mrb[0].mxu0
      %2456 = vdwg.mxu0
      %v2457 = vadd.f32 %v2395, %v2452
      %s2458 = scalar_lea.vmem %s165, 40
      %v2459 = vld [vmem:[%s2458] sm:$0xf]
      %v2460 = vld [vmem:[%s503] sm:$0x3]
      %v2462 = vsel %vm179, %v2459, 0
      %v2465 = vsel %vm183, %v2460, 0
      %2467 = vmatprep.subr.bf16.mxu0 0
      %2468 = vmatpush1.bf16.msra.mxu0 %v2465
      %2469 = vmatprep.subr.bf16.mxu0 0
      %2470 = vmatpush1.bf16.msra.mxu0 0
      %2471 = vmatprep.subr.bf16.mxu0 0
      %2472 = vmatpush1.bf16.msra.mxu0 0
      %2473 = vmatprep.subr.bf16.mxu0 0
      %2474 = vmatpush1.bf16.msra.mxu0 0
      %2475 = vmatprep.subr.bf16.mxu0 0
      %2476 = vmatpush1.bf16.msra.mxu0 0
      %2477 = vmatprep.subr.bf16.mxu0 0
      %2478 = vmatpush1.bf16.msra.mxu0 0
      %2479 = vmatprep.subr.bf16.mxu0 0
      %2480 = vmatpush1.bf16.msra.mxu0 0
      %2481 = vmatprep.subr.bf16.mxu0 0
      %2482 = vmatpush1.bf16.msra.mxu0 0
      %2483 = vmatprep.subr.bf16.mxu0 0
      %2484 = vmatpush1.bf16.msra.mxu0 0
      %2485 = vmatprep.subr.bf16.mxu0 0
      %2486 = vmatpush1.bf16.msra.mxu0 0
      %2487 = vmatprep.subr.bf16.mxu0 0
      %2488 = vmatpush1.bf16.msra.mxu0 0
      %2489 = vmatprep.subr.bf16.mxu0 0
      %2490 = vmatpush1.bf16.msra.mxu0 0
      %2491 = vmatprep.subr.bf16.mxu0 0
      %2492 = vmatpush1.bf16.msra.mxu0 0
      %2493 = vmatprep.subr.bf16.mxu0 0
      %2494 = vmatpush1.bf16.msra.mxu0 0
      %2495 = vmatprep.subr.bf16.mxu0 0
      %2496 = vmatpush1.bf16.msra.mxu0 0
      %2497 = vmatprep.subr.bf16.mxu0 0
      %2498 = vmatpush1.bf16.msra.mxu0 0
      %2499 = vmatprep.mubr.bf16.mxu0 0
      %2500 = vmatmul.mubr.bf16.gmra.mrb[0].mxu0 %v2462
      %v2501 = vpop.f32.mrb[0].mxu0
      %v2502 = vadd.f32 0.0, %v2501
      %v2503 = vpop.f32.mrb[0].mxu0
      %v2504 = vpop.f32.mrb[0].mxu0
      %v2505 = vpop.f32.mrb[0].mxu0
      %2506 = vdwg.mxu0
      %v2507 = vadd.f32 %v2457, %v2502
      %s2508 = scalar_lea.vmem %s165, 112
      %v2509 = vld [vmem:[%s2508] sm:$0xf]
      %v2510 = vld [vmem:[%s554] sm:$0x3]
      %v2512 = vsel %vm179, %v2509, 0
      %v2515 = vsel %vm183, %v2510, 0
      %2517 = vmatprep.subr.bf16.mxu0 0
      %2518 = vmatpush1.bf16.msra.mxu0 %v2515
      %2519 = vmatprep.subr.bf16.mxu0 0
      %2520 = vmatpush1.bf16.msra.mxu0 0
      %2521 = vmatprep.subr.bf16.mxu0 0
      %2522 = vmatpush1.bf16.msra.mxu0 0
      %2523 = vmatprep.subr.bf16.mxu0 0
      %2524 = vmatpush1.bf16.msra.mxu0 0
      %2525 = vmatprep.subr.bf16.mxu0 0
      %2526 = vmatpush1.bf16.msra.mxu0 0
      %2527 = vmatprep.subr.bf16.mxu0 0
      %2528 = vmatpush1.bf16.msra.mxu0 0
      %2529 = vmatprep.subr.bf16.mxu0 0
      %2530 = vmatpush1.bf16.msra.mxu0 0
      %2531 = vmatprep.subr.bf16.mxu0 0
      %2532 = vmatpush1.bf16.msra.mxu0 0
      %2533 = vmatprep.subr.bf16.mxu0 0
      %2534 = vmatpush1.bf16.msra.mxu0 0
      %2535 = vmatprep.subr.bf16.mxu0 0
      %2536 = vmatpush1.bf16.msra.mxu0 0
      %2537 = vmatprep.subr.bf16.mxu0 0
      %2538 = vmatpush1.bf16.msra.mxu0 0
      %2539 = vmatprep.subr.bf16.mxu0 0
      %2540 = vmatpush1.bf16.msra.mxu0 0
      %2541 = vmatprep.subr.bf16.mxu0 0
      %2542 = vmatpush1.bf16.msra.mxu0 0
      %2543 = vmatprep.subr.bf16.mxu0 0
      %2544 = vmatpush1.bf16.msra.mxu0 0
      %2545 = vmatprep.subr.bf16.mxu0 0
      %2546 = vmatpush1.bf16.msra.mxu0 0
      %2547 = vmatprep.subr.bf16.mxu0 0
      %2548 = vmatpush1.bf16.msra.mxu0 0
      %2549 = vmatprep.mubr.bf16.mxu0 0
      %2550 = vmatmul.mubr.bf16.gmra.mrb[0].mxu0 %v2512
      %v2551 = vpop.f32.mrb[0].mxu0
      %v2552 = vadd.f32 0.0, %v2551
      %v2553 = vpop.f32.mrb[0].mxu0
      %v2554 = vpop.f32.mrb[0].mxu0
      %v2555 = vpop.f32.mrb[0].mxu0
      %2556 = vdwg.mxu0
      %v2557 = vadd.f32 %v2507, %v2552
      %v2558 = vld [vmem:[%s2458] sm:$0xf]
      %v2559 = vld [vmem:[%s2458 + $0x4] sm:$0x1]
      %v2560 = vld [vmem:[%s605] sm:$0x3]
      %v2563 = vunpack.c.l.b16 %v2558
      %v2564 = vunpack.c.l.b16 %v2559
      %v2565 = vpack.c.b16 %v2564, %v2563
      %v2567 = vshrl.u32 %v2565, 16
      %v2569 = vshll.u32 %v2565, 16
      %v2571 = vrot.slane %v2569, 1
      %v2572 = vor.u32 %v2567, %v2571
      %v2574 = vsel %vm179, %v2572, 0
      %v2577 = vsel %vm183, %v2560, 0
      %2579 = vmatprep.subr.bf16.mxu0 0
      %2580 = vmatpush1.bf16.msra.mxu0 %v2577
      %2581 = vmatprep.subr.bf16.mxu0 0
      %2582 = vmatpush1.bf16.msra.mxu0 0
      %2583 = vmatprep.subr.bf16.mxu0 0
      %2584 = vmatpush1.bf16.msra.mxu0 0
      %2585 = vmatprep.subr.bf16.mxu0 0
      %2586 = vmatpush1.bf16.msra.mxu0 0
      %2587 = vmatprep.subr.bf16.mxu0 0
      %2588 = vmatpush1.bf16.msra.mxu0 0
      %2589 = vmatprep.subr.bf16.mxu0 0
      %2590 = vmatpush1.bf16.msra.mxu0 0
      %2591 = vmatprep.subr.bf16.mxu0 0
      %2592 = vmatpush1.bf16.msra.mxu0 0
      %2593 = vmatprep.subr.bf16.mxu0 0
      %2594 = vmatpush1.bf16.msra.mxu0 0
      %2595 = vmatprep.subr.bf16.mxu0 0
      %2596 = vmatpush1.bf16.msra.mxu0 0
      %2597 = vmatprep.subr.bf16.mxu0 0
      %2598 = vmatpush1.bf16.msra.mxu0 0
      %2599 = vmatprep.subr.bf16.mxu0 0
      %2600 = vmatpush1.bf16.msra.mxu0 0
      %2601 = vmatprep.subr.bf16.mxu0 0
      %2602 = vmatpush1.bf16.msra.mxu0 0
      %2603 = vmatprep.subr.bf16.mxu0 0
      %2604 = vmatpush1.bf16.msra.mxu0 0
      %2605 = vmatprep.subr.bf16.mxu0 0
      %2606 = vmatpush1.bf16.msra.mxu0 0
      %2607 = vmatprep.subr.bf16.mxu0 0
      %2608 = vmatpush1.bf16.msra.mxu0 0
      %2609 = vmatprep.subr.bf16.mxu0 0
      %2610 = vmatpush1.bf16.msra.mxu0 0
      %2611 = vmatprep.mubr.bf16.mxu0 0
      %2612 = vmatmul.mubr.bf16.gmra.mrb[0].mxu0 %v2574
      %v2613 = vpop.f32.mrb[0].mxu0
      %v2614 = vadd.f32 0.0, %v2613
      %v2615 = vpop.f32.mrb[0].mxu0
      %v2616 = vpop.f32.mrb[0].mxu0
      %v2617 = vpop.f32.mrb[0].mxu0
      %2618 = vdwg.mxu0
      %v2619 = vadd.f32 %v2557, %v2614
      %v2620 = vadd.f32 %v2619, %v670
      %v2621 = vmax.f32 %v2620, 0.0
      %v2622 = vpack.c.bf16 %v2621, %v2621
      %s2623 = scalar_lea.vmem %s170, 16
      %2624 = vst.msk [vmem:[%s2623] sm:$0xf] %vm675, %v2622
      %v2625 = vld [vmem:[%s2458] sm:$0xf]
      %v2626 = vld [vmem:[%s1] sm:$0x3]
      %v2627 = vld [vmem:[%s2508] sm:$0xf]
      %v2628 = vld [vmem:[%s177] sm:$0x3]
      %v2630 = vsel %vm179, %v2627, 0
      %v2633 = vsel %vm183, %v2628, 0
      %2635 = vmatprep.subr.bf16.mxu0 0
      %2636 = vmatpush1.bf16.msra.mxu0 %v2633
      %2637 = vmatprep.subr.bf16.mxu0 0
      %2638 = vmatpush1.bf16.msra.mxu0 0
      %2639 = vmatprep.subr.bf16.mxu0 0
      %2640 = vmatpush1.bf16.msra.mxu0 0
      %2641 = vmatprep.subr.bf16.mxu0 0
      %2642 = vmatpush1.bf16.msra.mxu0 0
      %2643 = vmatprep.subr.bf16.mxu0 0
      %2644 = vmatpush1.bf16.msra.mxu0 0
      %2645 = vmatprep.subr.bf16.mxu0 0
      %2646 = vmatpush1.bf16.msra.mxu0 0
      %2647 = vmatprep.subr.bf16.mxu0 0
      %2648 = vmatpush1.bf16.msra.mxu0 0
      %2649 = vmatprep.subr.bf16.mxu0 0
      %2650 = vmatpush1.bf16.msra.mxu0 0
      %2651 = vmatprep.subr.bf16.mxu0 0
      %2652 = vmatpush1.bf16.msra.mxu0 0
      %2653 = vmatprep.subr.bf16.mxu0 0
      %2654 = vmatpush1.bf16.msra.mxu0 0
      %2655 = vmatprep.subr.bf16.mxu0 0
      %2656 = vmatpush1.bf16.msra.mxu0 0
      %2657 = vmatprep.subr.bf16.mxu0 0
      %2658 = vmatpush1.bf16.msra.mxu0 0
      %2659 = vmatprep.subr.bf16.mxu0 0
      %2660 = vmatpush1.bf16.msra.mxu0 0
      %2661 = vmatprep.subr.bf16.mxu0 0
      %2662 = vmatpush1.bf16.msra.mxu0 0
      %2663 = vmatprep.subr.bf16.mxu0 0
      %2664 = vmatpush1.bf16.msra.mxu0 0
      %2665 = vmatprep.subr.bf16.mxu0 0
      %2666 = vmatpush1.bf16.msra.mxu0 0
      %2667 = vmatprep.mubr.bf16.mxu0 0
      %2668 = vmatmul.mubr.bf16.gmra.mrb[0].mxu0 %v2630
      %v2669 = vpop.f32.mrb[0].mxu0
      %v2670 = vadd.f32 0.0, %v2669
      %v2671 = vpop.f32.mrb[0].mxu0
      %v2672 = vpop.f32.mrb[0].mxu0
      %v2673 = vpop.f32.mrb[0].mxu0
      %2674 = vdwg.mxu0
      %v2676 = vsel %vm179, %v2625, 0
      %v2679 = vsel %vm183, %v2626, 0
      %2681 = vmatprep.subr.bf16.mxu0 0
      %2682 = vmatpush1.bf16.msra.mxu0 %v2679
      %2683 = vmatprep.subr.bf16.mxu0 0
      %2684 = vmatpush1.bf16.msra.mxu0 0
      %2685 = vmatprep.subr.bf16.mxu0 0
      %2686 = vmatpush1.bf16.msra.mxu0 0
      %2687 = vmatprep.subr.bf16.mxu0 0
      %2688 = vmatpush1.bf16.msra.mxu0 0
      %2689 = vmatprep.subr.bf16.mxu0 0
      %2690 = vmatpush1.bf16.msra.mxu0 0
      %2691 = vmatprep.subr.bf16.mxu0 0
      %2692 = vmatpush1.bf16.msra.mxu0 0
      %2693 = vmatprep.subr.bf16.mxu0 0
      %2694 = vmatpush1.bf16.msra.mxu0 0
      %2695 = vmatprep.subr.bf16.mxu0 0
      %2696 = vmatpush1.bf16.msra.mxu0 0
      %2697 = vmatprep.subr.bf16.mxu0 0
      %2698 = vmatpush1.bf16.msra.mxu0 0
      %2699 = vmatprep.subr.bf16.mxu0 0
      %2700 = vmatpush1.bf16.msra.mxu0 0
      %2701 = vmatprep.subr.bf16.mxu0 0
      %2702 = vmatpush1.bf16.msra.mxu0 0
      %2703 = vmatprep.subr.bf16.mxu0 0
      %2704 = vmatpush1.bf16.msra.mxu0 0
      %2705 = vmatprep.subr.bf16.mxu0 0
      %2706 = vmatpush1.bf16.msra.mxu0 0
      %2707 = vmatprep.subr.bf16.mxu0 0
      %2708 = vmatpush1.bf16.msra.mxu0 0
      %2709 = vmatprep.subr.bf16.mxu0 0
      %2710 = vmatpush1.bf16.msra.mxu0 0
      %2711 = vmatprep.subr.bf16.mxu0 0
      %2712 = vmatpush1.bf16.msra.mxu0 0
      %2713 = vmatprep.mubr.bf16.mxu0 0
      %2714 = vmatmul.mubr.bf16.gmra.mrb[0].mxu0 %v2676
      %v2715 = vpop.f32.mrb[0].mxu0
      %v2716 = vadd.f32 %v2670, %v2715
      %v2717 = vpop.f32.mrb[0].mxu0
      %v2718 = vpop.f32.mrb[0].mxu0
      %v2719 = vpop.f32.mrb[0].mxu0
      %2720 = vdwg.mxu0
      %v2721 = vld [vmem:[%s2458] sm:$0xf]
      %v2722 = vld [vmem:[%s2458 + $0x4] sm:$0x1]
      %v2723 = vld [vmem:[%s275] sm:$0x3]
      %v2726 = vunpack.c.l.b16 %v2721
      %v2727 = vunpack.c.l.b16 %v2722
      %v2728 = vpack.c.b16 %v2727, %v2726
      %v2730 = vshrl.u32 %v2728, 16
      %v2732 = vshll.u32 %v2728, 16
      %v2734 = vrot.slane %v2732, 1
      %v2735 = vor.u32 %v2730, %v2734
      %v2737 = vsel %vm179, %v2735, 0
      %v2740 = vsel %vm183, %v2723, 0
      %2742 = vmatprep.subr.bf16.mxu0 0
      %2743 = vmatpush1.bf16.msra.mxu0 %v2740
      %2744 = vmatprep.subr.bf16.mxu0 0
      %2745 = vmatpush1.bf16.msra.mxu0 0
      %2746 = vmatprep.subr.bf16.mxu0 0
      %2747 = vmatpush1.bf16.msra.mxu0 0
      %2748 = vmatprep.subr.bf16.mxu0 0
      %2749 = vmatpush1.bf16.msra.mxu0 0
      %2750 = vmatprep.subr.bf16.mxu0 0
      %2751 = vmatpush1.bf16.msra.mxu0 0
      %2752 = vmatprep.subr.bf16.mxu0 0
      %2753 = vmatpush1.bf16.msra.mxu0 0
      %2754 = vmatprep.subr.bf16.mxu0 0
      %2755 = vmatpush1.bf16.msra.mxu0 0
      %2756 = vmatprep.subr.bf16.mxu0 0
      %2757 = vmatpush1.bf16.msra.mxu0 0
      %2758 = vmatprep.subr.bf16.mxu0 0
      %2759 = vmatpush1.bf16.msra.mxu0 0
      %2760 = vmatprep.subr.bf16.mxu0 0
      %2761 = vmatpush1.bf16.msra.mxu0 0
      %2762 = vmatprep.subr.bf16.mxu0 0
      %2763 = vmatpush1.bf16.msra.mxu0 0
      %2764 = vmatprep.subr.bf16.mxu0 0
      %2765 = vmatpush1.bf16.msra.mxu0 0
      %2766 = vmatprep.subr.bf16.mxu0 0
      %2767 = vmatpush1.bf16.msra.mxu0 0
      %2768 = vmatprep.subr.bf16.mxu0 0
      %2769 = vmatpush1.bf16.msra.mxu0 0
      %2770 = vmatprep.subr.bf16.mxu0 0
      %2771 = vmatpush1.bf16.msra.mxu0 0
      %2772 = vmatprep.subr.bf16.mxu0 0
      %2773 = vmatpush1.bf16.msra.mxu0 0
      %2774 = vmatprep.mubr.bf16.mxu0 0
      %2775 = vmatmul.mubr.bf16.gmra.mrb[0].mxu0 %v2737
      %v2776 = vpop.f32.mrb[0].mxu0
      %v2777 = vadd.f32 0.0, %v2776
      %v2778 = vpop.f32.mrb[0].mxu0
      %v2779 = vpop.f32.mrb[0].mxu0
      %v2780 = vpop.f32.mrb[0].mxu0
      %2781 = vdwg.mxu0
      %v2782 = vadd.f32 %v2716, %v2777
      %s2783 = scalar_lea.vmem %s165, 184
      %v2784 = vld [vmem:[%s2783] sm:$0xf]
      %v2785 = vld [vmem:[%s338] sm:$0x3]
      %v2787 = vsel %vm179, %v2784, 0
      %v2790 = vsel %vm183, %v2785, 0
      %2792 = vmatprep.subr.bf16.mxu0 0
      %2793 = vmatpush1.bf16.msra.mxu0 %v2790
      %2794 = vmatprep.subr.bf16.mxu0 0
      %2795 = vmatpush1.bf16.msra.mxu0 0
      %2796 = vmatprep.subr.bf16.mxu0 0
      %2797 = vmatpush1.bf16.msra.mxu0 0
      %2798 = vmatprep.subr.bf16.mxu0 0
      %2799 = vmatpush1.bf16.msra.mxu0 0
      %2800 = vmatprep.subr.bf16.mxu0 0
      %2801 = vmatpush1.bf16.msra.mxu0 0
      %2802 = vmatprep.subr.bf16.mxu0 0
      %2803 = vmatpush1.bf16.msra.mxu0 0
      %2804 = vmatprep.subr.bf16.mxu0 0
      %2805 = vmatpush1.bf16.msra.mxu0 0
      %2806 = vmatprep.subr.bf16.mxu0 0
      %2807 = vmatpush1.bf16.msra.mxu0 0
      %2808 = vmatprep.subr.bf16.mxu0 0
      %2809 = vmatpush1.bf16.msra.mxu0 0
      %2810 = vmatprep.subr.bf16.mxu0 0
      %2811 = vmatpush1.bf16.msra.mxu0 0
      %2812 = vmatprep.subr.bf16.mxu0 0
      %2813 = vmatpush1.bf16.msra.mxu0 0
      %2814 = vmatprep.subr.bf16.mxu0 0
      %2815 = vmatpush1.bf16.msra.mxu0 0
      %2816 = vmatprep.subr.bf16.mxu0 0
      %2817 = vmatpush1.bf16.msra.mxu0 0
      %2818 = vmatprep.subr.bf16.mxu0 0
      %2819 = vmatpush1.bf16.msra.mxu0 0
      %2820 = vmatprep.subr.bf16.mxu0 0
      %2821 = vmatpush1.bf16.msra.mxu0 0
      %2822 = vmatprep.subr.bf16.mxu0 0
      %2823 = vmatpush1.bf16.msra.mxu0 0
      %2824 = vmatprep.mubr.bf16.mxu0 0
      %2825 = vmatmul.mubr.bf16.gmra.mrb[0].mxu0 %v2787
      %v2826 = vpop.f32.mrb[0].mxu0
      %v2827 = vadd.f32 0.0, %v2826
      %v2828 = vpop.f32.mrb[0].mxu0
      %v2829 = vpop.f32.mrb[0].mxu0
      %v2830 = vpop.f32.mrb[0].mxu0
      %2831 = vdwg.mxu0
      %v2832 = vadd.f32 %v2782, %v2827
      %s2833 = scalar_lea.vmem %s165, 256
      %v2834 = vld [vmem:[%s2833] sm:$0xf]
      %v2835 = vld [vmem:[%s389] sm:$0x3]
      %v2837 = vsel %vm179, %v2834, 0
      %v2840 = vsel %vm183, %v2835, 0
      %2842 = vmatprep.subr.bf16.mxu0 0
      %2843 = vmatpush1.bf16.msra.mxu0 %v2840
      %2844 = vmatprep.subr.bf16.mxu0 0
      %2845 = vmatpush1.bf16.msra.mxu0 0
      %2846 = vmatprep.subr.bf16.mxu0 0
      %2847 = vmatpush1.bf16.msra.mxu0 0
      %2848 = vmatprep.subr.bf16.mxu0 0
      %2849 = vmatpush1.bf16.msra.mxu0 0
      %2850 = vmatprep.subr.bf16.mxu0 0
      %2851 = vmatpush1.bf16.msra.mxu0 0
      %2852 = vmatprep.subr.bf16.mxu0 0
      %2853 = vmatpush1.bf16.msra.mxu0 0
      %2854 = vmatprep.subr.bf16.mxu0 0
      %2855 = vmatpush1.bf16.msra.mxu0 0
      %2856 = vmatprep.subr.bf16.mxu0 0
      %2857 = vmatpush1.bf16.msra.mxu0 0
      %2858 = vmatprep.subr.bf16.mxu0 0
      %2859 = vmatpush1.bf16.msra.mxu0 0
      %2860 = vmatprep.subr.bf16.mxu0 0
      %2861 = vmatpush1.bf16.msra.mxu0 0
      %2862 = vmatprep.subr.bf16.mxu0 0
      %2863 = vmatpush1.bf16.msra.mxu0 0
      %2864 = vmatprep.subr.bf16.mxu0 0
      %2865 = vmatpush1.bf16.msra.mxu0 0
      %2866 = vmatprep.subr.bf16.mxu0 0
      %2867 = vmatpush1.bf16.msra.mxu0 0
      %2868 = vmatprep.subr.bf16.mxu0 0
      %2869 = vmatpush1.bf16.msra.mxu0 0
      %2870 = vmatprep.subr.bf16.mxu0 0
      %2871 = vmatpush1.bf16.msra.mxu0 0
      %2872 = vmatprep.subr.bf16.mxu0 0
      %2873 = vmatpush1.bf16.msra.mxu0 0
      %2874 = vmatprep.mubr.bf16.mxu0 0
      %2875 = vmatmul.mubr.bf16.gmra.mrb[0].mxu0 %v2837
      %v2876 = vpop.f32.mrb[0].mxu0
      %v2877 = vadd.f32 0.0, %v2876
      %v2878 = vpop.f32.mrb[0].mxu0
      %v2879 = vpop.f32.mrb[0].mxu0
      %v2880 = vpop.f32.mrb[0].mxu0
      %2881 = vdwg.mxu0
      %v2882 = vadd.f32 %v2832, %v2877
      %v2883 = vld [vmem:[%s2783] sm:$0xf]
      %v2884 = vld [vmem:[%s2783 + $0x4] sm:$0x1]
      %v2885 = vld [vmem:[%s440] sm:$0x3]
      %v2888 = vunpack.c.l.b16 %v2883
      %v2889 = vunpack.c.l.b16 %v2884
      %v2890 = vpack.c.b16 %v2889, %v2888
      %v2892 = vshrl.u32 %v2890, 16
      %v2894 = vshll.u32 %v2890, 16
      %v2896 = vrot.slane %v2894, 1
      %v2897 = vor.u32 %v2892, %v2896
      %v2899 = vsel %vm179, %v2897, 0
      %v2902 = vsel %vm183, %v2885, 0
      %2904 = vmatprep.subr.bf16.mxu0 0
      %2905 = vmatpush1.bf16.msra.mxu0 %v2902
      %2906 = vmatprep.subr.bf16.mxu0 0
      %2907 = vmatpush1.bf16.msra.mxu0 0
      %2908 = vmatprep.subr.bf16.mxu0 0
      %2909 = vmatpush1.bf16.msra.mxu0 0
      %2910 = vmatprep.subr.bf16.mxu0 0
      %2911 = vmatpush1.bf16.msra.mxu0 0
      %2912 = vmatprep.subr.bf16.mxu0 0
      %2913 = vmatpush1.bf16.msra.mxu0 0
      %2914 = vmatprep.subr.bf16.mxu0 0
      %2915 = vmatpush1.bf16.msra.mxu0 0
      %2916 = vmatprep.subr.bf16.mxu0 0
      %2917 = vmatpush1.bf16.msra.mxu0 0
      %2918 = vmatprep.subr.bf16.mxu0 0
      %2919 = vmatpush1.bf16.msra.mxu0 0
      %2920 = vmatprep.subr.bf16.mxu0 0
      %2921 = vmatpush1.bf16.msra.mxu0 0
      %2922 = vmatprep.subr.bf16.mxu0 0
      %2923 = vmatpush1.bf16.msra.mxu0 0
      %2924 = vmatprep.subr.bf16.mxu0 0
      %2925 = vmatpush1.bf16.msra.mxu0 0
      %2926 = vmatprep.subr.bf16.mxu0 0
      %2927 = vmatpush1.bf16.msra.mxu0 0
      %2928 = vmatprep.subr.bf16.mxu0 0
      %2929 = vmatpush1.bf16.msra.mxu0 0
      %2930 = vmatprep.subr.bf16.mxu0 0
      %2931 = vmatpush1.bf16.msra.mxu0 0
      %2932 = vmatprep.subr.bf16.mxu0 0
      %2933 = vmatpush1.bf16.msra.mxu0 0
      %2934 = vmatprep.subr.bf16.mxu0 0
      %2935 = vmatpush1.bf16.msra.mxu0 0
      %2936 = vmatprep.mubr.bf16.mxu0 0
      %2937 = vmatmul.mubr.bf16.gmra.mrb[0].mxu0 %v2899
      %v2938 = vpop.f32.mrb[0].mxu0
      %v2939 = vadd.f32 0.0, %v2938
      %v2940 = vpop.f32.mrb[0].mxu0
      %v2941 = vpop.f32.mrb[0].mxu0
      %v2942 = vpop.f32.mrb[0].mxu0
      %2943 = vdwg.mxu0
      %v2944 = vadd.f32 %v2882, %v2939
      %s2945 = scalar_lea.vmem %s165, 48
      %v2946 = vld [vmem:[%s2945] sm:$0xf]
      %v2947 = vld [vmem:[%s503] sm:$0x3]
      %v2949 = vsel %vm179, %v2946, 0
      %v2952 = vsel %vm183, %v2947, 0
      %2954 = vmatprep.subr.bf16.mxu0 0
      %2955 = vmatpush1.bf16.msra.mxu0 %v2952
      %2956 = vmatprep.subr.bf16.mxu0 0
      %2957 = vmatpush1.bf16.msra.mxu0 0
      %2958 = vmatprep.subr.bf16.mxu0 0
      %2959 = vmatpush1.bf16.msra.mxu0 0
      %2960 = vmatprep.subr.bf16.mxu0 0
      %2961 = vmatpush1.bf16.msra.mxu0 0
      %2962 = vmatprep.subr.bf16.mxu0 0
      %2963 = vmatpush1.bf16.msra.mxu0 0
      %2964 = vmatprep.subr.bf16.mxu0 0
      %2965 = vmatpush1.bf16.msra.mxu0 0
      %2966 = vmatprep.subr.bf16.mxu0 0
      %2967 = vmatpush1.bf16.msra.mxu0 0
      %2968 = vmatprep.subr.bf16.mxu0 0
      %2969 = vmatpush1.bf16.msra.mxu0 0
      %2970 = vmatprep.subr.bf16.mxu0 0
      %2971 = vmatpush1.bf16.msra.mxu0 0
      %2972 = vmatprep.subr.bf16.mxu0 0
      %2973 = vmatpush1.bf16.msra.mxu0 0
      %2974 = vmatprep.subr.bf16.mxu0 0
      %2975 = vmatpush1.bf16.msra.mxu0 0
      %2976 = vmatprep.subr.bf16.mxu0 0
      %2977 = vmatpush1.bf16.msra.mxu0 0
      %2978 = vmatprep.subr.bf16.mxu0 0
      %2979 = vmatpush1.bf16.msra.mxu0 0
      %2980 = vmatprep.subr.bf16.mxu0 0
      %2981 = vmatpush1.bf16.msra.mxu0 0
      %2982 = vmatprep.subr.bf16.mxu0 0
      %2983 = vmatpush1.bf16.msra.mxu0 0
      %2984 = vmatprep.subr.bf16.mxu0 0
      %2985 = vmatpush1.bf16.msra.mxu0 0
      %2986 = vmatprep.mubr.bf16.mxu0 0
      %2987 = vmatmul.mubr.bf16.gmra.mrb[0].mxu0 %v2949
      %v2988 = vpop.f32.mrb[0].mxu0
      %v2989 = vadd.f32 0.0, %v2988
      %v2990 = vpop.f32.mrb[0].mxu0
      %v2991 = vpop.f32.mrb[0].mxu0
      %v2992 = vpop.f32.mrb[0].mxu0
      %2993 = vdwg.mxu0
      %v2994 = vadd.f32 %v2944, %v2989
      %s2995 = scalar_lea.vmem %s165, 120
      %v2996 = vld [vmem:[%s2995] sm:$0xf]
      %v2997 = vld [vmem:[%s554] sm:$0x3]
      %v2999 = vsel %vm179, %v2996, 0
      %v3002 = vsel %vm183, %v2997, 0
      %3004 = vmatprep.subr.bf16.mxu0 0
      %3005 = vmatpush1.bf16.msra.mxu0 %v3002
      %3006 = vmatprep.subr.bf16.mxu0 0
      %3007 = vmatpush1.bf16.msra.mxu0 0
      %3008 = vmatprep.subr.bf16.mxu0 0
      %3009 = vmatpush1.bf16.msra.mxu0 0
      %3010 = vmatprep.subr.bf16.mxu0 0
      %3011 = vmatpush1.bf16.msra.mxu0 0
      %3012 = vmatprep.subr.bf16.mxu0 0
      %3013 = vmatpush1.bf16.msra.mxu0 0
      %3014 = vmatprep.subr.bf16.mxu0 0
      %3015 = vmatpush1.bf16.msra.mxu0 0
      %3016 = vmatprep.subr.bf16.mxu0 0
      %3017 = vmatpush1.bf16.msra.mxu0 0
      %3018 = vmatprep.subr.bf16.mxu0 0
      %3019 = vmatpush1.bf16.msra.mxu0 0
      %3020 = vmatprep.subr.bf16.mxu0 0
      %3021 = vmatpush1.bf16.msra.mxu0 0
      %3022 = vmatprep.subr.bf16.mxu0 0
      %3023 = vmatpush1.bf16.msra.mxu0 0
      %3024 = vmatprep.subr.bf16.mxu0 0
      %3025 = vmatpush1.bf16.msra.mxu0 0
      %3026 = vmatprep.subr.bf16.mxu0 0
      %3027 = vmatpush1.bf16.msra.mxu0 0
      %3028 = vmatprep.subr.bf16.mxu0 0
      %3029 = vmatpush1.bf16.msra.mxu0 0
      %3030 = vmatprep.subr.bf16.mxu0 0
      %3031 = vmatpush1.bf16.msra.mxu0 0
      %3032 = vmatprep.subr.bf16.mxu0 0
      %3033 = vmatpush1.bf16.msra.mxu0 0
      %3034 = vmatprep.subr.bf16.mxu0 0
      %3035 = vmatpush1.bf16.msra.mxu0 0
      %3036 = vmatprep.mubr.bf16.mxu0 0
      %3037 = vmatmul.mubr.bf16.gmra.mrb[0].mxu0 %v2999
      %v3038 = vpop.f32.mrb[0].mxu0
      %v3039 = vadd.f32 0.0, %v3038
      %v3040 = vpop.f32.mrb[0].mxu0
      %v3041 = vpop.f32.mrb[0].mxu0
      %v3042 = vpop.f32.mrb[0].mxu0
      %3043 = vdwg.mxu0
      %v3044 = vadd.f32 %v2994, %v3039
      %v3045 = vld [vmem:[%s2945] sm:$0xf]
      %v3046 = vld [vmem:[%s2945 + $0x4] sm:$0x1]
      %v3047 = vld [vmem:[%s605] sm:$0x3]
      %v3050 = vunpack.c.l.b16 %v3045
      %v3051 = vunpack.c.l.b16 %v3046
      %v3052 = vpack.c.b16 %v3051, %v3050
      %v3054 = vshrl.u32 %v3052, 16
      %v3056 = vshll.u32 %v3052, 16
      %v3058 = vrot.slane %v3056, 1
      %v3059 = vor.u32 %v3054, %v3058
      %v3061 = vsel %vm179, %v3059, 0
      %v3064 = vsel %vm183, %v3047, 0
      %3066 = vmatprep.subr.bf16.mxu0 0
      %3067 = vmatpush1.bf16.msra.mxu0 %v3064
      %3068 = vmatprep.subr.bf16.mxu0 0
      %3069 = vmatpush1.bf16.msra.mxu0 0
      %3070 = vmatprep.subr.bf16.mxu0 0
      %3071 = vmatpush1.bf16.msra.mxu0 0
      %3072 = vmatprep.subr.bf16.mxu0 0
      %3073 = vmatpush1.bf16.msra.mxu0 0
      %3074 = vmatprep.subr.bf16.mxu0 0
      %3075 = vmatpush1.bf16.msra.mxu0 0
      %3076 = vmatprep.subr.bf16.mxu0 0
      %3077 = vmatpush1.bf16.msra.mxu0 0
      %3078 = vmatprep.subr.bf16.mxu0 0
      %3079 = vmatpush1.bf16.msra.mxu0 0
      %3080 = vmatprep.subr.bf16.mxu0 0
      %3081 = vmatpush1.bf16.msra.mxu0 0
      %3082 = vmatprep.subr.bf16.mxu0 0
      %3083 = vmatpush1.bf16.msra.mxu0 0
      %3084 = vmatprep.subr.bf16.mxu0 0
      %3085 = vmatpush1.bf16.msra.mxu0 0
      %3086 = vmatprep.subr.bf16.mxu0 0
      %3087 = vmatpush1.bf16.msra.mxu0 0
      %3088 = vmatprep.subr.bf16.mxu0 0
      %3089 = vmatpush1.bf16.msra.mxu0 0
      %3090 = vmatprep.subr.bf16.mxu0 0
      %3091 = vmatpush1.bf16.msra.mxu0 0
      %3092 = vmatprep.subr.bf16.mxu0 0
      %3093 = vmatpush1.bf16.msra.mxu0 0
      %3094 = vmatprep.subr.bf16.mxu0 0
      %3095 = vmatpush1.bf16.msra.mxu0 0
      %3096 = vmatprep.subr.bf16.mxu0 0
      %3097 = vmatpush1.bf16.msra.mxu0 0
      %3098 = vmatprep.mubr.bf16.mxu0 0
      %3099 = vmatmul.mubr.bf16.gmra.mrb[0].mxu0 %v3061
      %v3100 = vpop.f32.mrb[0].mxu0
      %v3101 = vadd.f32 0.0, %v3100
      %v3102 = vpop.f32.mrb[0].mxu0
      %v3103 = vpop.f32.mrb[0].mxu0
      %v3104 = vpop.f32.mrb[0].mxu0
      %3105 = vdwg.mxu0
      %v3106 = vadd.f32 %v3044, %v3101
      %v3107 = vadd.f32 %v3106, %v670
      %v3108 = vmax.f32 %v3107, 0.0
      %v3109 = vpack.c.bf16 %v3108, %v3108
      %s3110 = scalar_lea.vmem %s170, 20
      %3111 = vst.msk [vmem:[%s3110] sm:$0xf] %vm675, %v3109
      %v3112 = vld [vmem:[%s2945] sm:$0xf]
      %v3113 = vld [vmem:[%s1] sm:$0x3]
      %v3114 = vld [vmem:[%s2995] sm:$0xf]
      %v3115 = vld [vmem:[%s177] sm:$0x3]
      %v3117 = vsel %vm179, %v3114, 0
      %v3120 = vsel %vm183, %v3115, 0
      %3122 = vmatprep.subr.bf16.mxu0 0
      %3123 = vmatpush1.bf16.msra.mxu0 %v3120
      %3124 = vmatprep.subr.bf16.mxu0 0
      %3125 = vmatpush1.bf16.msra.mxu0 0
      %3126 = vmatprep.subr.bf16.mxu0 0
      %3127 = vmatpush1.bf16.msra.mxu0 0
      %3128 = vmatprep.subr.bf16.mxu0 0
      %3129 = vmatpush1.bf16.msra.mxu0 0
      %3130 = vmatprep.subr.bf16.mxu0 0
      %3131 = vmatpush1.bf16.msra.mxu0 0
      %3132 = vmatprep.subr.bf16.mxu0 0
      %3133 = vmatpush1.bf16.msra.mxu0 0
      %3134 = vmatprep.subr.bf16.mxu0 0
      %3135 = vmatpush1.bf16.msra.mxu0 0
      %3136 = vmatprep.subr.bf16.mxu0 0
      %3137 = vmatpush1.bf16.msra.mxu0 0
      %3138 = vmatprep.subr.bf16.mxu0 0
      %3139 = vmatpush1.bf16.msra.mxu0 0
      %3140 = vmatprep.subr.bf16.mxu0 0
      %3141 = vmatpush1.bf16.msra.mxu0 0
      %3142 = vmatprep.subr.bf16.mxu0 0
      %3143 = vmatpush1.bf16.msra.mxu0 0
      %3144 = vmatprep.subr.bf16.mxu0 0
      %3145 = vmatpush1.bf16.msra.mxu0 0
      %3146 = vmatprep.subr.bf16.mxu0 0
      %3147 = vmatpush1.bf16.msra.mxu0 0
      %3148 = vmatprep.subr.bf16.mxu0 0
      %3149 = vmatpush1.bf16.msra.mxu0 0
      %3150 = vmatprep.subr.bf16.mxu0 0
      %3151 = vmatpush1.bf16.msra.mxu0 0
      %3152 = vmatprep.subr.bf16.mxu0 0
      %3153 = vmatpush1.bf16.msra.mxu0 0
      %3154 = vmatprep.mubr.bf16.mxu0 0
      %3155 = vmatmul.mubr.bf16.gmra.mrb[0].mxu0 %v3117
      %v3156 = vpop.f32.mrb[0].mxu0
      %v3157 = vadd.f32 0.0, %v3156
      %v3158 = vpop.f32.mrb[0].mxu0
      %v3159 = vpop.f32.mrb[0].mxu0
      %v3160 = vpop.f32.mrb[0].mxu0
      %3161 = vdwg.mxu0
      %v3163 = vsel %vm179, %v3112, 0
      %v3166 = vsel %vm183, %v3113, 0
      %3168 = vmatprep.subr.bf16.mxu0 0
      %3169 = vmatpush1.bf16.msra.mxu0 %v3166
      %3170 = vmatprep.subr.bf16.mxu0 0
      %3171 = vmatpush1.bf16.msra.mxu0 0
      %3172 = vmatprep.subr.bf16.mxu0 0
      %3173 = vmatpush1.bf16.msra.mxu0 0
      %3174 = vmatprep.subr.bf16.mxu0 0
      %3175 = vmatpush1.bf16.msra.mxu0 0
      %3176 = vmatprep.subr.bf16.mxu0 0
      %3177 = vmatpush1.bf16.msra.mxu0 0
      %3178 = vmatprep.subr.bf16.mxu0 0
      %3179 = vmatpush1.bf16.msra.mxu0 0
      %3180 = vmatprep.subr.bf16.mxu0 0
      %3181 = vmatpush1.bf16.msra.mxu0 0
      %3182 = vmatprep.subr.bf16.mxu0 0
      %3183 = vmatpush1.bf16.msra.mxu0 0
      %3184 = vmatprep.subr.bf16.mxu0 0
      %3185 = vmatpush1.bf16.msra.mxu0 0
      %3186 = vmatprep.subr.bf16.mxu0 0
      %3187 = vmatpush1.bf16.msra.mxu0 0
      %3188 = vmatprep.subr.bf16.mxu0 0
      %3189 = vmatpush1.bf16.msra.mxu0 0
      %3190 = vmatprep.subr.bf16.mxu0 0
      %3191 = vmatpush1.bf16.msra.mxu0 0
      %3192 = vmatprep.subr.bf16.mxu0 0
      %3193 = vmatpush1.bf16.msra.mxu0 0
      %3194 = vmatprep.subr.bf16.mxu0 0
      %3195 = vmatpush1.bf16.msra.mxu0 0
      %3196 = vmatprep.subr.bf16.mxu0 0
      %3197 = vmatpush1.bf16.msra.mxu0 0
      %3198 = vmatprep.subr.bf16.mxu0 0
      %3199 = vmatpush1.bf16.msra.mxu0 0
      %3200 = vmatprep.mubr.bf16.mxu0 0
      %3201 = vmatmul.mubr.bf16.gmra.mrb[0].mxu0 %v3163
      %v3202 = vpop.f32.mrb[0].mxu0
      %v3203 = vadd.f32 %v3157, %v3202
      %v3204 = vpop.f32.mrb[0].mxu0
      %v3205 = vpop.f32.mrb[0].mxu0
      %v3206 = vpop.f32.mrb[0].mxu0
      %3207 = vdwg.mxu0
      %v3208 = vld [vmem:[%s2945] sm:$0xf]
      %v3209 = vld [vmem:[%s2945 + $0x4] sm:$0x1]
      %v3210 = vld [vmem:[%s275] sm:$0x3]
      %v3213 = vunpack.c.l.b16 %v3208
      %v3214 = vunpack.c.l.b16 %v3209
      %v3215 = vpack.c.b16 %v3214, %v3213
      %v3217 = vshrl.u32 %v3215, 16
      %v3219 = vshll.u32 %v3215, 16
      %v3221 = vrot.slane %v3219, 1
      %v3222 = vor.u32 %v3217, %v3221
      %v3224 = vsel %vm179, %v3222, 0
      %v3227 = vsel %vm183, %v3210, 0
      %3229 = vmatprep.subr.bf16.mxu0 0
      %3230 = vmatpush1.bf16.msra.mxu0 %v3227
      %3231 = vmatprep.subr.bf16.mxu0 0
      %3232 = vmatpush1.bf16.msra.mxu0 0
      %3233 = vmatprep.subr.bf16.mxu0 0
      %3234 = vmatpush1.bf16.msra.mxu0 0
      %3235 = vmatprep.subr.bf16.mxu0 0
      %3236 = vmatpush1.bf16.msra.mxu0 0
      %3237 = vmatprep.subr.bf16.mxu0 0
      %3238 = vmatpush1.bf16.msra.mxu0 0
      %3239 = vmatprep.subr.bf16.mxu0 0
      %3240 = vmatpush1.bf16.msra.mxu0 0
      %3241 = vmatprep.subr.bf16.mxu0 0
      %3242 = vmatpush1.bf16.msra.mxu0 0
      %3243 = vmatprep.subr.bf16.mxu0 0
      %3244 = vmatpush1.bf16.msra.mxu0 0
      %3245 = vmatprep.subr.bf16.mxu0 0
      %3246 = vmatpush1.bf16.msra.mxu0 0
      %3247 = vmatprep.subr.bf16.mxu0 0
      %3248 = vmatpush1.bf16.msra.mxu0 0
      %3249 = vmatprep.subr.bf16.mxu0 0
      %3250 = vmatpush1.bf16.msra.mxu0 0
      %3251 = vmatprep.subr.bf16.mxu0 0
      %3252 = vmatpush1.bf16.msra.mxu0 0
      %3253 = vmatprep.subr.bf16.mxu0 0
      %3254 = vmatpush1.bf16.msra.mxu0 0
      %3255 = vmatprep.subr.bf16.mxu0 0
      %3256 = vmatpush1.bf16.msra.mxu0 0
      %3257 = vmatprep.subr.bf16.mxu0 0
      %3258 = vmatpush1.bf16.msra.mxu0 0
      %3259 = vmatprep.subr.bf16.mxu0 0
      %3260 = vmatpush1.bf16.msra.mxu0 0
      %3261 = vmatprep.mubr.bf16.mxu0 0
      %3262 = vmatmul.mubr.bf16.gmra.mrb[0].mxu0 %v3224
      %v3263 = vpop.f32.mrb[0].mxu0
      %v3264 = vadd.f32 0.0, %v3263
      %v3265 = vpop.f32.mrb[0].mxu0
      %v3266 = vpop.f32.mrb[0].mxu0
      %v3267 = vpop.f32.mrb[0].mxu0
      %3268 = vdwg.mxu0
      %v3269 = vadd.f32 %v3203, %v3264
      %s3270 = scalar_lea.vmem %s165, 192
      %v3271 = vld [vmem:[%s3270] sm:$0xf]
      %v3272 = vld [vmem:[%s338] sm:$0x3]
      %v3274 = vsel %vm179, %v3271, 0
      %v3277 = vsel %vm183, %v3272, 0
      %3279 = vmatprep.subr.bf16.mxu0 0
      %3280 = vmatpush1.bf16.msra.mxu0 %v3277
      %3281 = vmatprep.subr.bf16.mxu0 0
      %3282 = vmatpush1.bf16.msra.mxu0 0
      %3283 = vmatprep.subr.bf16.mxu0 0
      %3284 = vmatpush1.bf16.msra.mxu0 0
      %3285 = vmatprep.subr.bf16.mxu0 0
      %3286 = vmatpush1.bf16.msra.mxu0 0
      %3287 = vmatprep.subr.bf16.mxu0 0
      %3288 = vmatpush1.bf16.msra.mxu0 0
      %3289 = vmatprep.subr.bf16.mxu0 0
      %3290 = vmatpush1.bf16.msra.mxu0 0
      %3291 = vmatprep.subr.bf16.mxu0 0
      %3292 = vmatpush1.bf16.msra.mxu0 0
      %3293 = vmatprep.subr.bf16.mxu0 0
      %3294 = vmatpush1.bf16.msra.mxu0 0
      %3295 = vmatprep.subr.bf16.mxu0 0
      %3296 = vmatpush1.bf16.msra.mxu0 0
      %3297 = vmatprep.subr.bf16.mxu0 0
      %3298 = vmatpush1.bf16.msra.mxu0 0
      %3299 = vmatprep.subr.bf16.mxu0 0
      %3300 = vmatpush1.bf16.msra.mxu0 0
      %3301 = vmatprep.subr.bf16.mxu0 0
      %3302 = vmatpush1.bf16.msra.mxu0 0
      %3303 = vmatprep.subr.bf16.mxu0 0
      %3304 = vmatpush1.bf16.msra.mxu0 0
      %3305 = vmatprep.subr.bf16.mxu0 0
      %3306 = vmatpush1.bf16.msra.mxu0 0
      %3307 = vmatprep.subr.bf16.mxu0 0
      %3308 = vmatpush1.bf16.msra.mxu0 0
      %3309 = vmatprep.subr.bf16.mxu0 0
      %3310 = vmatpush1.bf16.msra.mxu0 0
      %3311 = vmatprep.mubr.bf16.mxu0 0
      %3312 = vmatmul.mubr.bf16.gmra.mrb[0].mxu0 %v3274
      %v3313 = vpop.f32.mrb[0].mxu0
      %v3314 = vadd.f32 0.0, %v3313
      %v3315 = vpop.f32.mrb[0].mxu0
      %v3316 = vpop.f32.mrb[0].mxu0
      %v3317 = vpop.f32.mrb[0].mxu0
      %3318 = vdwg.mxu0
      %v3319 = vadd.f32 %v3269, %v3314
      %s3320 = scalar_lea.vmem %s165, 264
      %v3321 = vld [vmem:[%s3320] sm:$0xf]
      %v3322 = vld [vmem:[%s389] sm:$0x3]
      %v3324 = vsel %vm179, %v3321, 0
      %v3327 = vsel %vm183, %v3322, 0
      %3329 = vmatprep.subr.bf16.mxu0 0
      %3330 = vmatpush1.bf16.msra.mxu0 %v3327
      %3331 = vmatprep.subr.bf16.mxu0 0
      %3332 = vmatpush1.bf16.msra.mxu0 0
      %3333 = vmatprep.subr.bf16.mxu0 0
      %3334 = vmatpush1.bf16.msra.mxu0 0
      %3335 = vmatprep.subr.bf16.mxu0 0
      %3336 = vmatpush1.bf16.msra.mxu0 0
      %3337 = vmatprep.subr.bf16.mxu0 0
      %3338 = vmatpush1.bf16.msra.mxu0 0
      %3339 = vmatprep.subr.bf16.mxu0 0
      %3340 = vmatpush1.bf16.msra.mxu0 0
      %3341 = vmatprep.subr.bf16.mxu0 0
      %3342 = vmatpush1.bf16.msra.mxu0 0
      %3343 = vmatprep.subr.bf16.mxu0 0
      %3344 = vmatpush1.bf16.msra.mxu0 0
      %3345 = vmatprep.subr.bf16.mxu0 0
      %3346 = vmatpush1.bf16.msra.mxu0 0
      %3347 = vmatprep.subr.bf16.mxu0 0
      %3348 = vmatpush1.bf16.msra.mxu0 0
      %3349 = vmatprep.subr.bf16.mxu0 0
      %3350 = vmatpush1.bf16.msra.mxu0 0
      %3351 = vmatprep.subr.bf16.mxu0 0
      %3352 = vmatpush1.bf16.msra.mxu0 0
      %3353 = vmatprep.subr.bf16.mxu0 0
      %3354 = vmatpush1.bf16.msra.mxu0 0
      %3355 = vmatprep.subr.bf16.mxu0 0
      %3356 = vmatpush1.bf16.msra.mxu0 0
      %3357 = vmatprep.subr.bf16.mxu0 0
      %3358 = vmatpush1.bf16.msra.mxu0 0
      %3359 = vmatprep.subr.bf16.mxu0 0
      %3360 = vmatpush1.bf16.msra.mxu0 0
      %3361 = vmatprep.mubr.bf16.mxu0 0
      %3362 = vmatmul.mubr.bf16.gmra.mrb[0].mxu0 %v3324
      %v3363 = vpop.f32.mrb[0].mxu0
      %v3364 = vadd.f32 0.0, %v3363
      %v3365 = vpop.f32.mrb[0].mxu0
      %v3366 = vpop.f32.mrb[0].mxu0
      %v3367 = vpop.f32.mrb[0].mxu0
      %3368 = vdwg.mxu0
      %v3369 = vadd.f32 %v3319, %v3364
      %v3370 = vld [vmem:[%s3270] sm:$0xf]
      %v3371 = vld [vmem:[%s3270 + $0x4] sm:$0x1]
      %v3372 = vld [vmem:[%s440] sm:$0x3]
      %v3375 = vunpack.c.l.b16 %v3370
      %v3376 = vunpack.c.l.b16 %v3371
      %v3377 = vpack.c.b16 %v3376, %v3375
      %v3379 = vshrl.u32 %v3377, 16
      %v3381 = vshll.u32 %v3377, 16
      %v3383 = vrot.slane %v3381, 1
      %v3384 = vor.u32 %v3379, %v3383
      %v3386 = vsel %vm179, %v3384, 0
      %v3389 = vsel %vm183, %v3372, 0
      %3391 = vmatprep.subr.bf16.mxu0 0
      %3392 = vmatpush1.bf16.msra.mxu0 %v3389
      %3393 = vmatprep.subr.bf16.mxu0 0
      %3394 = vmatpush1.bf16.msra.mxu0 0
      %3395 = vmatprep.subr.bf16.mxu0 0
      %3396 = vmatpush1.bf16.msra.mxu0 0
      %3397 = vmatprep.subr.bf16.mxu0 0
      %3398 = vmatpush1.bf16.msra.mxu0 0
      %3399 = vmatprep.subr.bf16.mxu0 0
      %3400 = vmatpush1.bf16.msra.mxu0 0
      %3401 = vmatprep.subr.bf16.mxu0 0
      %3402 = vmatpush1.bf16.msra.mxu0 0
      %3403 = vmatprep.subr.bf16.mxu0 0
      %3404 = vmatpush1.bf16.msra.mxu0 0
      %3405 = vmatprep.subr.bf16.mxu0 0
      %3406 = vmatpush1.bf16.msra.mxu0 0
      %3407 = vmatprep.subr.bf16.mxu0 0
      %3408 = vmatpush1.bf16.msra.mxu0 0
      %3409 = vmatprep.subr.bf16.mxu0 0
      %3410 = vmatpush1.bf16.msra.mxu0 0
      %3411 = vmatprep.subr.bf16.mxu0 0
      %3412 = vmatpush1.bf16.msra.mxu0 0
      %3413 = vmatprep.subr.bf16.mxu0 0
      %3414 = vmatpush1.bf16.msra.mxu0 0
      %3415 = vmatprep.subr.bf16.mxu0 0
      %3416 = vmatpush1.bf16.msra.mxu0 0
      %3417 = vmatprep.subr.bf16.mxu0 0
      %3418 = vmatpush1.bf16.msra.mxu0 0
      %3419 = vmatprep.subr.bf16.mxu0 0
      %3420 = vmatpush1.bf16.msra.mxu0 0
      %3421 = vmatprep.subr.bf16.mxu0 0
      %3422 = vmatpush1.bf16.msra.mxu0 0
      %3423 = vmatprep.mubr.bf16.mxu0 0
      %3424 = vmatmul.mubr.bf16.gmra.mrb[0].mxu0 %v3386
      %v3425 = vpop.f32.mrb[0].mxu0
      %v3426 = vadd.f32 0.0, %v3425
      %v3427 = vpop.f32.mrb[0].mxu0
      %v3428 = vpop.f32.mrb[0].mxu0
      %v3429 = vpop.f32.mrb[0].mxu0
      %3430 = vdwg.mxu0
      %v3431 = vadd.f32 %v3369, %v3426
      %s3432 = scalar_lea.vmem %s165, 56
      %v3433 = vld [vmem:[%s3432] sm:$0xf]
      %v3434 = vld [vmem:[%s503] sm:$0x3]
      %v3436 = vsel %vm179, %v3433, 0
      %v3439 = vsel %vm183, %v3434, 0
      %3441 = vmatprep.subr.bf16.mxu0 0
      %3442 = vmatpush1.bf16.msra.mxu0 %v3439
      %3443 = vmatprep.subr.bf16.mxu0 0
      %3444 = vmatpush1.bf16.msra.mxu0 0
      %3445 = vmatprep.subr.bf16.mxu0 0
      %3446 = vmatpush1.bf16.msra.mxu0 0
      %3447 = vmatprep.subr.bf16.mxu0 0
      %3448 = vmatpush1.bf16.msra.mxu0 0
      %3449 = vmatprep.subr.bf16.mxu0 0
      %3450 = vmatpush1.bf16.msra.mxu0 0
      %3451 = vmatprep.subr.bf16.mxu0 0
      %3452 = vmatpush1.bf16.msra.mxu0 0
      %3453 = vmatprep.subr.bf16.mxu0 0
      %3454 = vmatpush1.bf16.msra.mxu0 0
      %3455 = vmatprep.subr.bf16.mxu0 0
      %3456 = vmatpush1.bf16.msra.mxu0 0
      %3457 = vmatprep.subr.bf16.mxu0 0
      %3458 = vmatpush1.bf16.msra.mxu0 0
      %3459 = vmatprep.subr.bf16.mxu0 0
      %3460 = vmatpush1.bf16.msra.mxu0 0
      %3461 = vmatprep.subr.bf16.mxu0 0
      %3462 = vmatpush1.bf16.msra.mxu0 0
      %3463 = vmatprep.subr.bf16.mxu0 0
      %3464 = vmatpush1.bf16.msra.mxu0 0
      %3465 = vmatprep.subr.bf16.mxu0 0
      %3466 = vmatpush1.bf16.msra.mxu0 0
      %3467 = vmatprep.subr.bf16.mxu0 0
      %3468 = vmatpush1.bf16.msra.mxu0 0
      %3469 = vmatprep.subr.bf16.mxu0 0
      %3470 = vmatpush1.bf16.msra.mxu0 0
      %3471 = vmatprep.subr.bf16.mxu0 0
      %3472 = vmatpush1.bf16.msra.mxu0 0
      %3473 = vmatprep.mubr.bf16.mxu0 0
      %3474 = vmatmul.mubr.bf16.gmra.mrb[0].mxu0 %v3436
      %v3475 = vpop.f32.mrb[0].mxu0
      %v3476 = vadd.f32 0.0, %v3475
      %v3477 = vpop.f32.mrb[0].mxu0
      %v3478 = vpop.f32.mrb[0].mxu0
      %v3479 = vpop.f32.mrb[0].mxu0
      %3480 = vdwg.mxu0
      %v3481 = vadd.f32 %v3431, %v3476
      %s3482 = scalar_lea.vmem %s165, 128
      %v3483 = vld [vmem:[%s3482] sm:$0xf]
      %v3484 = vld [vmem:[%s554] sm:$0x3]
      %v3486 = vsel %vm179, %v3483, 0
      %v3489 = vsel %vm183, %v3484, 0
      %3491 = vmatprep.subr.bf16.mxu0 0
      %3492 = vmatpush1.bf16.msra.mxu0 %v3489
      %3493 = vmatprep.subr.bf16.mxu0 0
      %3494 = vmatpush1.bf16.msra.mxu0 0
      %3495 = vmatprep.subr.bf16.mxu0 0
      %3496 = vmatpush1.bf16.msra.mxu0 0
      %3497 = vmatprep.subr.bf16.mxu0 0
      %3498 = vmatpush1.bf16.msra.mxu0 0
      %3499 = vmatprep.subr.bf16.mxu0 0
      %3500 = vmatpush1.bf16.msra.mxu0 0
      %3501 = vmatprep.subr.bf16.mxu0 0
      %3502 = vmatpush1.bf16.msra.mxu0 0
      %3503 = vmatprep.subr.bf16.mxu0 0
      %3504 = vmatpush1.bf16.msra.mxu0 0
      %3505 = vmatprep.subr.bf16.mxu0 0
      %3506 = vmatpush1.bf16.msra.mxu0 0
      %3507 = vmatprep.subr.bf16.mxu0 0
      %3508 = vmatpush1.bf16.msra.mxu0 0
      %3509 = vmatprep.subr.bf16.mxu0 0
      %3510 = vmatpush1.bf16.msra.mxu0 0
      %3511 = vmatprep.subr.bf16.mxu0 0
      %3512 = vmatpush1.bf16.msra.mxu0 0
      %3513 = vmatprep.subr.bf16.mxu0 0
      %3514 = vmatpush1.bf16.msra.mxu0 0
      %3515 = vmatprep.subr.bf16.mxu0 0
      %3516 = vmatpush1.bf16.msra.mxu0 0
      %3517 = vmatprep.subr.bf16.mxu0 0
      %3518 = vmatpush1.bf16.msra.mxu0 0
      %3519 = vmatprep.subr.bf16.mxu0 0
      %3520 = vmatpush1.bf16.msra.mxu0 0
      %3521 = vmatprep.subr.bf16.mxu0 0
      %3522 = vmatpush1.bf16.msra.mxu0 0
      %3523 = vmatprep.mubr.bf16.mxu0 0
      %3524 = vmatmul.mubr.bf16.gmra.mrb[0].mxu0 %v3486
      %v3525 = vpop.f32.mrb[0].mxu0
      %v3526 = vadd.f32 0.0, %v3525
      %v3527 = vpop.f32.mrb[0].mxu0
      %v3528 = vpop.f32.mrb[0].mxu0
      %v3529 = vpop.f32.mrb[0].mxu0
      %3530 = vdwg.mxu0
      %v3531 = vadd.f32 %v3481, %v3526
      %v3532 = vld [vmem:[%s3432] sm:$0xf]
      %v3533 = vld [vmem:[%s3432 + $0x4] sm:$0x1]
      %v3534 = vld [vmem:[%s605] sm:$0x3]
      %v3537 = vunpack.c.l.b16 %v3532
      %v3538 = vunpack.c.l.b16 %v3533
      %v3539 = vpack.c.b16 %v3538, %v3537
      %v3541 = vshrl.u32 %v3539, 16
      %v3543 = vshll.u32 %v3539, 16
      %v3545 = vrot.slane %v3543, 1
      %v3546 = vor.u32 %v3541, %v3545
      %v3548 = vsel %vm179, %v3546, 0
      %v3551 = vsel %vm183, %v3534, 0
      %3553 = vmatprep.subr.bf16.mxu0 0
      %3554 = vmatpush1.bf16.msra.mxu0 %v3551
      %3555 = vmatprep.subr.bf16.mxu0 0
      %3556 = vmatpush1.bf16.msra.mxu0 0
      %3557 = vmatprep.subr.bf16.mxu0 0
      %3558 = vmatpush1.bf16.msra.mxu0 0
      %3559 = vmatprep.subr.bf16.mxu0 0
      %3560 = vmatpush1.bf16.msra.mxu0 0
      %3561 = vmatprep.subr.bf16.mxu0 0
      %3562 = vmatpush1.bf16.msra.mxu0 0
      %3563 = vmatprep.subr.bf16.mxu0 0
      %3564 = vmatpush1.bf16.msra.mxu0 0
      %3565 = vmatprep.subr.bf16.mxu0 0
      %3566 = vmatpush1.bf16.msra.mxu0 0
      %3567 = vmatprep.subr.bf16.mxu0 0
      %3568 = vmatpush1.bf16.msra.mxu0 0
      %3569 = vmatprep.subr.bf16.mxu0 0
      %3570 = vmatpush1.bf16.msra.mxu0 0
      %3571 = vmatprep.subr.bf16.mxu0 0
      %3572 = vmatpush1.bf16.msra.mxu0 0
      %3573 = vmatprep.subr.bf16.mxu0 0
      %3574 = vmatpush1.bf16.msra.mxu0 0
      %3575 = vmatprep.subr.bf16.mxu0 0
      %3576 = vmatpush1.bf16.msra.mxu0 0
      %3577 = vmatprep.subr.bf16.mxu0 0
      %3578 = vmatpush1.bf16.msra.mxu0 0
      %3579 = vmatprep.subr.bf16.mxu0 0
      %3580 = vmatpush1.bf16.msra.mxu0 0
      %3581 = vmatprep.subr.bf16.mxu0 0
      %3582 = vmatpush1.bf16.msra.mxu0 0
      %3583 = vmatprep.subr.bf16.mxu0 0
      %3584 = vmatpush1.bf16.msra.mxu0 0
      %3585 = vmatprep.mubr.bf16.mxu0 0
      %3586 = vmatmul.mubr.bf16.gmra.mrb[0].mxu0 %v3548
      %v3587 = vpop.f32.mrb[0].mxu0
      %v3588 = vadd.f32 0.0, %v3587
      %v3589 = vpop.f32.mrb[0].mxu0
      %v3590 = vpop.f32.mrb[0].mxu0
      %v3591 = vpop.f32.mrb[0].mxu0
      %3592 = vdwg.mxu0
      %v3593 = vadd.f32 %v3531, %v3588
      %v3594 = vadd.f32 %v3593, %v670
      %v3595 = vmax.f32 %v3594, 0.0
      %v3596 = vpack.c.bf16 %v3595, %v3595
      %s3597 = scalar_lea.vmem %s170, 24
      %3598 = vst.msk [vmem:[%s3597] sm:$0xf] %vm675, %v3596
      %v3599 = vld [vmem:[%s3432] sm:$0xf]
      %v3600 = vld [vmem:[%s1] sm:$0x3]
      %v3601 = vld [vmem:[%s3482] sm:$0xf]
      %v3602 = vld [vmem:[%s177] sm:$0x3]
      %v3604 = vsel %vm179, %v3601, 0
      %v3607 = vsel %vm183, %v3602, 0
      %3609 = vmatprep.subr.bf16.mxu0 0
      %3610 = vmatpush1.bf16.msra.mxu0 %v3607
      %3611 = vmatprep.subr.bf16.mxu0 0
      %3612 = vmatpush1.bf16.msra.mxu0 0
      %3613 = vmatprep.subr.bf16.mxu0 0
      %3614 = vmatpush1.bf16.msra.mxu0 0
      %3615 = vmatprep.subr.bf16.mxu0 0
      %3616 = vmatpush1.bf16.msra.mxu0 0
      %3617 = vmatprep.subr.bf16.mxu0 0
      %3618 = vmatpush1.bf16.msra.mxu0 0
      %3619 = vmatprep.subr.bf16.mxu0 0
      %3620 = vmatpush1.bf16.msra.mxu0 0
      %3621 = vmatprep.subr.bf16.mxu0 0
      %3622 = vmatpush1.bf16.msra.mxu0 0
      %3623 = vmatprep.subr.bf16.mxu0 0
      %3624 = vmatpush1.bf16.msra.mxu0 0
      %3625 = vmatprep.subr.bf16.mxu0 0
      %3626 = vmatpush1.bf16.msra.mxu0 0
      %3627 = vmatprep.subr.bf16.mxu0 0
      %3628 = vmatpush1.bf16.msra.mxu0 0
      %3629 = vmatprep.subr.bf16.mxu0 0
      %3630 = vmatpush1.bf16.msra.mxu0 0
      %3631 = vmatprep.subr.bf16.mxu0 0
      %3632 = vmatpush1.bf16.msra.mxu0 0
      %3633 = vmatprep.subr.bf16.mxu0 0
      %3634 = vmatpush1.bf16.msra.mxu0 0
      %3635 = vmatprep.subr.bf16.mxu0 0
      %3636 = vmatpush1.bf16.msra.mxu0 0
      %3637 = vmatprep.subr.bf16.mxu0 0
      %3638 = vmatpush1.bf16.msra.mxu0 0
      %3639 = vmatprep.subr.bf16.mxu0 0
      %3640 = vmatpush1.bf16.msra.mxu0 0
      %3641 = vmatprep.mubr.bf16.mxu0 0
      %3642 = vmatmul.mubr.bf16.gmra.mrb[0].mxu0 %v3604
      %v3643 = vpop.f32.mrb[0].mxu0
      %v3644 = vadd.f32 0.0, %v3643
      %v3645 = vpop.f32.mrb[0].mxu0
      %v3646 = vpop.f32.mrb[0].mxu0
      %v3647 = vpop.f32.mrb[0].mxu0
      %3648 = vdwg.mxu0
      %v3650 = vsel %vm179, %v3599, 0
      %v3653 = vsel %vm183, %v3600, 0
      %3655 = vmatprep.subr.bf16.mxu0 0
      %3656 = vmatpush1.bf16.msra.mxu0 %v3653
      %3657 = vmatprep.subr.bf16.mxu0 0
      %3658 = vmatpush1.bf16.msra.mxu0 0
      %3659 = vmatprep.subr.bf16.mxu0 0
      %3660 = vmatpush1.bf16.msra.mxu0 0
      %3661 = vmatprep.subr.bf16.mxu0 0
      %3662 = vmatpush1.bf16.msra.mxu0 0
      %3663 = vmatprep.subr.bf16.mxu0 0
      %3664 = vmatpush1.bf16.msra.mxu0 0
      %3665 = vmatprep.subr.bf16.mxu0 0
      %3666 = vmatpush1.bf16.msra.mxu0 0
      %3667 = vmatprep.subr.bf16.mxu0 0
      %3668 = vmatpush1.bf16.msra.mxu0 0
      %3669 = vmatprep.subr.bf16.mxu0 0
      %3670 = vmatpush1.bf16.msra.mxu0 0
      %3671 = vmatprep.subr.bf16.mxu0 0
      %3672 = vmatpush1.bf16.msra.mxu0 0
      %3673 = vmatprep.subr.bf16.mxu0 0
      %3674 = vmatpush1.bf16.msra.mxu0 0
      %3675 = vmatprep.subr.bf16.mxu0 0
      %3676 = vmatpush1.bf16.msra.mxu0 0
      %3677 = vmatprep.subr.bf16.mxu0 0
      %3678 = vmatpush1.bf16.msra.mxu0 0
      %3679 = vmatprep.subr.bf16.mxu0 0
      %3680 = vmatpush1.bf16.msra.mxu0 0
      %3681 = vmatprep.subr.bf16.mxu0 0
      %3682 = vmatpush1.bf16.msra.mxu0 0
      %3683 = vmatprep.subr.bf16.mxu0 0
      %3684 = vmatpush1.bf16.msra.mxu0 0
      %3685 = vmatprep.subr.bf16.mxu0 0
      %3686 = vmatpush1.bf16.msra.mxu0 0
      %3687 = vmatprep.mubr.bf16.mxu0 0
      %3688 = vmatmul.mubr.bf16.gmra.mrb[0].mxu0 %v3650
      %v3689 = vpop.f32.mrb[0].mxu0
      %v3690 = vadd.f32 %v3644, %v3689
      %v3691 = vpop.f32.mrb[0].mxu0
      %v3692 = vpop.f32.mrb[0].mxu0
      %v3693 = vpop.f32.mrb[0].mxu0
      %3694 = vdwg.mxu0
      %v3695 = vld [vmem:[%s3432] sm:$0xf]
      %v3696 = vld [vmem:[%s3432 + $0x4] sm:$0x1]
      %v3697 = vld [vmem:[%s275] sm:$0x3]
      %v3700 = vunpack.c.l.b16 %v3695
      %v3701 = vunpack.c.l.b16 %v3696
      %v3702 = vpack.c.b16 %v3701, %v3700
      %v3704 = vshrl.u32 %v3702, 16
      %v3706 = vshll.u32 %v3702, 16
      %v3708 = vrot.slane %v3706, 1
      %v3709 = vor.u32 %v3704, %v3708
      %v3711 = vsel %vm179, %v3709, 0
      %v3714 = vsel %vm183, %v3697, 0
      %3716 = vmatprep.subr.bf16.mxu0 0
      %3717 = vmatpush1.bf16.msra.mxu0 %v3714
      %3718 = vmatprep.subr.bf16.mxu0 0
      %3719 = vmatpush1.bf16.msra.mxu0 0
      %3720 = vmatprep.subr.bf16.mxu0 0
      %3721 = vmatpush1.bf16.msra.mxu0 0
      %3722 = vmatprep.subr.bf16.mxu0 0
      %3723 = vmatpush1.bf16.msra.mxu0 0
      %3724 = vmatprep.subr.bf16.mxu0 0
      %3725 = vmatpush1.bf16.msra.mxu0 0
      %3726 = vmatprep.subr.bf16.mxu0 0
      %3727 = vmatpush1.bf16.msra.mxu0 0
      %3728 = vmatprep.subr.bf16.mxu0 0
      %3729 = vmatpush1.bf16.msra.mxu0 0
      %3730 = vmatprep.subr.bf16.mxu0 0
      %3731 = vmatpush1.bf16.msra.mxu0 0
      %3732 = vmatprep.subr.bf16.mxu0 0
      %3733 = vmatpush1.bf16.msra.mxu0 0
      %3734 = vmatprep.subr.bf16.mxu0 0
      %3735 = vmatpush1.bf16.msra.mxu0 0
      %3736 = vmatprep.subr.bf16.mxu0 0
      %3737 = vmatpush1.bf16.msra.mxu0 0
      %3738 = vmatprep.subr.bf16.mxu0 0
      %3739 = vmatpush1.bf16.msra.mxu0 0
      %3740 = vmatprep.subr.bf16.mxu0 0
      %3741 = vmatpush1.bf16.msra.mxu0 0
      %3742 = vmatprep.subr.bf16.mxu0 0
      %3743 = vmatpush1.bf16.msra.mxu0 0
      %3744 = vmatprep.subr.bf16.mxu0 0
      %3745 = vmatpush1.bf16.msra.mxu0 0
      %3746 = vmatprep.subr.bf16.mxu0 0
      %3747 = vmatpush1.bf16.msra.mxu0 0
      %3748 = vmatprep.mubr.bf16.mxu0 0
      %3749 = vmatmul.mubr.bf16.gmra.mrb[0].mxu0 %v3711
      %v3750 = vpop.f32.mrb[0].mxu0
      %v3751 = vadd.f32 0.0, %v3750
      %v3752 = vpop.f32.mrb[0].mxu0
      %v3753 = vpop.f32.mrb[0].mxu0
      %v3754 = vpop.f32.mrb[0].mxu0
      %3755 = vdwg.mxu0
      %v3756 = vadd.f32 %v3690, %v3751
      %s3757 = scalar_lea.vmem %s165, 200
      %v3758 = vld [vmem:[%s3757] sm:$0xf]
      %v3759 = vld [vmem:[%s338] sm:$0x3]
      %v3761 = vsel %vm179, %v3758, 0
      %v3764 = vsel %vm183, %v3759, 0
      %3766 = vmatprep.subr.bf16.mxu0 0
      %3767 = vmatpush1.bf16.msra.mxu0 %v3764
      %3768 = vmatprep.subr.bf16.mxu0 0
      %3769 = vmatpush1.bf16.msra.mxu0 0
      %3770 = vmatprep.subr.bf16.mxu0 0
      %3771 = vmatpush1.bf16.msra.mxu0 0
      %3772 = vmatprep.subr.bf16.mxu0 0
      %3773 = vmatpush1.bf16.msra.mxu0 0
      %3774 = vmatprep.subr.bf16.mxu0 0
      %3775 = vmatpush1.bf16.msra.mxu0 0
      %3776 = vmatprep.subr.bf16.mxu0 0
      %3777 = vmatpush1.bf16.msra.mxu0 0
      %3778 = vmatprep.subr.bf16.mxu0 0
      %3779 = vmatpush1.bf16.msra.mxu0 0
      %3780 = vmatprep.subr.bf16.mxu0 0
      %3781 = vmatpush1.bf16.msra.mxu0 0
      %3782 = vmatprep.subr.bf16.mxu0 0
      %3783 = vmatpush1.bf16.msra.mxu0 0
      %3784 = vmatprep.subr.bf16.mxu0 0
      %3785 = vmatpush1.bf16.msra.mxu0 0
      %3786 = vmatprep.subr.bf16.mxu0 0
      %3787 = vmatpush1.bf16.msra.mxu0 0
      %3788 = vmatprep.subr.bf16.mxu0 0
      %3789 = vmatpush1.bf16.msra.mxu0 0
      %3790 = vmatprep.subr.bf16.mxu0 0
      %3791 = vmatpush1.bf16.msra.mxu0 0
      %3792 = vmatprep.subr.bf16.mxu0 0
      %3793 = vmatpush1.bf16.msra.mxu0 0
      %3794 = vmatprep.subr.bf16.mxu0 0
      %3795 = vmatpush1.bf16.msra.mxu0 0
      %3796 = vmatprep.subr.bf16.mxu0 0
      %3797 = vmatpush1.bf16.msra.mxu0 0
      %3798 = vmatprep.mubr.bf16.mxu0 0
      %3799 = vmatmul.mubr.bf16.gmra.mrb[0].mxu0 %v3761
      %v3800 = vpop.f32.mrb[0].mxu0
      %v3801 = vadd.f32 0.0, %v3800
      %v3802 = vpop.f32.mrb[0].mxu0
      %v3803 = vpop.f32.mrb[0].mxu0
      %v3804 = vpop.f32.mrb[0].mxu0
      %3805 = vdwg.mxu0
      %v3806 = vadd.f32 %v3756, %v3801
      %s3807 = scalar_lea.vmem %s165, 272
      %v3808 = vld [vmem:[%s3807] sm:$0xf]
      %v3809 = vld [vmem:[%s389] sm:$0x3]
      %v3811 = vsel %vm179, %v3808, 0
      %v3814 = vsel %vm183, %v3809, 0
      %3816 = vmatprep.subr.bf16.mxu0 0
      %3817 = vmatpush1.bf16.msra.mxu0 %v3814
      %3818 = vmatprep.subr.bf16.mxu0 0
      %3819 = vmatpush1.bf16.msra.mxu0 0
      %3820 = vmatprep.subr.bf16.mxu0 0
      %3821 = vmatpush1.bf16.msra.mxu0 0
      %3822 = vmatprep.subr.bf16.mxu0 0
      %3823 = vmatpush1.bf16.msra.mxu0 0
      %3824 = vmatprep.subr.bf16.mxu0 0
      %3825 = vmatpush1.bf16.msra.mxu0 0
      %3826 = vmatprep.subr.bf16.mxu0 0
      %3827 = vmatpush1.bf16.msra.mxu0 0
      %3828 = vmatprep.subr.bf16.mxu0 0
      %3829 = vmatpush1.bf16.msra.mxu0 0
      %3830 = vmatprep.subr.bf16.mxu0 0
      %3831 = vmatpush1.bf16.msra.mxu0 0
      %3832 = vmatprep.subr.bf16.mxu0 0
      %3833 = vmatpush1.bf16.msra.mxu0 0
      %3834 = vmatprep.subr.bf16.mxu0 0
      %3835 = vmatpush1.bf16.msra.mxu0 0
      %3836 = vmatprep.subr.bf16.mxu0 0
      %3837 = vmatpush1.bf16.msra.mxu0 0
      %3838 = vmatprep.subr.bf16.mxu0 0
      %3839 = vmatpush1.bf16.msra.mxu0 0
      %3840 = vmatprep.subr.bf16.mxu0 0
      %3841 = vmatpush1.bf16.msra.mxu0 0
      %3842 = vmatprep.subr.bf16.mxu0 0
      %3843 = vmatpush1.bf16.msra.mxu0 0
      %3844 = vmatprep.subr.bf16.mxu0 0
      %3845 = vmatpush1.bf16.msra.mxu0 0
      %3846 = vmatprep.subr.bf16.mxu0 0
      %3847 = vmatpush1.bf16.msra.mxu0 0
      %3848 = vmatprep.mubr.bf16.mxu0 0
      %3849 = vmatmul.mubr.bf16.gmra.mrb[0].mxu0 %v3811
      %v3850 = vpop.f32.mrb[0].mxu0
      %v3851 = vadd.f32 0.0, %v3850
      %v3852 = vpop.f32.mrb[0].mxu0
      %v3853 = vpop.f32.mrb[0].mxu0
      %v3854 = vpop.f32.mrb[0].mxu0
      %3855 = vdwg.mxu0
      %v3856 = vadd.f32 %v3806, %v3851
      %v3857 = vld [vmem:[%s3757] sm:$0xf]
      %v3858 = vld [vmem:[%s3757 + $0x4] sm:$0x1]
      %v3859 = vld [vmem:[%s440] sm:$0x3]
      %v3862 = vunpack.c.l.b16 %v3857
      %v3863 = vunpack.c.l.b16 %v3858
      %v3864 = vpack.c.b16 %v3863, %v3862
      %v3866 = vshrl.u32 %v3864, 16
      %v3868 = vshll.u32 %v3864, 16
      %v3870 = vrot.slane %v3868, 1
      %v3871 = vor.u32 %v3866, %v3870
      %v3873 = vsel %vm179, %v3871, 0
      %v3876 = vsel %vm183, %v3859, 0
      %3878 = vmatprep.subr.bf16.mxu0 0
      %3879 = vmatpush1.bf16.msra.mxu0 %v3876
      %3880 = vmatprep.subr.bf16.mxu0 0
      %3881 = vmatpush1.bf16.msra.mxu0 0
      %3882 = vmatprep.subr.bf16.mxu0 0
      %3883 = vmatpush1.bf16.msra.mxu0 0
      %3884 = vmatprep.subr.bf16.mxu0 0
      %3885 = vmatpush1.bf16.msra.mxu0 0
      %3886 = vmatprep.subr.bf16.mxu0 0
      %3887 = vmatpush1.bf16.msra.mxu0 0
      %3888 = vmatprep.subr.bf16.mxu0 0
      %3889 = vmatpush1.bf16.msra.mxu0 0
      %3890 = vmatprep.subr.bf16.mxu0 0
      %3891 = vmatpush1.bf16.msra.mxu0 0
      %3892 = vmatprep.subr.bf16.mxu0 0
      %3893 = vmatpush1.bf16.msra.mxu0 0
      %3894 = vmatprep.subr.bf16.mxu0 0
      %3895 = vmatpush1.bf16.msra.mxu0 0
      %3896 = vmatprep.subr.bf16.mxu0 0
      %3897 = vmatpush1.bf16.msra.mxu0 0
      %3898 = vmatprep.subr.bf16.mxu0 0
      %3899 = vmatpush1.bf16.msra.mxu0 0
      %3900 = vmatprep.subr.bf16.mxu0 0
      %3901 = vmatpush1.bf16.msra.mxu0 0
      %3902 = vmatprep.subr.bf16.mxu0 0
      %3903 = vmatpush1.bf16.msra.mxu0 0
      %3904 = vmatprep.subr.bf16.mxu0 0
      %3905 = vmatpush1.bf16.msra.mxu0 0
      %3906 = vmatprep.subr.bf16.mxu0 0
      %3907 = vmatpush1.bf16.msra.mxu0 0
      %3908 = vmatprep.subr.bf16.mxu0 0
      %3909 = vmatpush1.bf16.msra.mxu0 0
      %3910 = vmatprep.mubr.bf16.mxu0 0
      %3911 = vmatmul.mubr.bf16.gmra.mrb[0].mxu0 %v3873
      %v3912 = vpop.f32.mrb[0].mxu0
      %v3913 = vadd.f32 0.0, %v3912
      %v3914 = vpop.f32.mrb[0].mxu0
      %v3915 = vpop.f32.mrb[0].mxu0
      %v3916 = vpop.f32.mrb[0].mxu0
      %3917 = vdwg.mxu0
      %v3918 = vadd.f32 %v3856, %v3913
      %s3919 = scalar_lea.vmem %s165, 64
      %v3920 = vld [vmem:[%s3919] sm:$0xf]
      %v3921 = vld [vmem:[%s503] sm:$0x3]
      %v3923 = vsel %vm179, %v3920, 0
      %v3926 = vsel %vm183, %v3921, 0
      %3928 = vmatprep.subr.bf16.mxu0 0
      %3929 = vmatpush1.bf16.msra.mxu0 %v3926
      %3930 = vmatprep.subr.bf16.mxu0 0
      %3931 = vmatpush1.bf16.msra.mxu0 0
      %3932 = vmatprep.subr.bf16.mxu0 0
      %3933 = vmatpush1.bf16.msra.mxu0 0
      %3934 = vmatprep.subr.bf16.mxu0 0
      %3935 = vmatpush1.bf16.msra.mxu0 0
      %3936 = vmatprep.subr.bf16.mxu0 0
      %3937 = vmatpush1.bf16.msra.mxu0 0
      %3938 = vmatprep.subr.bf16.mxu0 0
      %3939 = vmatpush1.bf16.msra.mxu0 0
      %3940 = vmatprep.subr.bf16.mxu0 0
      %3941 = vmatpush1.bf16.msra.mxu0 0
      %3942 = vmatprep.subr.bf16.mxu0 0
      %3943 = vmatpush1.bf16.msra.mxu0 0
      %3944 = vmatprep.subr.bf16.mxu0 0
      %3945 = vmatpush1.bf16.msra.mxu0 0
      %3946 = vmatprep.subr.bf16.mxu0 0
      %3947 = vmatpush1.bf16.msra.mxu0 0
      %3948 = vmatprep.subr.bf16.mxu0 0
      %3949 = vmatpush1.bf16.msra.mxu0 0
      %3950 = vmatprep.subr.bf16.mxu0 0
      %3951 = vmatpush1.bf16.msra.mxu0 0
      %3952 = vmatprep.subr.bf16.mxu0 0
      %3953 = vmatpush1.bf16.msra.mxu0 0
      %3954 = vmatprep.subr.bf16.mxu0 0
      %3955 = vmatpush1.bf16.msra.mxu0 0
      %3956 = vmatprep.subr.bf16.mxu0 0
      %3957 = vmatpush1.bf16.msra.mxu0 0
      %3958 = vmatprep.subr.bf16.mxu0 0
      %3959 = vmatpush1.bf16.msra.mxu0 0
      %3960 = vmatprep.mubr.bf16.mxu0 0
      %3961 = vmatmul.mubr.bf16.gmra.mrb[0].mxu0 %v3923
      %v3962 = vpop.f32.mrb[0].mxu0
      %v3963 = vadd.f32 0.0, %v3962
      %v3964 = vpop.f32.mrb[0].mxu0
      %v3965 = vpop.f32.mrb[0].mxu0
      %v3966 = vpop.f32.mrb[0].mxu0
      %3967 = vdwg.mxu0
      %v3968 = vadd.f32 %v3918, %v3963
      %s3969 = scalar_lea.vmem %s165, 136
      %v3970 = vld [vmem:[%s3969] sm:$0xf]
      %v3971 = vld [vmem:[%s554] sm:$0x3]
      %v3973 = vsel %vm179, %v3970, 0
      %v3976 = vsel %vm183, %v3971, 0
      %3978 = vmatprep.subr.bf16.mxu0 0
      %3979 = vmatpush1.bf16.msra.mxu0 %v3976
      %3980 = vmatprep.subr.bf16.mxu0 0
      %3981 = vmatpush1.bf16.msra.mxu0 0
      %3982 = vmatprep.subr.bf16.mxu0 0
      %3983 = vmatpush1.bf16.msra.mxu0 0
      %3984 = vmatprep.subr.bf16.mxu0 0
      %3985 = vmatpush1.bf16.msra.mxu0 0
      %3986 = vmatprep.subr.bf16.mxu0 0
      %3987 = vmatpush1.bf16.msra.mxu0 0
      %3988 = vmatprep.subr.bf16.mxu0 0
      %3989 = vmatpush1.bf16.msra.mxu0 0
      %3990 = vmatprep.subr.bf16.mxu0 0
      %3991 = vmatpush1.bf16.msra.mxu0 0
      %3992 = vmatprep.subr.bf16.mxu0 0
      %3993 = vmatpush1.bf16.msra.mxu0 0
      %3994 = vmatprep.subr.bf16.mxu0 0
      %3995 = vmatpush1.bf16.msra.mxu0 0
      %3996 = vmatprep.subr.bf16.mxu0 0
      %3997 = vmatpush1.bf16.msra.mxu0 0
      %3998 = vmatprep.subr.bf16.mxu0 0
      %3999 = vmatpush1.bf16.msra.mxu0 0
      %4000 = vmatprep.subr.bf16.mxu0 0
      %4001 = vmatpush1.bf16.msra.mxu0 0
      %4002 = vmatprep.subr.bf16.mxu0 0
      %4003 = vmatpush1.bf16.msra.mxu0 0
      %4004 = vmatprep.subr.bf16.mxu0 0
      %4005 = vmatpush1.bf16.msra.mxu0 0
      %4006 = vmatprep.subr.bf16.mxu0 0
      %4007 = vmatpush1.bf16.msra.mxu0 0
      %4008 = vmatprep.subr.bf16.mxu0 0
      %4009 = vmatpush1.bf16.msra.mxu0 0
      %4010 = vmatprep.mubr.bf16.mxu0 0
      %4011 = vmatmul.mubr.bf16.gmra.mrb[0].mxu0 %v3973
      %v4012 = vpop.f32.mrb[0].mxu0
      %v4013 = vadd.f32 0.0, %v4012
      %v4014 = vpop.f32.mrb[0].mxu0
      %v4015 = vpop.f32.mrb[0].mxu0
      %v4016 = vpop.f32.mrb[0].mxu0
      %4017 = vdwg.mxu0
      %v4018 = vadd.f32 %v3968, %v4013
      %v4019 = vld [vmem:[%s3919] sm:$0xf]
      %v4020 = vld [vmem:[%s3919 + $0x4] sm:$0x1]
      %v4021 = vld [vmem:[%s605] sm:$0x3]
      %v4024 = vunpack.c.l.b16 %v4019
      %v4025 = vunpack.c.l.b16 %v4020
      %v4026 = vpack.c.b16 %v4025, %v4024
      %v4028 = vshrl.u32 %v4026, 16
      %v4030 = vshll.u32 %v4026, 16
      %v4032 = vrot.slane %v4030, 1
      %v4033 = vor.u32 %v4028, %v4032
      %v4035 = vsel %vm179, %v4033, 0
      %v4038 = vsel %vm183, %v4021, 0
      %4040 = vmatprep.subr.bf16.mxu0 0
      %4041 = vmatpush1.bf16.msra.mxu0 %v4038
      %4042 = vmatprep.subr.bf16.mxu0 0
      %4043 = vmatpush1.bf16.msra.mxu0 0
      %4044 = vmatprep.subr.bf16.mxu0 0
      %4045 = vmatpush1.bf16.msra.mxu0 0
      %4046 = vmatprep.subr.bf16.mxu0 0
      %4047 = vmatpush1.bf16.msra.mxu0 0
      %4048 = vmatprep.subr.bf16.mxu0 0
      %4049 = vmatpush1.bf16.msra.mxu0 0
      %4050 = vmatprep.subr.bf16.mxu0 0
      %4051 = vmatpush1.bf16.msra.mxu0 0
      %4052 = vmatprep.subr.bf16.mxu0 0
      %4053 = vmatpush1.bf16.msra.mxu0 0
      %4054 = vmatprep.subr.bf16.mxu0 0
      %4055 = vmatpush1.bf16.msra.mxu0 0
      %4056 = vmatprep.subr.bf16.mxu0 0
      %4057 = vmatpush1.bf16.msra.mxu0 0
      %4058 = vmatprep.subr.bf16.mxu0 0
      %4059 = vmatpush1.bf16.msra.mxu0 0
      %4060 = vmatprep.subr.bf16.mxu0 0
      %4061 = vmatpush1.bf16.msra.mxu0 0
      %4062 = vmatprep.subr.bf16.mxu0 0
      %4063 = vmatpush1.bf16.msra.mxu0 0
      %4064 = vmatprep.subr.bf16.mxu0 0
      %4065 = vmatpush1.bf16.msra.mxu0 0
      %4066 = vmatprep.subr.bf16.mxu0 0
      %4067 = vmatpush1.bf16.msra.mxu0 0
      %4068 = vmatprep.subr.bf16.mxu0 0
      %4069 = vmatpush1.bf16.msra.mxu0 0
      %4070 = vmatprep.subr.bf16.mxu0 0
      %4071 = vmatpush1.bf16.msra.mxu0 0
      %4072 = vmatprep.mubr.bf16.mxu0 0
      %4073 = vmatmul.mubr.bf16.gmra.mrb[0].mxu0 %v4035
      %v4074 = vpop.f32.mrb[0].mxu0
      %v4075 = vadd.f32 0.0, %v4074
      %v4076 = vpop.f32.mrb[0].mxu0
      %v4077 = vpop.f32.mrb[0].mxu0
      %v4078 = vpop.f32.mrb[0].mxu0
      %4079 = vdwg.mxu0
      %v4080 = vadd.f32 %v4018, %v4075
      %v4081 = vadd.f32 %v4080, %v670
      %v4082 = vmax.f32 %v4081, 0.0
      %v4083 = vpack.c.bf16 %v4082, %v4082
      %s4084 = scalar_lea.vmem %s170, 28
      %4085 = vst.msk [vmem:[%s4084] sm:$0xf] %vm675, %v4083
      %p4086 = scmp.lt.s32.totalorder %s14, 1
      %s4087 = scalar_select %p4086, %s14, 1
      %s4088 = smul.addr %s4087, 8
      %s4089 = smul.addr %s4088, 4
      %s4090 = scalar_lea.vmem %s3, %s4089
      // Predicated region
      $region33: #{deeplabv3_forward.4} parent=31 // pred_check
        %p4091 = pneg %p100
      $region34: #{deeplabv3_forward.4} parent=31 // pred_check_branch
        %4093 = sbr.rel (%p4091) target = $region36
      $region35: #{deeplabv3_forward.4} parent=31 // pred_region
        _
      $region36: #{deeplabv3_forward.4} parent=31 // pred_fallthru
        _
    $region32: #{deeplabv3_forward.4} parent=5 // pred_fallthru
      _
    %p4094 = scmp.le.s32.totalorder 2, %s9
    // Predicated region
    $region37: #{deeplabv3_forward.4} parent=5 // pred_check
      %p4095 = pneg %p4094
    $region38: #{deeplabv3_forward.4} parent=5 // pred_check_branch
      %4097 = sbr.rel (%p4095) target = $region40
    $region39: #{deeplabv3_forward.4} parent=5 // pred_region
      %s4098 = ssub.s32 %s9, 2
      // Predicated region
      $region41: #{deeplabv3_forward.4} parent=39 // pred_check
        %p4099 = pneg %p106
      $region42: #{deeplabv3_forward.4} parent=39 // pred_check_branch
        %4101 = sbr.rel (%p4099) target = $region44
      $region43: #{deeplabv3_forward.4} parent=39 // pred_region
        %p4102 = scmp.lt.s32.totalorder %s15, 1
        %s4103 = scalar_select %p4102, %s15, 1
        %s4104 = smul.addr %s4103, 8
        %s4105 = smul.addr %s4104, 4
        %s4106 = scalar_lea.vmem %s3, %s4105
      $region44: #{deeplabv3_forward.4} parent=39 // pred_fallthru
        _
    $region40: #{deeplabv3_forward.4} parent=5 // pred_fallthru
      _
  $region6: #{deeplabv3_forward.4} parent=0 // loop_footer
    %s13 = sadd.s32 1, %s9
  $region7: #{deeplabv3_forward.4} parent=0 // loop_footer_branch
    %8 = sbr.rel target = $region3
  $region8: #{deeplabv3_forward.4} parent=0 // loop_exit
    _

</llo_original>
